<compile_context>
chip_gen: v7x
topology: tpu7x:2x2x1
jax: 0.10.0
libtpu: 0.0.40
codegen_flags: <defaults>
</compile_context>

<pallas_src>
import functools

import jax
import jax.numpy as jnp
from jax import lax
from jax.experimental import pallas as pl
from jax.experimental.pallas import tpu as pltpu


# ---------------------------------------------------------------------------
# Problem sizes (module defaults; small point count for the demo)
# ---------------------------------------------------------------------------
L_POS = 10                     # gamma_x dim = 6*10 + 3 = 63 (padded to 64)
L_DIR = 4                      # gamma_d dim = 6*4  + 3 = 27 (padded to 32)
HIDDEN = 256                   # hidden_dim (module default); layout assumes 256
N_POINTS = 512                 # number of (pos, dir) samples
TILE = 256                     # rows per grid step; raise to 512-1024 for big N
GX_PAD = 64                    # padded gamma_x width
GD_PAD = 32                    # padded gamma_d width
OUT_W = 128                    # packed lane-dense output width


# ---------------------------------------------------------------------------
# Positional encoding (standard NeRF): [x, sin(2^i x), cos(2^i x)]_{i<L}
# ---------------------------------------------------------------------------
def positional_encoding(x, L):
    feats = [x]
    for i in range(L):
        f = jnp.float32(2.0 ** i)
        feats.append(jnp.sin(f * x))
        feats.append(jnp.cos(f * x))
    return jnp.concatenate(feats, axis=-1)


def _pick_epilogue_dtype():
    """bf16 bias+ReLU epilogue on v6e/v7x (bf16 VALU, VALU-bound); f32 on
    v5e/older (MXU-bound, no bf16 VALU) or anything we can't identify."""
    try:
        kind = jax.devices()[0].device_kind.lower()
    except Exception:
        return jnp.float32
    if "v6" in kind or "v7" in kind:
        return jnp.bfloat16
    return jnp.float32


# ---------------------------------------------------------------------------
# Pallas kernel: full MLP forward for one tile of points
# ---------------------------------------------------------------------------
def _nerf_mlp_kernel(gx_ref, gd_ref,
                     wg_ref,    # (2, 64, H)  bf16: [net1 L0 | net2 L0 gamma_x part]
                     wh_ref,    # (8, H, H)   bf16: all (H,H) hidden weights
                     bh_ref,    # (9, 1, H)   cdt : all H-wide biases (net1 L0 first)
                     w2s_ref,   # (H, 128)    bf16: net2 L3 sigma column (lane 3)
                     wph_ref,   # (H, 128)    bf16: post L0, h part
                     wpg_ref,   # (32, 128)   bf16: post L0, gamma_d part (K padded)
                     wp1_ref,   # (128, 128)  bf16: post L1, c in lanes 0-2
                     b128_ref,  # (3, 1, 128) f32 : [sigma bias | post L0 bias | post L1 bias]
                     out_ref,   # (T, 128)    f32 : packed [c | sigma | 0...]
                     *, cdt):
    f32 = jnp.float32
    bf16 = jnp.bfloat16

    gx = gx_ref[...]            # (T, 64) bf16
    gd = gd_ref[...]            # (T, 32) bf16

    def hdot(a, b):             # hidden-layer dot: bf16 MXU, epilogue-dtype output
        return jnp.dot(a, b, preferred_element_type=cdt)

    def fdot(a, b):             # f32-accumulated dot for the output heads
        return jnp.dot(a, b, preferred_element_type=f32)

    def relu_mxu(x):            # ReLU in the epilogue dtype, bf16 for the next dot
        return jax.nn.relu(x).astype(bf16)

    # ----- net1: Linear(63->H) + 4x Linear(H->H), all ReLU ------------------
    h = relu_mxu(hdot(gx, wg_ref[0]) + bh_ref[0])
    for j in range(4):
        h = relu_mxu(hdot(h, wh_ref[j]) + bh_ref[j + 1])

    # ----- net2: torch.cat((h, gamma_x)) folded into split dots -------------
    h = relu_mxu(hdot(h, wh_ref[4]) + hdot(gx, wg_ref[1]) + bh_ref[5])
    h = relu_mxu(hdot(h, wh_ref[5]) + bh_ref[6])
    h = relu_mxu(hdot(h, wh_ref[6]) + bh_ref[7])
    # Last net2 layer (H -> H+1), split: sigma column -> lane 3 of a 128-wide
    # slab (ReLU applied, matching the module's trailing nn.ReLU); hidden part
    # goes through the standard aligned epilogue.
    sig_slab = jax.nn.relu(fdot(h, w2s_ref[...]) + b128_ref[0])        # (T,128) f32
    h = relu_mxu(hdot(h, wh_ref[7]) + bh_ref[8])

    # ----- post_net: torch.cat((h, gamma_d)) folded into split dots ---------
    bp0 = b128_ref[1].astype(cdt)
    hp = relu_mxu(hdot(h, wph_ref[...]) + hdot(gd, wpg_ref[...]) + bp0)
    c_slab = jax.nn.sigmoid(fdot(hp, wp1_ref[...]) + b128_ref[2])      # (T,128) f32

    # Packed lane-dense output: lanes 0-2 = c, lane 3 = sigma, rest zero.
    lane = lax.broadcasted_iota(jnp.int32, c_slab.shape, 1)
    out_ref[...] = jnp.where(lane < 3, c_slab, sig_slab)


# ---------------------------------------------------------------------------
# Parameter packing (module layout -> kernel layout)
# ---------------------------------------------------------------------------
def pack_params(params, hidden=HIDDEN, epilogue_dtype=jnp.float32):
    assert hidden == 256, "kernel layout assumes hidden_dim == 256"
    bf16, f32 = jnp.bfloat16, jnp.float32
    net1, net2, post = params["net1"], params["net2"], params["post"]

    def padk(w, k):   # zero-pad contraction (row) dim
        return jnp.pad(w, ((0, k - w.shape[0]), (0, 0)))

    def padn(x, n):   # zero-pad output (lane) dim
        return jnp.pad(x, ((0, 0), (0, n - x.shape[1])))

    w1, b1 = net1[0]                         # (63,H), (1,H)
    w2_0, b2_0 = net2[0]                     # (H+63,H), (1,H)
    w2_0h, w2_0g = w2_0[:hidden], w2_0[hidden:]
    w2_3, b2_3 = net2[3]                     # (H,H+1), (1,H+1)
    wp0, bp0 = post[0]                       # (H+27,128), (1,128)
    wp0h, wp0g = wp0[:hidden], wp0[hidden:]
    wp1, bp1 = post[1]                       # (128,3), (1,3)

    # gamma_x-side weights (K padded 63->64) stacked: [net1 L0 | net2 L0 skip]
    wg = jnp.stack([padk(w1, GX_PAD), padk(w2_0g, GX_PAD)]).astype(bf16)   # (2,64,H)

    # every (H,H) hidden weight
    wh = jnp.stack([net1[1][0], net1[2][0], net1[3][0], net1[4][0],
                    w2_0h, net2[1][0], net2[2][0],
                    w2_3[:, :hidden]]).astype(bf16)                        # (8,H,H)
    # every (1,H) bias, stored in the epilogue dtype
    bh = jnp.stack([b1, net1[1][1], net1[2][1], net1[3][1], net1[4][1],
                    b2_0, net2[1][1], net2[2][1],
                    b2_3[:, :hidden]]).astype(epilogue_dtype)              # (9,1,H)

    # sigma column of net2's last layer -> lane 3 of a 128-wide slab
    w2s = jnp.zeros((hidden, OUT_W), f32).at[:, 3].set(w2_3[:, hidden]).astype(bf16)
    b2s = jnp.zeros((1, OUT_W), f32).at[0, 3].set(b2_3[0, hidden])

    wph = wp0h.astype(bf16)                                                # (H,128)
    wpg = padk(wp0g, GD_PAD).astype(bf16)                                  # (32,128)
    wp1p = padn(wp1, OUT_W).astype(bf16)                                   # (128,128)
    bp1p = padn(bp1, OUT_W).astype(f32)                                    # (1,128)

    b128 = jnp.stack([b2s, bp0.astype(f32), bp1p])                         # (3,1,128)

    return dict(wg=wg, wh=wh, bh=bh, w2s=w2s, wph=wph, wpg=wpg,
                wp1=wp1p, b128=b128)


# ---------------------------------------------------------------------------
# Wrapper
# ---------------------------------------------------------------------------
def nerf_forward(params, pos, d, *, hidden=HIDDEN, tile=TILE, epilogue_dtype=None):
    if epilogue_dtype is None:
        epilogue_dtype = _pick_epilogue_dtype()
    n = pos.shape[0]
    tile = min(tile, n)
    assert n % tile == 0 and tile % 8 == 0

    gx = jnp.pad(positional_encoding(pos, L_POS),
                 ((0, 0), (0, GX_PAD - (6 * L_POS + 3)))).astype(jnp.bfloat16)
    gd = jnp.pad(positional_encoding(d, L_DIR),
                 ((0, 0), (0, GD_PAD - (6 * L_DIR + 3)))).astype(jnp.bfloat16)
    pk = pack_params(params, hidden, epilogue_dtype)

    def full(a):
        nd = a.ndim
        return pl.BlockSpec(a.shape, lambda i, _nd=nd: (0,) * _nd)

    weight_bytes = sum(int(v.size) * v.dtype.itemsize for v in pk.values())
    flops_per_row = 2 * (2 * GX_PAD * hidden + 8 * hidden * hidden
                         + 2 * hidden * OUT_W + GD_PAD * OUT_W + OUT_W * OUT_W)
    cost = pl.CostEstimate(
        flops=int(flops_per_row * n),
        transcendentals=int(OUT_W * n),
        bytes_accessed=int(weight_bytes
                           + gx.size * gx.dtype.itemsize
                           + gd.size * gd.dtype.itemsize
                           + n * OUT_W * 4))

    kernel = functools.partial(_nerf_mlp_kernel, cdt=epilogue_dtype)
    order = ("wg", "wh", "bh", "w2s", "wph", "wpg", "wp1", "b128")

    packed = pl.pallas_call(
        kernel,
        out_shape=jax.ShapeDtypeStruct((n, OUT_W), jnp.float32),
        grid_spec=pltpu.PrefetchScalarGridSpec(
            num_scalar_prefetch=0,
            grid=(n // tile,),
            in_specs=[pl.BlockSpec((tile, GX_PAD), lambda i: (i, 0)),
                      pl.BlockSpec((tile, GD_PAD), lambda i: (i, 0))]
                     + [full(pk[k]) for k in order],
            out_specs=pl.BlockSpec((tile, OUT_W), lambda i: (i, 0)),
        ),
        compiler_params=pltpu.CompilerParams(
            dimension_semantics=("parallel",),
            vmem_limit_bytes=16 * 1024 * 1024),
        cost_estimate=cost,
    )(gx, gd, *[pk[k] for k in order])

    return packed[:, 0:3], packed[:, 3]


# ---------------------------------------------------------------------------
# Pure-JAX reference: literal translation of NaiveNeRFModel.forward (concat
# structure kept), with the same mixed precision as the kernel: bf16 matmul
# inputs, `compute_dtype` epilogue for the hidden ReLU layers, f32 for the
# final sigmoid pre-activation.
# ---------------------------------------------------------------------------
def nerf_forward_ref(params, pos, d, compute_dtype=jnp.float32):
    bf16, f32 = jnp.bfloat16, jnp.float32
    cdt = compute_dtype

    def lin(x, w, b, odt):
        y = jnp.dot(x.astype(bf16), w.astype(bf16), preferred_element_type=odt)
        return y + b.astype(odt)

    gx = positional_encoding(pos, L_POS)
    gd = positional_encoding(d, L_DIR)

    h = gx
    for (w, b) in params["net1"]:
        h = jax.nn.relu(lin(h, w, b, cdt))
    h2 = jnp.concatenate([h.astype(f32), gx], axis=1)
    for (w, b) in params["net2"]:
        h2 = jax.nn.relu(lin(h2, w, b, cdt))
    sigma = h2[:, -1].astype(f32)
    hh = h2[:, :-1]
    x3 = jnp.concatenate([hh.astype(f32), gd], axis=1)
    w, b = params["post"][0]
    hp = jax.nn.relu(lin(x3, w, b, cdt))
    w, b = params["post"][1]
    c = jax.nn.sigmoid(lin(hp, w, b, f32))
    return c, sigma


# ---------------------------------------------------------------------------
# Deterministic parameter init (same structure as the nn.Module)
# ---------------------------------------------------------------------------
def init_params(key, hidden=HIDDEN, l_pos=L_POS, l_dir=L_DIR):
    d_gx = 6 * l_pos + 3
    d_gd = 6 * l_dir + 3

    def linear(k, din, dout):
        w = jax.random.normal(k, (din, dout), jnp.float32) * jnp.sqrt(2.0 / din)
        b = jnp.zeros((1, dout), jnp.float32)
        return (w, b)

    dims_net1 = [(d_gx, hidden)] + [(hidden, hidden)] * 4
    dims_net2 = [(hidden + d_gx, hidden), (hidden, hidden),
                 (hidden, hidden), (hidden, hidden + 1)]
    dims_post = [(hidden + d_gd, hidden // 2), (hidden // 2, 3)]

    keys = jax.random.split(key, len(dims_net1) + len(dims_net2) + len(dims_post))
    ki = iter(keys)
    return {
        "net1": [linear(next(ki), di, do) for (di, do) in dims_net1],
        "net2": [linear(next(ki), di, do) for (di, do) in dims_net2],
        "post": [linear(next(ki), di, do) for (di, do) in dims_post],
    }


if __name__ == "__main__":
    key = jax.random.PRNGKey(0)
    k_p, k_x, k_d = jax.random.split(key, 3)
    params = init_params(k_p)

    pos = jax.random.normal(k_x, (N_POINTS, 3), jnp.float32)
    d = jax.random.normal(k_d, (N_POINTS, 3), jnp.float32)
    d = d / jnp.linalg.norm(d, axis=-1, keepdims=True)

    cdt = _pick_epilogue_dtype()

    c, sigma = nerf_forward(params, pos, d, epilogue_dtype=cdt)
    c = jax.block_until_ready(c)
    sigma = jax.block_until_ready(sigma)

    c_ref, sigma_ref = nerf_forward_ref(params, pos, d, compute_dtype=cdt)
    c_ref = jax.block_until_ready(c_ref)
    sigma_ref = jax.block_until_ready(sigma_ref)

    assert c.shape == (N_POINTS, 3) and sigma.shape == (N_POINTS,)
    # The bf16 epilogue (v6e/v7x) rounds every hidden pre-activation to bf16
    # and the split-dot folding reorders accumulation, so kernel-vs-reference
    # drift is O(1e-2) worst-element there vs O(1e-4) on the f32 path.
    tol = 2e-3 if cdt == jnp.float32 else 5e-2
    assert jnp.allclose(c, c_ref, atol=tol, rtol=tol), (
        f"c max abs err {jnp.max(jnp.abs(c - c_ref))}")
    assert jnp.allclose(sigma, sigma_ref, atol=tol, rtol=tol), (
        f"sigma max abs err {jnp.max(jnp.abs(sigma - sigma_ref))}")

    print("KERNEL_OK")
</pallas_src>

<mosaic_0001>
module attributes {stable_mosaic.version = 11 : i64} {
  func.func @_nerf_mlp_kernel(%arg0: i32, %arg1: memref<256x64xbf16, #tpu.memory_space<vmem>>, %arg2: memref<256x32xbf16, #tpu.memory_space<vmem>>, %arg3: memref<2x64x256xbf16, #tpu.memory_space<vmem>>, %arg4: memref<8x256x256xbf16, #tpu.memory_space<vmem>>, %arg5: memref<9x1x256xf32, #tpu.memory_space<vmem>>, %arg6: memref<256x128xbf16, #tpu.memory_space<vmem>>, %arg7: memref<256x128xbf16, #tpu.memory_space<vmem>>, %arg8: memref<32x128xbf16, #tpu.memory_space<vmem>>, %arg9: memref<128x128xbf16, #tpu.memory_space<vmem>>, %arg10: memref<3x1x128xf32, #tpu.memory_space<vmem>>, %arg11: memref<256x128xf32, #tpu.memory_space<vmem>>) attributes {dimension_semantics = [#tpu.dimension_semantics<parallel>], iteration_bounds = array<i64: 2>, scalar_prefetch = 0 : i64, scratch_operands = 0 : i64, tpu.core_type = #tpu.core_type<tc>, window_params = [{transform_indices = @transform_0, window_bounds = array<i64: 256, 64>}, {transform_indices = @transform_1, window_bounds = array<i64: 256, 32>}, {pipeline_mode = #tpu.pipeline_mode<synchronous>, transform_indices = @transform_2, window_bounds = array<i64: 2, 64, 256>}, {pipeline_mode = #tpu.pipeline_mode<synchronous>, transform_indices = @transform_3, window_bounds = array<i64: 8, 256, 256>}, {pipeline_mode = #tpu.pipeline_mode<synchronous>, transform_indices = @transform_4, window_bounds = array<i64: 9, 1, 256>}, {pipeline_mode = #tpu.pipeline_mode<synchronous>, transform_indices = @transform_5, window_bounds = array<i64: 256, 128>}, {pipeline_mode = #tpu.pipeline_mode<synchronous>, transform_indices = @transform_6, window_bounds = array<i64: 256, 128>}, {pipeline_mode = #tpu.pipeline_mode<synchronous>, transform_indices = @transform_7, window_bounds = array<i64: 32, 128>}, {pipeline_mode = #tpu.pipeline_mode<synchronous>, transform_indices = @transform_8, window_bounds = array<i64: 128, 128>}, {pipeline_mode = #tpu.pipeline_mode<synchronous>, transform_indices = @transform_9, window_bounds = array<i64: 3, 1, 128>}, {transform_indices = @transform_10, window_bounds = array<i64: 256, 128>}]} {
    %c0 = arith.constant 0 : index
    %c0_0 = arith.constant 0 : index
    %0 = vector.load %arg1[%c0, %c0_0] : memref<256x64xbf16, #tpu.memory_space<vmem>>, vector<256x64xbf16>
    %c0_1 = arith.constant 0 : index
    %c0_2 = arith.constant 0 : index
    %1 = vector.load %arg2[%c0_1, %c0_2] : memref<256x32xbf16, #tpu.memory_space<vmem>>, vector<256x32xbf16>
    %c0_3 = arith.constant 0 : index
    %c0_4 = arith.constant 0 : index
    %c0_5 = arith.constant 0 : index
    %2 = vector.load %arg3[%c0_3, %c0_4, %c0_5] : memref<2x64x256xbf16, #tpu.memory_space<vmem>>, vector<1x64x256xbf16>
    %3 = vector.shape_cast %2 : vector<1x64x256xbf16> to vector<64x256xbf16>
    %cst = arith.constant dense<0.000000e+00> : vector<256x256xf32>
    %4 = tpu.matmul %0, %3, %cst {dimension_numbers = #tpu.dot_dimension_numbers<[1], [0], [0], [1], [0, 0, 1, 1], [], []>} : vector<256x64xbf16>, vector<64x256xbf16>, vector<256x256xf32> -> vector<256x256xf32>
    %c0_6 = arith.constant 0 : index
    %c0_7 = arith.constant 0 : index
    %c0_8 = arith.constant 0 : index
    %5 = vector.load %arg5[%c0_6, %c0_7, %c0_8] : memref<9x1x256xf32, #tpu.memory_space<vmem>>, vector<1x1x256xf32>
    %6 = vector.shape_cast %5 : vector<1x1x256xf32> to vector<1x256xf32>
    %7 = vector.broadcast %6 : vector<1x256xf32> to vector<256x256xf32>
    %8 = arith.addf %4, %7 : vector<256x256xf32>
    %cst_9 = arith.constant 0.000000e+00 : f32
    %9 = vector.broadcast %cst_9 : f32 to vector<256x256xf32>
    %10 = arith.maximumf %8, %9 : vector<256x256xf32>
    %11 = arith.truncf %10 : vector<256x256xf32> to vector<256x256xbf16>
    %c0_10 = arith.constant 0 : index
    %c0_11 = arith.constant 0 : index
    %c0_12 = arith.constant 0 : index
    %12 = vector.load %arg4[%c0_10, %c0_11, %c0_12] : memref<8x256x256xbf16, #tpu.memory_space<vmem>>, vector<1x256x256xbf16>
    %13 = vector.shape_cast %12 : vector<1x256x256xbf16> to vector<256x256xbf16>
    %cst_13 = arith.constant dense<0.000000e+00> : vector<256x256xf32>
    %14 = tpu.matmul %11, %13, %cst_13 {dimension_numbers = #tpu.dot_dimension_numbers<[1], [0], [0], [1], [0, 0, 1, 1], [], []>} : vector<256x256xbf16>, vector<256x256xbf16>, vector<256x256xf32> -> vector<256x256xf32>
    %c1 = arith.constant 1 : index
    %c0_14 = arith.constant 0 : index
    %c0_15 = arith.constant 0 : index
    %15 = vector.load %arg5[%c1, %c0_14, %c0_15] : memref<9x1x256xf32, #tpu.memory_space<vmem>>, vector<1x1x256xf32>
    %16 = vector.shape_cast %15 : vector<1x1x256xf32> to vector<1x256xf32>
    %17 = vector.broadcast %16 : vector<1x256xf32> to vector<256x256xf32>
    %18 = arith.addf %14, %17 : vector<256x256xf32>
    %cst_16 = arith.constant 0.000000e+00 : f32
    %19 = vector.broadcast %cst_16 : f32 to vector<256x256xf32>
    %20 = arith.maximumf %18, %19 : vector<256x256xf32>
    %21 = arith.truncf %20 : vector<256x256xf32> to vector<256x256xbf16>
    %c1_17 = arith.constant 1 : index
    %c0_18 = arith.constant 0 : index
    %c0_19 = arith.constant 0 : index
    %22 = vector.load %arg4[%c1_17, %c0_18, %c0_19] : memref<8x256x256xbf16, #tpu.memory_space<vmem>>, vector<1x256x256xbf16>
    %23 = vector.shape_cast %22 : vector<1x256x256xbf16> to vector<256x256xbf16>
    %cst_20 = arith.constant dense<0.000000e+00> : vector<256x256xf32>
    %24 = tpu.matmul %21, %23, %cst_20 {dimension_numbers = #tpu.dot_dimension_numbers<[1], [0], [0], [1], [0, 0, 1, 1], [], []>} : vector<256x256xbf16>, vector<256x256xbf16>, vector<256x256xf32> -> vector<256x256xf32>
    %c2 = arith.constant 2 : index
    %c0_21 = arith.constant 0 : index
    %c0_22 = arith.constant 0 : index
    %25 = vector.load %arg5[%c2, %c0_21, %c0_22] : memref<9x1x256xf32, #tpu.memory_space<vmem>>, vector<1x1x256xf32>
    %26 = vector.shape_cast %25 : vector<1x1x256xf32> to vector<1x256xf32>
    %27 = vector.broadcast %26 : vector<1x256xf32> to vector<256x256xf32>
    %28 = arith.addf %24, %27 : vector<256x256xf32>
    %cst_23 = arith.constant 0.000000e+00 : f32
    %29 = vector.broadcast %cst_23 : f32 to vector<256x256xf32>
    %30 = arith.maximumf %28, %29 : vector<256x256xf32>
    %31 = arith.truncf %30 : vector<256x256xf32> to vector<256x256xbf16>
    %c2_24 = arith.constant 2 : index
    %c0_25 = arith.constant 0 : index
    %c0_26 = arith.constant 0 : index
    %32 = vector.load %arg4[%c2_24, %c0_25, %c0_26] : memref<8x256x256xbf16, #tpu.memory_space<vmem>>, vector<1x256x256xbf16>
    %33 = vector.shape_cast %32 : vector<1x256x256xbf16> to vector<256x256xbf16>
    %cst_27 = arith.constant dense<0.000000e+00> : vector<256x256xf32>
    %34 = tpu.matmul %31, %33, %cst_27 {dimension_numbers = #tpu.dot_dimension_numbers<[1], [0], [0], [1], [0, 0, 1, 1], [], []>} : vector<256x256xbf16>, vector<256x256xbf16>, vector<256x256xf32> -> vector<256x256xf32>
    %c3 = arith.constant 3 : index
    %c0_28 = arith.constant 0 : index
    %c0_29 = arith.constant 0 : index
    %35 = vector.load %arg5[%c3, %c0_28, %c0_29] : memref<9x1x256xf32, #tpu.memory_space<vmem>>, vector<1x1x256xf32>
    %36 = vector.shape_cast %35 : vector<1x1x256xf32> to vector<1x256xf32>
    %37 = vector.broadcast %36 : vector<1x256xf32> to vector<256x256xf32>
    %38 = arith.addf %34, %37 : vector<256x256xf32>
    %cst_30 = arith.constant 0.000000e+00 : f32
    %39 = vector.broadcast %cst_30 : f32 to vector<256x256xf32>
    %40 = arith.maximumf %38, %39 : vector<256x256xf32>
    %41 = arith.truncf %40 : vector<256x256xf32> to vector<256x256xbf16>
    %c3_31 = arith.constant 3 : index
    %c0_32 = arith.constant 0 : index
    %c0_33 = arith.constant 0 : index
    %42 = vector.load %arg4[%c3_31, %c0_32, %c0_33] : memref<8x256x256xbf16, #tpu.memory_space<vmem>>, vector<1x256x256xbf16>
    %43 = vector.shape_cast %42 : vector<1x256x256xbf16> to vector<256x256xbf16>
    %cst_34 = arith.constant dense<0.000000e+00> : vector<256x256xf32>
    %44 = tpu.matmul %41, %43, %cst_34 {dimension_numbers = #tpu.dot_dimension_numbers<[1], [0], [0], [1], [0, 0, 1, 1], [], []>} : vector<256x256xbf16>, vector<256x256xbf16>, vector<256x256xf32> -> vector<256x256xf32>
    %c4 = arith.constant 4 : index
    %c0_35 = arith.constant 0 : index
    %c0_36 = arith.constant 0 : index
    %45 = vector.load %arg5[%c4, %c0_35, %c0_36] : memref<9x1x256xf32, #tpu.memory_space<vmem>>, vector<1x1x256xf32>
    %46 = vector.shape_cast %45 : vector<1x1x256xf32> to vector<1x256xf32>
    %47 = vector.broadcast %46 : vector<1x256xf32> to vector<256x256xf32>
    %48 = arith.addf %44, %47 : vector<256x256xf32>
    %cst_37 = arith.constant 0.000000e+00 : f32
    %49 = vector.broadcast %cst_37 : f32 to vector<256x256xf32>
    %50 = arith.maximumf %48, %49 : vector<256x256xf32>
    %51 = arith.truncf %50 : vector<256x256xf32> to vector<256x256xbf16>
    %c4_38 = arith.constant 4 : index
    %c0_39 = arith.constant 0 : index
    %c0_40 = arith.constant 0 : index
    %52 = vector.load %arg4[%c4_38, %c0_39, %c0_40] : memref<8x256x256xbf16, #tpu.memory_space<vmem>>, vector<1x256x256xbf16>
    %53 = vector.shape_cast %52 : vector<1x256x256xbf16> to vector<256x256xbf16>
    %cst_41 = arith.constant dense<0.000000e+00> : vector<256x256xf32>
    %54 = tpu.matmul %51, %53, %cst_41 {dimension_numbers = #tpu.dot_dimension_numbers<[1], [0], [0], [1], [0, 0, 1, 1], [], []>} : vector<256x256xbf16>, vector<256x256xbf16>, vector<256x256xf32> -> vector<256x256xf32>
    %c1_42 = arith.constant 1 : index
    %c0_43 = arith.constant 0 : index
    %c0_44 = arith.constant 0 : index
    %55 = vector.load %arg3[%c1_42, %c0_43, %c0_44] : memref<2x64x256xbf16, #tpu.memory_space<vmem>>, vector<1x64x256xbf16>
    %56 = vector.shape_cast %55 : vector<1x64x256xbf16> to vector<64x256xbf16>
    %cst_45 = arith.constant dense<0.000000e+00> : vector<256x256xf32>
    %57 = tpu.matmul %0, %56, %cst_45 {dimension_numbers = #tpu.dot_dimension_numbers<[1], [0], [0], [1], [0, 0, 1, 1], [], []>} : vector<256x64xbf16>, vector<64x256xbf16>, vector<256x256xf32> -> vector<256x256xf32>
    %58 = arith.addf %54, %57 : vector<256x256xf32>
    %c5 = arith.constant 5 : index
    %c0_46 = arith.constant 0 : index
    %c0_47 = arith.constant 0 : index
    %59 = vector.load %arg5[%c5, %c0_46, %c0_47] : memref<9x1x256xf32, #tpu.memory_space<vmem>>, vector<1x1x256xf32>
    %60 = vector.shape_cast %59 : vector<1x1x256xf32> to vector<1x256xf32>
    %61 = vector.broadcast %60 : vector<1x256xf32> to vector<256x256xf32>
    %62 = arith.addf %58, %61 : vector<256x256xf32>
    %cst_48 = arith.constant 0.000000e+00 : f32
    %63 = vector.broadcast %cst_48 : f32 to vector<256x256xf32>
    %64 = arith.maximumf %62, %63 : vector<256x256xf32>
    %65 = arith.truncf %64 : vector<256x256xf32> to vector<256x256xbf16>
    %c5_49 = arith.constant 5 : index
    %c0_50 = arith.constant 0 : index
    %c0_51 = arith.constant 0 : index
    %66 = vector.load %arg4[%c5_49, %c0_50, %c0_51] : memref<8x256x256xbf16, #tpu.memory_space<vmem>>, vector<1x256x256xbf16>
    %67 = vector.shape_cast %66 : vector<1x256x256xbf16> to vector<256x256xbf16>
    %cst_52 = arith.constant dense<0.000000e+00> : vector<256x256xf32>
    %68 = tpu.matmul %65, %67, %cst_52 {dimension_numbers = #tpu.dot_dimension_numbers<[1], [0], [0], [1], [0, 0, 1, 1], [], []>} : vector<256x256xbf16>, vector<256x256xbf16>, vector<256x256xf32> -> vector<256x256xf32>
    %c6 = arith.constant 6 : index
    %c0_53 = arith.constant 0 : index
    %c0_54 = arith.constant 0 : index
    %69 = vector.load %arg5[%c6, %c0_53, %c0_54] : memref<9x1x256xf32, #tpu.memory_space<vmem>>, vector<1x1x256xf32>
    %70 = vector.shape_cast %69 : vector<1x1x256xf32> to vector<1x256xf32>
    %71 = vector.broadcast %70 : vector<1x256xf32> to vector<256x256xf32>
    %72 = arith.addf %68, %71 : vector<256x256xf32>
    %cst_55 = arith.constant 0.000000e+00 : f32
    %73 = vector.broadcast %cst_55 : f32 to vector<256x256xf32>
    %74 = arith.maximumf %72, %73 : vector<256x256xf32>
    %75 = arith.truncf %74 : vector<256x256xf32> to vector<256x256xbf16>
    %c6_56 = arith.constant 6 : index
    %c0_57 = arith.constant 0 : index
    %c0_58 = arith.constant 0 : index
    %76 = vector.load %arg4[%c6_56, %c0_57, %c0_58] : memref<8x256x256xbf16, #tpu.memory_space<vmem>>, vector<1x256x256xbf16>
    %77 = vector.shape_cast %76 : vector<1x256x256xbf16> to vector<256x256xbf16>
    %cst_59 = arith.constant dense<0.000000e+00> : vector<256x256xf32>
    %78 = tpu.matmul %75, %77, %cst_59 {dimension_numbers = #tpu.dot_dimension_numbers<[1], [0], [0], [1], [0, 0, 1, 1], [], []>} : vector<256x256xbf16>, vector<256x256xbf16>, vector<256x256xf32> -> vector<256x256xf32>
    %c7 = arith.constant 7 : index
    %c0_60 = arith.constant 0 : index
    %c0_61 = arith.constant 0 : index
    %79 = vector.load %arg5[%c7, %c0_60, %c0_61] : memref<9x1x256xf32, #tpu.memory_space<vmem>>, vector<1x1x256xf32>
    %80 = vector.shape_cast %79 : vector<1x1x256xf32> to vector<1x256xf32>
    %81 = vector.broadcast %80 : vector<1x256xf32> to vector<256x256xf32>
    %82 = arith.addf %78, %81 : vector<256x256xf32>
    %cst_62 = arith.constant 0.000000e+00 : f32
    %83 = vector.broadcast %cst_62 : f32 to vector<256x256xf32>
    %84 = arith.maximumf %82, %83 : vector<256x256xf32>
    %85 = arith.truncf %84 : vector<256x256xf32> to vector<256x256xbf16>
    %c0_63 = arith.constant 0 : index
    %c0_64 = arith.constant 0 : index
    %86 = vector.load %arg6[%c0_63, %c0_64] : memref<256x128xbf16, #tpu.memory_space<vmem>>, vector<256x128xbf16>
    %cst_65 = arith.constant dense<0.000000e+00> : vector<256x128xf32>
    %87 = tpu.matmul %85, %86, %cst_65 {dimension_numbers = #tpu.dot_dimension_numbers<[1], [0], [0], [1], [0, 0, 1, 1], [], []>} : vector<256x256xbf16>, vector<256x128xbf16>, vector<256x128xf32> -> vector<256x128xf32>
    %c0_66 = arith.constant 0 : index
    %c0_67 = arith.constant 0 : index
    %c0_68 = arith.constant 0 : index
    %88 = vector.load %arg10[%c0_66, %c0_67, %c0_68] : memref<3x1x128xf32, #tpu.memory_space<vmem>>, vector<1x1x128xf32>
    %89 = vector.shape_cast %88 : vector<1x1x128xf32> to vector<1x128xf32>
    %90 = vector.broadcast %89 : vector<1x128xf32> to vector<256x128xf32>
    %91 = arith.addf %87, %90 : vector<256x128xf32>
    %cst_69 = arith.constant 0.000000e+00 : f32
    %92 = vector.broadcast %cst_69 : f32 to vector<256x128xf32>
    %93 = arith.maximumf %91, %92 : vector<256x128xf32>
    %c7_70 = arith.constant 7 : index
    %c0_71 = arith.constant 0 : index
    %c0_72 = arith.constant 0 : index
    %94 = vector.load %arg4[%c7_70, %c0_71, %c0_72] : memref<8x256x256xbf16, #tpu.memory_space<vmem>>, vector<1x256x256xbf16>
    %95 = vector.shape_cast %94 : vector<1x256x256xbf16> to vector<256x256xbf16>
    %cst_73 = arith.constant dense<0.000000e+00> : vector<256x256xf32>
    %96 = tpu.matmul %85, %95, %cst_73 {dimension_numbers = #tpu.dot_dimension_numbers<[1], [0], [0], [1], [0, 0, 1, 1], [], []>} : vector<256x256xbf16>, vector<256x256xbf16>, vector<256x256xf32> -> vector<256x256xf32>
    %c8 = arith.constant 8 : index
    %c0_74 = arith.constant 0 : index
    %c0_75 = arith.constant 0 : index
    %97 = vector.load %arg5[%c8, %c0_74, %c0_75] : memref<9x1x256xf32, #tpu.memory_space<vmem>>, vector<1x1x256xf32>
    %98 = vector.shape_cast %97 : vector<1x1x256xf32> to vector<1x256xf32>
    %99 = vector.broadcast %98 : vector<1x256xf32> to vector<256x256xf32>
    %100 = arith.addf %96, %99 : vector<256x256xf32>
    %cst_76 = arith.constant 0.000000e+00 : f32
    %101 = vector.broadcast %cst_76 : f32 to vector<256x256xf32>
    %102 = arith.maximumf %100, %101 : vector<256x256xf32>
    %103 = arith.truncf %102 : vector<256x256xf32> to vector<256x256xbf16>
    %c1_77 = arith.constant 1 : index
    %c0_78 = arith.constant 0 : index
    %c0_79 = arith.constant 0 : index
    %104 = vector.load %arg10[%c1_77, %c0_78, %c0_79] : memref<3x1x128xf32, #tpu.memory_space<vmem>>, vector<1x1x128xf32>
    %105 = vector.shape_cast %104 : vector<1x1x128xf32> to vector<1x128xf32>
    %c0_80 = arith.constant 0 : index
    %c0_81 = arith.constant 0 : index
    %106 = vector.load %arg7[%c0_80, %c0_81] : memref<256x128xbf16, #tpu.memory_space<vmem>>, vector<256x128xbf16>
    %cst_82 = arith.constant dense<0.000000e+00> : vector<256x128xf32>
    %107 = tpu.matmul %103, %106, %cst_82 {dimension_numbers = #tpu.dot_dimension_numbers<[1], [0], [0], [1], [0, 0, 1, 1], [], []>} : vector<256x256xbf16>, vector<256x128xbf16>, vector<256x128xf32> -> vector<256x128xf32>
    %c0_83 = arith.constant 0 : index
    %c0_84 = arith.constant 0 : index
    %108 = vector.load %arg8[%c0_83, %c0_84] : memref<32x128xbf16, #tpu.memory_space<vmem>>, vector<32x128xbf16>
    %cst_85 = arith.constant dense<0.000000e+00> : vector<256x128xf32>
    %109 = tpu.matmul %1, %108, %cst_85 {dimension_numbers = #tpu.dot_dimension_numbers<[1], [0], [0], [1], [0, 0, 1, 1], [], []>} : vector<256x32xbf16>, vector<32x128xbf16>, vector<256x128xf32> -> vector<256x128xf32>
    %110 = arith.addf %107, %109 : vector<256x128xf32>
    %111 = vector.broadcast %105 : vector<1x128xf32> to vector<256x128xf32>
    %112 = arith.addf %110, %111 : vector<256x128xf32>
    %cst_86 = arith.constant 0.000000e+00 : f32
    %113 = vector.broadcast %cst_86 : f32 to vector<256x128xf32>
    %114 = arith.maximumf %112, %113 : vector<256x128xf32>
    %115 = arith.truncf %114 : vector<256x128xf32> to vector<256x128xbf16>
    %c0_87 = arith.constant 0 : index
    %c0_88 = arith.constant 0 : index
    %116 = vector.load %arg9[%c0_87, %c0_88] : memref<128x128xbf16, #tpu.memory_space<vmem>>, vector<128x128xbf16>
    %cst_89 = arith.constant dense<0.000000e+00> : vector<256x128xf32>
    %117 = tpu.matmul %115, %116, %cst_89 {dimension_numbers = #tpu.dot_dimension_numbers<[1], [0], [0], [1], [0, 0, 1, 1], [], []>} : vector<256x128xbf16>, vector<128x128xbf16>, vector<256x128xf32> -> vector<256x128xf32>
    %c2_90 = arith.constant 2 : index
    %c0_91 = arith.constant 0 : index
    %c0_92 = arith.constant 0 : index
    %118 = vector.load %arg10[%c2_90, %c0_91, %c0_92] : memref<3x1x128xf32, #tpu.memory_space<vmem>>, vector<1x1x128xf32>
    %119 = vector.shape_cast %118 : vector<1x1x128xf32> to vector<1x128xf32>
    %120 = vector.broadcast %119 : vector<1x128xf32> to vector<256x128xf32>
    %121 = arith.addf %117, %120 : vector<256x128xf32>
    %122 = arith.negf %121 : vector<256x128xf32>
    %123 = math.exp %122 : vector<256x128xf32>
    %cst_93 = arith.constant 1.000000e+00 : f32
    %124 = vector.broadcast %cst_93 : f32 to vector<256x128xf32>
    %125 = arith.addf %124, %123 : vector<256x128xf32>
    %126 = arith.divf %124, %125 : vector<256x128xf32>
    %127 = tpu.iota {dimensions = array<i32: 1>} : vector<256x128xi32>
    %c3_i32 = arith.constant 3 : i32
    %128 = vector.broadcast %c3_i32 : i32 to vector<256x128xi32>
    %129 = arith.cmpi slt, %127, %128 : vector<256x128xi32>
    %130 = arith.select %129, %126, %93 : vector<256x128xi1>, vector<256x128xf32>
    %c0_94 = arith.constant 0 : index
    %c0_95 = arith.constant 0 : index
    %131 = vector.load %arg11[%c0_94, %c0_95] : memref<256x128xf32, #tpu.memory_space<vmem>>, vector<256x128xf32>
    tpu.vector_store %arg11[%c0_94, %c0_95], %130 {strides = array<i32>} : memref<256x128xf32, #tpu.memory_space<vmem>>, vector<256x128xf32>,
    return
  }
  func.func @transform_0(%arg0: i32) -> (i32, i32) {
    %c0_i32 = arith.constant 0 : i32
    %c0_i32_0 = arith.constant 0 : i32
    return %arg0, %c0_i32 : i32, i32
  }
  func.func @transform_1(%arg0: i32) -> (i32, i32) {
    %c0_i32 = arith.constant 0 : i32
    %c0_i32_0 = arith.constant 0 : i32
    return %arg0, %c0_i32 : i32, i32
  }
  func.func @transform_2(%arg0: i32) -> (i32, i32, i32) {
    %c0_i32 = arith.constant 0 : i32
    %c0_i32_0 = arith.constant 0 : i32
    %c0_i32_1 = arith.constant 0 : i32
    %c0_i32_2 = arith.constant 0 : i32
    return %c0_i32, %c0_i32_0, %c0_i32_1 : i32, i32, i32
  }
  func.func @transform_3(%arg0: i32) -> (i32, i32, i32) {
    %c0_i32 = arith.constant 0 : i32
    %c0_i32_0 = arith.constant 0 : i32
    %c0_i32_1 = arith.constant 0 : i32
    %c0_i32_2 = arith.constant 0 : i32
    return %c0_i32, %c0_i32_0, %c0_i32_1 : i32, i32, i32
  }
  func.func @transform_4(%arg0: i32) -> (i32, i32, i32) {
    %c0_i32 = arith.constant 0 : i32
    %c0_i32_0 = arith.constant 0 : i32
    %c0_i32_1 = arith.constant 0 : i32
    %c0_i32_2 = arith.constant 0 : i32
    return %c0_i32, %c0_i32_0, %c0_i32_1 : i32, i32, i32
  }
  func.func @transform_5(%arg0: i32) -> (i32, i32) {
    %c0_i32 = arith.constant 0 : i32
    %c0_i32_0 = arith.constant 0 : i32
    %c0_i32_1 = arith.constant 0 : i32
    return %c0_i32, %c0_i32_0 : i32, i32
  }
  func.func @transform_6(%arg0: i32) -> (i32, i32) {
    %c0_i32 = arith.constant 0 : i32
    %c0_i32_0 = arith.constant 0 : i32
    %c0_i32_1 = arith.constant 0 : i32
    return %c0_i32, %c0_i32_0 : i32, i32
  }
  func.func @transform_7(%arg0: i32) -> (i32, i32) {
    %c0_i32 = arith.constant 0 : i32
    %c0_i32_0 = arith.constant 0 : i32
    %c0_i32_1 = arith.constant 0 : i32
    return %c0_i32, %c0_i32_0 : i32, i32
  }
  func.func @transform_8(%arg0: i32) -> (i32, i32) {
    %c0_i32 = arith.constant 0 : i32
    %c0_i32_0 = arith.constant 0 : i32
    %c0_i32_1 = arith.constant 0 : i32
    return %c0_i32, %c0_i32_0 : i32, i32
  }
  func.func @transform_9(%arg0: i32) -> (i32, i32, i32) {
    %c0_i32 = arith.constant 0 : i32
    %c0_i32_0 = arith.constant 0 : i32
    %c0_i32_1 = arith.constant 0 : i32
    %c0_i32_2 = arith.constant 0 : i32
    return %c0_i32, %c0_i32_0, %c0_i32_1 : i32, i32, i32
  }
  func.func @transform_10(%arg0: i32) -> (i32, i32) {
    %c0_i32 = arith.constant 0 : i32
    %c0_i32_0 = arith.constant 0 : i32
    return %arg0, %c0_i32 : i32, i32
  }
}

</mosaic_0001>

<llo_original>
// kernel: tpu_custom_call.1
$region0: #{tpu_custom_call.1}
  #allocation0 [shape = 'u32[]', space=smem, size = 0x4, offset = 0x4, fixed_abs, tag = 'smem constant byte address 0x4 - core index']
  #allocation1 [shape = 'u32[144,128]{1,0:T(1,128)}', space=vmem, size = 0x12000, scoped, tag = 'internal scratch']
  %s0 = inlined_call_operand.vmem [shape: bf16[512,64], index: 0, kind: input, shape index: {}]
  %s1 = inlined_call_operand.vmem [shape: bf16[512,32], index: 1, kind: input, shape index: {}]
  %s2 = inlined_call_operand.vmem [shape: bf16[2,64,256], index: 2, kind: input, shape index: {}]
  %s3 = inlined_call_operand.hbm [shape: bf16[8,256,256], index: 3, kind: input, shape index: {}]
  %s4 = inlined_call_operand.vmem [shape: f32[9,1,256], index: 4, kind: input, shape index: {}]
  %s5 = inlined_call_operand.vmem [shape: bf16[256,128], index: 5, kind: input, shape index: {}]
  %s6 = inlined_call_operand.vmem [shape: bf16[256,128], index: 6, kind: input, shape index: {}]
  %s7 = inlined_call_operand.vmem [shape: bf16[32,128], index: 7, kind: input, shape index: {}]
  %s8 = inlined_call_operand.vmem [shape: bf16[128,128], index: 8, kind: input, shape index: {}]
  %s9 = inlined_call_operand.vmem [shape: f32[3,1,128], index: 9, kind: input, shape index: {}]
  %s10 = inlined_call_operand.hbm [shape: f32[512,128], index: 10, kind: output, shape index: {}]
  %s11 = sld [smem:[#allocation0]]
  $region77: #{tpu_custom_call.1} parent=0
    _
  %s13 = ssub.s32 1, %s11
  %s14 = scalar_select 0, %s13, %s11
  $region1: #{tpu_custom_call.1} parent=0
    #allocation2 [shape = 'u8[1048576]{0}', space=vmem, size = 0x100000, scoped, tag = 'input window, operand 3, single buffered']
    #allocation3 [shape = 's32[2]{0}', space=sflag, size = 0x8, scoped, tag = 'scoped memory for tpu_custom_call.1']
    #allocation4 [shape = 's32[2]{0}', space=sflag, size = 0x8, scoped, tag = 'scoped memory for tpu_custom_call.1']
    #allocation5 [shape = 'u8[262144]{0}', space=vmem, size = 0x40000, scoped, tag = 'output window, operand 0']
    %15 = vsyncpa [#allocation3], 0
    %16 = vsyncpa [#allocation4], 0
    %s17 = scalar_lea.sflag [#allocation4], 1
    %18 = vsyncpa %s17, 0
    loop: start=0, step=1, limit=4
    $region2: #{tpu_custom_call.1} parent=1 // loop_pre_header
      _
    $region3: #{tpu_custom_call.1} parent=1 // loop_header
      %s20 = sphi 0, %s24
      %p21 = scmp.ge.s32.totalorder %s20, 4
      %s30 = sphi 0, %s32
      %s33 = sphi 0, %s30
      %s34 = sphi 0, %s33
      %s50 = sphi 0, %s34
      %s56 = sphi 0, %s58
      %s59 = sphi 0, %s56
      %s60 = sphi 0, %s59
      %s76 = sphi 0, %s60
      %s80 = sphi 0, %s80
      %s82 = sphi 0, %s80
      %s83 = sphi 0, %s82
      %s97 = sphi 0, %s83
      %s101 = sphi 0, %s101
      %s103 = sphi 0, %s101
      %s104 = sphi 0, %s103
      %s118 = sphi 0, %s104
      %s122 = sphi 0, %s122
      %s124 = sphi 0, %s122
      %s125 = sphi 0, %s124
      %s139 = sphi 0, %s125
      %s143 = sphi 0, %s143
      %s145 = sphi 0, %s143
      %s146 = sphi 0, %s145
      %s160 = sphi 0, %s146
      %s164 = sphi 0, %s164
      %s166 = sphi 0, %s164
      %s167 = sphi 0, %s166
      %s181 = sphi 0, %s167
      %s185 = sphi 0, %s185
      %s187 = sphi 0, %s185
      %s188 = sphi 0, %s187
      %s202 = sphi 0, %s188
      %s206 = sphi 0, %s206
      %s208 = sphi 0, %s206
      %s209 = sphi 0, %s208
      %s223 = sphi 0, %s209
      %s227 = sphi 0, %s227
      %s229 = sphi 0, %s227
      %s230 = sphi 0, %s229
      %s244 = sphi 0, %s230
      %s250 = sphi 0, %s252
      %s253 = sphi 0, %s250
      %s254 = sphi 0, %s253
      %s270 = sphi 0, %s254
    $region4: #{tpu_custom_call.1} parent=1 // loop_header_branch
      %23 = sbr.rel (%p21) target = $region8
    $region5: #{tpu_custom_call.1} parent=1 // loop_body
      %s25 = ssub.s32 %s20, 1
      %s26 = ssub.s32 %s20, 2
      %s27 = sadd.s32 %s20, 1
      %s28 = ssub.s32 %s20, %s27
      %p29 = scmp.eq.s32.totalorder %s28, 0
      %s31 = sadd.s32 %s30, 1
      %s32 = scalar_select %p29, %s30, %s31
      %p35 = pneg %p29
      %p36 = scmp.eq.s32.totalorder %s20, 1
      %p37 = por %p35, %p36
      %p38 = scmp.ne.s32.totalorder %s30, %s33
      %p39 = scmp.eq.s32.totalorder %s20, 0
      %p40 = por %p38, %p39
      %p41 = scmp.ne.s32.totalorder %s30, %s33
      %p42 = scmp.eq.s32.totalorder %s25, 1
      %p43 = por %p41, %p42
      %p44 = scmp.ne.s32.totalorder %s33, %s34
      %p45 = scmp.eq.s32.totalorder %s25, 0
      %p46 = por %p44, %p45
      %p47 = scmp.ne.s32.totalorder %s33, %s34
      %p48 = scmp.eq.s32.totalorder %s26, 1
      %p49 = por %p47, %p48
      %p51 = scmp.ne.s32.totalorder %s34, %s50
      %p52 = scmp.eq.s32.totalorder %s26, 0
      %p53 = por %p51, %p52
      %s54 = ssub.s32 %s20, %s27
      %p55 = scmp.eq.s32.totalorder %s54, 0
      %s57 = sadd.s32 %s56, 1
      %s58 = scalar_select %p55, %s56, %s57
      %p61 = pneg %p55
      %p62 = scmp.eq.s32.totalorder %s20, 1
      %p63 = por %p61, %p62
      %p64 = scmp.ne.s32.totalorder %s56, %s59
      %p65 = scmp.eq.s32.totalorder %s20, 0
      %p66 = por %p64, %p65
      %p67 = scmp.ne.s32.totalorder %s56, %s59
      %p68 = scmp.eq.s32.totalorder %s25, 1
      %p69 = por %p67, %p68
      %p70 = scmp.ne.s32.totalorder %s59, %s60
      %p71 = scmp.eq.s32.totalorder %s25, 0
      %p72 = por %p70, %p71
      %p73 = scmp.ne.s32.totalorder %s59, %s60
      %p74 = scmp.eq.s32.totalorder %s26, 1
      %p75 = por %p73, %p74
      %p77 = scmp.ne.s32.totalorder %s60, %s76
      %p78 = scmp.eq.s32.totalorder %s26, 0
      %p79 = por %p77, %p78
      %s81 = sadd.s32 %s80, 1
      %p84 = scmp.eq.s32.totalorder %s20, 1
      %p85 = scmp.ne.s32.totalorder %s80, %s82
      %p86 = scmp.eq.s32.totalorder %s20, 0
      %p87 = por %p85, %p86
      %p88 = scmp.ne.s32.totalorder %s80, %s82
      %p89 = scmp.eq.s32.totalorder %s25, 1
      %p90 = por %p88, %p89
      %p91 = scmp.ne.s32.totalorder %s82, %s83
      %p92 = scmp.eq.s32.totalorder %s25, 0
      %p93 = por %p91, %p92
      %p94 = scmp.ne.s32.totalorder %s82, %s83
      %p95 = scmp.eq.s32.totalorder %s26, 1
      %p96 = por %p94, %p95
      %p98 = scmp.ne.s32.totalorder %s83, %s97
      %p99 = scmp.eq.s32.totalorder %s26, 0
      %p100 = por %p98, %p99
      %s102 = sadd.s32 %s101, 1
      %p105 = scmp.eq.s32.totalorder %s20, 1
      %p106 = scmp.ne.s32.totalorder %s101, %s103
      %p107 = scmp.eq.s32.totalorder %s20, 0
      %p108 = por %p106, %p107
      %p109 = scmp.ne.s32.totalorder %s101, %s103
      %p110 = scmp.eq.s32.totalorder %s25, 1
      %p111 = por %p109, %p110
      %p112 = scmp.ne.s32.totalorder %s103, %s104
      %p113 = scmp.eq.s32.totalorder %s25, 0
      %p114 = por %p112, %p113
      %p115 = scmp.ne.s32.totalorder %s103, %s104
      %p116 = scmp.eq.s32.totalorder %s26, 1
      %p117 = por %p115, %p116
      %p119 = scmp.ne.s32.totalorder %s104, %s118
      %p120 = scmp.eq.s32.totalorder %s26, 0
      %p121 = por %p119, %p120
      %s123 = sadd.s32 %s122, 1
      %p126 = scmp.eq.s32.totalorder %s20, 1
      %p127 = scmp.ne.s32.totalorder %s122, %s124
      %p128 = scmp.eq.s32.totalorder %s20, 0
      %p129 = por %p127, %p128
      %p130 = scmp.ne.s32.totalorder %s122, %s124
      %p131 = scmp.eq.s32.totalorder %s25, 1
      %p132 = por %p130, %p131
      %p133 = scmp.ne.s32.totalorder %s124, %s125
      %p134 = scmp.eq.s32.totalorder %s25, 0
      %p135 = por %p133, %p134
      %p136 = scmp.ne.s32.totalorder %s124, %s125
      %p137 = scmp.eq.s32.totalorder %s26, 1
      %p138 = por %p136, %p137
      %p140 = scmp.ne.s32.totalorder %s125, %s139
      %p141 = scmp.eq.s32.totalorder %s26, 0
      %p142 = por %p140, %p141
      %s144 = sadd.s32 %s143, 1
      %p147 = scmp.eq.s32.totalorder %s20, 1
      %p148 = scmp.ne.s32.totalorder %s143, %s145
      %p149 = scmp.eq.s32.totalorder %s20, 0
      %p150 = por %p148, %p149
      %p151 = scmp.ne.s32.totalorder %s143, %s145
      %p152 = scmp.eq.s32.totalorder %s25, 1
      %p153 = por %p151, %p152
      %p154 = scmp.ne.s32.totalorder %s145, %s146
      %p155 = scmp.eq.s32.totalorder %s25, 0
      %p156 = por %p154, %p155
      %p157 = scmp.ne.s32.totalorder %s145, %s146
      %p158 = scmp.eq.s32.totalorder %s26, 1
      %p159 = por %p157, %p158
      %p161 = scmp.ne.s32.totalorder %s146, %s160
      %p162 = scmp.eq.s32.totalorder %s26, 0
      %p163 = por %p161, %p162
      %s165 = sadd.s32 %s164, 1
      %p168 = scmp.eq.s32.totalorder %s20, 1
      %p169 = scmp.ne.s32.totalorder %s164, %s166
      %p170 = scmp.eq.s32.totalorder %s20, 0
      %p171 = por %p169, %p170
      %p172 = scmp.ne.s32.totalorder %s164, %s166
      %p173 = scmp.eq.s32.totalorder %s25, 1
      %p174 = por %p172, %p173
      %p175 = scmp.ne.s32.totalorder %s166, %s167
      %p176 = scmp.eq.s32.totalorder %s25, 0
      %p177 = por %p175, %p176
      %p178 = scmp.ne.s32.totalorder %s166, %s167
      %p179 = scmp.eq.s32.totalorder %s26, 1
      %p180 = por %p178, %p179
      %p182 = scmp.ne.s32.totalorder %s167, %s181
      %p183 = scmp.eq.s32.totalorder %s26, 0
      %p184 = por %p182, %p183
      %s186 = sadd.s32 %s185, 1
      %p189 = scmp.eq.s32.totalorder %s20, 1
      %p190 = scmp.ne.s32.totalorder %s185, %s187
      %p191 = scmp.eq.s32.totalorder %s20, 0
      %p192 = por %p190, %p191
      %p193 = scmp.ne.s32.totalorder %s185, %s187
      %p194 = scmp.eq.s32.totalorder %s25, 1
      %p195 = por %p193, %p194
      %p196 = scmp.ne.s32.totalorder %s187, %s188
      %p197 = scmp.eq.s32.totalorder %s25, 0
      %p198 = por %p196, %p197
      %p199 = scmp.ne.s32.totalorder %s187, %s188
      %p200 = scmp.eq.s32.totalorder %s26, 1
      %p201 = por %p199, %p200
      %p203 = scmp.ne.s32.totalorder %s188, %s202
      %p204 = scmp.eq.s32.totalorder %s26, 0
      %p205 = por %p203, %p204
      %s207 = sadd.s32 %s206, 1
      %p210 = scmp.eq.s32.totalorder %s20, 1
      %p211 = scmp.ne.s32.totalorder %s206, %s208
      %p212 = scmp.eq.s32.totalorder %s20, 0
      %p213 = por %p211, %p212
      %p214 = scmp.ne.s32.totalorder %s206, %s208
      %p215 = scmp.eq.s32.totalorder %s25, 1
      %p216 = por %p214, %p215
      %p217 = scmp.ne.s32.totalorder %s208, %s209
      %p218 = scmp.eq.s32.totalorder %s25, 0
      %p219 = por %p217, %p218
      %p220 = scmp.ne.s32.totalorder %s208, %s209
      %p221 = scmp.eq.s32.totalorder %s26, 1
      %p222 = por %p220, %p221
      %p224 = scmp.ne.s32.totalorder %s209, %s223
      %p225 = scmp.eq.s32.totalorder %s26, 0
      %p226 = por %p224, %p225
      %s228 = sadd.s32 %s227, 1
      %p231 = scmp.eq.s32.totalorder %s20, 1
      %p232 = scmp.ne.s32.totalorder %s227, %s229
      %p233 = scmp.eq.s32.totalorder %s20, 0
      %p234 = por %p232, %p233
      %p235 = scmp.ne.s32.totalorder %s227, %s229
      %p236 = scmp.eq.s32.totalorder %s25, 1
      %p237 = por %p235, %p236
      %p238 = scmp.ne.s32.totalorder %s229, %s230
      %p239 = scmp.eq.s32.totalorder %s25, 0
      %p240 = por %p238, %p239
      %p241 = scmp.ne.s32.totalorder %s229, %s230
      %p242 = scmp.eq.s32.totalorder %s26, 1
      %p243 = por %p241, %p242
      %p245 = scmp.ne.s32.totalorder %s230, %s244
      %p246 = scmp.eq.s32.totalorder %s26, 0
      %p247 = por %p245, %p246
      %s248 = ssub.s32 %s20, %s27
      %p249 = scmp.eq.s32.totalorder %s248, 0
      %s251 = sadd.s32 %s250, 1
      %s252 = scalar_select %p249, %s250, %s251
      %p255 = pneg %p249
      %p256 = scmp.eq.s32.totalorder %s20, 1
      %p257 = por %p255, %p256
      %p258 = scmp.ne.s32.totalorder %s250, %s253
      %p259 = scmp.eq.s32.totalorder %s20, 0
      %p260 = por %p258, %p259
      %p261 = scmp.ne.s32.totalorder %s250, %s253
      %p262 = scmp.eq.s32.totalorder %s25, 1
      %p263 = por %p261, %p262
      %p264 = scmp.ne.s32.totalorder %s253, %s254
      %p265 = scmp.eq.s32.totalorder %s25, 0
      %p266 = por %p264, %p265
      %p267 = scmp.ne.s32.totalorder %s253, %s254
      %p268 = scmp.eq.s32.totalorder %s26, 1
      %p269 = por %p267, %p268
      %p271 = scmp.ne.s32.totalorder %s254, %s270
      %p272 = scmp.eq.s32.totalorder %s26, 0
      %p273 = por %p271, %p272
      %p274 = scmp.le.s32.totalorder 1, %s20
      %p275 = scmp.lt.s32.totalorder %s20, 3
      %p276 = pnand %p274, %p275
      %p277 = pneg %p276
      // Predicated region
      $region9: #{tpu_custom_call.1} parent=5 // pred_check
        _
      $region10: #{tpu_custom_call.1} parent=5 // pred_check_branch
        %279 = sbr.rel (%p276) target = $region12
      $region11: #{tpu_custom_call.1} parent=5 // pred_region
        %s280 = ssub.s32 %s20, 1
        // Predicated region
        $region13: #{tpu_custom_call.1} parent=11 // pred_check
          %p281 = pneg %p93
        $region14: #{tpu_custom_call.1} parent=11 // pred_check_branch
          %283 = sbr.rel (%p281) target = $region16
        $region15: #{tpu_custom_call.1} parent=11 // pred_region
          _
        $region16: #{tpu_custom_call.1} parent=11 // pred_fallthru
          _
        // Predicated region
        $region17: #{tpu_custom_call.1} parent=11 // pred_check
          %p284 = pneg %p114
        $region18: #{tpu_custom_call.1} parent=11 // pred_check_branch
          %286 = sbr.rel (%p284) target = $region20
        $region19: #{tpu_custom_call.1} parent=11 // pred_region
          %s288 = ssub.s32 32768, 32768
          %289 = vsyncadd [#allocation3], %s288
          %s290 = sshll.u32 [#allocation2], 4
          %s291 = int_to_ptr.vmem [resolvable:$true] %s290
          %296 = dma.hbm_to_vmem [thread:$0]  %s3, 32768, %s291, [#allocation3], 128, 128, 8
        $region20: #{tpu_custom_call.1} parent=11 // pred_fallthru
          _
        // Predicated region
        $region21: #{tpu_custom_call.1} parent=11 // pred_check
          %p297 = pneg %p135
        $region22: #{tpu_custom_call.1} parent=11 // pred_check_branch
          %299 = sbr.rel (%p297) target = $region24
        $region23: #{tpu_custom_call.1} parent=11 // pred_region
          _
        $region24: #{tpu_custom_call.1} parent=11 // pred_fallthru
          _
        // Predicated region
        $region25: #{tpu_custom_call.1} parent=11 // pred_check
          %p300 = pneg %p156
        $region26: #{tpu_custom_call.1} parent=11 // pred_check_branch
          %302 = sbr.rel (%p300) target = $region28
        $region27: #{tpu_custom_call.1} parent=11 // pred_region
          _
        $region28: #{tpu_custom_call.1} parent=11 // pred_fallthru
          _
        // Predicated region
        $region29: #{tpu_custom_call.1} parent=11 // pred_check
          %p303 = pneg %p177
        $region30: #{tpu_custom_call.1} parent=11 // pred_check_branch
          %305 = sbr.rel (%p303) target = $region32
        $region31: #{tpu_custom_call.1} parent=11 // pred_region
          _
        $region32: #{tpu_custom_call.1} parent=11 // pred_fallthru
          _
        // Predicated region
        $region33: #{tpu_custom_call.1} parent=11 // pred_check
          %p306 = pneg %p198
        $region34: #{tpu_custom_call.1} parent=11 // pred_check_branch
          %308 = sbr.rel (%p306) target = $region36
        $region35: #{tpu_custom_call.1} parent=11 // pred_region
          _
        $region36: #{tpu_custom_call.1} parent=11 // pred_fallthru
          _
        // Predicated region
        $region37: #{tpu_custom_call.1} parent=11 // pred_check
          %p309 = pneg %p219
        $region38: #{tpu_custom_call.1} parent=11 // pred_check_branch
          %311 = sbr.rel (%p309) target = $region40
        $region39: #{tpu_custom_call.1} parent=11 // pred_region
          _
        $region40: #{tpu_custom_call.1} parent=11 // pred_fallthru
          _
        // Predicated region
        $region41: #{tpu_custom_call.1} parent=11 // pred_check
          %p312 = pneg %p240
        $region42: #{tpu_custom_call.1} parent=11 // pred_check_branch
          %314 = sbr.rel (%p312) target = $region44
        $region43: #{tpu_custom_call.1} parent=11 // pred_region
          _
        $region44: #{tpu_custom_call.1} parent=11 // pred_fallthru
          _
      $region12: #{tpu_custom_call.1} parent=5 // pred_fallthru
        _
      %p315 = scmp.lt.s32.totalorder %s20, 2
      // Predicated region
      $region45: #{tpu_custom_call.1} parent=5 // pred_check
        %p316 = pneg %p315
      $region46: #{tpu_custom_call.1} parent=5 // pred_check_branch
        %318 = sbr.rel (%p316) target = $region48
      $region47: #{tpu_custom_call.1} parent=5 // pred_region
        // Predicated region
        $region49: #{tpu_custom_call.1} parent=47 // pred_check
          %p319 = pneg %p40
        $region50: #{tpu_custom_call.1} parent=47 // pred_check_branch
          %321 = sbr.rel (%p319) target = $region52
        $region51: #{tpu_custom_call.1} parent=47 // pred_region
          %s322 = smul.u32 32, %s20
          %p323 = scmp.lt.s32.totalorder %s322, 63
          %s324 = scalar_select %p323, %s322, 63
          %s325 = smul.addr %s324, 4
          %s326 = scalar_lea.vmem %s0, %s325
          %s327 = smul.u32 32, %s20
        $region52: #{tpu_custom_call.1} parent=47 // pred_fallthru
          _
        // Predicated region
        $region53: #{tpu_custom_call.1} parent=47 // pred_check
          %p328 = pneg %p66
        $region54: #{tpu_custom_call.1} parent=47 // pred_check_branch
          %330 = sbr.rel (%p328) target = $region56
        $region55: #{tpu_custom_call.1} parent=47 // pred_region
          %s331 = smul.u32 32, %s20
          %p332 = scmp.lt.s32.totalorder %s331, 63
          %s333 = scalar_select %p332, %s331, 63
          %s334 = smul.addr %s333, 4
          %s335 = scalar_lea.vmem %s1, %s334
          %s336 = smul.u32 32, %s20
        $region56: #{tpu_custom_call.1} parent=47 // pred_fallthru
          _
      $region48: #{tpu_custom_call.1} parent=5 // pred_fallthru
        _
      %p337 = scmp.le.s32.totalorder 1, %s20
      %p338 = scmp.lt.s32.totalorder %s20, 3
      %p339 = pnand %p337, %p338
      %p340 = pneg %p339
      // Predicated region
      $region57: #{tpu_custom_call.1} parent=5 // pred_check
        _
      $region58: #{tpu_custom_call.1} parent=5 // pred_check_branch
        %342 = sbr.rel (%p339) target = $region60
      $region59: #{tpu_custom_call.1} parent=5 // pred_region
        %s343 = ssub.s32 %s20, 1
        // Predicated region
        $region61: #{tpu_custom_call.1} parent=59 // pred_check
          %p344 = pneg %p114
        $region62: #{tpu_custom_call.1} parent=59 // pred_check_branch
          %346 = sbr.rel (%p344) target = $region64
        $region63: #{tpu_custom_call.1} parent=59 // pred_region
          %347 = dma.done [#allocation3], 32768
        $region64: #{tpu_custom_call.1} parent=59 // pred_fallthru
          _
        %s348 = smul.u32 32, %s25
        %p349 = scmp.lt.s32.totalorder %s348, 63
        %s350 = scalar_select %p349, %s348, 63
        %s351 = smul.addr %s350, 4
        %s352 = scalar_lea.vmem %s0, %s351
        %p353 = pneg %p46
        %p354 = pneg %p43
        %s355 = smul.u32 32, %s25
        %p356 = scmp.lt.s32.totalorder %s355, 63
        %s357 = scalar_select %p356, %s355, 63
        %s358 = smul.addr %s357, 4
        %s359 = scalar_lea.vmem %s1, %s358
        %p360 = pneg %p72
        %p361 = pneg %p69
        %p362 = pneg %p93
        %p363 = pneg %p90
        %p364 = pneg %p114
        %p365 = pneg %p111
        %p366 = pneg %p135
        %p367 = pneg %p132
        %p368 = pneg %p156
        %p369 = pneg %p153
        %p370 = pneg %p177
        %p371 = pneg %p174
        %p372 = pneg %p198
        %p373 = pneg %p195
        %p374 = pneg %p219
        %p375 = pneg %p216
        %p376 = pneg %p240
        %p377 = pneg %p237
        %p378 = pneg %p266
        %p379 = pneg %p263
        %s380 = sand.u32 %s253, 1
        %s381 = scalar_lea.sflag [#allocation4], %s380
        %s382 = sand.u32 %s253, 1
        %s383 = smul.addr %s382, 256
        %s384 = scalar_lea.vmem [#allocation5], %s383
        %s385 = smul.u32 32, %s25
        %p386 = scmp.lt.s32.totalorder %s385, 63
        %s387 = scalar_select %p386, %s385, 63
        %s388 = smul.addr %s387, 4
        %s389 = scalar_lea.vmem %s0, %s388
        %s390 = smul.u32 32, %s25
        %s391 = smul.u32 32, %s25
        %p392 = scmp.lt.s32.totalorder %s391, 63
        %s393 = scalar_select %p392, %s391, 63
        %s394 = smul.addr %s393, 4
        %s395 = scalar_lea.vmem %s1, %s394
        %s396 = smul.u32 32, %s25
        %s397 = smul.u32 32, %s25
        %v399 = vld [vmem:[%s389] sm:$0xf]
        %v400 = vld [vmem:[%s389 + $0x4] sm:$0xf]
        %v401 = vld [vmem:[%s389 + $0x8] sm:$0xf]
        %v402 = vld [vmem:[%s389 + $0xc] sm:$0xf]
        %v403 = vld [vmem:[%s389 + $0x10] sm:$0xf]
        %v404 = vld [vmem:[%s389 + $0x14] sm:$0xf]
        %v405 = vld [vmem:[%s389 + $0x18] sm:$0xf]
        %v406 = vld [vmem:[%s389 + $0x1c] sm:$0xf]
        %v407 = vld [vmem:[%s389 + $0x20] sm:$0xf]
        %v408 = vld [vmem:[%s389 + $0x24] sm:$0xf]
        %v409 = vld [vmem:[%s389 + $0x28] sm:$0xf]
        %v410 = vld [vmem:[%s389 + $0x2c] sm:$0xf]
        %v411 = vld [vmem:[%s389 + $0x30] sm:$0xf]
        %v412 = vld [vmem:[%s389 + $0x34] sm:$0xf]
        %v413 = vld [vmem:[%s389 + $0x38] sm:$0xf]
        %v414 = vld [vmem:[%s389 + $0x3c] sm:$0xf]
        %v415 = vld [vmem:[%s389 + $0x40] sm:$0xf]
        %v416 = vld [vmem:[%s389 + $0x44] sm:$0xf]
        %v417 = vld [vmem:[%s389 + $0x48] sm:$0xf]
        %v418 = vld [vmem:[%s389 + $0x4c] sm:$0xf]
        %v419 = vld [vmem:[%s389 + $0x50] sm:$0xf]
        %v420 = vld [vmem:[%s389 + $0x54] sm:$0xf]
        %v421 = vld [vmem:[%s389 + $0x58] sm:$0xf]
        %v422 = vld [vmem:[%s389 + $0x5c] sm:$0xf]
        %v423 = vld [vmem:[%s389 + $0x60] sm:$0xf]
        %v424 = vld [vmem:[%s389 + $0x64] sm:$0xf]
        %v425 = vld [vmem:[%s389 + $0x68] sm:$0xf]
        %v426 = vld [vmem:[%s389 + $0x6c] sm:$0xf]
        %v427 = vld [vmem:[%s389 + $0x70] sm:$0xf]
        %v428 = vld [vmem:[%s389 + $0x74] sm:$0xf]
        %v429 = vld [vmem:[%s389 + $0x78] sm:$0xf]
        %v430 = vld [vmem:[%s389 + $0x7c] sm:$0xf]
        %v431 = vld [vmem:[%s395] sm:$0xf]
        %v432 = vld [vmem:[%s395 + $0x4] sm:$0xf]
        %v433 = vld [vmem:[%s395 + $0x8] sm:$0xf]
        %v434 = vld [vmem:[%s395 + $0xc] sm:$0xf]
        %v435 = vld [vmem:[%s395 + $0x10] sm:$0xf]
        %v436 = vld [vmem:[%s395 + $0x14] sm:$0xf]
        %v437 = vld [vmem:[%s395 + $0x18] sm:$0xf]
        %v438 = vld [vmem:[%s395 + $0x1c] sm:$0xf]
        %v439 = vld [vmem:[%s395 + $0x20] sm:$0xf]
        %v440 = vld [vmem:[%s395 + $0x24] sm:$0xf]
        %v441 = vld [vmem:[%s395 + $0x28] sm:$0xf]
        %v442 = vld [vmem:[%s395 + $0x2c] sm:$0xf]
        %v443 = vld [vmem:[%s395 + $0x30] sm:$0xf]
        %v444 = vld [vmem:[%s395 + $0x34] sm:$0xf]
        %v445 = vld [vmem:[%s395 + $0x38] sm:$0xf]
        %v446 = vld [vmem:[%s395 + $0x3c] sm:$0xf]
        %v447 = vld [vmem:[%s395 + $0x40] sm:$0xf]
        %v448 = vld [vmem:[%s395 + $0x44] sm:$0xf]
        %v449 = vld [vmem:[%s395 + $0x48] sm:$0xf]
        %v450 = vld [vmem:[%s395 + $0x4c] sm:$0xf]
        %v451 = vld [vmem:[%s395 + $0x50] sm:$0xf]
        %v452 = vld [vmem:[%s395 + $0x54] sm:$0xf]
        %v453 = vld [vmem:[%s395 + $0x58] sm:$0xf]
        %v454 = vld [vmem:[%s395 + $0x5c] sm:$0xf]
        %v455 = vld [vmem:[%s395 + $0x60] sm:$0xf]
        %v456 = vld [vmem:[%s395 + $0x64] sm:$0xf]
        %v457 = vld [vmem:[%s395 + $0x68] sm:$0xf]
        %v458 = vld [vmem:[%s395 + $0x6c] sm:$0xf]
        %v459 = vld [vmem:[%s395 + $0x70] sm:$0xf]
        %v460 = vld [vmem:[%s395 + $0x74] sm:$0xf]
        %v461 = vld [vmem:[%s395 + $0x78] sm:$0xf]
        %v462 = vld [vmem:[%s395 + $0x7c] sm:$0xf]
        %v463 = vld [vmem:[%s2] sm:$0xff]
        %v464 = vld [vmem:[%s2 + $0x8] sm:$0xff]
        %v465 = vld [vmem:[%s2 + $0x10] sm:$0xff]
        %v466 = vld [vmem:[%s2 + $0x18] sm:$0xff]
        %v467 = vld [vmem:[%s2 + $0x20] sm:$0xff]
        %v468 = vld [vmem:[%s2 + $0x28] sm:$0xff]
        %v469 = vld [vmem:[%s2 + $0x30] sm:$0xff]
        %v470 = vld [vmem:[%s2 + $0x38] sm:$0xff]
        %v471 = vld [vmem:[%s4] sm:$0x3]
        %v473 = vlaneseq
        %v474 = vshrl.u32 %v473, 7
        %v475 = vsub.s32 0, %v474
        %v476 = vrot.slane %v471, %v475
        %v477 = vlaneseq
        %v478 = vshrl.u32 %v477, 7
        %v479 = vsub.s32 1, %v478
        %v480 = vrot.slane %v471, %v479
        %v515 = vunpack.c.l.b16 %v399
        %v516 = vunpack.c.l.b16 %v400
        %v517 = vunpack.c.l.b16 %v401
        %v518 = vunpack.c.l.b16 %v402
        %v519 = vunpack.c.l.b16 %v403
        %v520 = vunpack.c.l.b16 %v404
        %v521 = vunpack.c.l.b16 %v405
        %v522 = vunpack.c.l.b16 %v406
        %v523 = vunpack.c.l.b16 %v407
        %v524 = vunpack.c.l.b16 %v408
        %v525 = vunpack.c.l.b16 %v409
        %v526 = vunpack.c.l.b16 %v410
        %v527 = vunpack.c.l.b16 %v411
        %v528 = vunpack.c.l.b16 %v412
        %v529 = vunpack.c.l.b16 %v413
        %v530 = vunpack.c.l.b16 %v414
        %v531 = vunpack.c.l.b16 %v415
        %v532 = vunpack.c.l.b16 %v416
        %v533 = vunpack.c.l.b16 %v417
        %v534 = vunpack.c.l.b16 %v418
        %v535 = vunpack.c.l.b16 %v419
        %v536 = vunpack.c.l.b16 %v420
        %v537 = vunpack.c.l.b16 %v421
        %v538 = vunpack.c.l.b16 %v422
        %v539 = vunpack.c.l.b16 %v423
        %v540 = vunpack.c.l.b16 %v424
        %v541 = vunpack.c.l.b16 %v425
        %v542 = vunpack.c.l.b16 %v426
        %v543 = vunpack.c.l.b16 %v427
        %v544 = vunpack.c.l.b16 %v428
        %v545 = vunpack.c.l.b16 %v429
        %v546 = vunpack.c.l.b16 %v430
        %v547 = vpack.c.b16 %v516, %v515
        %v548 = vpack.c.b16 %v518, %v517
        %v549 = vpack.c.b16 %v520, %v519
        %v550 = vpack.c.b16 %v522, %v521
        %v551 = vpack.c.b16 %v524, %v523
        %v552 = vpack.c.b16 %v526, %v525
        %v553 = vpack.c.b16 %v528, %v527
        %v554 = vpack.c.b16 %v530, %v529
        %v555 = vpack.c.b16 %v532, %v531
        %v556 = vpack.c.b16 %v534, %v533
        %v557 = vpack.c.b16 %v536, %v535
        %v558 = vpack.c.b16 %v538, %v537
        %v559 = vpack.c.b16 %v540, %v539
        %v560 = vpack.c.b16 %v542, %v541
        %v561 = vpack.c.b16 %v544, %v543
        %v562 = vpack.c.b16 %v546, %v545
        %v571 = vunpack.c.l.b16 %v463
        %v572 = vunpack.c.h.b16 %v463
        %v573 = vunpack.c.l.b16 %v464
        %v574 = vunpack.c.h.b16 %v464
        %v575 = vunpack.c.l.b16 %v465
        %v576 = vunpack.c.h.b16 %v465
        %v577 = vunpack.c.l.b16 %v466
        %v578 = vunpack.c.h.b16 %v466
        %v579 = vunpack.c.l.b16 %v467
        %v580 = vunpack.c.h.b16 %v467
        %v581 = vunpack.c.l.b16 %v468
        %v582 = vunpack.c.h.b16 %v468
        %v583 = vunpack.c.l.b16 %v469
        %v584 = vunpack.c.h.b16 %v469
        %v585 = vunpack.c.l.b16 %v470
        %v586 = vunpack.c.h.b16 %v470
        %v587 = vpack.c.b16 %v573, %v571
        %v588 = vpack.c.b16 %v574, %v572
        %v589 = vpack.c.b16 %v577, %v575
        %v590 = vpack.c.b16 %v578, %v576
        %v591 = vpack.c.b16 %v581, %v579
        %v592 = vpack.c.b16 %v582, %v580
        %v593 = vpack.c.b16 %v585, %v583
        %v594 = vpack.c.b16 %v586, %v584
        %vm603 = vcmask 523264
        %v605 = vsel %vm603, %v547, 0
        %v608 = vsel %vm603, %v548, 0
        %v611 = vsel %vm603, %v549, 0
        %v614 = vsel %vm603, %v550, 0
        %v617 = vsel %vm603, %v551, 0
        %v620 = vsel %vm603, %v552, 0
        %v623 = vsel %vm603, %v553, 0
        %v626 = vsel %vm603, %v554, 0
        %v629 = vsel %vm603, %v555, 0
        %v632 = vsel %vm603, %v556, 0
        %v635 = vsel %vm603, %v557, 0
        %v638 = vsel %vm603, %v558, 0
        %v641 = vsel %vm603, %v559, 0
        %v644 = vsel %vm603, %v560, 0
        %v647 = vsel %vm603, %v561, 0
        %v650 = vsel %vm603, %v562, 0
        %652 = vmatprep.subr.bf16.mxu0 %v588
        %653 = vmatpush1.bf16.msra.mxu0 %v587
        %654 = vmatprep.subr.bf16.mxu0 %v590
        %655 = vmatpush1.bf16.msra.mxu0 %v589
        %656 = vmatprep.subr.bf16.mxu0 %v592
        %657 = vmatpush1.bf16.msra.mxu0 %v591
        %658 = vmatprep.subr.bf16.mxu0 %v594
        %659 = vmatpush1.bf16.msra.mxu0 %v593
        %660 = vmatprep.subr.bf16.mxu0 0
        %661 = vmatpush1.bf16.msra.mxu0 0
        %662 = vmatprep.subr.bf16.mxu0 0
        %663 = vmatpush1.bf16.msra.mxu0 0
        %664 = vmatprep.subr.bf16.mxu0 0
        %665 = vmatpush1.bf16.msra.mxu0 0
        %666 = vmatprep.subr.bf16.mxu0 0
        %667 = vmatpush1.bf16.msra.mxu0 0
        %668 = vmatprep.subr.bf16.mxu0 0
        %669 = vmatpush1.bf16.msra.mxu0 0
        %670 = vmatprep.subr.bf16.mxu0 0
        %671 = vmatpush1.bf16.msra.mxu0 0
        %672 = vmatprep.subr.bf16.mxu0 0
        %673 = vmatpush1.bf16.msra.mxu0 0
        %674 = vmatprep.subr.bf16.mxu0 0
        %675 = vmatpush1.bf16.msra.mxu0 0
        %676 = vmatprep.subr.bf16.mxu0 0
        %677 = vmatpush1.bf16.msra.mxu0 0
        %678 = vmatprep.subr.bf16.mxu0 0
        %679 = vmatpush1.bf16.msra.mxu0 0
        %680 = vmatprep.subr.bf16.mxu0 0
        %681 = vmatpush1.bf16.msra.mxu0 0
        %682 = vmatprep.subr.bf16.mxu0 0
        %683 = vmatpush1.bf16.msra.mxu0 0
        %684 = vmatprep.mubr.bf16.mxu0 0
        %685 = vmatmul.mubr.bf16.gmra.mrb[0].mxu0 %v605
        %v686 = vpop.f32.mrb[0].mxu0
        %v687 = vadd.f32 %v476, %v686
        %v688 = vpop.f32.mrb[0].mxu0
        %v689 = vadd.f32 %v480, %v688
        %v690 = vpop.f32.mrb[0].mxu0
        %v691 = vadd.f32 %v476, %v690
        %v692 = vpop.f32.mrb[0].mxu0
        %v693 = vadd.f32 %v480, %v692
        %694 = vmatprep.mubr.bf16.mxu0 0
        %695 = vmatmul.mubr.bf16.gmra.mrb[0].mxu0 %v608
        %v696 = vpop.f32.mrb[0].mxu0
        %v697 = vadd.f32 %v476, %v696
        %v698 = vpop.f32.mrb[0].mxu0
        %v699 = vadd.f32 %v480, %v698
        %v700 = vpop.f32.mrb[0].mxu0
        %v701 = vadd.f32 %v476, %v700
        %v702 = vpop.f32.mrb[0].mxu0
        %v703 = vadd.f32 %v480, %v702
        %704 = vmatprep.mubr.bf16.mxu0 0
        %705 = vmatmul.mubr.bf16.gmra.mrb[0].mxu0 %v611
        %v706 = vpop.f32.mrb[0].mxu0
        %v707 = vadd.f32 %v476, %v706
        %v708 = vpop.f32.mrb[0].mxu0
        %v709 = vadd.f32 %v480, %v708
        %v710 = vpop.f32.mrb[0].mxu0
        %v711 = vadd.f32 %v476, %v710
        %v712 = vpop.f32.mrb[0].mxu0
        %v713 = vadd.f32 %v480, %v712
        %714 = vmatprep.mubr.bf16.mxu0 0
        %715 = vmatmul.mubr.bf16.gmra.mrb[0].mxu0 %v614
        %v716 = vpop.f32.mrb[0].mxu0
        %v717 = vadd.f32 %v476, %v716
        %v718 = vpop.f32.mrb[0].mxu0
        %v719 = vadd.f32 %v480, %v718
        %v720 = vpop.f32.mrb[0].mxu0
        %v721 = vadd.f32 %v476, %v720
        %v722 = vpop.f32.mrb[0].mxu0
        %v723 = vadd.f32 %v480, %v722
        %724 = vmatprep.mubr.bf16.mxu0 0
        %725 = vmatmul.mubr.bf16.gmra.mrb[0].mxu0 %v617
        %v726 = vpop.f32.mrb[0].mxu0
        %v727 = vadd.f32 %v476, %v726
        %v728 = vpop.f32.mrb[0].mxu0
        %v729 = vadd.f32 %v480, %v728
        %v730 = vpop.f32.mrb[0].mxu0
        %v731 = vadd.f32 %v476, %v730
        %v732 = vpop.f32.mrb[0].mxu0
        %v733 = vadd.f32 %v480, %v732
        %734 = vmatprep.mubr.bf16.mxu0 0
        %735 = vmatmul.mubr.bf16.gmra.mrb[0].mxu0 %v620
        %v736 = vpop.f32.mrb[0].mxu0
        %v737 = vadd.f32 %v476, %v736
        %v738 = vpop.f32.mrb[0].mxu0
        %v739 = vadd.f32 %v480, %v738
        %v740 = vpop.f32.mrb[0].mxu0
        %v741 = vadd.f32 %v476, %v740
        %v742 = vpop.f32.mrb[0].mxu0
        %v743 = vadd.f32 %v480, %v742
        %744 = vmatprep.mubr.bf16.mxu0 0
        %745 = vmatmul.mubr.bf16.gmra.mrb[0].mxu0 %v623
        %v746 = vpop.f32.mrb[0].mxu0
        %v747 = vadd.f32 %v476, %v746
        %v748 = vpop.f32.mrb[0].mxu0
        %v749 = vadd.f32 %v480, %v748
        %v750 = vpop.f32.mrb[0].mxu0
        %v751 = vadd.f32 %v476, %v750
        %v752 = vpop.f32.mrb[0].mxu0
        %v753 = vadd.f32 %v480, %v752
        %754 = vmatprep.mubr.bf16.mxu0 0
        %755 = vmatmul.mubr.bf16.gmra.mrb[0].mxu0 %v626
        %v756 = vpop.f32.mrb[0].mxu0
        %v757 = vadd.f32 %v476, %v756
        %v758 = vpop.f32.mrb[0].mxu0
        %v759 = vadd.f32 %v480, %v758
        %v760 = vpop.f32.mrb[0].mxu0
        %v761 = vadd.f32 %v476, %v760
        %v762 = vpop.f32.mrb[0].mxu0
        %v763 = vadd.f32 %v480, %v762
        %764 = vmatprep.mubr.bf16.mxu0 0
        %765 = vmatmul.mubr.bf16.gmra.mrb[0].mxu0 %v629
        %v766 = vpop.f32.mrb[0].mxu0
        %v767 = vadd.f32 %v476, %v766
        %v768 = vpop.f32.mrb[0].mxu0
        %v769 = vadd.f32 %v480, %v768
        %v770 = vpop.f32.mrb[0].mxu0
        %v771 = vadd.f32 %v476, %v770
        %v772 = vpop.f32.mrb[0].mxu0
        %v773 = vadd.f32 %v480, %v772
        %774 = vmatprep.mubr.bf16.mxu0 0
        %775 = vmatmul.mubr.bf16.gmra.mrb[0].mxu0 %v632
        %v776 = vpop.f32.mrb[0].mxu0
        %v777 = vadd.f32 %v476, %v776
        %v778 = vpop.f32.mrb[0].mxu0
        %v779 = vadd.f32 %v480, %v778
        %v780 = vpop.f32.mrb[0].mxu0
        %v781 = vadd.f32 %v476, %v780
        %v782 = vpop.f32.mrb[0].mxu0
        %v783 = vadd.f32 %v480, %v782
        %784 = vmatprep.mubr.bf16.mxu0 0
        %785 = vmatmul.mubr.bf16.gmra.mrb[0].mxu0 %v635
        %v786 = vpop.f32.mrb[0].mxu0
        %v787 = vadd.f32 %v476, %v786
        %v788 = vpop.f32.mrb[0].mxu0
        %v789 = vadd.f32 %v480, %v788
        %v790 = vpop.f32.mrb[0].mxu0
        %v791 = vadd.f32 %v476, %v790
        %v792 = vpop.f32.mrb[0].mxu0
        %v793 = vadd.f32 %v480, %v792
        %794 = vmatprep.mubr.bf16.mxu0 0
        %795 = vmatmul.mubr.bf16.gmra.mrb[0].mxu0 %v638
        %v796 = vpop.f32.mrb[0].mxu0
        %v797 = vadd.f32 %v476, %v796
        %v798 = vpop.f32.mrb[0].mxu0
        %v799 = vadd.f32 %v480, %v798
        %v800 = vpop.f32.mrb[0].mxu0
        %v801 = vadd.f32 %v476, %v800
        %v802 = vpop.f32.mrb[0].mxu0
        %v803 = vadd.f32 %v480, %v802
        %804 = vmatprep.mubr.bf16.mxu0 0
        %805 = vmatmul.mubr.bf16.gmra.mrb[0].mxu0 %v641
        %v806 = vpop.f32.mrb[0].mxu0
        %v807 = vadd.f32 %v476, %v806
        %v808 = vpop.f32.mrb[0].mxu0
        %v809 = vadd.f32 %v480, %v808
        %v810 = vpop.f32.mrb[0].mxu0
        %v811 = vadd.f32 %v476, %v810
        %v812 = vpop.f32.mrb[0].mxu0
        %v813 = vadd.f32 %v480, %v812
        %814 = vmatprep.mubr.bf16.mxu0 0
        %815 = vmatmul.mubr.bf16.gmra.mrb[0].mxu0 %v644
        %v816 = vpop.f32.mrb[0].mxu0
        %v817 = vadd.f32 %v476, %v816
        %v818 = vpop.f32.mrb[0].mxu0
        %v819 = vadd.f32 %v480, %v818
        %v820 = vpop.f32.mrb[0].mxu0
        %v821 = vadd.f32 %v476, %v820
        %v822 = vpop.f32.mrb[0].mxu0
        %v823 = vadd.f32 %v480, %v822
        %824 = vmatprep.mubr.bf16.mxu0 0
        %825 = vmatmul.mubr.bf16.gmra.mrb[0].mxu0 %v647
        %v826 = vpop.f32.mrb[0].mxu0
        %v827 = vadd.f32 %v476, %v826
        %v828 = vpop.f32.mrb[0].mxu0
        %v829 = vadd.f32 %v480, %v828
        %v830 = vpop.f32.mrb[0].mxu0
        %v831 = vadd.f32 %v476, %v830
        %v832 = vpop.f32.mrb[0].mxu0
        %v833 = vadd.f32 %v480, %v832
        %834 = vmatprep.mubr.bf16.mxu0 0
        %835 = vmatmul.mubr.bf16.gmra.mrb[0].mxu0 %v650
        %v836 = vpop.f32.mrb[0].mxu0
        %v837 = vadd.f32 %v476, %v836
        %v838 = vpop.f32.mrb[0].mxu0
        %v839 = vadd.f32 %v480, %v838
        %v840 = vpop.f32.mrb[0].mxu0
        %v841 = vadd.f32 %v476, %v840
        %v842 = vpop.f32.mrb[0].mxu0
        %v843 = vadd.f32 %v480, %v842
        %844 = vdwg.mxu0
        %v845 = vmax.f32 %v687, 0.0
        %v846 = vmax.f32 %v689, 0.0
        %v847 = vmax.f32 %v691, 0.0
        %v848 = vmax.f32 %v693, 0.0
        %v849 = vmax.f32 %v697, 0.0
        %v850 = vmax.f32 %v699, 0.0
        %v851 = vmax.f32 %v701, 0.0
        %v852 = vmax.f32 %v703, 0.0
        %v853 = vmax.f32 %v707, 0.0
        %v854 = vmax.f32 %v709, 0.0
        %v855 = vmax.f32 %v711, 0.0
        %v856 = vmax.f32 %v713, 0.0
        %v857 = vmax.f32 %v717, 0.0
        %v858 = vmax.f32 %v719, 0.0
        %v859 = vmax.f32 %v721, 0.0
        %v860 = vmax.f32 %v723, 0.0
        %v861 = vmax.f32 %v727, 0.0
        %v862 = vmax.f32 %v729, 0.0
        %v863 = vmax.f32 %v731, 0.0
        %v864 = vmax.f32 %v733, 0.0
        %v865 = vmax.f32 %v737, 0.0
        %v866 = vmax.f32 %v739, 0.0
        %v867 = vmax.f32 %v741, 0.0
        %v868 = vmax.f32 %v743, 0.0
        %v869 = vmax.f32 %v747, 0.0
        %v870 = vmax.f32 %v749, 0.0
        %v871 = vmax.f32 %v751, 0.0
        %v872 = vmax.f32 %v753, 0.0
        %v873 = vmax.f32 %v757, 0.0
        %v874 = vmax.f32 %v759, 0.0
        %v875 = vmax.f32 %v761, 0.0
        %v876 = vmax.f32 %v763, 0.0
        %v877 = vmax.f32 %v767, 0.0
        %v878 = vmax.f32 %v769, 0.0
        %v879 = vmax.f32 %v771, 0.0
        %v880 = vmax.f32 %v773, 0.0
        %v881 = vmax.f32 %v777, 0.0
        %v882 = vmax.f32 %v779, 0.0
        %v883 = vmax.f32 %v781, 0.0
        %v884 = vmax.f32 %v783, 0.0
        %v885 = vmax.f32 %v787, 0.0
        %v886 = vmax.f32 %v789, 0.0
        %v887 = vmax.f32 %v791, 0.0
        %v888 = vmax.f32 %v793, 0.0
        %v889 = vmax.f32 %v797, 0.0
        %v890 = vmax.f32 %v799, 0.0
        %v891 = vmax.f32 %v801, 0.0
        %v892 = vmax.f32 %v803, 0.0
        %v893 = vmax.f32 %v807, 0.0
        %v894 = vmax.f32 %v809, 0.0
        %v895 = vmax.f32 %v811, 0.0
        %v896 = vmax.f32 %v813, 0.0
        %v897 = vmax.f32 %v817, 0.0
        %v898 = vmax.f32 %v819, 0.0
        %v899 = vmax.f32 %v821, 0.0
        %v900 = vmax.f32 %v823, 0.0
        %v901 = vmax.f32 %v827, 0.0
        %v902 = vmax.f32 %v829, 0.0
        %v903 = vmax.f32 %v831, 0.0
        %v904 = vmax.f32 %v833, 0.0
        %v905 = vmax.f32 %v837, 0.0
        %v906 = vmax.f32 %v839, 0.0
        %v907 = vmax.f32 %v841, 0.0
        %v908 = vmax.f32 %v843, 0.0
        %v909 = vpack.c.bf16 %v847, %v845
        %v910 = vpack.c.bf16 %v848, %v846
        %v911 = vpack.c.bf16 %v851, %v849
        %v912 = vpack.c.bf16 %v852, %v850
        %v913 = vpack.c.bf16 %v855, %v853
        %v914 = vpack.c.bf16 %v856, %v854
        %v915 = vpack.c.bf16 %v859, %v857
        %v916 = vpack.c.bf16 %v860, %v858
        %v917 = vpack.c.bf16 %v863, %v861
        %v918 = vpack.c.bf16 %v864, %v862
        %v919 = vpack.c.bf16 %v867, %v865
        %v920 = vpack.c.bf16 %v868, %v866
        %v921 = vpack.c.bf16 %v871, %v869
        %v922 = vpack.c.bf16 %v872, %v870
        %v923 = vpack.c.bf16 %v875, %v873
        %v924 = vpack.c.bf16 %v876, %v874
        %v925 = vpack.c.bf16 %v879, %v877
        %v926 = vpack.c.bf16 %v880, %v878
        %v927 = vpack.c.bf16 %v883, %v881
        %v928 = vpack.c.bf16 %v884, %v882
        %v929 = vpack.c.bf16 %v887, %v885
        %v930 = vpack.c.bf16 %v888, %v886
        %v931 = vpack.c.bf16 %v891, %v889
        %v932 = vpack.c.bf16 %v892, %v890
        %v933 = vpack.c.bf16 %v895, %v893
        %v934 = vpack.c.bf16 %v896, %v894
        %v935 = vpack.c.bf16 %v899, %v897
        %v936 = vpack.c.bf16 %v900, %v898
        %v937 = vpack.c.bf16 %v903, %v901
        %v938 = vpack.c.bf16 %v904, %v902
        %v939 = vpack.c.bf16 %v907, %v905
        %v940 = vpack.c.bf16 %v908, %v906
        %v941 = vld [vmem:[#allocation2] sm:$0xff]
        %v942 = vld [vmem:[#allocation2 + $0x8] sm:$0xff]
        %v943 = vld [vmem:[#allocation2 + $0x10] sm:$0xff]
        %v944 = vld [vmem:[#allocation2 + $0x18] sm:$0xff]
        %v945 = vld [vmem:[#allocation2 + $0x20] sm:$0xff]
        %v946 = vld [vmem:[#allocation2 + $0x28] sm:$0xff]
        %v947 = vld [vmem:[#allocation2 + $0x30] sm:$0xff]
        %v948 = vld [vmem:[#allocation2 + $0x38] sm:$0xff]
        %v949 = vld [vmem:[#allocation2 + $0x40] sm:$0xff]
        %v950 = vld [vmem:[#allocation2 + $0x48] sm:$0xff]
        %v951 = vld [vmem:[#allocation2 + $0x50] sm:$0xff]
        %v952 = vld [vmem:[#allocation2 + $0x58] sm:$0xff]
        %v953 = vld [vmem:[#allocation2 + $0x60] sm:$0xff]
        %v954 = vld [vmem:[#allocation2 + $0x68] sm:$0xff]
        %v955 = vld [vmem:[#allocation2 + $0x70] sm:$0xff]
        %v956 = vld [vmem:[#allocation2 + $0x78] sm:$0xff]
        %v957 = vld [vmem:[#allocation2 + $0x80] sm:$0xff]
        %v958 = vld [vmem:[#allocation2 + $0x88] sm:$0xff]
        %v959 = vld [vmem:[#allocation2 + $0x90] sm:$0xff]
        %v960 = vld [vmem:[#allocation2 + $0x98] sm:$0xff]
        %v961 = vld [vmem:[#allocation2 + $0xa0] sm:$0xff]
        %v962 = vld [vmem:[#allocation2 + $0xa8] sm:$0xff]
        %v963 = vld [vmem:[#allocation2 + $0xb0] sm:$0xff]
        %v964 = vld [vmem:[#allocation2 + $0xb8] sm:$0xff]
        %v965 = vld [vmem:[#allocation2 + $0xc0] sm:$0xff]
        %v966 = vld [vmem:[#allocation2 + $0xc8] sm:$0xff]
        %v967 = vld [vmem:[#allocation2 + $0xd0] sm:$0xff]
        %v968 = vld [vmem:[#allocation2 + $0xd8] sm:$0xff]
        %v969 = vld [vmem:[#allocation2 + $0xe0] sm:$0xff]
        %v970 = vld [vmem:[#allocation2 + $0xe8] sm:$0xff]
        %v971 = vld [vmem:[#allocation2 + $0xf0] sm:$0xff]
        %v972 = vld [vmem:[#allocation2 + $0xf8] sm:$0xff]
        %s973 = scalar_lea.vmem %s4, 2
        %v974 = vld [vmem:[%s973] sm:$0x3]
        %v976 = vlaneseq
        %v977 = vshrl.u32 %v976, 7
        %v978 = vsub.s32 0, %v977
        %v979 = vrot.slane %v974, %v978
        %v980 = vlaneseq
        %v981 = vshrl.u32 %v980, 7
        %v982 = vsub.s32 1, %v981
        %v983 = vrot.slane %v974, %v982
        %v1018 = vunpack.c.l.b16 %v941
        %v1019 = vunpack.c.h.b16 %v941
        %v1020 = vunpack.c.l.b16 %v942
        %v1021 = vunpack.c.h.b16 %v942
        %v1022 = vunpack.c.l.b16 %v943
        %v1023 = vunpack.c.h.b16 %v943
        %v1024 = vunpack.c.l.b16 %v944
        %v1025 = vunpack.c.h.b16 %v944
        %v1026 = vunpack.c.l.b16 %v945
        %v1027 = vunpack.c.h.b16 %v945
        %v1028 = vunpack.c.l.b16 %v946
        %v1029 = vunpack.c.h.b16 %v946
        %v1030 = vunpack.c.l.b16 %v947
        %v1031 = vunpack.c.h.b16 %v947
        %v1032 = vunpack.c.l.b16 %v948
        %v1033 = vunpack.c.h.b16 %v948
        %v1034 = vunpack.c.l.b16 %v949
        %v1035 = vunpack.c.h.b16 %v949
        %v1036 = vunpack.c.l.b16 %v950
        %v1037 = vunpack.c.h.b16 %v950
        %v1038 = vunpack.c.l.b16 %v951
        %v1039 = vunpack.c.h.b16 %v951
        %v1040 = vunpack.c.l.b16 %v952
        %v1041 = vunpack.c.h.b16 %v952
        %v1042 = vunpack.c.l.b16 %v953
        %v1043 = vunpack.c.h.b16 %v953
        %v1044 = vunpack.c.l.b16 %v954
        %v1045 = vunpack.c.h.b16 %v954
        %v1046 = vunpack.c.l.b16 %v955
        %v1047 = vunpack.c.h.b16 %v955
        %v1048 = vunpack.c.l.b16 %v956
        %v1049 = vunpack.c.h.b16 %v956
        %v1050 = vunpack.c.l.b16 %v957
        %v1051 = vunpack.c.h.b16 %v957
        %v1052 = vunpack.c.l.b16 %v958
        %v1053 = vunpack.c.h.b16 %v958
        %v1054 = vunpack.c.l.b16 %v959
        %v1055 = vunpack.c.h.b16 %v959
        %v1056 = vunpack.c.l.b16 %v960
        %v1057 = vunpack.c.h.b16 %v960
        %v1058 = vunpack.c.l.b16 %v961
        %v1059 = vunpack.c.h.b16 %v961
        %v1060 = vunpack.c.l.b16 %v962
        %v1061 = vunpack.c.h.b16 %v962
        %v1062 = vunpack.c.l.b16 %v963
        %v1063 = vunpack.c.h.b16 %v963
        %v1064 = vunpack.c.l.b16 %v964
        %v1065 = vunpack.c.h.b16 %v964
        %v1066 = vunpack.c.l.b16 %v965
        %v1067 = vunpack.c.h.b16 %v965
        %v1068 = vunpack.c.l.b16 %v966
        %v1069 = vunpack.c.h.b16 %v966
        %v1070 = vunpack.c.l.b16 %v967
        %v1071 = vunpack.c.h.b16 %v967
        %v1072 = vunpack.c.l.b16 %v968
        %v1073 = vunpack.c.h.b16 %v968
        %v1074 = vunpack.c.l.b16 %v969
        %v1075 = vunpack.c.h.b16 %v969
        %v1076 = vunpack.c.l.b16 %v970
        %v1077 = vunpack.c.h.b16 %v970
        %v1078 = vunpack.c.l.b16 %v971
        %v1079 = vunpack.c.h.b16 %v971
        %v1080 = vunpack.c.l.b16 %v972
        %v1081 = vunpack.c.h.b16 %v972
        %v1082 = vpack.c.b16 %v1020, %v1018
        %v1083 = vpack.c.b16 %v1021, %v1019
        %v1084 = vpack.c.b16 %v1024, %v1022
        %v1085 = vpack.c.b16 %v1025, %v1023
        %v1086 = vpack.c.b16 %v1028, %v1026
        %v1087 = vpack.c.b16 %v1029, %v1027
        %v1088 = vpack.c.b16 %v1032, %v1030
        %v1089 = vpack.c.b16 %v1033, %v1031
        %v1090 = vpack.c.b16 %v1036, %v1034
        %v1091 = vpack.c.b16 %v1037, %v1035
        %v1092 = vpack.c.b16 %v1040, %v1038
        %v1093 = vpack.c.b16 %v1041, %v1039
        %v1094 = vpack.c.b16 %v1044, %v1042
        %v1095 = vpack.c.b16 %v1045, %v1043
        %v1096 = vpack.c.b16 %v1048, %v1046
        %v1097 = vpack.c.b16 %v1049, %v1047
        %v1098 = vpack.c.b16 %v1052, %v1050
        %v1099 = vpack.c.b16 %v1053, %v1051
        %v1100 = vpack.c.b16 %v1056, %v1054
        %v1101 = vpack.c.b16 %v1057, %v1055
        %v1102 = vpack.c.b16 %v1060, %v1058
        %v1103 = vpack.c.b16 %v1061, %v1059
        %v1104 = vpack.c.b16 %v1064, %v1062
        %v1105 = vpack.c.b16 %v1065, %v1063
        %v1106 = vpack.c.b16 %v1068, %v1066
        %v1107 = vpack.c.b16 %v1069, %v1067
        %v1108 = vpack.c.b16 %v1072, %v1070
        %v1109 = vpack.c.b16 %v1073, %v1071
        %v1110 = vpack.c.b16 %v1076, %v1074
        %v1111 = vpack.c.b16 %v1077, %v1075
        %v1112 = vpack.c.b16 %v1080, %v1078
        %v1113 = vpack.c.b16 %v1081, %v1079
        %1146 = vmatprep.subr.bf16.mxu0 %v1083
        %1147 = vmatpush1.bf16.msra.mxu0 %v1082
        %1148 = vmatprep.subr.bf16.mxu0 %v1085
        %1149 = vmatpush1.bf16.msra.mxu0 %v1084
        %1150 = vmatprep.subr.bf16.mxu0 %v1087
        %1151 = vmatpush1.bf16.msra.mxu0 %v1086
        %1152 = vmatprep.subr.bf16.mxu0 %v1089
        %1153 = vmatpush1.bf16.msra.mxu0 %v1088
        %1154 = vmatprep.subr.bf16.mxu0 %v1091
        %1155 = vmatpush1.bf16.msra.mxu0 %v1090
        %1156 = vmatprep.subr.bf16.mxu0 %v1093
        %1157 = vmatpush1.bf16.msra.mxu0 %v1092
        %1158 = vmatprep.subr.bf16.mxu0 %v1095
        %1159 = vmatpush1.bf16.msra.mxu0 %v1094
        %1160 = vmatprep.subr.bf16.mxu0 %v1097
        %1161 = vmatpush1.bf16.msra.mxu0 %v1096
        %1162 = vmatprep.subr.bf16.mxu0 %v1099
        %1163 = vmatpush1.bf16.msra.mxu0 %v1098
        %1164 = vmatprep.subr.bf16.mxu0 %v1101
        %1165 = vmatpush1.bf16.msra.mxu0 %v1100
        %1166 = vmatprep.subr.bf16.mxu0 %v1103
        %1167 = vmatpush1.bf16.msra.mxu0 %v1102
        %1168 = vmatprep.subr.bf16.mxu0 %v1105
        %1169 = vmatpush1.bf16.msra.mxu0 %v1104
        %1170 = vmatprep.subr.bf16.mxu0 %v1107
        %1171 = vmatpush1.bf16.msra.mxu0 %v1106
        %1172 = vmatprep.subr.bf16.mxu0 %v1109
        %1173 = vmatpush1.bf16.msra.mxu0 %v1108
        %1174 = vmatprep.subr.bf16.mxu0 %v1111
        %1175 = vmatpush1.bf16.msra.mxu0 %v1110
        %1176 = vmatprep.subr.bf16.mxu0 %v1113
        %1177 = vmatpush1.bf16.msra.mxu0 %v1112
        %1178 = vmatprep.mubr.bf16.mxu0 %v910
        %1179 = vmatmul.mubr.bf16.gmra.mrb[0].mxu0 %v909
        %v1180 = vpop.f32.mrb[0].mxu0
        %v1181 = vadd.f32 %v979, %v1180
        %v1182 = vpop.f32.mrb[0].mxu0
        %v1183 = vadd.f32 %v983, %v1182
        %v1184 = vpop.f32.mrb[0].mxu0
        %v1185 = vadd.f32 %v979, %v1184
        %v1186 = vpop.f32.mrb[0].mxu0
        %v1187 = vadd.f32 %v983, %v1186
        %1188 = vmatprep.mubr.bf16.mxu0 %v912
        %1189 = vmatmul.mubr.bf16.gmra.mrb[0].mxu0 %v911
        %v1190 = vpop.f32.mrb[0].mxu0
        %v1191 = vadd.f32 %v979, %v1190
        %v1192 = vpop.f32.mrb[0].mxu0
        %v1193 = vadd.f32 %v983, %v1192
        %v1194 = vpop.f32.mrb[0].mxu0
        %v1195 = vadd.f32 %v979, %v1194
        %v1196 = vpop.f32.mrb[0].mxu0
        %v1197 = vadd.f32 %v983, %v1196
        %1198 = vmatprep.mubr.bf16.mxu0 %v914
        %1199 = vmatmul.mubr.bf16.gmra.mrb[0].mxu0 %v913
        %v1200 = vpop.f32.mrb[0].mxu0
        %v1201 = vadd.f32 %v979, %v1200
        %v1202 = vpop.f32.mrb[0].mxu0
        %v1203 = vadd.f32 %v983, %v1202
        %v1204 = vpop.f32.mrb[0].mxu0
        %v1205 = vadd.f32 %v979, %v1204
        %v1206 = vpop.f32.mrb[0].mxu0
        %v1207 = vadd.f32 %v983, %v1206
        %1208 = vmatprep.mubr.bf16.mxu0 %v916
        %1209 = vmatmul.mubr.bf16.gmra.mrb[0].mxu0 %v915
        %v1210 = vpop.f32.mrb[0].mxu0
        %v1211 = vadd.f32 %v979, %v1210
        %v1212 = vpop.f32.mrb[0].mxu0
        %v1213 = vadd.f32 %v983, %v1212
        %v1214 = vpop.f32.mrb[0].mxu0
        %v1215 = vadd.f32 %v979, %v1214
        %v1216 = vpop.f32.mrb[0].mxu0
        %v1217 = vadd.f32 %v983, %v1216
        %1218 = vmatprep.mubr.bf16.mxu0 %v918
        %1219 = vmatmul.mubr.bf16.gmra.mrb[0].mxu0 %v917
        %v1220 = vpop.f32.mrb[0].mxu0
        %v1221 = vadd.f32 %v979, %v1220
        %v1222 = vpop.f32.mrb[0].mxu0
        %v1223 = vadd.f32 %v983, %v1222
        %v1224 = vpop.f32.mrb[0].mxu0
        %v1225 = vadd.f32 %v979, %v1224
        %v1226 = vpop.f32.mrb[0].mxu0
        %v1227 = vadd.f32 %v983, %v1226
        %1228 = vmatprep.mubr.bf16.mxu0 %v920
        %1229 = vmatmul.mubr.bf16.gmra.mrb[0].mxu0 %v919
        %v1230 = vpop.f32.mrb[0].mxu0
        %v1231 = vadd.f32 %v979, %v1230
        %v1232 = vpop.f32.mrb[0].mxu0
        %v1233 = vadd.f32 %v983, %v1232
        %v1234 = vpop.f32.mrb[0].mxu0
        %v1235 = vadd.f32 %v979, %v1234
        %v1236 = vpop.f32.mrb[0].mxu0
        %v1237 = vadd.f32 %v983, %v1236
        %1238 = vmatprep.mubr.bf16.mxu0 %v922
        %1239 = vmatmul.mubr.bf16.gmra.mrb[0].mxu0 %v921
        %v1240 = vpop.f32.mrb[0].mxu0
        %v1241 = vadd.f32 %v979, %v1240
        %v1242 = vpop.f32.mrb[0].mxu0
        %v1243 = vadd.f32 %v983, %v1242
        %v1244 = vpop.f32.mrb[0].mxu0
        %v1245 = vadd.f32 %v979, %v1244
        %v1246 = vpop.f32.mrb[0].mxu0
        %v1247 = vadd.f32 %v983, %v1246
        %1248 = vmatprep.mubr.bf16.mxu0 %v924
        %1249 = vmatmul.mubr.bf16.gmra.mrb[0].mxu0 %v923
        %v1250 = vpop.f32.mrb[0].mxu0
        %v1251 = vadd.f32 %v979, %v1250
        %v1252 = vpop.f32.mrb[0].mxu0
        %v1253 = vadd.f32 %v983, %v1252
        %v1254 = vpop.f32.mrb[0].mxu0
        %v1255 = vadd.f32 %v979, %v1254
        %v1256 = vpop.f32.mrb[0].mxu0
        %v1257 = vadd.f32 %v983, %v1256
        %1258 = vmatprep.mubr.bf16.mxu0 %v926
        %1259 = vmatmul.mubr.bf16.gmra.mrb[0].mxu0 %v925
        %v1260 = vpop.f32.mrb[0].mxu0
        %v1261 = vadd.f32 %v979, %v1260
        %v1262 = vpop.f32.mrb[0].mxu0
        %v1263 = vadd.f32 %v983, %v1262
        %v1264 = vpop.f32.mrb[0].mxu0
        %v1265 = vadd.f32 %v979, %v1264
        %v1266 = vpop.f32.mrb[0].mxu0
        %v1267 = vadd.f32 %v983, %v1266
        %1268 = vmatprep.mubr.bf16.mxu0 %v928
        %1269 = vmatmul.mubr.bf16.gmra.mrb[0].mxu0 %v927
        %v1270 = vpop.f32.mrb[0].mxu0
        %v1271 = vadd.f32 %v979, %v1270
        %v1272 = vpop.f32.mrb[0].mxu0
        %v1273 = vadd.f32 %v983, %v1272
        %v1274 = vpop.f32.mrb[0].mxu0
        %v1275 = vadd.f32 %v979, %v1274
        %v1276 = vpop.f32.mrb[0].mxu0
        %v1277 = vadd.f32 %v983, %v1276
        %1278 = vmatprep.mubr.bf16.mxu0 %v930
        %1279 = vmatmul.mubr.bf16.gmra.mrb[0].mxu0 %v929
        %v1280 = vpop.f32.mrb[0].mxu0
        %v1281 = vadd.f32 %v979, %v1280
        %v1282 = vpop.f32.mrb[0].mxu0
        %v1283 = vadd.f32 %v983, %v1282
        %v1284 = vpop.f32.mrb[0].mxu0
        %v1285 = vadd.f32 %v979, %v1284
        %v1286 = vpop.f32.mrb[0].mxu0
        %v1287 = vadd.f32 %v983, %v1286
        %1288 = vmatprep.mubr.bf16.mxu0 %v932
        %1289 = vmatmul.mubr.bf16.gmra.mrb[0].mxu0 %v931
        %v1290 = vpop.f32.mrb[0].mxu0
        %v1291 = vadd.f32 %v979, %v1290
        %v1292 = vpop.f32.mrb[0].mxu0
        %v1293 = vadd.f32 %v983, %v1292
        %v1294 = vpop.f32.mrb[0].mxu0
        %v1295 = vadd.f32 %v979, %v1294
        %v1296 = vpop.f32.mrb[0].mxu0
        %v1297 = vadd.f32 %v983, %v1296
        %1298 = vmatprep.mubr.bf16.mxu0 %v934
        %1299 = vmatmul.mubr.bf16.gmra.mrb[0].mxu0 %v933
        %v1300 = vpop.f32.mrb[0].mxu0
        %v1301 = vadd.f32 %v979, %v1300
        %v1302 = vpop.f32.mrb[0].mxu0
        %v1303 = vadd.f32 %v983, %v1302
        %v1304 = vpop.f32.mrb[0].mxu0
        %v1305 = vadd.f32 %v979, %v1304
        %v1306 = vpop.f32.mrb[0].mxu0
        %v1307 = vadd.f32 %v983, %v1306
        %1308 = vmatprep.mubr.bf16.mxu0 %v936
        %1309 = vmatmul.mubr.bf16.gmra.mrb[0].mxu0 %v935
        %v1310 = vpop.f32.mrb[0].mxu0
        %v1311 = vadd.f32 %v979, %v1310
        %v1312 = vpop.f32.mrb[0].mxu0
        %v1313 = vadd.f32 %v983, %v1312
        %v1314 = vpop.f32.mrb[0].mxu0
        %v1315 = vadd.f32 %v979, %v1314
        %v1316 = vpop.f32.mrb[0].mxu0
        %v1317 = vadd.f32 %v983, %v1316
        %1318 = vmatprep.mubr.bf16.mxu0 %v938
        %1319 = vmatmul.mubr.bf16.gmra.mrb[0].mxu0 %v937
        %v1320 = vpop.f32.mrb[0].mxu0
        %v1321 = vadd.f32 %v979, %v1320
        %v1322 = vpop.f32.mrb[0].mxu0
        %v1323 = vadd.f32 %v983, %v1322
        %v1324 = vpop.f32.mrb[0].mxu0
        %v1325 = vadd.f32 %v979, %v1324
        %v1326 = vpop.f32.mrb[0].mxu0
        %v1327 = vadd.f32 %v983, %v1326
        %1328 = vmatprep.mubr.bf16.mxu0 %v940
        %1329 = vmatmul.mubr.bf16.gmra.mrb[0].mxu0 %v939
        %v1330 = vpop.f32.mrb[0].mxu0
        %v1331 = vadd.f32 %v979, %v1330
        %v1332 = vpop.f32.mrb[0].mxu0
        %v1333 = vadd.f32 %v983, %v1332
        %v1334 = vpop.f32.mrb[0].mxu0
        %v1335 = vadd.f32 %v979, %v1334
        %v1336 = vpop.f32.mrb[0].mxu0
        %v1337 = vadd.f32 %v983, %v1336
        %1338 = vdwg.mxu0
        %v1339 = vmax.f32 %v1181, 0.0
        %v1340 = vmax.f32 %v1183, 0.0
        %v1341 = vmax.f32 %v1185, 0.0
        %v1342 = vmax.f32 %v1187, 0.0
        %v1343 = vmax.f32 %v1191, 0.0
        %v1344 = vmax.f32 %v1193, 0.0
        %v1345 = vmax.f32 %v1195, 0.0
        %v1346 = vmax.f32 %v1197, 0.0
        %v1347 = vmax.f32 %v1201, 0.0
        %v1348 = vmax.f32 %v1203, 0.0
        %v1349 = vmax.f32 %v1205, 0.0
        %v1350 = vmax.f32 %v1207, 0.0
        %v1351 = vmax.f32 %v1211, 0.0
        %v1352 = vmax.f32 %v1213, 0.0
        %v1353 = vmax.f32 %v1215, 0.0
        %v1354 = vmax.f32 %v1217, 0.0
        %v1355 = vmax.f32 %v1221, 0.0
        %v1356 = vmax.f32 %v1223, 0.0
        %v1357 = vmax.f32 %v1225, 0.0
        %v1358 = vmax.f32 %v1227, 0.0
        %v1359 = vmax.f32 %v1231, 0.0
        %v1360 = vmax.f32 %v1233, 0.0
        %v1361 = vmax.f32 %v1235, 0.0
        %v1362 = vmax.f32 %v1237, 0.0
        %v1363 = vmax.f32 %v1241, 0.0
        %v1364 = vmax.f32 %v1243, 0.0
        %v1365 = vmax.f32 %v1245, 0.0
        %v1366 = vmax.f32 %v1247, 0.0
        %v1367 = vmax.f32 %v1251, 0.0
        %v1368 = vmax.f32 %v1253, 0.0
        %v1369 = vmax.f32 %v1255, 0.0
        %v1370 = vmax.f32 %v1257, 0.0
        %v1371 = vmax.f32 %v1261, 0.0
        %v1372 = vmax.f32 %v1263, 0.0
        %v1373 = vmax.f32 %v1265, 0.0
        %v1374 = vmax.f32 %v1267, 0.0
        %v1375 = vmax.f32 %v1271, 0.0
        %v1376 = vmax.f32 %v1273, 0.0
        %v1377 = vmax.f32 %v1275, 0.0
        %v1378 = vmax.f32 %v1277, 0.0
        %v1379 = vmax.f32 %v1281, 0.0
        %v1380 = vmax.f32 %v1283, 0.0
        %v1381 = vmax.f32 %v1285, 0.0
        %v1382 = vmax.f32 %v1287, 0.0
        %v1383 = vmax.f32 %v1291, 0.0
        %v1384 = vmax.f32 %v1293, 0.0
        %v1385 = vmax.f32 %v1295, 0.0
        %v1386 = vmax.f32 %v1297, 0.0
        %v1387 = vmax.f32 %v1301, 0.0
        %v1388 = vmax.f32 %v1303, 0.0
        %v1389 = vmax.f32 %v1305, 0.0
        %v1390 = vmax.f32 %v1307, 0.0
        %v1391 = vmax.f32 %v1311, 0.0
        %v1392 = vmax.f32 %v1313, 0.0
        %v1393 = vmax.f32 %v1315, 0.0
        %v1394 = vmax.f32 %v1317, 0.0
        %v1395 = vmax.f32 %v1321, 0.0
        %v1396 = vmax.f32 %v1323, 0.0
        %v1397 = vmax.f32 %v1325, 0.0
        %v1398 = vmax.f32 %v1327, 0.0
        %v1399 = vmax.f32 %v1331, 0.0
        %v1400 = vmax.f32 %v1333, 0.0
        %v1401 = vmax.f32 %v1335, 0.0
        %v1402 = vmax.f32 %v1337, 0.0
        %v1403 = vpack.c.bf16 %v1341, %v1339
        %v1404 = vpack.c.bf16 %v1342, %v1340
        %v1405 = vpack.c.bf16 %v1345, %v1343
        %v1406 = vpack.c.bf16 %v1346, %v1344
        %v1407 = vpack.c.bf16 %v1349, %v1347
        %v1408 = vpack.c.bf16 %v1350, %v1348
        %v1409 = vpack.c.bf16 %v1353, %v1351
        %v1410 = vpack.c.bf16 %v1354, %v1352
        %v1411 = vpack.c.bf16 %v1357, %v1355
        %v1412 = vpack.c.bf16 %v1358, %v1356
        %v1413 = vpack.c.bf16 %v1361, %v1359
        %v1414 = vpack.c.bf16 %v1362, %v1360
        %v1415 = vpack.c.bf16 %v1365, %v1363
        %v1416 = vpack.c.bf16 %v1366, %v1364
        %v1417 = vpack.c.bf16 %v1369, %v1367
        %v1418 = vpack.c.bf16 %v1370, %v1368
        %v1419 = vpack.c.bf16 %v1373, %v1371
        %v1420 = vpack.c.bf16 %v1374, %v1372
        %v1421 = vpack.c.bf16 %v1377, %v1375
        %v1422 = vpack.c.bf16 %v1378, %v1376
        %v1423 = vpack.c.bf16 %v1381, %v1379
        %v1424 = vpack.c.bf16 %v1382, %v1380
        %v1425 = vpack.c.bf16 %v1385, %v1383
        %v1426 = vpack.c.bf16 %v1386, %v1384
        %v1427 = vpack.c.bf16 %v1389, %v1387
        %v1428 = vpack.c.bf16 %v1390, %v1388
        %v1429 = vpack.c.bf16 %v1393, %v1391
        %v1430 = vpack.c.bf16 %v1394, %v1392
        %v1431 = vpack.c.bf16 %v1397, %v1395
        %v1432 = vpack.c.bf16 %v1398, %v1396
        %v1433 = vpack.c.bf16 %v1401, %v1399
        %v1434 = vpack.c.bf16 %v1402, %v1400
        %s1435 = scalar_lea.vmem [#allocation2], 256
        %v1436 = vld [vmem:[%s1435] sm:$0xff]
        %v1437 = vld [vmem:[%s1435 + $0x8] sm:$0xff]
        %v1438 = vld [vmem:[%s1435 + $0x10] sm:$0xff]
        %v1439 = vld [vmem:[%s1435 + $0x18] sm:$0xff]
        %v1440 = vld [vmem:[%s1435 + $0x20] sm:$0xff]
        %v1441 = vld [vmem:[%s1435 + $0x28] sm:$0xff]
        %v1442 = vld [vmem:[%s1435 + $0x30] sm:$0xff]
        %v1443 = vld [vmem:[%s1435 + $0x38] sm:$0xff]
        %v1444 = vld [vmem:[%s1435 + $0x40] sm:$0xff]
        %v1445 = vld [vmem:[%s1435 + $0x48] sm:$0xff]
        %v1446 = vld [vmem:[%s1435 + $0x50] sm:$0xff]
        %v1447 = vld [vmem:[%s1435 + $0x58] sm:$0xff]
        %v1448 = vld [vmem:[%s1435 + $0x60] sm:$0xff]
        %v1449 = vld [vmem:[%s1435 + $0x68] sm:$0xff]
        %v1450 = vld [vmem:[%s1435 + $0x70] sm:$0xff]
        %v1451 = vld [vmem:[%s1435 + $0x78] sm:$0xff]
        %v1452 = vld [vmem:[%s1435 + $0x80] sm:$0xff]
        %v1453 = vld [vmem:[%s1435 + $0x88] sm:$0xff]
        %v1454 = vld [vmem:[%s1435 + $0x90] sm:$0xff]
        %v1455 = vld [vmem:[%s1435 + $0x98] sm:$0xff]
        %v1456 = vld [vmem:[%s1435 + $0xa0] sm:$0xff]
        %v1457 = vld [vmem:[%s1435 + $0xa8] sm:$0xff]
        %v1458 = vld [vmem:[%s1435 + $0xb0] sm:$0xff]
        %v1459 = vld [vmem:[%s1435 + $0xb8] sm:$0xff]
        %v1460 = vld [vmem:[%s1435 + $0xc0] sm:$0xff]
        %v1461 = vld [vmem:[%s1435 + $0xc8] sm:$0xff]
        %v1462 = vld [vmem:[%s1435 + $0xd0] sm:$0xff]
        %v1463 = vld [vmem:[%s1435 + $0xd8] sm:$0xff]
        %v1464 = vld [vmem:[%s1435 + $0xe0] sm:$0xff]
        %v1465 = vld [vmem:[%s1435 + $0xe8] sm:$0xff]
        %v1466 = vld [vmem:[%s1435 + $0xf0] sm:$0xff]
        %v1467 = vld [vmem:[%s1435 + $0xf8] sm:$0xff]
        %s1468 = scalar_lea.vmem %s4, 4
        %v1469 = vld [vmem:[%s1468] sm:$0x3]
        %v1471 = vlaneseq
        %v1472 = vshrl.u32 %v1471, 7
        %v1473 = vsub.s32 0, %v1472
        %v1474 = vrot.slane %v1469, %v1473
        %v1475 = vlaneseq
        %v1476 = vshrl.u32 %v1475, 7
        %v1477 = vsub.s32 1, %v1476
        %v1478 = vrot.slane %v1469, %v1477
        %v1513 = vunpack.c.l.b16 %v1436
        %v1514 = vunpack.c.h.b16 %v1436
        %v1515 = vunpack.c.l.b16 %v1437
        %v1516 = vunpack.c.h.b16 %v1437
        %v1517 = vunpack.c.l.b16 %v1438
        %v1518 = vunpack.c.h.b16 %v1438
        %v1519 = vunpack.c.l.b16 %v1439
        %v1520 = vunpack.c.h.b16 %v1439
        %v1521 = vunpack.c.l.b16 %v1440
        %v1522 = vunpack.c.h.b16 %v1440
        %v1523 = vunpack.c.l.b16 %v1441
        %v1524 = vunpack.c.h.b16 %v1441
        %v1525 = vunpack.c.l.b16 %v1442
        %v1526 = vunpack.c.h.b16 %v1442
        %v1527 = vunpack.c.l.b16 %v1443
        %v1528 = vunpack.c.h.b16 %v1443
        %v1529 = vunpack.c.l.b16 %v1444
        %v1530 = vunpack.c.h.b16 %v1444
        %v1531 = vunpack.c.l.b16 %v1445
        %v1532 = vunpack.c.h.b16 %v1445
        %v1533 = vunpack.c.l.b16 %v1446
        %v1534 = vunpack.c.h.b16 %v1446
        %v1535 = vunpack.c.l.b16 %v1447
        %v1536 = vunpack.c.h.b16 %v1447
        %v1537 = vunpack.c.l.b16 %v1448
        %v1538 = vunpack.c.h.b16 %v1448
        %v1539 = vunpack.c.l.b16 %v1449
        %v1540 = vunpack.c.h.b16 %v1449
        %v1541 = vunpack.c.l.b16 %v1450
        %v1542 = vunpack.c.h.b16 %v1450
        %v1543 = vunpack.c.l.b16 %v1451
        %v1544 = vunpack.c.h.b16 %v1451
        %v1545 = vunpack.c.l.b16 %v1452
        %v1546 = vunpack.c.h.b16 %v1452
        %v1547 = vunpack.c.l.b16 %v1453
        %v1548 = vunpack.c.h.b16 %v1453
        %v1549 = vunpack.c.l.b16 %v1454
        %v1550 = vunpack.c.h.b16 %v1454
        %v1551 = vunpack.c.l.b16 %v1455
        %v1552 = vunpack.c.h.b16 %v1455
        %v1553 = vunpack.c.l.b16 %v1456
        %v1554 = vunpack.c.h.b16 %v1456
        %v1555 = vunpack.c.l.b16 %v1457
        %v1556 = vunpack.c.h.b16 %v1457
        %v1557 = vunpack.c.l.b16 %v1458
        %v1558 = vunpack.c.h.b16 %v1458
        %v1559 = vunpack.c.l.b16 %v1459
        %v1560 = vunpack.c.h.b16 %v1459
        %v1561 = vunpack.c.l.b16 %v1460
        %v1562 = vunpack.c.h.b16 %v1460
        %v1563 = vunpack.c.l.b16 %v1461
        %v1564 = vunpack.c.h.b16 %v1461
        %v1565 = vunpack.c.l.b16 %v1462
        %v1566 = vunpack.c.h.b16 %v1462
        %v1567 = vunpack.c.l.b16 %v1463
        %v1568 = vunpack.c.h.b16 %v1463
        %v1569 = vunpack.c.l.b16 %v1464
        %v1570 = vunpack.c.h.b16 %v1464
        %v1571 = vunpack.c.l.b16 %v1465
        %v1572 = vunpack.c.h.b16 %v1465
        %v1573 = vunpack.c.l.b16 %v1466
        %v1574 = vunpack.c.h.b16 %v1466
        %v1575 = vunpack.c.l.b16 %v1467
        %v1576 = vunpack.c.h.b16 %v1467
        %v1577 = vpack.c.b16 %v1515, %v1513
        %v1578 = vpack.c.b16 %v1516, %v1514
        %v1579 = vpack.c.b16 %v1519, %v1517
        %v1580 = vpack.c.b16 %v1520, %v1518
        %v1581 = vpack.c.b16 %v1523, %v1521
        %v1582 = vpack.c.b16 %v1524, %v1522
        %v1583 = vpack.c.b16 %v1527, %v1525
        %v1584 = vpack.c.b16 %v1528, %v1526
        %v1585 = vpack.c.b16 %v1531, %v1529
        %v1586 = vpack.c.b16 %v1532, %v1530
        %v1587 = vpack.c.b16 %v1535, %v1533
        %v1588 = vpack.c.b16 %v1536, %v1534
        %v1589 = vpack.c.b16 %v1539, %v1537
        %v1590 = vpack.c.b16 %v1540, %v1538
        %v1591 = vpack.c.b16 %v1543, %v1541
        %v1592 = vpack.c.b16 %v1544, %v1542
        %v1593 = vpack.c.b16 %v1547, %v1545
        %v1594 = vpack.c.b16 %v1548, %v1546
        %v1595 = vpack.c.b16 %v1551, %v1549
        %v1596 = vpack.c.b16 %v1552, %v1550
        %v1597 = vpack.c.b16 %v1555, %v1553
        %v1598 = vpack.c.b16 %v1556, %v1554
        %v1599 = vpack.c.b16 %v1559, %v1557
        %v1600 = vpack.c.b16 %v1560, %v1558
        %v1601 = vpack.c.b16 %v1563, %v1561
        %v1602 = vpack.c.b16 %v1564, %v1562
        %v1603 = vpack.c.b16 %v1567, %v1565
        %v1604 = vpack.c.b16 %v1568, %v1566
        %v1605 = vpack.c.b16 %v1571, %v1569
        %v1606 = vpack.c.b16 %v1572, %v1570
        %v1607 = vpack.c.b16 %v1575, %v1573
        %v1608 = vpack.c.b16 %v1576, %v1574
        %1641 = vmatprep.subr.bf16.mxu0 %v1578
        %1642 = vmatpush1.bf16.msra.mxu0 %v1577
        %1643 = vmatprep.subr.bf16.mxu0 %v1580
        %1644 = vmatpush1.bf16.msra.mxu0 %v1579
        %1645 = vmatprep.subr.bf16.mxu0 %v1582
        %1646 = vmatpush1.bf16.msra.mxu0 %v1581
        %1647 = vmatprep.subr.bf16.mxu0 %v1584
        %1648 = vmatpush1.bf16.msra.mxu0 %v1583
        %1649 = vmatprep.subr.bf16.mxu0 %v1586
        %1650 = vmatpush1.bf16.msra.mxu0 %v1585
        %1651 = vmatprep.subr.bf16.mxu0 %v1588
        %1652 = vmatpush1.bf16.msra.mxu0 %v1587
        %1653 = vmatprep.subr.bf16.mxu0 %v1590
        %1654 = vmatpush1.bf16.msra.mxu0 %v1589
        %1655 = vmatprep.subr.bf16.mxu0 %v1592
        %1656 = vmatpush1.bf16.msra.mxu0 %v1591
        %1657 = vmatprep.subr.bf16.mxu0 %v1594
        %1658 = vmatpush1.bf16.msra.mxu0 %v1593
        %1659 = vmatprep.subr.bf16.mxu0 %v1596
        %1660 = vmatpush1.bf16.msra.mxu0 %v1595
        %1661 = vmatprep.subr.bf16.mxu0 %v1598
        %1662 = vmatpush1.bf16.msra.mxu0 %v1597
        %1663 = vmatprep.subr.bf16.mxu0 %v1600
        %1664 = vmatpush1.bf16.msra.mxu0 %v1599
        %1665 = vmatprep.subr.bf16.mxu0 %v1602
        %1666 = vmatpush1.bf16.msra.mxu0 %v1601
        %1667 = vmatprep.subr.bf16.mxu0 %v1604
        %1668 = vmatpush1.bf16.msra.mxu0 %v1603
        %1669 = vmatprep.subr.bf16.mxu0 %v1606
        %1670 = vmatpush1.bf16.msra.mxu0 %v1605
        %1671 = vmatprep.subr.bf16.mxu0 %v1608
        %1672 = vmatpush1.bf16.msra.mxu0 %v1607
        %1673 = vmatprep.mubr.bf16.mxu0 %v1404
        %1674 = vmatmul.mubr.bf16.gmra.mrb[0].mxu0 %v1403
        %v1675 = vpop.f32.mrb[0].mxu0
        %v1676 = vadd.f32 %v1474, %v1675
        %v1677 = vpop.f32.mrb[0].mxu0
        %v1678 = vadd.f32 %v1478, %v1677
        %v1679 = vpop.f32.mrb[0].mxu0
        %v1680 = vadd.f32 %v1474, %v1679
        %v1681 = vpop.f32.mrb[0].mxu0
        %v1682 = vadd.f32 %v1478, %v1681
        %1683 = vmatprep.mubr.bf16.mxu0 %v1406
        %1684 = vmatmul.mubr.bf16.gmra.mrb[0].mxu0 %v1405
        %v1685 = vpop.f32.mrb[0].mxu0
        %v1686 = vadd.f32 %v1474, %v1685
        %v1687 = vpop.f32.mrb[0].mxu0
        %v1688 = vadd.f32 %v1478, %v1687
        %v1689 = vpop.f32.mrb[0].mxu0
        %v1690 = vadd.f32 %v1474, %v1689
        %v1691 = vpop.f32.mrb[0].mxu0
        %v1692 = vadd.f32 %v1478, %v1691
        %1693 = vmatprep.mubr.bf16.mxu0 %v1408
        %1694 = vmatmul.mubr.bf16.gmra.mrb[0].mxu0 %v1407
        %v1695 = vpop.f32.mrb[0].mxu0
        %v1696 = vadd.f32 %v1474, %v1695
        %v1697 = vpop.f32.mrb[0].mxu0
        %v1698 = vadd.f32 %v1478, %v1697
        %v1699 = vpop.f32.mrb[0].mxu0
        %v1700 = vadd.f32 %v1474, %v1699
        %v1701 = vpop.f32.mrb[0].mxu0
        %v1702 = vadd.f32 %v1478, %v1701
        %1703 = vmatprep.mubr.bf16.mxu0 %v1410
        %1704 = vmatmul.mubr.bf16.gmra.mrb[0].mxu0 %v1409
        %v1705 = vpop.f32.mrb[0].mxu0
        %v1706 = vadd.f32 %v1474, %v1705
        %v1707 = vpop.f32.mrb[0].mxu0
        %v1708 = vadd.f32 %v1478, %v1707
        %v1709 = vpop.f32.mrb[0].mxu0
        %v1710 = vadd.f32 %v1474, %v1709
        %v1711 = vpop.f32.mrb[0].mxu0
        %v1712 = vadd.f32 %v1478, %v1711
        %1713 = vmatprep.mubr.bf16.mxu0 %v1412
        %1714 = vmatmul.mubr.bf16.gmra.mrb[0].mxu0 %v1411
        %v1715 = vpop.f32.mrb[0].mxu0
        %v1716 = vadd.f32 %v1474, %v1715
        %v1717 = vpop.f32.mrb[0].mxu0
        %v1718 = vadd.f32 %v1478, %v1717
        %v1719 = vpop.f32.mrb[0].mxu0
        %v1720 = vadd.f32 %v1474, %v1719
        %v1721 = vpop.f32.mrb[0].mxu0
        %v1722 = vadd.f32 %v1478, %v1721
        %1723 = vmatprep.mubr.bf16.mxu0 %v1414
        %1724 = vmatmul.mubr.bf16.gmra.mrb[0].mxu0 %v1413
        %v1725 = vpop.f32.mrb[0].mxu0
        %v1726 = vadd.f32 %v1474, %v1725
        %v1727 = vpop.f32.mrb[0].mxu0
        %v1728 = vadd.f32 %v1478, %v1727
        %v1729 = vpop.f32.mrb[0].mxu0
        %v1730 = vadd.f32 %v1474, %v1729
        %v1731 = vpop.f32.mrb[0].mxu0
        %v1732 = vadd.f32 %v1478, %v1731
        %1733 = vmatprep.mubr.bf16.mxu0 %v1416
        %1734 = vmatmul.mubr.bf16.gmra.mrb[0].mxu0 %v1415
        %v1735 = vpop.f32.mrb[0].mxu0
        %v1736 = vadd.f32 %v1474, %v1735
        %v1737 = vpop.f32.mrb[0].mxu0
        %v1738 = vadd.f32 %v1478, %v1737
        %v1739 = vpop.f32.mrb[0].mxu0
        %v1740 = vadd.f32 %v1474, %v1739
        %v1741 = vpop.f32.mrb[0].mxu0
        %v1742 = vadd.f32 %v1478, %v1741
        %1743 = vmatprep.mubr.bf16.mxu0 %v1418
        %1744 = vmatmul.mubr.bf16.gmra.mrb[0].mxu0 %v1417
        %v1745 = vpop.f32.mrb[0].mxu0
        %v1746 = vadd.f32 %v1474, %v1745
        %v1747 = vpop.f32.mrb[0].mxu0
        %v1748 = vadd.f32 %v1478, %v1747
        %v1749 = vpop.f32.mrb[0].mxu0
        %v1750 = vadd.f32 %v1474, %v1749
        %v1751 = vpop.f32.mrb[0].mxu0
        %v1752 = vadd.f32 %v1478, %v1751
        %1753 = vmatprep.mubr.bf16.mxu0 %v1420
        %1754 = vmatmul.mubr.bf16.gmra.mrb[0].mxu0 %v1419
        %v1755 = vpop.f32.mrb[0].mxu0
        %v1756 = vadd.f32 %v1474, %v1755
        %v1757 = vpop.f32.mrb[0].mxu0
        %v1758 = vadd.f32 %v1478, %v1757
        %v1759 = vpop.f32.mrb[0].mxu0
        %v1760 = vadd.f32 %v1474, %v1759
        %v1761 = vpop.f32.mrb[0].mxu0
        %v1762 = vadd.f32 %v1478, %v1761
        %1763 = vmatprep.mubr.bf16.mxu0 %v1422
        %1764 = vmatmul.mubr.bf16.gmra.mrb[0].mxu0 %v1421
        %v1765 = vpop.f32.mrb[0].mxu0
        %v1766 = vadd.f32 %v1474, %v1765
        %v1767 = vpop.f32.mrb[0].mxu0
        %v1768 = vadd.f32 %v1478, %v1767
        %v1769 = vpop.f32.mrb[0].mxu0
        %v1770 = vadd.f32 %v1474, %v1769
        %v1771 = vpop.f32.mrb[0].mxu0
        %v1772 = vadd.f32 %v1478, %v1771
        %1773 = vmatprep.mubr.bf16.mxu0 %v1424
        %1774 = vmatmul.mubr.bf16.gmra.mrb[0].mxu0 %v1423
        %v1775 = vpop.f32.mrb[0].mxu0
        %v1776 = vadd.f32 %v1474, %v1775
        %v1777 = vpop.f32.mrb[0].mxu0
        %v1778 = vadd.f32 %v1478, %v1777
        %v1779 = vpop.f32.mrb[0].mxu0
        %v1780 = vadd.f32 %v1474, %v1779
        %v1781 = vpop.f32.mrb[0].mxu0
        %v1782 = vadd.f32 %v1478, %v1781
        %1783 = vmatprep.mubr.bf16.mxu0 %v1426
        %1784 = vmatmul.mubr.bf16.gmra.mrb[0].mxu0 %v1425
        %v1785 = vpop.f32.mrb[0].mxu0
        %v1786 = vadd.f32 %v1474, %v1785
        %v1787 = vpop.f32.mrb[0].mxu0
        %v1788 = vadd.f32 %v1478, %v1787
        %v1789 = vpop.f32.mrb[0].mxu0
        %v1790 = vadd.f32 %v1474, %v1789
        %v1791 = vpop.f32.mrb[0].mxu0
        %v1792 = vadd.f32 %v1478, %v1791
        %1793 = vmatprep.mubr.bf16.mxu0 %v1428
        %1794 = vmatmul.mubr.bf16.gmra.mrb[0].mxu0 %v1427
        %v1795 = vpop.f32.mrb[0].mxu0
        %v1796 = vadd.f32 %v1474, %v1795
        %v1797 = vpop.f32.mrb[0].mxu0
        %v1798 = vadd.f32 %v1478, %v1797
        %v1799 = vpop.f32.mrb[0].mxu0
        %v1800 = vadd.f32 %v1474, %v1799
        %v1801 = vpop.f32.mrb[0].mxu0
        %v1802 = vadd.f32 %v1478, %v1801
        %1803 = vmatprep.mubr.bf16.mxu0 %v1430
        %1804 = vmatmul.mubr.bf16.gmra.mrb[0].mxu0 %v1429
        %v1805 = vpop.f32.mrb[0].mxu0
        %v1806 = vadd.f32 %v1474, %v1805
        %v1807 = vpop.f32.mrb[0].mxu0
        %v1808 = vadd.f32 %v1478, %v1807
        %v1809 = vpop.f32.mrb[0].mxu0
        %v1810 = vadd.f32 %v1474, %v1809
        %v1811 = vpop.f32.mrb[0].mxu0
        %v1812 = vadd.f32 %v1478, %v1811
        %1813 = vmatprep.mubr.bf16.mxu0 %v1432
        %1814 = vmatmul.mubr.bf16.gmra.mrb[0].mxu0 %v1431
        %v1815 = vpop.f32.mrb[0].mxu0
        %v1816 = vadd.f32 %v1474, %v1815
        %v1817 = vpop.f32.mrb[0].mxu0
        %v1818 = vadd.f32 %v1478, %v1817
        %v1819 = vpop.f32.mrb[0].mxu0
        %v1820 = vadd.f32 %v1474, %v1819
        %v1821 = vpop.f32.mrb[0].mxu0
        %v1822 = vadd.f32 %v1478, %v1821
        %1823 = vmatprep.mubr.bf16.mxu0 %v1434
        %1824 = vmatmul.mubr.bf16.gmra.mrb[0].mxu0 %v1433
        %v1825 = vpop.f32.mrb[0].mxu0
        %v1826 = vadd.f32 %v1474, %v1825
        %v1827 = vpop.f32.mrb[0].mxu0
        %v1828 = vadd.f32 %v1478, %v1827
        %v1829 = vpop.f32.mrb[0].mxu0
        %v1830 = vadd.f32 %v1474, %v1829
        %v1831 = vpop.f32.mrb[0].mxu0
        %v1832 = vadd.f32 %v1478, %v1831
        %1833 = vdwg.mxu0
        %v1834 = vmax.f32 %v1676, 0.0
        %v1835 = vmax.f32 %v1678, 0.0
        %v1836 = vmax.f32 %v1680, 0.0
        %v1837 = vmax.f32 %v1682, 0.0
        %v1838 = vmax.f32 %v1686, 0.0
        %v1839 = vmax.f32 %v1688, 0.0
        %v1840 = vmax.f32 %v1690, 0.0
        %v1841 = vmax.f32 %v1692, 0.0
        %v1842 = vmax.f32 %v1696, 0.0
        %v1843 = vmax.f32 %v1698, 0.0
        %v1844 = vmax.f32 %v1700, 0.0
        %v1845 = vmax.f32 %v1702, 0.0
        %v1846 = vmax.f32 %v1706, 0.0
        %v1847 = vmax.f32 %v1708, 0.0
        %v1848 = vmax.f32 %v1710, 0.0
        %v1849 = vmax.f32 %v1712, 0.0
        %v1850 = vmax.f32 %v1716, 0.0
        %v1851 = vmax.f32 %v1718, 0.0
        %v1852 = vmax.f32 %v1720, 0.0
        %v1853 = vmax.f32 %v1722, 0.0
        %v1854 = vmax.f32 %v1726, 0.0
        %v1855 = vmax.f32 %v1728, 0.0
        %v1856 = vmax.f32 %v1730, 0.0
        %v1857 = vmax.f32 %v1732, 0.0
        %v1858 = vmax.f32 %v1736, 0.0
        %v1859 = vmax.f32 %v1738, 0.0
        %v1860 = vmax.f32 %v1740, 0.0
        %v1861 = vmax.f32 %v1742, 0.0
        %v1862 = vmax.f32 %v1746, 0.0
        %v1863 = vmax.f32 %v1748, 0.0
        %v1864 = vmax.f32 %v1750, 0.0
        %v1865 = vmax.f32 %v1752, 0.0
        %v1866 = vmax.f32 %v1756, 0.0
        %v1867 = vmax.f32 %v1758, 0.0
        %v1868 = vmax.f32 %v1760, 0.0
        %v1869 = vmax.f32 %v1762, 0.0
        %v1870 = vmax.f32 %v1766, 0.0
        %v1871 = vmax.f32 %v1768, 0.0
        %v1872 = vmax.f32 %v1770, 0.0
        %v1873 = vmax.f32 %v1772, 0.0
        %v1874 = vmax.f32 %v1776, 0.0
        %v1875 = vmax.f32 %v1778, 0.0
        %v1876 = vmax.f32 %v1780, 0.0
        %v1877 = vmax.f32 %v1782, 0.0
        %v1878 = vmax.f32 %v1786, 0.0
        %v1879 = vmax.f32 %v1788, 0.0
        %v1880 = vmax.f32 %v1790, 0.0
        %v1881 = vmax.f32 %v1792, 0.0
        %v1882 = vmax.f32 %v1796, 0.0
        %v1883 = vmax.f32 %v1798, 0.0
        %v1884 = vmax.f32 %v1800, 0.0
        %v1885 = vmax.f32 %v1802, 0.0
        %v1886 = vmax.f32 %v1806, 0.0
        %v1887 = vmax.f32 %v1808, 0.0
        %v1888 = vmax.f32 %v1810, 0.0
        %v1889 = vmax.f32 %v1812, 0.0
        %v1890 = vmax.f32 %v1816, 0.0
        %v1891 = vmax.f32 %v1818, 0.0
        %v1892 = vmax.f32 %v1820, 0.0
        %v1893 = vmax.f32 %v1822, 0.0
        %v1894 = vmax.f32 %v1826, 0.0
        %v1895 = vmax.f32 %v1828, 0.0
        %v1896 = vmax.f32 %v1830, 0.0
        %v1897 = vmax.f32 %v1832, 0.0
        %v1898 = vpack.c.bf16 %v1836, %v1834
        %v1899 = vpack.c.bf16 %v1837, %v1835
        %v1900 = vpack.c.bf16 %v1840, %v1838
        %v1901 = vpack.c.bf16 %v1841, %v1839
        %v1902 = vpack.c.bf16 %v1844, %v1842
        %v1903 = vpack.c.bf16 %v1845, %v1843
        %v1904 = vpack.c.bf16 %v1848, %v1846
        %v1905 = vpack.c.bf16 %v1849, %v1847
        %v1906 = vpack.c.bf16 %v1852, %v1850
        %v1907 = vpack.c.bf16 %v1853, %v1851
        %v1908 = vpack.c.bf16 %v1856, %v1854
        %v1909 = vpack.c.bf16 %v1857, %v1855
        %v1910 = vpack.c.bf16 %v1860, %v1858
        %v1911 = vpack.c.bf16 %v1861, %v1859
        %v1912 = vpack.c.bf16 %v1864, %v1862
        %v1913 = vpack.c.bf16 %v1865, %v1863
        %v1914 = vpack.c.bf16 %v1868, %v1866
        %v1915 = vpack.c.bf16 %v1869, %v1867
        %v1916 = vpack.c.bf16 %v1872, %v1870
        %v1917 = vpack.c.bf16 %v1873, %v1871
        %v1918 = vpack.c.bf16 %v1876, %v1874
        %v1919 = vpack.c.bf16 %v1877, %v1875
        %v1920 = vpack.c.bf16 %v1880, %v1878
        %v1921 = vpack.c.bf16 %v1881, %v1879
        %v1922 = vpack.c.bf16 %v1884, %v1882
        %v1923 = vpack.c.bf16 %v1885, %v1883
        %v1924 = vpack.c.bf16 %v1888, %v1886
        %v1925 = vpack.c.bf16 %v1889, %v1887
        %v1926 = vpack.c.bf16 %v1892, %v1890
        %v1927 = vpack.c.bf16 %v1893, %v1891
        %v1928 = vpack.c.bf16 %v1896, %v1894
        %v1929 = vpack.c.bf16 %v1897, %v1895
        %s1930 = scalar_lea.vmem [#allocation2], 512
        %v1931 = vld [vmem:[%s1930] sm:$0xff]
        %v1932 = vld [vmem:[%s1930 + $0x8] sm:$0xff]
        %v1933 = vld [vmem:[%s1930 + $0x10] sm:$0xff]
        %v1934 = vld [vmem:[%s1930 + $0x18] sm:$0xff]
        %v1935 = vld [vmem:[%s1930 + $0x20] sm:$0xff]
        %v1936 = vld [vmem:[%s1930 + $0x28] sm:$0xff]
        %v1937 = vld [vmem:[%s1930 + $0x30] sm:$0xff]
        %v1938 = vld [vmem:[%s1930 + $0x38] sm:$0xff]
        %v1939 = vld [vmem:[%s1930 + $0x40] sm:$0xff]
        %v1940 = vld [vmem:[%s1930 + $0x48] sm:$0xff]
        %v1941 = vld [vmem:[%s1930 + $0x50] sm:$0xff]
        %v1942 = vld [vmem:[%s1930 + $0x58] sm:$0xff]
        %v1943 = vld [vmem:[%s1930 + $0x60] sm:$0xff]
        %v1944 = vld [vmem:[%s1930 + $0x68] sm:$0xff]
        %v1945 = vld [vmem:[%s1930 + $0x70] sm:$0xff]
        %v1946 = vld [vmem:[%s1930 + $0x78] sm:$0xff]
        %v1947 = vld [vmem:[%s1930 + $0x80] sm:$0xff]
        %v1948 = vld [vmem:[%s1930 + $0x88] sm:$0xff]
        %v1949 = vld [vmem:[%s1930 + $0x90] sm:$0xff]
        %v1950 = vld [vmem:[%s1930 + $0x98] sm:$0xff]
        %v1951 = vld [vmem:[%s1930 + $0xa0] sm:$0xff]
        %v1952 = vld [vmem:[%s1930 + $0xa8] sm:$0xff]
        %v1953 = vld [vmem:[%s1930 + $0xb0] sm:$0xff]
        %v1954 = vld [vmem:[%s1930 + $0xb8] sm:$0xff]
        %v1955 = vld [vmem:[%s1930 + $0xc0] sm:$0xff]
        %v1956 = vld [vmem:[%s1930 + $0xc8] sm:$0xff]
        %v1957 = vld [vmem:[%s1930 + $0xd0] sm:$0xff]
        %v1958 = vld [vmem:[%s1930 + $0xd8] sm:$0xff]
        %v1959 = vld [vmem:[%s1930 + $0xe0] sm:$0xff]
        %v1960 = vld [vmem:[%s1930 + $0xe8] sm:$0xff]
        %v1961 = vld [vmem:[%s1930 + $0xf0] sm:$0xff]
        %v1962 = vld [vmem:[%s1930 + $0xf8] sm:$0xff]
        %s1963 = scalar_lea.vmem %s4, 6
        %v1964 = vld [vmem:[%s1963] sm:$0x3]
        %v1966 = vlaneseq
        %v1967 = vshrl.u32 %v1966, 7
        %v1968 = vsub.s32 0, %v1967
        %v1969 = vrot.slane %v1964, %v1968
        %v1970 = vlaneseq
        %v1971 = vshrl.u32 %v1970, 7
        %v1972 = vsub.s32 1, %v1971
        %v1973 = vrot.slane %v1964, %v1972
        %v2008 = vunpack.c.l.b16 %v1931
        %v2009 = vunpack.c.h.b16 %v1931
        %v2010 = vunpack.c.l.b16 %v1932
        %v2011 = vunpack.c.h.b16 %v1932
        %v2012 = vunpack.c.l.b16 %v1933
        %v2013 = vunpack.c.h.b16 %v1933
        %v2014 = vunpack.c.l.b16 %v1934
        %v2015 = vunpack.c.h.b16 %v1934
        %v2016 = vunpack.c.l.b16 %v1935
        %v2017 = vunpack.c.h.b16 %v1935
        %v2018 = vunpack.c.l.b16 %v1936
        %v2019 = vunpack.c.h.b16 %v1936
        %v2020 = vunpack.c.l.b16 %v1937
        %v2021 = vunpack.c.h.b16 %v1937
        %v2022 = vunpack.c.l.b16 %v1938
        %v2023 = vunpack.c.h.b16 %v1938
        %v2024 = vunpack.c.l.b16 %v1939
        %v2025 = vunpack.c.h.b16 %v1939
        %v2026 = vunpack.c.l.b16 %v1940
        %v2027 = vunpack.c.h.b16 %v1940
        %v2028 = vunpack.c.l.b16 %v1941
        %v2029 = vunpack.c.h.b16 %v1941
        %v2030 = vunpack.c.l.b16 %v1942
        %v2031 = vunpack.c.h.b16 %v1942
        %v2032 = vunpack.c.l.b16 %v1943
        %v2033 = vunpack.c.h.b16 %v1943
        %v2034 = vunpack.c.l.b16 %v1944
        %v2035 = vunpack.c.h.b16 %v1944
        %v2036 = vunpack.c.l.b16 %v1945
        %v2037 = vunpack.c.h.b16 %v1945
        %v2038 = vunpack.c.l.b16 %v1946
        %v2039 = vunpack.c.h.b16 %v1946
        %v2040 = vunpack.c.l.b16 %v1947
        %v2041 = vunpack.c.h.b16 %v1947
        %v2042 = vunpack.c.l.b16 %v1948
        %v2043 = vunpack.c.h.b16 %v1948
        %v2044 = vunpack.c.l.b16 %v1949
        %v2045 = vunpack.c.h.b16 %v1949
        %v2046 = vunpack.c.l.b16 %v1950
        %v2047 = vunpack.c.h.b16 %v1950
        %v2048 = vunpack.c.l.b16 %v1951
        %v2049 = vunpack.c.h.b16 %v1951
        %v2050 = vunpack.c.l.b16 %v1952
        %v2051 = vunpack.c.h.b16 %v1952
        %v2052 = vunpack.c.l.b16 %v1953
        %v2053 = vunpack.c.h.b16 %v1953
        %v2054 = vunpack.c.l.b16 %v1954
        %v2055 = vunpack.c.h.b16 %v1954
        %v2056 = vunpack.c.l.b16 %v1955
        %v2057 = vunpack.c.h.b16 %v1955
        %v2058 = vunpack.c.l.b16 %v1956
        %v2059 = vunpack.c.h.b16 %v1956
        %v2060 = vunpack.c.l.b16 %v1957
        %v2061 = vunpack.c.h.b16 %v1957
        %v2062 = vunpack.c.l.b16 %v1958
        %v2063 = vunpack.c.h.b16 %v1958
        %v2064 = vunpack.c.l.b16 %v1959
        %v2065 = vunpack.c.h.b16 %v1959
        %v2066 = vunpack.c.l.b16 %v1960
        %v2067 = vunpack.c.h.b16 %v1960
        %v2068 = vunpack.c.l.b16 %v1961
        %v2069 = vunpack.c.h.b16 %v1961
        %v2070 = vunpack.c.l.b16 %v1962
        %v2071 = vunpack.c.h.b16 %v1962
        %v2072 = vpack.c.b16 %v2010, %v2008
        %v2073 = vpack.c.b16 %v2011, %v2009
        %v2074 = vpack.c.b16 %v2014, %v2012
        %v2075 = vpack.c.b16 %v2015, %v2013
        %v2076 = vpack.c.b16 %v2018, %v2016
        %v2077 = vpack.c.b16 %v2019, %v2017
        %v2078 = vpack.c.b16 %v2022, %v2020
        %v2079 = vpack.c.b16 %v2023, %v2021
        %v2080 = vpack.c.b16 %v2026, %v2024
        %v2081 = vpack.c.b16 %v2027, %v2025
        %v2082 = vpack.c.b16 %v2030, %v2028
        %v2083 = vpack.c.b16 %v2031, %v2029
        %v2084 = vpack.c.b16 %v2034, %v2032
        %v2085 = vpack.c.b16 %v2035, %v2033
        %v2086 = vpack.c.b16 %v2038, %v2036
        %v2087 = vpack.c.b16 %v2039, %v2037
        %v2088 = vpack.c.b16 %v2042, %v2040
        %v2089 = vpack.c.b16 %v2043, %v2041
        %v2090 = vpack.c.b16 %v2046, %v2044
        %v2091 = vpack.c.b16 %v2047, %v2045
        %v2092 = vpack.c.b16 %v2050, %v2048
        %v2093 = vpack.c.b16 %v2051, %v2049
        %v2094 = vpack.c.b16 %v2054, %v2052
        %v2095 = vpack.c.b16 %v2055, %v2053
        %v2096 = vpack.c.b16 %v2058, %v2056
        %v2097 = vpack.c.b16 %v2059, %v2057
        %v2098 = vpack.c.b16 %v2062, %v2060
        %v2099 = vpack.c.b16 %v2063, %v2061
        %v2100 = vpack.c.b16 %v2066, %v2064
        %v2101 = vpack.c.b16 %v2067, %v2065
        %v2102 = vpack.c.b16 %v2070, %v2068
        %v2103 = vpack.c.b16 %v2071, %v2069
        %2136 = vmatprep.subr.bf16.mxu0 %v2073
        %2137 = vmatpush1.bf16.msra.mxu0 %v2072
        %2138 = vmatprep.subr.bf16.mxu0 %v2075
        %2139 = vmatpush1.bf16.msra.mxu0 %v2074
        %2140 = vmatprep.subr.bf16.mxu0 %v2077
        %2141 = vmatpush1.bf16.msra.mxu0 %v2076
        %2142 = vmatprep.subr.bf16.mxu0 %v2079
        %2143 = vmatpush1.bf16.msra.mxu0 %v2078
        %2144 = vmatprep.subr.bf16.mxu0 %v2081
        %2145 = vmatpush1.bf16.msra.mxu0 %v2080
        %2146 = vmatprep.subr.bf16.mxu0 %v2083
        %2147 = vmatpush1.bf16.msra.mxu0 %v2082
        %2148 = vmatprep.subr.bf16.mxu0 %v2085
        %2149 = vmatpush1.bf16.msra.mxu0 %v2084
        %2150 = vmatprep.subr.bf16.mxu0 %v2087
        %2151 = vmatpush1.bf16.msra.mxu0 %v2086
        %2152 = vmatprep.subr.bf16.mxu0 %v2089
        %2153 = vmatpush1.bf16.msra.mxu0 %v2088
        %2154 = vmatprep.subr.bf16.mxu0 %v2091
        %2155 = vmatpush1.bf16.msra.mxu0 %v2090
        %2156 = vmatprep.subr.bf16.mxu0 %v2093
        %2157 = vmatpush1.bf16.msra.mxu0 %v2092
        %2158 = vmatprep.subr.bf16.mxu0 %v2095
        %2159 = vmatpush1.bf16.msra.mxu0 %v2094
        %2160 = vmatprep.subr.bf16.mxu0 %v2097
        %2161 = vmatpush1.bf16.msra.mxu0 %v2096
        %2162 = vmatprep.subr.bf16.mxu0 %v2099
        %2163 = vmatpush1.bf16.msra.mxu0 %v2098
        %2164 = vmatprep.subr.bf16.mxu0 %v2101
        %2165 = vmatpush1.bf16.msra.mxu0 %v2100
        %2166 = vmatprep.subr.bf16.mxu0 %v2103
        %2167 = vmatpush1.bf16.msra.mxu0 %v2102
        %2168 = vmatprep.mubr.bf16.mxu0 %v1899
        %2169 = vmatmul.mubr.bf16.gmra.mrb[0].mxu0 %v1898
        %v2170 = vpop.f32.mrb[0].mxu0
        %v2171 = vadd.f32 %v1969, %v2170
        %v2172 = vpop.f32.mrb[0].mxu0
        %v2173 = vadd.f32 %v1973, %v2172
        %v2174 = vpop.f32.mrb[0].mxu0
        %v2175 = vadd.f32 %v1969, %v2174
        %v2176 = vpop.f32.mrb[0].mxu0
        %v2177 = vadd.f32 %v1973, %v2176
        %2178 = vmatprep.mubr.bf16.mxu0 %v1901
        %2179 = vmatmul.mubr.bf16.gmra.mrb[0].mxu0 %v1900
        %v2180 = vpop.f32.mrb[0].mxu0
        %v2181 = vadd.f32 %v1969, %v2180
        %v2182 = vpop.f32.mrb[0].mxu0
        %v2183 = vadd.f32 %v1973, %v2182
        %v2184 = vpop.f32.mrb[0].mxu0
        %v2185 = vadd.f32 %v1969, %v2184
        %v2186 = vpop.f32.mrb[0].mxu0
        %v2187 = vadd.f32 %v1973, %v2186
        %2188 = vmatprep.mubr.bf16.mxu0 %v1903
        %2189 = vmatmul.mubr.bf16.gmra.mrb[0].mxu0 %v1902
        %v2190 = vpop.f32.mrb[0].mxu0
        %v2191 = vadd.f32 %v1969, %v2190
        %v2192 = vpop.f32.mrb[0].mxu0
        %v2193 = vadd.f32 %v1973, %v2192
        %v2194 = vpop.f32.mrb[0].mxu0
        %v2195 = vadd.f32 %v1969, %v2194
        %v2196 = vpop.f32.mrb[0].mxu0
        %v2197 = vadd.f32 %v1973, %v2196
        %2198 = vmatprep.mubr.bf16.mxu0 %v1905
        %2199 = vmatmul.mubr.bf16.gmra.mrb[0].mxu0 %v1904
        %v2200 = vpop.f32.mrb[0].mxu0
        %v2201 = vadd.f32 %v1969, %v2200
        %v2202 = vpop.f32.mrb[0].mxu0
        %v2203 = vadd.f32 %v1973, %v2202
        %v2204 = vpop.f32.mrb[0].mxu0
        %v2205 = vadd.f32 %v1969, %v2204
        %v2206 = vpop.f32.mrb[0].mxu0
        %v2207 = vadd.f32 %v1973, %v2206
        %2208 = vmatprep.mubr.bf16.mxu0 %v1907
        %2209 = vmatmul.mubr.bf16.gmra.mrb[0].mxu0 %v1906
        %v2210 = vpop.f32.mrb[0].mxu0
        %v2211 = vadd.f32 %v1969, %v2210
        %v2212 = vpop.f32.mrb[0].mxu0
        %v2213 = vadd.f32 %v1973, %v2212
        %v2214 = vpop.f32.mrb[0].mxu0
        %v2215 = vadd.f32 %v1969, %v2214
        %v2216 = vpop.f32.mrb[0].mxu0
        %v2217 = vadd.f32 %v1973, %v2216
        %2218 = vmatprep.mubr.bf16.mxu0 %v1909
        %2219 = vmatmul.mubr.bf16.gmra.mrb[0].mxu0 %v1908
        %v2220 = vpop.f32.mrb[0].mxu0
        %v2221 = vadd.f32 %v1969, %v2220
        %v2222 = vpop.f32.mrb[0].mxu0
        %v2223 = vadd.f32 %v1973, %v2222
        %v2224 = vpop.f32.mrb[0].mxu0
        %v2225 = vadd.f32 %v1969, %v2224
        %v2226 = vpop.f32.mrb[0].mxu0
        %v2227 = vadd.f32 %v1973, %v2226
        %2228 = vmatprep.mubr.bf16.mxu0 %v1911
        %2229 = vmatmul.mubr.bf16.gmra.mrb[0].mxu0 %v1910
        %v2230 = vpop.f32.mrb[0].mxu0
        %v2231 = vadd.f32 %v1969, %v2230
        %v2232 = vpop.f32.mrb[0].mxu0
        %v2233 = vadd.f32 %v1973, %v2232
        %v2234 = vpop.f32.mrb[0].mxu0
        %v2235 = vadd.f32 %v1969, %v2234
        %v2236 = vpop.f32.mrb[0].mxu0
        %v2237 = vadd.f32 %v1973, %v2236
        %2238 = vmatprep.mubr.bf16.mxu0 %v1913
        %2239 = vmatmul.mubr.bf16.gmra.mrb[0].mxu0 %v1912
        %v2240 = vpop.f32.mrb[0].mxu0
        %v2241 = vadd.f32 %v1969, %v2240
        %v2242 = vpop.f32.mrb[0].mxu0
        %v2243 = vadd.f32 %v1973, %v2242
        %v2244 = vpop.f32.mrb[0].mxu0
        %v2245 = vadd.f32 %v1969, %v2244
        %v2246 = vpop.f32.mrb[0].mxu0
        %v2247 = vadd.f32 %v1973, %v2246
        %2248 = vmatprep.mubr.bf16.mxu0 %v1915
        %2249 = vmatmul.mubr.bf16.gmra.mrb[0].mxu0 %v1914
        %v2250 = vpop.f32.mrb[0].mxu0
        %v2251 = vadd.f32 %v1969, %v2250
        %v2252 = vpop.f32.mrb[0].mxu0
        %v2253 = vadd.f32 %v1973, %v2252
        %v2254 = vpop.f32.mrb[0].mxu0
        %v2255 = vadd.f32 %v1969, %v2254
        %v2256 = vpop.f32.mrb[0].mxu0
        %v2257 = vadd.f32 %v1973, %v2256
        %2258 = vmatprep.mubr.bf16.mxu0 %v1917
        %2259 = vmatmul.mubr.bf16.gmra.mrb[0].mxu0 %v1916
        %v2260 = vpop.f32.mrb[0].mxu0
        %v2261 = vadd.f32 %v1969, %v2260
        %v2262 = vpop.f32.mrb[0].mxu0
        %v2263 = vadd.f32 %v1973, %v2262
        %v2264 = vpop.f32.mrb[0].mxu0
        %v2265 = vadd.f32 %v1969, %v2264
        %v2266 = vpop.f32.mrb[0].mxu0
        %v2267 = vadd.f32 %v1973, %v2266
        %2268 = vmatprep.mubr.bf16.mxu0 %v1919
        %2269 = vmatmul.mubr.bf16.gmra.mrb[0].mxu0 %v1918
        %v2270 = vpop.f32.mrb[0].mxu0
        %v2271 = vadd.f32 %v1969, %v2270
        %v2272 = vpop.f32.mrb[0].mxu0
        %v2273 = vadd.f32 %v1973, %v2272
        %v2274 = vpop.f32.mrb[0].mxu0
        %v2275 = vadd.f32 %v1969, %v2274
        %v2276 = vpop.f32.mrb[0].mxu0
        %v2277 = vadd.f32 %v1973, %v2276
        %2278 = vmatprep.mubr.bf16.mxu0 %v1921
        %2279 = vmatmul.mubr.bf16.gmra.mrb[0].mxu0 %v1920
        %v2280 = vpop.f32.mrb[0].mxu0
        %v2281 = vadd.f32 %v1969, %v2280
        %v2282 = vpop.f32.mrb[0].mxu0
        %v2283 = vadd.f32 %v1973, %v2282
        %v2284 = vpop.f32.mrb[0].mxu0
        %v2285 = vadd.f32 %v1969, %v2284
        %v2286 = vpop.f32.mrb[0].mxu0
        %v2287 = vadd.f32 %v1973, %v2286
        %2288 = vmatprep.mubr.bf16.mxu0 %v1923
        %2289 = vmatmul.mubr.bf16.gmra.mrb[0].mxu0 %v1922
        %v2290 = vpop.f32.mrb[0].mxu0
        %v2291 = vadd.f32 %v1969, %v2290
        %v2292 = vpop.f32.mrb[0].mxu0
        %v2293 = vadd.f32 %v1973, %v2292
        %v2294 = vpop.f32.mrb[0].mxu0
        %v2295 = vadd.f32 %v1969, %v2294
        %v2296 = vpop.f32.mrb[0].mxu0
        %v2297 = vadd.f32 %v1973, %v2296
        %2298 = vmatprep.mubr.bf16.mxu0 %v1925
        %2299 = vmatmul.mubr.bf16.gmra.mrb[0].mxu0 %v1924
        %v2300 = vpop.f32.mrb[0].mxu0
        %v2301 = vadd.f32 %v1969, %v2300
        %v2302 = vpop.f32.mrb[0].mxu0
        %v2303 = vadd.f32 %v1973, %v2302
        %v2304 = vpop.f32.mrb[0].mxu0
        %v2305 = vadd.f32 %v1969, %v2304
        %v2306 = vpop.f32.mrb[0].mxu0
        %v2307 = vadd.f32 %v1973, %v2306
        %2308 = vmatprep.mubr.bf16.mxu0 %v1927
        %2309 = vmatmul.mubr.bf16.gmra.mrb[0].mxu0 %v1926
        %v2310 = vpop.f32.mrb[0].mxu0
        %v2311 = vadd.f32 %v1969, %v2310
        %v2312 = vpop.f32.mrb[0].mxu0
        %v2313 = vadd.f32 %v1973, %v2312
        %v2314 = vpop.f32.mrb[0].mxu0
        %v2315 = vadd.f32 %v1969, %v2314
        %v2316 = vpop.f32.mrb[0].mxu0
        %v2317 = vadd.f32 %v1973, %v2316
        %2318 = vmatprep.mubr.bf16.mxu0 %v1929
        %2319 = vmatmul.mubr.bf16.gmra.mrb[0].mxu0 %v1928
        %v2320 = vpop.f32.mrb[0].mxu0
        %v2321 = vadd.f32 %v1969, %v2320
        %v2322 = vpop.f32.mrb[0].mxu0
        %v2323 = vadd.f32 %v1973, %v2322
        %v2324 = vpop.f32.mrb[0].mxu0
        %v2325 = vadd.f32 %v1969, %v2324
        %v2326 = vpop.f32.mrb[0].mxu0
        %v2327 = vadd.f32 %v1973, %v2326
        %2328 = vdwg.mxu0
        %v2329 = vmax.f32 %v2171, 0.0
        %v2330 = vmax.f32 %v2173, 0.0
        %v2331 = vmax.f32 %v2175, 0.0
        %v2332 = vmax.f32 %v2177, 0.0
        %v2333 = vmax.f32 %v2181, 0.0
        %v2334 = vmax.f32 %v2183, 0.0
        %v2335 = vmax.f32 %v2185, 0.0
        %v2336 = vmax.f32 %v2187, 0.0
        %v2337 = vmax.f32 %v2191, 0.0
        %v2338 = vmax.f32 %v2193, 0.0
        %v2339 = vmax.f32 %v2195, 0.0
        %v2340 = vmax.f32 %v2197, 0.0
        %v2341 = vmax.f32 %v2201, 0.0
        %v2342 = vmax.f32 %v2203, 0.0
        %v2343 = vmax.f32 %v2205, 0.0
        %v2344 = vmax.f32 %v2207, 0.0
        %v2345 = vmax.f32 %v2211, 0.0
        %v2346 = vmax.f32 %v2213, 0.0
        %v2347 = vmax.f32 %v2215, 0.0
        %v2348 = vmax.f32 %v2217, 0.0
        %v2349 = vmax.f32 %v2221, 0.0
        %v2350 = vmax.f32 %v2223, 0.0
        %v2351 = vmax.f32 %v2225, 0.0
        %v2352 = vmax.f32 %v2227, 0.0
        %v2353 = vmax.f32 %v2231, 0.0
        %v2354 = vmax.f32 %v2233, 0.0
        %v2355 = vmax.f32 %v2235, 0.0
        %v2356 = vmax.f32 %v2237, 0.0
        %v2357 = vmax.f32 %v2241, 0.0
        %v2358 = vmax.f32 %v2243, 0.0
        %v2359 = vmax.f32 %v2245, 0.0
        %v2360 = vmax.f32 %v2247, 0.0
        %v2361 = vmax.f32 %v2251, 0.0
        %v2362 = vmax.f32 %v2253, 0.0
        %v2363 = vmax.f32 %v2255, 0.0
        %v2364 = vmax.f32 %v2257, 0.0
        %v2365 = vmax.f32 %v2261, 0.0
        %v2366 = vmax.f32 %v2263, 0.0
        %v2367 = vmax.f32 %v2265, 0.0
        %v2368 = vmax.f32 %v2267, 0.0
        %v2369 = vmax.f32 %v2271, 0.0
        %v2370 = vmax.f32 %v2273, 0.0
        %v2371 = vmax.f32 %v2275, 0.0
        %v2372 = vmax.f32 %v2277, 0.0
        %v2373 = vmax.f32 %v2281, 0.0
        %v2374 = vmax.f32 %v2283, 0.0
        %v2375 = vmax.f32 %v2285, 0.0
        %v2376 = vmax.f32 %v2287, 0.0
        %v2377 = vmax.f32 %v2291, 0.0
        %v2378 = vmax.f32 %v2293, 0.0
        %v2379 = vmax.f32 %v2295, 0.0
        %v2380 = vmax.f32 %v2297, 0.0
        %v2381 = vmax.f32 %v2301, 0.0
        %v2382 = vmax.f32 %v2303, 0.0
        %v2383 = vmax.f32 %v2305, 0.0
        %v2384 = vmax.f32 %v2307, 0.0
        %v2385 = vmax.f32 %v2311, 0.0
        %v2386 = vmax.f32 %v2313, 0.0
        %v2387 = vmax.f32 %v2315, 0.0
        %v2388 = vmax.f32 %v2317, 0.0
        %v2389 = vmax.f32 %v2321, 0.0
        %v2390 = vmax.f32 %v2323, 0.0
        %v2391 = vmax.f32 %v2325, 0.0
        %v2392 = vmax.f32 %v2327, 0.0
        %v2393 = vpack.c.bf16 %v2331, %v2329
        %v2394 = vpack.c.bf16 %v2332, %v2330
        %v2395 = vpack.c.bf16 %v2335, %v2333
        %v2396 = vpack.c.bf16 %v2336, %v2334
        %v2397 = vpack.c.bf16 %v2339, %v2337
        %v2398 = vpack.c.bf16 %v2340, %v2338
        %v2399 = vpack.c.bf16 %v2343, %v2341
        %v2400 = vpack.c.bf16 %v2344, %v2342
        %v2401 = vpack.c.bf16 %v2347, %v2345
        %v2402 = vpack.c.bf16 %v2348, %v2346
        %v2403 = vpack.c.bf16 %v2351, %v2349
        %v2404 = vpack.c.bf16 %v2352, %v2350
        %v2405 = vpack.c.bf16 %v2355, %v2353
        %v2406 = vpack.c.bf16 %v2356, %v2354
        %v2407 = vpack.c.bf16 %v2359, %v2357
        %v2408 = vpack.c.bf16 %v2360, %v2358
        %v2409 = vpack.c.bf16 %v2363, %v2361
        %v2410 = vpack.c.bf16 %v2364, %v2362
        %v2411 = vpack.c.bf16 %v2367, %v2365
        %v2412 = vpack.c.bf16 %v2368, %v2366
        %v2413 = vpack.c.bf16 %v2371, %v2369
        %v2414 = vpack.c.bf16 %v2372, %v2370
        %v2415 = vpack.c.bf16 %v2375, %v2373
        %v2416 = vpack.c.bf16 %v2376, %v2374
        %v2417 = vpack.c.bf16 %v2379, %v2377
        %v2418 = vpack.c.bf16 %v2380, %v2378
        %v2419 = vpack.c.bf16 %v2383, %v2381
        %v2420 = vpack.c.bf16 %v2384, %v2382
        %v2421 = vpack.c.bf16 %v2387, %v2385
        %v2422 = vpack.c.bf16 %v2388, %v2386
        %v2423 = vpack.c.bf16 %v2391, %v2389
        %v2424 = vpack.c.bf16 %v2392, %v2390
        %s2425 = scalar_lea.vmem [#allocation2], 768
        %v2426 = vld [vmem:[%s2425] sm:$0xff]
        %v2427 = vld [vmem:[%s2425 + $0x8] sm:$0xff]
        %v2428 = vld [vmem:[%s2425 + $0x10] sm:$0xff]
        %v2429 = vld [vmem:[%s2425 + $0x18] sm:$0xff]
        %v2430 = vld [vmem:[%s2425 + $0x20] sm:$0xff]
        %v2431 = vld [vmem:[%s2425 + $0x28] sm:$0xff]
        %v2432 = vld [vmem:[%s2425 + $0x30] sm:$0xff]
        %v2433 = vld [vmem:[%s2425 + $0x38] sm:$0xff]
        %v2434 = vld [vmem:[%s2425 + $0x40] sm:$0xff]
        %v2435 = vld [vmem:[%s2425 + $0x48] sm:$0xff]
        %v2436 = vld [vmem:[%s2425 + $0x50] sm:$0xff]
        %v2437 = vld [vmem:[%s2425 + $0x58] sm:$0xff]
        %v2438 = vld [vmem:[%s2425 + $0x60] sm:$0xff]
        %v2439 = vld [vmem:[%s2425 + $0x68] sm:$0xff]
        %v2440 = vld [vmem:[%s2425 + $0x70] sm:$0xff]
        %v2441 = vld [vmem:[%s2425 + $0x78] sm:$0xff]
        %v2442 = vld [vmem:[%s2425 + $0x80] sm:$0xff]
        %v2443 = vld [vmem:[%s2425 + $0x88] sm:$0xff]
        %v2444 = vld [vmem:[%s2425 + $0x90] sm:$0xff]
        %v2445 = vld [vmem:[%s2425 + $0x98] sm:$0xff]
        %v2446 = vld [vmem:[%s2425 + $0xa0] sm:$0xff]
        %v2447 = vld [vmem:[%s2425 + $0xa8] sm:$0xff]
        %v2448 = vld [vmem:[%s2425 + $0xb0] sm:$0xff]
        %v2449 = vld [vmem:[%s2425 + $0xb8] sm:$0xff]
        %v2450 = vld [vmem:[%s2425 + $0xc0] sm:$0xff]
        %v2451 = vld [vmem:[%s2425 + $0xc8] sm:$0xff]
        %v2452 = vld [vmem:[%s2425 + $0xd0] sm:$0xff]
        %v2453 = vld [vmem:[%s2425 + $0xd8] sm:$0xff]
        %v2454 = vld [vmem:[%s2425 + $0xe0] sm:$0xff]
        %v2455 = vld [vmem:[%s2425 + $0xe8] sm:$0xff]
        %v2456 = vld [vmem:[%s2425 + $0xf0] sm:$0xff]
        %v2457 = vld [vmem:[%s2425 + $0xf8] sm:$0xff]
        %s2458 = scalar_lea.vmem %s4, 8
        %v2459 = vld [vmem:[%s2458] sm:$0x3]
        %v2461 = vlaneseq
        %v2462 = vshrl.u32 %v2461, 7
        %v2463 = vsub.s32 0, %v2462
        %v2464 = vrot.slane %v2459, %v2463
        %v2465 = vlaneseq
        %v2466 = vshrl.u32 %v2465, 7
        %v2467 = vsub.s32 1, %v2466
        %v2468 = vrot.slane %v2459, %v2467
        %v2503 = vunpack.c.l.b16 %v2426
        %v2504 = vunpack.c.h.b16 %v2426
        %v2505 = vunpack.c.l.b16 %v2427
        %v2506 = vunpack.c.h.b16 %v2427
        %v2507 = vunpack.c.l.b16 %v2428
        %v2508 = vunpack.c.h.b16 %v2428
        %v2509 = vunpack.c.l.b16 %v2429
        %v2510 = vunpack.c.h.b16 %v2429
        %v2511 = vunpack.c.l.b16 %v2430
        %v2512 = vunpack.c.h.b16 %v2430
        %v2513 = vunpack.c.l.b16 %v2431
        %v2514 = vunpack.c.h.b16 %v2431
        %v2515 = vunpack.c.l.b16 %v2432
        %v2516 = vunpack.c.h.b16 %v2432
        %v2517 = vunpack.c.l.b16 %v2433
        %v2518 = vunpack.c.h.b16 %v2433
        %v2519 = vunpack.c.l.b16 %v2434
        %v2520 = vunpack.c.h.b16 %v2434
        %v2521 = vunpack.c.l.b16 %v2435
        %v2522 = vunpack.c.h.b16 %v2435
        %v2523 = vunpack.c.l.b16 %v2436
        %v2524 = vunpack.c.h.b16 %v2436
        %v2525 = vunpack.c.l.b16 %v2437
        %v2526 = vunpack.c.h.b16 %v2437
        %v2527 = vunpack.c.l.b16 %v2438
        %v2528 = vunpack.c.h.b16 %v2438
        %v2529 = vunpack.c.l.b16 %v2439
        %v2530 = vunpack.c.h.b16 %v2439
        %v2531 = vunpack.c.l.b16 %v2440
        %v2532 = vunpack.c.h.b16 %v2440
        %v2533 = vunpack.c.l.b16 %v2441
        %v2534 = vunpack.c.h.b16 %v2441
        %v2535 = vunpack.c.l.b16 %v2442
        %v2536 = vunpack.c.h.b16 %v2442
        %v2537 = vunpack.c.l.b16 %v2443
        %v2538 = vunpack.c.h.b16 %v2443
        %v2539 = vunpack.c.l.b16 %v2444
        %v2540 = vunpack.c.h.b16 %v2444
        %v2541 = vunpack.c.l.b16 %v2445
        %v2542 = vunpack.c.h.b16 %v2445
        %v2543 = vunpack.c.l.b16 %v2446
        %v2544 = vunpack.c.h.b16 %v2446
        %v2545 = vunpack.c.l.b16 %v2447
        %v2546 = vunpack.c.h.b16 %v2447
        %v2547 = vunpack.c.l.b16 %v2448
        %v2548 = vunpack.c.h.b16 %v2448
        %v2549 = vunpack.c.l.b16 %v2449
        %v2550 = vunpack.c.h.b16 %v2449
        %v2551 = vunpack.c.l.b16 %v2450
        %v2552 = vunpack.c.h.b16 %v2450
        %v2553 = vunpack.c.l.b16 %v2451
        %v2554 = vunpack.c.h.b16 %v2451
        %v2555 = vunpack.c.l.b16 %v2452
        %v2556 = vunpack.c.h.b16 %v2452
        %v2557 = vunpack.c.l.b16 %v2453
        %v2558 = vunpack.c.h.b16 %v2453
        %v2559 = vunpack.c.l.b16 %v2454
        %v2560 = vunpack.c.h.b16 %v2454
        %v2561 = vunpack.c.l.b16 %v2455
        %v2562 = vunpack.c.h.b16 %v2455
        %v2563 = vunpack.c.l.b16 %v2456
        %v2564 = vunpack.c.h.b16 %v2456
        %v2565 = vunpack.c.l.b16 %v2457
        %v2566 = vunpack.c.h.b16 %v2457
        %v2567 = vpack.c.b16 %v2505, %v2503
        %v2568 = vpack.c.b16 %v2506, %v2504
        %v2569 = vpack.c.b16 %v2509, %v2507
        %v2570 = vpack.c.b16 %v2510, %v2508
        %v2571 = vpack.c.b16 %v2513, %v2511
        %v2572 = vpack.c.b16 %v2514, %v2512
        %v2573 = vpack.c.b16 %v2517, %v2515
        %v2574 = vpack.c.b16 %v2518, %v2516
        %v2575 = vpack.c.b16 %v2521, %v2519
        %v2576 = vpack.c.b16 %v2522, %v2520
        %v2577 = vpack.c.b16 %v2525, %v2523
        %v2578 = vpack.c.b16 %v2526, %v2524
        %v2579 = vpack.c.b16 %v2529, %v2527
        %v2580 = vpack.c.b16 %v2530, %v2528
        %v2581 = vpack.c.b16 %v2533, %v2531
        %v2582 = vpack.c.b16 %v2534, %v2532
        %v2583 = vpack.c.b16 %v2537, %v2535
        %v2584 = vpack.c.b16 %v2538, %v2536
        %v2585 = vpack.c.b16 %v2541, %v2539
        %v2586 = vpack.c.b16 %v2542, %v2540
        %v2587 = vpack.c.b16 %v2545, %v2543
        %v2588 = vpack.c.b16 %v2546, %v2544
        %v2589 = vpack.c.b16 %v2549, %v2547
        %v2590 = vpack.c.b16 %v2550, %v2548
        %v2591 = vpack.c.b16 %v2553, %v2551
        %v2592 = vpack.c.b16 %v2554, %v2552
        %v2593 = vpack.c.b16 %v2557, %v2555
        %v2594 = vpack.c.b16 %v2558, %v2556
        %v2595 = vpack.c.b16 %v2561, %v2559
        %v2596 = vpack.c.b16 %v2562, %v2560
        %v2597 = vpack.c.b16 %v2565, %v2563
        %v2598 = vpack.c.b16 %v2566, %v2564
        %2631 = vmatprep.subr.bf16.mxu0 %v2568
        %2632 = vmatpush1.bf16.msra.mxu0 %v2567
        %2633 = vmatprep.subr.bf16.mxu0 %v2570
        %2634 = vmatpush1.bf16.msra.mxu0 %v2569
        %2635 = vmatprep.subr.bf16.mxu0 %v2572
        %2636 = vmatpush1.bf16.msra.mxu0 %v2571
        %2637 = vmatprep.subr.bf16.mxu0 %v2574
        %2638 = vmatpush1.bf16.msra.mxu0 %v2573
        %2639 = vmatprep.subr.bf16.mxu0 %v2576
        %2640 = vmatpush1.bf16.msra.mxu0 %v2575
        %2641 = vmatprep.subr.bf16.mxu0 %v2578
        %2642 = vmatpush1.bf16.msra.mxu0 %v2577
        %2643 = vmatprep.subr.bf16.mxu0 %v2580
        %2644 = vmatpush1.bf16.msra.mxu0 %v2579
        %2645 = vmatprep.subr.bf16.mxu0 %v2582
        %2646 = vmatpush1.bf16.msra.mxu0 %v2581
        %2647 = vmatprep.subr.bf16.mxu0 %v2584
        %2648 = vmatpush1.bf16.msra.mxu0 %v2583
        %2649 = vmatprep.subr.bf16.mxu0 %v2586
        %2650 = vmatpush1.bf16.msra.mxu0 %v2585
        %2651 = vmatprep.subr.bf16.mxu0 %v2588
        %2652 = vmatpush1.bf16.msra.mxu0 %v2587
        %2653 = vmatprep.subr.bf16.mxu0 %v2590
        %2654 = vmatpush1.bf16.msra.mxu0 %v2589
        %2655 = vmatprep.subr.bf16.mxu0 %v2592
        %2656 = vmatpush1.bf16.msra.mxu0 %v2591
        %2657 = vmatprep.subr.bf16.mxu0 %v2594
        %2658 = vmatpush1.bf16.msra.mxu0 %v2593
        %2659 = vmatprep.subr.bf16.mxu0 %v2596
        %2660 = vmatpush1.bf16.msra.mxu0 %v2595
        %2661 = vmatprep.subr.bf16.mxu0 %v2598
        %2662 = vmatpush1.bf16.msra.mxu0 %v2597
        %2663 = vmatprep.mubr.bf16.mxu0 %v2394
        %2664 = vmatmul.mubr.bf16.gmra.mrb[0].mxu0 %v2393
        %v2665 = vpop.f32.mrb[0].mxu0
        %v2666 = vadd.f32 %v2464, %v2665
        %v2667 = vpop.f32.mrb[0].mxu0
        %v2668 = vadd.f32 %v2468, %v2667
        %v2669 = vpop.f32.mrb[0].mxu0
        %v2670 = vadd.f32 %v2464, %v2669
        %v2671 = vpop.f32.mrb[0].mxu0
        %v2672 = vadd.f32 %v2468, %v2671
        %2673 = vmatprep.mubr.bf16.mxu0 %v2396
        %2674 = vmatmul.mubr.bf16.gmra.mrb[0].mxu0 %v2395
        %v2675 = vpop.f32.mrb[0].mxu0
        %v2676 = vadd.f32 %v2464, %v2675
        %v2677 = vpop.f32.mrb[0].mxu0
        %v2678 = vadd.f32 %v2468, %v2677
        %v2679 = vpop.f32.mrb[0].mxu0
        %v2680 = vadd.f32 %v2464, %v2679
        %v2681 = vpop.f32.mrb[0].mxu0
        %v2682 = vadd.f32 %v2468, %v2681
        %2683 = vmatprep.mubr.bf16.mxu0 %v2398
        %2684 = vmatmul.mubr.bf16.gmra.mrb[0].mxu0 %v2397
        %v2685 = vpop.f32.mrb[0].mxu0
        %v2686 = vadd.f32 %v2464, %v2685
        %v2687 = vpop.f32.mrb[0].mxu0
        %v2688 = vadd.f32 %v2468, %v2687
        %v2689 = vpop.f32.mrb[0].mxu0
        %v2690 = vadd.f32 %v2464, %v2689
        %v2691 = vpop.f32.mrb[0].mxu0
        %v2692 = vadd.f32 %v2468, %v2691
        %2693 = vmatprep.mubr.bf16.mxu0 %v2400
        %2694 = vmatmul.mubr.bf16.gmra.mrb[0].mxu0 %v2399
        %v2695 = vpop.f32.mrb[0].mxu0
        %v2696 = vadd.f32 %v2464, %v2695
        %v2697 = vpop.f32.mrb[0].mxu0
        %v2698 = vadd.f32 %v2468, %v2697
        %v2699 = vpop.f32.mrb[0].mxu0
        %v2700 = vadd.f32 %v2464, %v2699
        %v2701 = vpop.f32.mrb[0].mxu0
        %v2702 = vadd.f32 %v2468, %v2701
        %2703 = vmatprep.mubr.bf16.mxu0 %v2402
        %2704 = vmatmul.mubr.bf16.gmra.mrb[0].mxu0 %v2401
        %v2705 = vpop.f32.mrb[0].mxu0
        %v2706 = vadd.f32 %v2464, %v2705
        %v2707 = vpop.f32.mrb[0].mxu0
        %v2708 = vadd.f32 %v2468, %v2707
        %v2709 = vpop.f32.mrb[0].mxu0
        %v2710 = vadd.f32 %v2464, %v2709
        %v2711 = vpop.f32.mrb[0].mxu0
        %v2712 = vadd.f32 %v2468, %v2711
        %2713 = vmatprep.mubr.bf16.mxu0 %v2404
        %2714 = vmatmul.mubr.bf16.gmra.mrb[0].mxu0 %v2403
        %v2715 = vpop.f32.mrb[0].mxu0
        %v2716 = vadd.f32 %v2464, %v2715
        %v2717 = vpop.f32.mrb[0].mxu0
        %v2718 = vadd.f32 %v2468, %v2717
        %v2719 = vpop.f32.mrb[0].mxu0
        %v2720 = vadd.f32 %v2464, %v2719
        %v2721 = vpop.f32.mrb[0].mxu0
        %v2722 = vadd.f32 %v2468, %v2721
        %2723 = vmatprep.mubr.bf16.mxu0 %v2406
        %2724 = vmatmul.mubr.bf16.gmra.mrb[0].mxu0 %v2405
        %v2725 = vpop.f32.mrb[0].mxu0
        %v2726 = vadd.f32 %v2464, %v2725
        %v2727 = vpop.f32.mrb[0].mxu0
        %v2728 = vadd.f32 %v2468, %v2727
        %v2729 = vpop.f32.mrb[0].mxu0
        %v2730 = vadd.f32 %v2464, %v2729
        %v2731 = vpop.f32.mrb[0].mxu0
        %v2732 = vadd.f32 %v2468, %v2731
        %2733 = vmatprep.mubr.bf16.mxu0 %v2408
        %2734 = vmatmul.mubr.bf16.gmra.mrb[0].mxu0 %v2407
        %v2735 = vpop.f32.mrb[0].mxu0
        %v2736 = vadd.f32 %v2464, %v2735
        %v2737 = vpop.f32.mrb[0].mxu0
        %v2738 = vadd.f32 %v2468, %v2737
        %v2739 = vpop.f32.mrb[0].mxu0
        %v2740 = vadd.f32 %v2464, %v2739
        %v2741 = vpop.f32.mrb[0].mxu0
        %v2742 = vadd.f32 %v2468, %v2741
        %2743 = vmatprep.mubr.bf16.mxu0 %v2410
        %2744 = vmatmul.mubr.bf16.gmra.mrb[0].mxu0 %v2409
        %v2745 = vpop.f32.mrb[0].mxu0
        %v2746 = vadd.f32 %v2464, %v2745
        %v2747 = vpop.f32.mrb[0].mxu0
        %v2748 = vadd.f32 %v2468, %v2747
        %v2749 = vpop.f32.mrb[0].mxu0
        %v2750 = vadd.f32 %v2464, %v2749
        %v2751 = vpop.f32.mrb[0].mxu0
        %v2752 = vadd.f32 %v2468, %v2751
        %2753 = vmatprep.mubr.bf16.mxu0 %v2412
        %2754 = vmatmul.mubr.bf16.gmra.mrb[0].mxu0 %v2411
        %v2755 = vpop.f32.mrb[0].mxu0
        %v2756 = vadd.f32 %v2464, %v2755
        %v2757 = vpop.f32.mrb[0].mxu0
        %v2758 = vadd.f32 %v2468, %v2757
        %v2759 = vpop.f32.mrb[0].mxu0
        %v2760 = vadd.f32 %v2464, %v2759
        %v2761 = vpop.f32.mrb[0].mxu0
        %v2762 = vadd.f32 %v2468, %v2761
        %2763 = vmatprep.mubr.bf16.mxu0 %v2414
        %2764 = vmatmul.mubr.bf16.gmra.mrb[0].mxu0 %v2413
        %v2765 = vpop.f32.mrb[0].mxu0
        %v2766 = vadd.f32 %v2464, %v2765
        %v2767 = vpop.f32.mrb[0].mxu0
        %v2768 = vadd.f32 %v2468, %v2767
        %v2769 = vpop.f32.mrb[0].mxu0
        %v2770 = vadd.f32 %v2464, %v2769
        %v2771 = vpop.f32.mrb[0].mxu0
        %v2772 = vadd.f32 %v2468, %v2771
        %2773 = vmatprep.mubr.bf16.mxu0 %v2416
        %2774 = vmatmul.mubr.bf16.gmra.mrb[0].mxu0 %v2415
        %v2775 = vpop.f32.mrb[0].mxu0
        %v2776 = vadd.f32 %v2464, %v2775
        %v2777 = vpop.f32.mrb[0].mxu0
        %v2778 = vadd.f32 %v2468, %v2777
        %v2779 = vpop.f32.mrb[0].mxu0
        %v2780 = vadd.f32 %v2464, %v2779
        %v2781 = vpop.f32.mrb[0].mxu0
        %v2782 = vadd.f32 %v2468, %v2781
        %2783 = vmatprep.mubr.bf16.mxu0 %v2418
        %2784 = vmatmul.mubr.bf16.gmra.mrb[0].mxu0 %v2417
        %v2785 = vpop.f32.mrb[0].mxu0
        %v2786 = vadd.f32 %v2464, %v2785
        %v2787 = vpop.f32.mrb[0].mxu0
        %v2788 = vadd.f32 %v2468, %v2787
        %v2789 = vpop.f32.mrb[0].mxu0
        %v2790 = vadd.f32 %v2464, %v2789
        %v2791 = vpop.f32.mrb[0].mxu0
        %v2792 = vadd.f32 %v2468, %v2791
        %2793 = vmatprep.mubr.bf16.mxu0 %v2420
        %2794 = vmatmul.mubr.bf16.gmra.mrb[0].mxu0 %v2419
        %v2795 = vpop.f32.mrb[0].mxu0
        %v2796 = vadd.f32 %v2464, %v2795
        %v2797 = vpop.f32.mrb[0].mxu0
        %v2798 = vadd.f32 %v2468, %v2797
        %v2799 = vpop.f32.mrb[0].mxu0
        %v2800 = vadd.f32 %v2464, %v2799
        %v2801 = vpop.f32.mrb[0].mxu0
        %v2802 = vadd.f32 %v2468, %v2801
        %2803 = vmatprep.mubr.bf16.mxu0 %v2422
        %2804 = vmatmul.mubr.bf16.gmra.mrb[0].mxu0 %v2421
        %v2805 = vpop.f32.mrb[0].mxu0
        %v2806 = vadd.f32 %v2464, %v2805
        %v2807 = vpop.f32.mrb[0].mxu0
        %v2808 = vadd.f32 %v2468, %v2807
        %v2809 = vpop.f32.mrb[0].mxu0
        %v2810 = vadd.f32 %v2464, %v2809
        %v2811 = vpop.f32.mrb[0].mxu0
        %v2812 = vadd.f32 %v2468, %v2811
        %2813 = vmatprep.mubr.bf16.mxu0 %v2424
        %2814 = vmatmul.mubr.bf16.gmra.mrb[0].mxu0 %v2423
        %v2815 = vpop.f32.mrb[0].mxu0
        %v2816 = vadd.f32 %v2464, %v2815
        %v2817 = vpop.f32.mrb[0].mxu0
        %v2818 = vadd.f32 %v2468, %v2817
        %v2819 = vpop.f32.mrb[0].mxu0
        %v2820 = vadd.f32 %v2464, %v2819
        %v2821 = vpop.f32.mrb[0].mxu0
        %v2822 = vadd.f32 %v2468, %v2821
        %2823 = vdwg.mxu0
        %v2824 = vmax.f32 %v2666, 0.0
        %v2825 = vmax.f32 %v2668, 0.0
        %v2826 = vmax.f32 %v2670, 0.0
        %v2827 = vmax.f32 %v2672, 0.0
        %v2828 = vmax.f32 %v2676, 0.0
        %v2829 = vmax.f32 %v2678, 0.0
        %v2830 = vmax.f32 %v2680, 0.0
        %v2831 = vmax.f32 %v2682, 0.0
        %v2832 = vmax.f32 %v2686, 0.0
        %v2833 = vmax.f32 %v2688, 0.0
        %v2834 = vmax.f32 %v2690, 0.0
        %v2835 = vmax.f32 %v2692, 0.0
        %v2836 = vmax.f32 %v2696, 0.0
        %v2837 = vmax.f32 %v2698, 0.0
        %v2838 = vmax.f32 %v2700, 0.0
        %v2839 = vmax.f32 %v2702, 0.0
        %v2840 = vmax.f32 %v2706, 0.0
        %v2841 = vmax.f32 %v2708, 0.0
        %v2842 = vmax.f32 %v2710, 0.0
        %v2843 = vmax.f32 %v2712, 0.0
        %v2844 = vmax.f32 %v2716, 0.0
        %v2845 = vmax.f32 %v2718, 0.0
        %v2846 = vmax.f32 %v2720, 0.0
        %v2847 = vmax.f32 %v2722, 0.0
        %v2848 = vmax.f32 %v2726, 0.0
        %v2849 = vmax.f32 %v2728, 0.0
        %v2850 = vmax.f32 %v2730, 0.0
        %v2851 = vmax.f32 %v2732, 0.0
        %v2852 = vmax.f32 %v2736, 0.0
        %v2853 = vmax.f32 %v2738, 0.0
        %v2854 = vmax.f32 %v2740, 0.0
        %v2855 = vmax.f32 %v2742, 0.0
        %v2856 = vmax.f32 %v2746, 0.0
        %v2857 = vmax.f32 %v2748, 0.0
        %v2858 = vmax.f32 %v2750, 0.0
        %v2859 = vmax.f32 %v2752, 0.0
        %v2860 = vmax.f32 %v2756, 0.0
        %v2861 = vmax.f32 %v2758, 0.0
        %v2862 = vmax.f32 %v2760, 0.0
        %v2863 = vmax.f32 %v2762, 0.0
        %v2864 = vmax.f32 %v2766, 0.0
        %v2865 = vmax.f32 %v2768, 0.0
        %v2866 = vmax.f32 %v2770, 0.0
        %v2867 = vmax.f32 %v2772, 0.0
        %v2868 = vmax.f32 %v2776, 0.0
        %v2869 = vmax.f32 %v2778, 0.0
        %v2870 = vmax.f32 %v2780, 0.0
        %v2871 = vmax.f32 %v2782, 0.0
        %v2872 = vmax.f32 %v2786, 0.0
        %v2873 = vmax.f32 %v2788, 0.0
        %v2874 = vmax.f32 %v2790, 0.0
        %v2875 = vmax.f32 %v2792, 0.0
        %v2876 = vmax.f32 %v2796, 0.0
        %v2877 = vmax.f32 %v2798, 0.0
        %v2878 = vmax.f32 %v2800, 0.0
        %v2879 = vmax.f32 %v2802, 0.0
        %v2880 = vmax.f32 %v2806, 0.0
        %v2881 = vmax.f32 %v2808, 0.0
        %v2882 = vmax.f32 %v2810, 0.0
        %v2883 = vmax.f32 %v2812, 0.0
        %v2884 = vmax.f32 %v2816, 0.0
        %v2885 = vmax.f32 %v2818, 0.0
        %v2886 = vmax.f32 %v2820, 0.0
        %v2887 = vmax.f32 %v2822, 0.0
        %v2888 = vpack.c.bf16 %v2826, %v2824
        %v2889 = vpack.c.bf16 %v2827, %v2825
        %v2890 = vpack.c.bf16 %v2830, %v2828
        %v2891 = vpack.c.bf16 %v2831, %v2829
        %v2892 = vpack.c.bf16 %v2834, %v2832
        %v2893 = vpack.c.bf16 %v2835, %v2833
        %v2894 = vpack.c.bf16 %v2838, %v2836
        %v2895 = vpack.c.bf16 %v2839, %v2837
        %v2896 = vpack.c.bf16 %v2842, %v2840
        %v2897 = vpack.c.bf16 %v2843, %v2841
        %v2898 = vpack.c.bf16 %v2846, %v2844
        %v2899 = vpack.c.bf16 %v2847, %v2845
        %v2900 = vpack.c.bf16 %v2850, %v2848
        %v2901 = vpack.c.bf16 %v2851, %v2849
        %v2902 = vpack.c.bf16 %v2854, %v2852
        %v2903 = vpack.c.bf16 %v2855, %v2853
        %v2904 = vpack.c.bf16 %v2858, %v2856
        %v2905 = vpack.c.bf16 %v2859, %v2857
        %v2906 = vpack.c.bf16 %v2862, %v2860
        %v2907 = vpack.c.bf16 %v2863, %v2861
        %v2908 = vpack.c.bf16 %v2866, %v2864
        %v2909 = vpack.c.bf16 %v2867, %v2865
        %v2910 = vpack.c.bf16 %v2870, %v2868
        %v2911 = vpack.c.bf16 %v2871, %v2869
        %v2912 = vpack.c.bf16 %v2874, %v2872
        %v2913 = vpack.c.bf16 %v2875, %v2873
        %v2914 = vpack.c.bf16 %v2878, %v2876
        %v2915 = vpack.c.bf16 %v2879, %v2877
        %v2916 = vpack.c.bf16 %v2882, %v2880
        %v2917 = vpack.c.bf16 %v2883, %v2881
        %v2918 = vpack.c.bf16 %v2886, %v2884
        %v2919 = vpack.c.bf16 %v2887, %v2885
        %s2920 = scalar_lea.vmem [#allocation2], 1024
        %v2921 = vld [vmem:[%s2920] sm:$0xff]
        %v2922 = vld [vmem:[%s2920 + $0x8] sm:$0xff]
        %v2923 = vld [vmem:[%s2920 + $0x10] sm:$0xff]
        %v2924 = vld [vmem:[%s2920 + $0x18] sm:$0xff]
        %v2925 = vld [vmem:[%s2920 + $0x20] sm:$0xff]
        %v2926 = vld [vmem:[%s2920 + $0x28] sm:$0xff]
        %v2927 = vld [vmem:[%s2920 + $0x30] sm:$0xff]
        %v2928 = vld [vmem:[%s2920 + $0x38] sm:$0xff]
        %v2929 = vld [vmem:[%s2920 + $0x40] sm:$0xff]
        %v2930 = vld [vmem:[%s2920 + $0x48] sm:$0xff]
        %v2931 = vld [vmem:[%s2920 + $0x50] sm:$0xff]
        %v2932 = vld [vmem:[%s2920 + $0x58] sm:$0xff]
        %v2933 = vld [vmem:[%s2920 + $0x60] sm:$0xff]
        %v2934 = vld [vmem:[%s2920 + $0x68] sm:$0xff]
        %v2935 = vld [vmem:[%s2920 + $0x70] sm:$0xff]
        %v2936 = vld [vmem:[%s2920 + $0x78] sm:$0xff]
        %v2937 = vld [vmem:[%s2920 + $0x80] sm:$0xff]
        %v2938 = vld [vmem:[%s2920 + $0x88] sm:$0xff]
        %v2939 = vld [vmem:[%s2920 + $0x90] sm:$0xff]
        %v2940 = vld [vmem:[%s2920 + $0x98] sm:$0xff]
        %v2941 = vld [vmem:[%s2920 + $0xa0] sm:$0xff]
        %v2942 = vld [vmem:[%s2920 + $0xa8] sm:$0xff]
        %v2943 = vld [vmem:[%s2920 + $0xb0] sm:$0xff]
        %v2944 = vld [vmem:[%s2920 + $0xb8] sm:$0xff]
        %v2945 = vld [vmem:[%s2920 + $0xc0] sm:$0xff]
        %v2946 = vld [vmem:[%s2920 + $0xc8] sm:$0xff]
        %v2947 = vld [vmem:[%s2920 + $0xd0] sm:$0xff]
        %v2948 = vld [vmem:[%s2920 + $0xd8] sm:$0xff]
        %v2949 = vld [vmem:[%s2920 + $0xe0] sm:$0xff]
        %v2950 = vld [vmem:[%s2920 + $0xe8] sm:$0xff]
        %v2951 = vld [vmem:[%s2920 + $0xf0] sm:$0xff]
        %v2952 = vld [vmem:[%s2920 + $0xf8] sm:$0xff]
        %s2953 = scalar_lea.vmem %s2, 64
        %v2954 = vld [vmem:[%s2953] sm:$0xff]
        %v2955 = vld [vmem:[%s2953 + $0x8] sm:$0xff]
        %v2956 = vld [vmem:[%s2953 + $0x10] sm:$0xff]
        %v2957 = vld [vmem:[%s2953 + $0x18] sm:$0xff]
        %v2958 = vld [vmem:[%s2953 + $0x20] sm:$0xff]
        %v2959 = vld [vmem:[%s2953 + $0x28] sm:$0xff]
        %v2960 = vld [vmem:[%s2953 + $0x30] sm:$0xff]
        %v2961 = vld [vmem:[%s2953 + $0x38] sm:$0xff]
        %v2970 = vunpack.c.l.b16 %v2954
        %v2971 = vunpack.c.h.b16 %v2954
        %v2972 = vunpack.c.l.b16 %v2955
        %v2973 = vunpack.c.h.b16 %v2955
        %v2974 = vunpack.c.l.b16 %v2956
        %v2975 = vunpack.c.h.b16 %v2956
        %v2976 = vunpack.c.l.b16 %v2957
        %v2977 = vunpack.c.h.b16 %v2957
        %v2978 = vunpack.c.l.b16 %v2958
        %v2979 = vunpack.c.h.b16 %v2958
        %v2980 = vunpack.c.l.b16 %v2959
        %v2981 = vunpack.c.h.b16 %v2959
        %v2982 = vunpack.c.l.b16 %v2960
        %v2983 = vunpack.c.h.b16 %v2960
        %v2984 = vunpack.c.l.b16 %v2961
        %v2985 = vunpack.c.h.b16 %v2961
        %v2986 = vpack.c.b16 %v2972, %v2970
        %v2987 = vpack.c.b16 %v2973, %v2971
        %v2988 = vpack.c.b16 %v2976, %v2974
        %v2989 = vpack.c.b16 %v2977, %v2975
        %v2990 = vpack.c.b16 %v2980, %v2978
        %v2991 = vpack.c.b16 %v2981, %v2979
        %v2992 = vpack.c.b16 %v2984, %v2982
        %v2993 = vpack.c.b16 %v2985, %v2983
        %3002 = vmatprep.subr.bf16.mxu0 %v2987
        %3003 = vmatpush1.bf16.msra.mxu0 %v2986
        %3004 = vmatprep.subr.bf16.mxu0 %v2989
        %3005 = vmatpush1.bf16.msra.mxu0 %v2988
        %3006 = vmatprep.subr.bf16.mxu0 %v2991
        %3007 = vmatpush1.bf16.msra.mxu0 %v2990
        %3008 = vmatprep.subr.bf16.mxu0 %v2993
        %3009 = vmatpush1.bf16.msra.mxu0 %v2992
        %3010 = vmatprep.subr.bf16.mxu0 0
        %3011 = vmatpush1.bf16.msra.mxu0 0
        %3012 = vmatprep.subr.bf16.mxu0 0
        %3013 = vmatpush1.bf16.msra.mxu0 0
        %3014 = vmatprep.subr.bf16.mxu0 0
        %3015 = vmatpush1.bf16.msra.mxu0 0
        %3016 = vmatprep.subr.bf16.mxu0 0
        %3017 = vmatpush1.bf16.msra.mxu0 0
        %3018 = vmatprep.subr.bf16.mxu0 0
        %3019 = vmatpush1.bf16.msra.mxu0 0
        %3020 = vmatprep.subr.bf16.mxu0 0
        %3021 = vmatpush1.bf16.msra.mxu0 0
        %3022 = vmatprep.subr.bf16.mxu0 0
        %3023 = vmatpush1.bf16.msra.mxu0 0
        %3024 = vmatprep.subr.bf16.mxu0 0
        %3025 = vmatpush1.bf16.msra.mxu0 0
        %3026 = vmatprep.subr.bf16.mxu0 0
        %3027 = vmatpush1.bf16.msra.mxu0 0
        %3028 = vmatprep.subr.bf16.mxu0 0
        %3029 = vmatpush1.bf16.msra.mxu0 0
        %3030 = vmatprep.subr.bf16.mxu0 0
        %3031 = vmatpush1.bf16.msra.mxu0 0
        %3032 = vmatprep.subr.bf16.mxu0 0
        %3033 = vmatpush1.bf16.msra.mxu0 0
        %3034 = vmatprep.mubr.bf16.mxu0 0
        %3035 = vmatmul.mubr.bf16.gmra.mrb[0].mxu0 %v605
        %v3036 = vpop.f32.mrb[0].mxu0
        %v3037 = vadd.f32 0.0, %v3036
        %v3038 = vpop.f32.mrb[0].mxu0
        %v3039 = vadd.f32 0.0, %v3038
        %v3040 = vpop.f32.mrb[0].mxu0
        %v3041 = vadd.f32 0.0, %v3040
        %v3042 = vpop.f32.mrb[0].mxu0
        %v3043 = vadd.f32 0.0, %v3042
        %3044 = vmatprep.mubr.bf16.mxu0 0
        %3045 = vmatmul.mubr.bf16.gmra.mrb[0].mxu0 %v608
        %v3046 = vpop.f32.mrb[0].mxu0
        %v3047 = vadd.f32 0.0, %v3046
        %v3048 = vpop.f32.mrb[0].mxu0
        %v3049 = vadd.f32 0.0, %v3048
        %v3050 = vpop.f32.mrb[0].mxu0
        %v3051 = vadd.f32 0.0, %v3050
        %v3052 = vpop.f32.mrb[0].mxu0
        %v3053 = vadd.f32 0.0, %v3052
        %3054 = vmatprep.mubr.bf16.mxu0 0
        %3055 = vmatmul.mubr.bf16.gmra.mrb[0].mxu0 %v611
        %v3056 = vpop.f32.mrb[0].mxu0
        %v3057 = vadd.f32 0.0, %v3056
        %v3058 = vpop.f32.mrb[0].mxu0
        %v3059 = vadd.f32 0.0, %v3058
        %v3060 = vpop.f32.mrb[0].mxu0
        %v3061 = vadd.f32 0.0, %v3060
        %v3062 = vpop.f32.mrb[0].mxu0
        %v3063 = vadd.f32 0.0, %v3062
        %3064 = vmatprep.mubr.bf16.mxu0 0
        %3065 = vmatmul.mubr.bf16.gmra.mrb[0].mxu0 %v614
        %v3066 = vpop.f32.mrb[0].mxu0
        %v3067 = vadd.f32 0.0, %v3066
        %v3068 = vpop.f32.mrb[0].mxu0
        %v3069 = vadd.f32 0.0, %v3068
        %v3070 = vpop.f32.mrb[0].mxu0
        %v3071 = vadd.f32 0.0, %v3070
        %v3072 = vpop.f32.mrb[0].mxu0
        %v3073 = vadd.f32 0.0, %v3072
        %3074 = vmatprep.mubr.bf16.mxu0 0
        %3075 = vmatmul.mubr.bf16.gmra.mrb[0].mxu0 %v617
        %v3076 = vpop.f32.mrb[0].mxu0
        %v3077 = vadd.f32 0.0, %v3076
        %v3078 = vpop.f32.mrb[0].mxu0
        %v3079 = vadd.f32 0.0, %v3078
        %v3080 = vpop.f32.mrb[0].mxu0
        %v3081 = vadd.f32 0.0, %v3080
        %v3082 = vpop.f32.mrb[0].mxu0
        %v3083 = vadd.f32 0.0, %v3082
        %3084 = vmatprep.mubr.bf16.mxu0 0
        %3085 = vmatmul.mubr.bf16.gmra.mrb[0].mxu0 %v620
        %v3086 = vpop.f32.mrb[0].mxu0
        %v3087 = vadd.f32 0.0, %v3086
        %v3088 = vpop.f32.mrb[0].mxu0
        %v3089 = vadd.f32 0.0, %v3088
        %v3090 = vpop.f32.mrb[0].mxu0
        %v3091 = vadd.f32 0.0, %v3090
        %v3092 = vpop.f32.mrb[0].mxu0
        %v3093 = vadd.f32 0.0, %v3092
        %3094 = vmatprep.mubr.bf16.mxu0 0
        %3095 = vmatmul.mubr.bf16.gmra.mrb[0].mxu0 %v623
        %v3096 = vpop.f32.mrb[0].mxu0
        %v3097 = vadd.f32 0.0, %v3096
        %v3098 = vpop.f32.mrb[0].mxu0
        %v3099 = vadd.f32 0.0, %v3098
        %v3100 = vpop.f32.mrb[0].mxu0
        %v3101 = vadd.f32 0.0, %v3100
        %v3102 = vpop.f32.mrb[0].mxu0
        %v3103 = vadd.f32 0.0, %v3102
        %3104 = vmatprep.mubr.bf16.mxu0 0
        %3105 = vmatmul.mubr.bf16.gmra.mrb[0].mxu0 %v626
        %v3106 = vpop.f32.mrb[0].mxu0
        %v3107 = vadd.f32 0.0, %v3106
        %v3108 = vpop.f32.mrb[0].mxu0
        %v3109 = vadd.f32 0.0, %v3108
        %v3110 = vpop.f32.mrb[0].mxu0
        %v3111 = vadd.f32 0.0, %v3110
        %v3112 = vpop.f32.mrb[0].mxu0
        %v3113 = vadd.f32 0.0, %v3112
        %3114 = vmatprep.mubr.bf16.mxu0 0
        %3115 = vmatmul.mubr.bf16.gmra.mrb[0].mxu0 %v629
        %v3116 = vpop.f32.mrb[0].mxu0
        %v3117 = vadd.f32 0.0, %v3116
        %v3118 = vpop.f32.mrb[0].mxu0
        %v3119 = vadd.f32 0.0, %v3118
        %v3120 = vpop.f32.mrb[0].mxu0
        %v3121 = vadd.f32 0.0, %v3120
        %v3122 = vpop.f32.mrb[0].mxu0
        %v3123 = vadd.f32 0.0, %v3122
        %3124 = vmatprep.mubr.bf16.mxu0 0
        %3125 = vmatmul.mubr.bf16.gmra.mrb[0].mxu0 %v632
        %v3126 = vpop.f32.mrb[0].mxu0
        %v3127 = vadd.f32 0.0, %v3126
        %v3128 = vpop.f32.mrb[0].mxu0
        %v3129 = vadd.f32 0.0, %v3128
        %v3130 = vpop.f32.mrb[0].mxu0
        %v3131 = vadd.f32 0.0, %v3130
        %v3132 = vpop.f32.mrb[0].mxu0
        %v3133 = vadd.f32 0.0, %v3132
        %3134 = vmatprep.mubr.bf16.mxu0 0
        %3135 = vmatmul.mubr.bf16.gmra.mrb[0].mxu0 %v635
        %v3136 = vpop.f32.mrb[0].mxu0
        %v3137 = vadd.f32 0.0, %v3136
        %v3138 = vpop.f32.mrb[0].mxu0
        %v3139 = vadd.f32 0.0, %v3138
        %v3140 = vpop.f32.mrb[0].mxu0
        %v3141 = vadd.f32 0.0, %v3140
        %v3142 = vpop.f32.mrb[0].mxu0
        %v3143 = vadd.f32 0.0, %v3142
        %3144 = vmatprep.mubr.bf16.mxu0 0
        %3145 = vmatmul.mubr.bf16.gmra.mrb[0].mxu0 %v638
        %v3146 = vpop.f32.mrb[0].mxu0
        %v3147 = vadd.f32 0.0, %v3146
        %v3148 = vpop.f32.mrb[0].mxu0
        %v3149 = vadd.f32 0.0, %v3148
        %v3150 = vpop.f32.mrb[0].mxu0
        %v3151 = vadd.f32 0.0, %v3150
        %v3152 = vpop.f32.mrb[0].mxu0
        %v3153 = vadd.f32 0.0, %v3152
        %3154 = vmatprep.mubr.bf16.mxu0 0
        %3155 = vmatmul.mubr.bf16.gmra.mrb[0].mxu0 %v641
        %v3156 = vpop.f32.mrb[0].mxu0
        %v3157 = vadd.f32 0.0, %v3156
        %v3158 = vpop.f32.mrb[0].mxu0
        %v3159 = vadd.f32 0.0, %v3158
        %v3160 = vpop.f32.mrb[0].mxu0
        %v3161 = vadd.f32 0.0, %v3160
        %v3162 = vpop.f32.mrb[0].mxu0
        %v3163 = vadd.f32 0.0, %v3162
        %3164 = vmatprep.mubr.bf16.mxu0 0
        %3165 = vmatmul.mubr.bf16.gmra.mrb[0].mxu0 %v644
        %v3166 = vpop.f32.mrb[0].mxu0
        %v3167 = vadd.f32 0.0, %v3166
        %v3168 = vpop.f32.mrb[0].mxu0
        %v3169 = vadd.f32 0.0, %v3168
        %v3170 = vpop.f32.mrb[0].mxu0
        %v3171 = vadd.f32 0.0, %v3170
        %v3172 = vpop.f32.mrb[0].mxu0
        %v3173 = vadd.f32 0.0, %v3172
        %3174 = vmatprep.mubr.bf16.mxu0 0
        %3175 = vmatmul.mubr.bf16.gmra.mrb[0].mxu0 %v647
        %v3176 = vpop.f32.mrb[0].mxu0
        %v3177 = vadd.f32 0.0, %v3176
        %v3178 = vpop.f32.mrb[0].mxu0
        %v3179 = vadd.f32 0.0, %v3178
        %v3180 = vpop.f32.mrb[0].mxu0
        %v3181 = vadd.f32 0.0, %v3180
        %v3182 = vpop.f32.mrb[0].mxu0
        %v3183 = vadd.f32 0.0, %v3182
        %3184 = vmatprep.mubr.bf16.mxu0 0
        %3185 = vmatmul.mubr.bf16.gmra.mrb[0].mxu0 %v650
        %v3186 = vpop.f32.mrb[0].mxu0
        %v3187 = vadd.f32 0.0, %v3186
        %v3188 = vpop.f32.mrb[0].mxu0
        %v3189 = vadd.f32 0.0, %v3188
        %v3190 = vpop.f32.mrb[0].mxu0
        %v3191 = vadd.f32 0.0, %v3190
        %v3192 = vpop.f32.mrb[0].mxu0
        %v3193 = vadd.f32 0.0, %v3192
        %3194 = vdwg.mxu0
        %v3227 = vunpack.c.l.b16 %v2921
        %v3228 = vunpack.c.h.b16 %v2921
        %v3229 = vunpack.c.l.b16 %v2922
        %v3230 = vunpack.c.h.b16 %v2922
        %v3231 = vunpack.c.l.b16 %v2923
        %v3232 = vunpack.c.h.b16 %v2923
        %v3233 = vunpack.c.l.b16 %v2924
        %v3234 = vunpack.c.h.b16 %v2924
        %v3235 = vunpack.c.l.b16 %v2925
        %v3236 = vunpack.c.h.b16 %v2925
        %v3237 = vunpack.c.l.b16 %v2926
        %v3238 = vunpack.c.h.b16 %v2926
        %v3239 = vunpack.c.l.b16 %v2927
        %v3240 = vunpack.c.h.b16 %v2927
        %v3241 = vunpack.c.l.b16 %v2928
        %v3242 = vunpack.c.h.b16 %v2928
        %v3243 = vunpack.c.l.b16 %v2929
        %v3244 = vunpack.c.h.b16 %v2929
        %v3245 = vunpack.c.l.b16 %v2930
        %v3246 = vunpack.c.h.b16 %v2930
        %v3247 = vunpack.c.l.b16 %v2931
        %v3248 = vunpack.c.h.b16 %v2931
        %v3249 = vunpack.c.l.b16 %v2932
        %v3250 = vunpack.c.h.b16 %v2932
        %v3251 = vunpack.c.l.b16 %v2933
        %v3252 = vunpack.c.h.b16 %v2933
        %v3253 = vunpack.c.l.b16 %v2934
        %v3254 = vunpack.c.h.b16 %v2934
        %v3255 = vunpack.c.l.b16 %v2935
        %v3256 = vunpack.c.h.b16 %v2935
        %v3257 = vunpack.c.l.b16 %v2936
        %v3258 = vunpack.c.h.b16 %v2936
        %v3259 = vunpack.c.l.b16 %v2937
        %v3260 = vunpack.c.h.b16 %v2937
        %v3261 = vunpack.c.l.b16 %v2938
        %v3262 = vunpack.c.h.b16 %v2938
        %v3263 = vunpack.c.l.b16 %v2939
        %v3264 = vunpack.c.h.b16 %v2939
        %v3265 = vunpack.c.l.b16 %v2940
        %v3266 = vunpack.c.h.b16 %v2940
        %v3267 = vunpack.c.l.b16 %v2941
        %v3268 = vunpack.c.h.b16 %v2941
        %v3269 = vunpack.c.l.b16 %v2942
        %v3270 = vunpack.c.h.b16 %v2942
        %v3271 = vunpack.c.l.b16 %v2943
        %v3272 = vunpack.c.h.b16 %v2943
        %v3273 = vunpack.c.l.b16 %v2944
        %v3274 = vunpack.c.h.b16 %v2944
        %v3275 = vunpack.c.l.b16 %v2945
        %v3276 = vunpack.c.h.b16 %v2945
        %v3277 = vunpack.c.l.b16 %v2946
        %v3278 = vunpack.c.h.b16 %v2946
        %v3279 = vunpack.c.l.b16 %v2947
        %v3280 = vunpack.c.h.b16 %v2947
        %v3281 = vunpack.c.l.b16 %v2948
        %v3282 = vunpack.c.h.b16 %v2948
        %v3283 = vunpack.c.l.b16 %v2949
        %v3284 = vunpack.c.h.b16 %v2949
        %v3285 = vunpack.c.l.b16 %v2950
        %v3286 = vunpack.c.h.b16 %v2950
        %v3287 = vunpack.c.l.b16 %v2951
        %v3288 = vunpack.c.h.b16 %v2951
        %v3289 = vunpack.c.l.b16 %v2952
        %v3290 = vunpack.c.h.b16 %v2952
        %v3291 = vpack.c.b16 %v3229, %v3227
        %v3292 = vpack.c.b16 %v3230, %v3228
        %v3293 = vpack.c.b16 %v3233, %v3231
        %v3294 = vpack.c.b16 %v3234, %v3232
        %v3295 = vpack.c.b16 %v3237, %v3235
        %v3296 = vpack.c.b16 %v3238, %v3236
        %v3297 = vpack.c.b16 %v3241, %v3239
        %v3298 = vpack.c.b16 %v3242, %v3240
        %v3299 = vpack.c.b16 %v3245, %v3243
        %v3300 = vpack.c.b16 %v3246, %v3244
        %v3301 = vpack.c.b16 %v3249, %v3247
        %v3302 = vpack.c.b16 %v3250, %v3248
        %v3303 = vpack.c.b16 %v3253, %v3251
        %v3304 = vpack.c.b16 %v3254, %v3252
        %v3305 = vpack.c.b16 %v3257, %v3255
        %v3306 = vpack.c.b16 %v3258, %v3256
        %v3307 = vpack.c.b16 %v3261, %v3259
        %v3308 = vpack.c.b16 %v3262, %v3260
        %v3309 = vpack.c.b16 %v3265, %v3263
        %v3310 = vpack.c.b16 %v3266, %v3264
        %v3311 = vpack.c.b16 %v3269, %v3267
        %v3312 = vpack.c.b16 %v3270, %v3268
        %v3313 = vpack.c.b16 %v3273, %v3271
        %v3314 = vpack.c.b16 %v3274, %v3272
        %v3315 = vpack.c.b16 %v3277, %v3275
        %v3316 = vpack.c.b16 %v3278, %v3276
        %v3317 = vpack.c.b16 %v3281, %v3279
        %v3318 = vpack.c.b16 %v3282, %v3280
        %v3319 = vpack.c.b16 %v3285, %v3283
        %v3320 = vpack.c.b16 %v3286, %v3284
        %v3321 = vpack.c.b16 %v3289, %v3287
        %v3322 = vpack.c.b16 %v3290, %v3288
        %3355 = vmatprep.subr.bf16.mxu0 %v3292
        %3356 = vmatpush1.bf16.msra.mxu0 %v3291
        %3357 = vmatprep.subr.bf16.mxu0 %v3294
        %3358 = vmatpush1.bf16.msra.mxu0 %v3293
        %3359 = vmatprep.subr.bf16.mxu0 %v3296
        %3360 = vmatpush1.bf16.msra.mxu0 %v3295
        %3361 = vmatprep.subr.bf16.mxu0 %v3298
        %3362 = vmatpush1.bf16.msra.mxu0 %v3297
        %3363 = vmatprep.subr.bf16.mxu0 %v3300
        %3364 = vmatpush1.bf16.msra.mxu0 %v3299
        %3365 = vmatprep.subr.bf16.mxu0 %v3302
        %3366 = vmatpush1.bf16.msra.mxu0 %v3301
        %3367 = vmatprep.subr.bf16.mxu0 %v3304
        %3368 = vmatpush1.bf16.msra.mxu0 %v3303
        %3369 = vmatprep.subr.bf16.mxu0 %v3306
        %3370 = vmatpush1.bf16.msra.mxu0 %v3305
        %3371 = vmatprep.subr.bf16.mxu0 %v3308
        %3372 = vmatpush1.bf16.msra.mxu0 %v3307
        %3373 = vmatprep.subr.bf16.mxu0 %v3310
        %3374 = vmatpush1.bf16.msra.mxu0 %v3309
        %3375 = vmatprep.subr.bf16.mxu0 %v3312
        %3376 = vmatpush1.bf16.msra.mxu0 %v3311
        %3377 = vmatprep.subr.bf16.mxu0 %v3314
        %3378 = vmatpush1.bf16.msra.mxu0 %v3313
        %3379 = vmatprep.subr.bf16.mxu0 %v3316
        %3380 = vmatpush1.bf16.msra.mxu0 %v3315
        %3381 = vmatprep.subr.bf16.mxu0 %v3318
        %3382 = vmatpush1.bf16.msra.mxu0 %v3317
        %3383 = vmatprep.subr.bf16.mxu0 %v3320
        %3384 = vmatpush1.bf16.msra.mxu0 %v3319
        %3385 = vmatprep.subr.bf16.mxu0 %v3322
        %3386 = vmatpush1.bf16.msra.mxu0 %v3321
        %3387 = vmatprep.mubr.bf16.mxu0 %v2889
        %3388 = vmatmul.mubr.bf16.gmra.mrb[0].mxu0 %v2888
        %v3389 = vpop.f32.mrb[0].mxu0
        %v3390 = vadd.f32 %v3037, %v3389
        %v3391 = vpop.f32.mrb[0].mxu0
        %v3392 = vadd.f32 %v3039, %v3391
        %v3393 = vpop.f32.mrb[0].mxu0
        %v3394 = vadd.f32 %v3041, %v3393
        %v3395 = vpop.f32.mrb[0].mxu0
        %v3396 = vadd.f32 %v3043, %v3395
        %3397 = vmatprep.mubr.bf16.mxu0 %v2891
        %3398 = vmatmul.mubr.bf16.gmra.mrb[0].mxu0 %v2890
        %v3399 = vpop.f32.mrb[0].mxu0
        %v3400 = vadd.f32 %v3047, %v3399
        %v3401 = vpop.f32.mrb[0].mxu0
        %v3402 = vadd.f32 %v3049, %v3401
        %v3403 = vpop.f32.mrb[0].mxu0
        %v3404 = vadd.f32 %v3051, %v3403
        %v3405 = vpop.f32.mrb[0].mxu0
        %v3406 = vadd.f32 %v3053, %v3405
        %3407 = vmatprep.mubr.bf16.mxu0 %v2893
        %3408 = vmatmul.mubr.bf16.gmra.mrb[0].mxu0 %v2892
        %v3409 = vpop.f32.mrb[0].mxu0
        %v3410 = vadd.f32 %v3057, %v3409
        %v3411 = vpop.f32.mrb[0].mxu0
        %v3412 = vadd.f32 %v3059, %v3411
        %v3413 = vpop.f32.mrb[0].mxu0
        %v3414 = vadd.f32 %v3061, %v3413
        %v3415 = vpop.f32.mrb[0].mxu0
        %v3416 = vadd.f32 %v3063, %v3415
        %3417 = vmatprep.mubr.bf16.mxu0 %v2895
        %3418 = vmatmul.mubr.bf16.gmra.mrb[0].mxu0 %v2894
        %v3419 = vpop.f32.mrb[0].mxu0
        %v3420 = vadd.f32 %v3067, %v3419
        %v3421 = vpop.f32.mrb[0].mxu0
        %v3422 = vadd.f32 %v3069, %v3421
        %v3423 = vpop.f32.mrb[0].mxu0
        %v3424 = vadd.f32 %v3071, %v3423
        %v3425 = vpop.f32.mrb[0].mxu0
        %v3426 = vadd.f32 %v3073, %v3425
        %3427 = vmatprep.mubr.bf16.mxu0 %v2897
        %3428 = vmatmul.mubr.bf16.gmra.mrb[0].mxu0 %v2896
        %v3429 = vpop.f32.mrb[0].mxu0
        %v3430 = vadd.f32 %v3077, %v3429
        %v3431 = vpop.f32.mrb[0].mxu0
        %v3432 = vadd.f32 %v3079, %v3431
        %v3433 = vpop.f32.mrb[0].mxu0
        %v3434 = vadd.f32 %v3081, %v3433
        %v3435 = vpop.f32.mrb[0].mxu0
        %v3436 = vadd.f32 %v3083, %v3435
        %3437 = vmatprep.mubr.bf16.mxu0 %v2899
        %3438 = vmatmul.mubr.bf16.gmra.mrb[0].mxu0 %v2898
        %v3439 = vpop.f32.mrb[0].mxu0
        %v3440 = vadd.f32 %v3087, %v3439
        %v3441 = vpop.f32.mrb[0].mxu0
        %v3442 = vadd.f32 %v3089, %v3441
        %v3443 = vpop.f32.mrb[0].mxu0
        %v3444 = vadd.f32 %v3091, %v3443
        %v3445 = vpop.f32.mrb[0].mxu0
        %v3446 = vadd.f32 %v3093, %v3445
        %3447 = vmatprep.mubr.bf16.mxu0 %v2901
        %3448 = vmatmul.mubr.bf16.gmra.mrb[0].mxu0 %v2900
        %v3449 = vpop.f32.mrb[0].mxu0
        %v3450 = vadd.f32 %v3097, %v3449
        %v3451 = vpop.f32.mrb[0].mxu0
        %v3452 = vadd.f32 %v3099, %v3451
        %v3453 = vpop.f32.mrb[0].mxu0
        %v3454 = vadd.f32 %v3101, %v3453
        %v3455 = vpop.f32.mrb[0].mxu0
        %v3456 = vadd.f32 %v3103, %v3455
        %3457 = vmatprep.mubr.bf16.mxu0 %v2903
        %3458 = vmatmul.mubr.bf16.gmra.mrb[0].mxu0 %v2902
        %v3459 = vpop.f32.mrb[0].mxu0
        %v3460 = vadd.f32 %v3107, %v3459
        %v3461 = vpop.f32.mrb[0].mxu0
        %v3462 = vadd.f32 %v3109, %v3461
        %v3463 = vpop.f32.mrb[0].mxu0
        %v3464 = vadd.f32 %v3111, %v3463
        %v3465 = vpop.f32.mrb[0].mxu0
        %v3466 = vadd.f32 %v3113, %v3465
        %3467 = vmatprep.mubr.bf16.mxu0 %v2905
        %3468 = vmatmul.mubr.bf16.gmra.mrb[0].mxu0 %v2904
        %v3469 = vpop.f32.mrb[0].mxu0
        %v3470 = vadd.f32 %v3117, %v3469
        %v3471 = vpop.f32.mrb[0].mxu0
        %v3472 = vadd.f32 %v3119, %v3471
        %v3473 = vpop.f32.mrb[0].mxu0
        %v3474 = vadd.f32 %v3121, %v3473
        %v3475 = vpop.f32.mrb[0].mxu0
        %v3476 = vadd.f32 %v3123, %v3475
        %3477 = vmatprep.mubr.bf16.mxu0 %v2907
        %3478 = vmatmul.mubr.bf16.gmra.mrb[0].mxu0 %v2906
        %v3479 = vpop.f32.mrb[0].mxu0
        %v3480 = vadd.f32 %v3127, %v3479
        %v3481 = vpop.f32.mrb[0].mxu0
        %v3482 = vadd.f32 %v3129, %v3481
        %v3483 = vpop.f32.mrb[0].mxu0
        %v3484 = vadd.f32 %v3131, %v3483
        %v3485 = vpop.f32.mrb[0].mxu0
        %v3486 = vadd.f32 %v3133, %v3485
        %3487 = vmatprep.mubr.bf16.mxu0 %v2909
        %3488 = vmatmul.mubr.bf16.gmra.mrb[0].mxu0 %v2908
        %v3489 = vpop.f32.mrb[0].mxu0
        %v3490 = vadd.f32 %v3137, %v3489
        %v3491 = vpop.f32.mrb[0].mxu0
        %v3492 = vadd.f32 %v3139, %v3491
        %v3493 = vpop.f32.mrb[0].mxu0
        %v3494 = vadd.f32 %v3141, %v3493
        %v3495 = vpop.f32.mrb[0].mxu0
        %v3496 = vadd.f32 %v3143, %v3495
        %3497 = vmatprep.mubr.bf16.mxu0 %v2911
        %3498 = vmatmul.mubr.bf16.gmra.mrb[0].mxu0 %v2910
        %v3499 = vpop.f32.mrb[0].mxu0
        %v3500 = vadd.f32 %v3147, %v3499
        %v3501 = vpop.f32.mrb[0].mxu0
        %v3502 = vadd.f32 %v3149, %v3501
        %v3503 = vpop.f32.mrb[0].mxu0
        %v3504 = vadd.f32 %v3151, %v3503
        %v3505 = vpop.f32.mrb[0].mxu0
        %v3506 = vadd.f32 %v3153, %v3505
        %3507 = vmatprep.mubr.bf16.mxu0 %v2913
        %3508 = vmatmul.mubr.bf16.gmra.mrb[0].mxu0 %v2912
        %v3509 = vpop.f32.mrb[0].mxu0
        %v3510 = vadd.f32 %v3157, %v3509
        %v3511 = vpop.f32.mrb[0].mxu0
        %v3512 = vadd.f32 %v3159, %v3511
        %v3513 = vpop.f32.mrb[0].mxu0
        %v3514 = vadd.f32 %v3161, %v3513
        %v3515 = vpop.f32.mrb[0].mxu0
        %v3516 = vadd.f32 %v3163, %v3515
        %3517 = vmatprep.mubr.bf16.mxu0 %v2915
        %3518 = vmatmul.mubr.bf16.gmra.mrb[0].mxu0 %v2914
        %v3519 = vpop.f32.mrb[0].mxu0
        %v3520 = vadd.f32 %v3167, %v3519
        %v3521 = vpop.f32.mrb[0].mxu0
        %v3522 = vadd.f32 %v3169, %v3521
        %v3523 = vpop.f32.mrb[0].mxu0
        %v3524 = vadd.f32 %v3171, %v3523
        %v3525 = vpop.f32.mrb[0].mxu0
        %v3526 = vadd.f32 %v3173, %v3525
        %3527 = vmatprep.mubr.bf16.mxu0 %v2917
        %3528 = vmatmul.mubr.bf16.gmra.mrb[0].mxu0 %v2916
        %v3529 = vpop.f32.mrb[0].mxu0
        %v3530 = vadd.f32 %v3177, %v3529
        %v3531 = vpop.f32.mrb[0].mxu0
        %v3532 = vadd.f32 %v3179, %v3531
        %v3533 = vpop.f32.mrb[0].mxu0
        %v3534 = vadd.f32 %v3181, %v3533
        %v3535 = vpop.f32.mrb[0].mxu0
        %v3536 = vadd.f32 %v3183, %v3535
        %3537 = vmatprep.mubr.bf16.mxu0 %v2919
        %3538 = vmatmul.mubr.bf16.gmra.mrb[0].mxu0 %v2918
        %v3539 = vpop.f32.mrb[0].mxu0
        %v3540 = vadd.f32 %v3187, %v3539
        %v3541 = vpop.f32.mrb[0].mxu0
        %v3542 = vadd.f32 %v3189, %v3541
        %v3543 = vpop.f32.mrb[0].mxu0
        %v3544 = vadd.f32 %v3191, %v3543
        %v3545 = vpop.f32.mrb[0].mxu0
        %v3546 = vadd.f32 %v3193, %v3545
        %3547 = vdwg.mxu0
        %s3548 = scalar_lea.vmem %s4, 10
        %v3549 = vld [vmem:[%s3548] sm:$0x3]
        %v3551 = vlaneseq
        %v3552 = vshrl.u32 %v3551, 7
        %v3553 = vsub.s32 0, %v3552
        %v3554 = vrot.slane %v3549, %v3553
        %v3555 = vlaneseq
        %v3556 = vshrl.u32 %v3555, 7
        %v3557 = vsub.s32 1, %v3556
        %v3558 = vrot.slane %v3549, %v3557
        %v3561 = vadd.f32 %v3390, %v3554
        %v3562 = vadd.f32 %v3392, %v3558
        %v3563 = vadd.f32 %v3394, %v3554
        %v3564 = vadd.f32 %v3396, %v3558
        %v3565 = vadd.f32 %v3400, %v3554
        %v3566 = vadd.f32 %v3402, %v3558
        %v3567 = vadd.f32 %v3404, %v3554
        %v3568 = vadd.f32 %v3406, %v3558
        %v3569 = vadd.f32 %v3410, %v3554
        %v3570 = vadd.f32 %v3412, %v3558
        %v3571 = vadd.f32 %v3414, %v3554
        %v3572 = vadd.f32 %v3416, %v3558
        %v3573 = vadd.f32 %v3420, %v3554
        %v3574 = vadd.f32 %v3422, %v3558
        %v3575 = vadd.f32 %v3424, %v3554
        %v3576 = vadd.f32 %v3426, %v3558
        %v3577 = vadd.f32 %v3430, %v3554
        %v3578 = vadd.f32 %v3432, %v3558
        %v3579 = vadd.f32 %v3434, %v3554
        %v3580 = vadd.f32 %v3436, %v3558
        %v3581 = vadd.f32 %v3440, %v3554
        %v3582 = vadd.f32 %v3442, %v3558
        %v3583 = vadd.f32 %v3444, %v3554
        %v3584 = vadd.f32 %v3446, %v3558
        %v3585 = vadd.f32 %v3450, %v3554
        %v3586 = vadd.f32 %v3452, %v3558
        %v3587 = vadd.f32 %v3454, %v3554
        %v3588 = vadd.f32 %v3456, %v3558
        %v3589 = vadd.f32 %v3460, %v3554
        %v3590 = vadd.f32 %v3462, %v3558
        %v3591 = vadd.f32 %v3464, %v3554
        %v3592 = vadd.f32 %v3466, %v3558
        %v3593 = vadd.f32 %v3470, %v3554
        %v3594 = vadd.f32 %v3472, %v3558
        %v3595 = vadd.f32 %v3474, %v3554
        %v3596 = vadd.f32 %v3476, %v3558
        %v3597 = vadd.f32 %v3480, %v3554
        %v3598 = vadd.f32 %v3482, %v3558
        %v3599 = vadd.f32 %v3484, %v3554
        %v3600 = vadd.f32 %v3486, %v3558
        %v3601 = vadd.f32 %v3490, %v3554
        %v3602 = vadd.f32 %v3492, %v3558
        %v3603 = vadd.f32 %v3494, %v3554
        %v3604 = vadd.f32 %v3496, %v3558
        %v3605 = vadd.f32 %v3500, %v3554
        %v3606 = vadd.f32 %v3502, %v3558
        %v3607 = vadd.f32 %v3504, %v3554
        %v3608 = vadd.f32 %v3506, %v3558
        %v3609 = vadd.f32 %v3510, %v3554
        %v3610 = vadd.f32 %v3512, %v3558
        %v3611 = vadd.f32 %v3514, %v3554
        %v3612 = vadd.f32 %v3516, %v3558
        %v3613 = vadd.f32 %v3520, %v3554
        %v3614 = vadd.f32 %v3522, %v3558
        %v3615 = vadd.f32 %v3524, %v3554
        %v3616 = vadd.f32 %v3526, %v3558
        %v3617 = vadd.f32 %v3530, %v3554
        %v3618 = vadd.f32 %v3532, %v3558
        %v3619 = vadd.f32 %v3534, %v3554
        %v3620 = vadd.f32 %v3536, %v3558
        %v3621 = vadd.f32 %v3540, %v3554
        %v3622 = vadd.f32 %v3542, %v3558
        %v3623 = vadd.f32 %v3544, %v3554
        %v3624 = vadd.f32 %v3546, %v3558
        %v3625 = vmax.f32 %v3561, 0.0
        %v3626 = vmax.f32 %v3562, 0.0
        %v3627 = vmax.f32 %v3563, 0.0
        %v3628 = vmax.f32 %v3564, 0.0
        %v3629 = vmax.f32 %v3565, 0.0
        %v3630 = vmax.f32 %v3566, 0.0
        %v3631 = vmax.f32 %v3567, 0.0
        %v3632 = vmax.f32 %v3568, 0.0
        %v3633 = vmax.f32 %v3569, 0.0
        %v3634 = vmax.f32 %v3570, 0.0
        %v3635 = vmax.f32 %v3571, 0.0
        %v3636 = vmax.f32 %v3572, 0.0
        %v3637 = vmax.f32 %v3573, 0.0
        %v3638 = vmax.f32 %v3574, 0.0
        %v3639 = vmax.f32 %v3575, 0.0
        %v3640 = vmax.f32 %v3576, 0.0
        %v3641 = vmax.f32 %v3577, 0.0
        %v3642 = vmax.f32 %v3578, 0.0
        %v3643 = vmax.f32 %v3579, 0.0
        %v3644 = vmax.f32 %v3580, 0.0
        %v3645 = vmax.f32 %v3581, 0.0
        %v3646 = vmax.f32 %v3582, 0.0
        %v3647 = vmax.f32 %v3583, 0.0
        %v3648 = vmax.f32 %v3584, 0.0
        %v3649 = vmax.f32 %v3585, 0.0
        %v3650 = vmax.f32 %v3586, 0.0
        %v3651 = vmax.f32 %v3587, 0.0
        %v3652 = vmax.f32 %v3588, 0.0
        %v3653 = vmax.f32 %v3589, 0.0
        %v3654 = vmax.f32 %v3590, 0.0
        %v3655 = vmax.f32 %v3591, 0.0
        %v3656 = vmax.f32 %v3592, 0.0
        %v3657 = vmax.f32 %v3593, 0.0
        %v3658 = vmax.f32 %v3594, 0.0
        %v3659 = vmax.f32 %v3595, 0.0
        %v3660 = vmax.f32 %v3596, 0.0
        %v3661 = vmax.f32 %v3597, 0.0
        %v3662 = vmax.f32 %v3598, 0.0
        %v3663 = vmax.f32 %v3599, 0.0
        %v3664 = vmax.f32 %v3600, 0.0
        %v3665 = vmax.f32 %v3601, 0.0
        %v3666 = vmax.f32 %v3602, 0.0
        %v3667 = vmax.f32 %v3603, 0.0
        %v3668 = vmax.f32 %v3604, 0.0
        %v3669 = vmax.f32 %v3605, 0.0
        %v3670 = vmax.f32 %v3606, 0.0
        %v3671 = vmax.f32 %v3607, 0.0
        %v3672 = vmax.f32 %v3608, 0.0
        %v3673 = vmax.f32 %v3609, 0.0
        %v3674 = vmax.f32 %v3610, 0.0
        %v3675 = vmax.f32 %v3611, 0.0
        %v3676 = vmax.f32 %v3612, 0.0
        %v3677 = vmax.f32 %v3613, 0.0
        %v3678 = vmax.f32 %v3614, 0.0
        %v3679 = vmax.f32 %v3615, 0.0
        %v3680 = vmax.f32 %v3616, 0.0
        %v3681 = vmax.f32 %v3617, 0.0
        %v3682 = vmax.f32 %v3618, 0.0
        %v3683 = vmax.f32 %v3619, 0.0
        %v3684 = vmax.f32 %v3620, 0.0
        %v3685 = vmax.f32 %v3621, 0.0
        %v3686 = vmax.f32 %v3622, 0.0
        %v3687 = vmax.f32 %v3623, 0.0
        %v3688 = vmax.f32 %v3624, 0.0
        %v3689 = vpack.c.bf16 %v3627, %v3625
        %v3690 = vpack.c.bf16 %v3628, %v3626
        %v3691 = vpack.c.bf16 %v3631, %v3629
        %v3692 = vpack.c.bf16 %v3632, %v3630
        %v3693 = vpack.c.bf16 %v3635, %v3633
        %v3694 = vpack.c.bf16 %v3636, %v3634
        %v3695 = vpack.c.bf16 %v3639, %v3637
        %v3696 = vpack.c.bf16 %v3640, %v3638
        %v3697 = vpack.c.bf16 %v3643, %v3641
        %v3698 = vpack.c.bf16 %v3644, %v3642
        %v3699 = vpack.c.bf16 %v3647, %v3645
        %v3700 = vpack.c.bf16 %v3648, %v3646
        %v3701 = vpack.c.bf16 %v3651, %v3649
        %v3702 = vpack.c.bf16 %v3652, %v3650
        %v3703 = vpack.c.bf16 %v3655, %v3653
        %v3704 = vpack.c.bf16 %v3656, %v3654
        %v3705 = vpack.c.bf16 %v3659, %v3657
        %v3706 = vpack.c.bf16 %v3660, %v3658
        %v3707 = vpack.c.bf16 %v3663, %v3661
        %v3708 = vpack.c.bf16 %v3664, %v3662
        %v3709 = vpack.c.bf16 %v3667, %v3665
        %v3710 = vpack.c.bf16 %v3668, %v3666
        %v3711 = vpack.c.bf16 %v3671, %v3669
        %v3712 = vpack.c.bf16 %v3672, %v3670
        %v3713 = vpack.c.bf16 %v3675, %v3673
        %v3714 = vpack.c.bf16 %v3676, %v3674
        %v3715 = vpack.c.bf16 %v3679, %v3677
        %v3716 = vpack.c.bf16 %v3680, %v3678
        %v3717 = vpack.c.bf16 %v3683, %v3681
        %v3718 = vpack.c.bf16 %v3684, %v3682
        %v3719 = vpack.c.bf16 %v3687, %v3685
        %v3720 = vpack.c.bf16 %v3688, %v3686
        %s3721 = scalar_lea.vmem [#allocation2], 1280
        %v3722 = vld [vmem:[%s3721] sm:$0xff]
        %v3723 = vld [vmem:[%s3721 + $0x8] sm:$0xff]
        %v3724 = vld [vmem:[%s3721 + $0x10] sm:$0xff]
        %v3725 = vld [vmem:[%s3721 + $0x18] sm:$0xff]
        %v3726 = vld [vmem:[%s3721 + $0x20] sm:$0xff]
        %v3727 = vld [vmem:[%s3721 + $0x28] sm:$0xff]
        %v3728 = vld [vmem:[%s3721 + $0x30] sm:$0xff]
        %v3729 = vld [vmem:[%s3721 + $0x38] sm:$0xff]
        %v3730 = vld [vmem:[%s3721 + $0x40] sm:$0xff]
        %v3731 = vld [vmem:[%s3721 + $0x48] sm:$0xff]
        %v3732 = vld [vmem:[%s3721 + $0x50] sm:$0xff]
        %v3733 = vld [vmem:[%s3721 + $0x58] sm:$0xff]
        %v3734 = vld [vmem:[%s3721 + $0x60] sm:$0xff]
        %v3735 = vld [vmem:[%s3721 + $0x68] sm:$0xff]
        %v3736 = vld [vmem:[%s3721 + $0x70] sm:$0xff]
        %v3737 = vld [vmem:[%s3721 + $0x78] sm:$0xff]
        %v3738 = vld [vmem:[%s3721 + $0x80] sm:$0xff]
        %v3739 = vld [vmem:[%s3721 + $0x88] sm:$0xff]
        %v3740 = vld [vmem:[%s3721 + $0x90] sm:$0xff]
        %v3741 = vld [vmem:[%s3721 + $0x98] sm:$0xff]
        %v3742 = vld [vmem:[%s3721 + $0xa0] sm:$0xff]
        %v3743 = vld [vmem:[%s3721 + $0xa8] sm:$0xff]
        %v3744 = vld [vmem:[%s3721 + $0xb0] sm:$0xff]
        %v3745 = vld [vmem:[%s3721 + $0xb8] sm:$0xff]
        %v3746 = vld [vmem:[%s3721 + $0xc0] sm:$0xff]
        %v3747 = vld [vmem:[%s3721 + $0xc8] sm:$0xff]
        %v3748 = vld [vmem:[%s3721 + $0xd0] sm:$0xff]
        %v3749 = vld [vmem:[%s3721 + $0xd8] sm:$0xff]
        %v3750 = vld [vmem:[%s3721 + $0xe0] sm:$0xff]
        %v3751 = vld [vmem:[%s3721 + $0xe8] sm:$0xff]
        %v3752 = vld [vmem:[%s3721 + $0xf0] sm:$0xff]
        %v3753 = vld [vmem:[%s3721 + $0xf8] sm:$0xff]
        %s3754 = scalar_lea.vmem %s4, 12
        %v3755 = vld [vmem:[%s3754] sm:$0x3]
        %v3757 = vlaneseq
        %v3758 = vshrl.u32 %v3757, 7
        %v3759 = vsub.s32 0, %v3758
        %v3760 = vrot.slane %v3755, %v3759
        %v3761 = vlaneseq
        %v3762 = vshrl.u32 %v3761, 7
        %v3763 = vsub.s32 1, %v3762
        %v3764 = vrot.slane %v3755, %v3763
        %v3799 = vunpack.c.l.b16 %v3722
        %v3800 = vunpack.c.h.b16 %v3722
        %v3801 = vunpack.c.l.b16 %v3723
        %v3802 = vunpack.c.h.b16 %v3723
        %v3803 = vunpack.c.l.b16 %v3724
        %v3804 = vunpack.c.h.b16 %v3724
        %v3805 = vunpack.c.l.b16 %v3725
        %v3806 = vunpack.c.h.b16 %v3725
        %v3807 = vunpack.c.l.b16 %v3726
        %v3808 = vunpack.c.h.b16 %v3726
        %v3809 = vunpack.c.l.b16 %v3727
        %v3810 = vunpack.c.h.b16 %v3727
        %v3811 = vunpack.c.l.b16 %v3728
        %v3812 = vunpack.c.h.b16 %v3728
        %v3813 = vunpack.c.l.b16 %v3729
        %v3814 = vunpack.c.h.b16 %v3729
        %v3815 = vunpack.c.l.b16 %v3730
        %v3816 = vunpack.c.h.b16 %v3730
        %v3817 = vunpack.c.l.b16 %v3731
        %v3818 = vunpack.c.h.b16 %v3731
        %v3819 = vunpack.c.l.b16 %v3732
        %v3820 = vunpack.c.h.b16 %v3732
        %v3821 = vunpack.c.l.b16 %v3733
        %v3822 = vunpack.c.h.b16 %v3733
        %v3823 = vunpack.c.l.b16 %v3734
        %v3824 = vunpack.c.h.b16 %v3734
        %v3825 = vunpack.c.l.b16 %v3735
        %v3826 = vunpack.c.h.b16 %v3735
        %v3827 = vunpack.c.l.b16 %v3736
        %v3828 = vunpack.c.h.b16 %v3736
        %v3829 = vunpack.c.l.b16 %v3737
        %v3830 = vunpack.c.h.b16 %v3737
        %v3831 = vunpack.c.l.b16 %v3738
        %v3832 = vunpack.c.h.b16 %v3738
        %v3833 = vunpack.c.l.b16 %v3739
        %v3834 = vunpack.c.h.b16 %v3739
        %v3835 = vunpack.c.l.b16 %v3740
        %v3836 = vunpack.c.h.b16 %v3740
        %v3837 = vunpack.c.l.b16 %v3741
        %v3838 = vunpack.c.h.b16 %v3741
        %v3839 = vunpack.c.l.b16 %v3742
        %v3840 = vunpack.c.h.b16 %v3742
        %v3841 = vunpack.c.l.b16 %v3743
        %v3842 = vunpack.c.h.b16 %v3743
        %v3843 = vunpack.c.l.b16 %v3744
        %v3844 = vunpack.c.h.b16 %v3744
        %v3845 = vunpack.c.l.b16 %v3745
        %v3846 = vunpack.c.h.b16 %v3745
        %v3847 = vunpack.c.l.b16 %v3746
        %v3848 = vunpack.c.h.b16 %v3746
        %v3849 = vunpack.c.l.b16 %v3747
        %v3850 = vunpack.c.h.b16 %v3747
        %v3851 = vunpack.c.l.b16 %v3748
        %v3852 = vunpack.c.h.b16 %v3748
        %v3853 = vunpack.c.l.b16 %v3749
        %v3854 = vunpack.c.h.b16 %v3749
        %v3855 = vunpack.c.l.b16 %v3750
        %v3856 = vunpack.c.h.b16 %v3750
        %v3857 = vunpack.c.l.b16 %v3751
        %v3858 = vunpack.c.h.b16 %v3751
        %v3859 = vunpack.c.l.b16 %v3752
        %v3860 = vunpack.c.h.b16 %v3752
        %v3861 = vunpack.c.l.b16 %v3753
        %v3862 = vunpack.c.h.b16 %v3753
        %v3863 = vpack.c.b16 %v3801, %v3799
        %v3864 = vpack.c.b16 %v3802, %v3800
        %v3865 = vpack.c.b16 %v3805, %v3803
        %v3866 = vpack.c.b16 %v3806, %v3804
        %v3867 = vpack.c.b16 %v3809, %v3807
        %v3868 = vpack.c.b16 %v3810, %v3808
        %v3869 = vpack.c.b16 %v3813, %v3811
        %v3870 = vpack.c.b16 %v3814, %v3812
        %v3871 = vpack.c.b16 %v3817, %v3815
        %v3872 = vpack.c.b16 %v3818, %v3816
        %v3873 = vpack.c.b16 %v3821, %v3819
        %v3874 = vpack.c.b16 %v3822, %v3820
        %v3875 = vpack.c.b16 %v3825, %v3823
        %v3876 = vpack.c.b16 %v3826, %v3824
        %v3877 = vpack.c.b16 %v3829, %v3827
        %v3878 = vpack.c.b16 %v3830, %v3828
        %v3879 = vpack.c.b16 %v3833, %v3831
        %v3880 = vpack.c.b16 %v3834, %v3832
        %v3881 = vpack.c.b16 %v3837, %v3835
        %v3882 = vpack.c.b16 %v3838, %v3836
        %v3883 = vpack.c.b16 %v3841, %v3839
        %v3884 = vpack.c.b16 %v3842, %v3840
        %v3885 = vpack.c.b16 %v3845, %v3843
        %v3886 = vpack.c.b16 %v3846, %v3844
        %v3887 = vpack.c.b16 %v3849, %v3847
        %v3888 = vpack.c.b16 %v3850, %v3848
        %v3889 = vpack.c.b16 %v3853, %v3851
        %v3890 = vpack.c.b16 %v3854, %v3852
        %v3891 = vpack.c.b16 %v3857, %v3855
        %v3892 = vpack.c.b16 %v3858, %v3856
        %v3893 = vpack.c.b16 %v3861, %v3859
        %v3894 = vpack.c.b16 %v3862, %v3860
        %3927 = vmatprep.subr.bf16.mxu0 %v3864
        %3928 = vmatpush1.bf16.msra.mxu0 %v3863
        %3929 = vmatprep.subr.bf16.mxu0 %v3866
        %3930 = vmatpush1.bf16.msra.mxu0 %v3865
        %3931 = vmatprep.subr.bf16.mxu0 %v3868
        %3932 = vmatpush1.bf16.msra.mxu0 %v3867
        %3933 = vmatprep.subr.bf16.mxu0 %v3870
        %3934 = vmatpush1.bf16.msra.mxu0 %v3869
        %3935 = vmatprep.subr.bf16.mxu0 %v3872
        %3936 = vmatpush1.bf16.msra.mxu0 %v3871
        %3937 = vmatprep.subr.bf16.mxu0 %v3874
        %3938 = vmatpush1.bf16.msra.mxu0 %v3873
        %3939 = vmatprep.subr.bf16.mxu0 %v3876
        %3940 = vmatpush1.bf16.msra.mxu0 %v3875
        %3941 = vmatprep.subr.bf16.mxu0 %v3878
        %3942 = vmatpush1.bf16.msra.mxu0 %v3877
        %3943 = vmatprep.subr.bf16.mxu0 %v3880
        %3944 = vmatpush1.bf16.msra.mxu0 %v3879
        %3945 = vmatprep.subr.bf16.mxu0 %v3882
        %3946 = vmatpush1.bf16.msra.mxu0 %v3881
        %3947 = vmatprep.subr.bf16.mxu0 %v3884
        %3948 = vmatpush1.bf16.msra.mxu0 %v3883
        %3949 = vmatprep.subr.bf16.mxu0 %v3886
        %3950 = vmatpush1.bf16.msra.mxu0 %v3885
        %3951 = vmatprep.subr.bf16.mxu0 %v3888
        %3952 = vmatpush1.bf16.msra.mxu0 %v3887
        %3953 = vmatprep.subr.bf16.mxu0 %v3890
        %3954 = vmatpush1.bf16.msra.mxu0 %v3889
        %3955 = vmatprep.subr.bf16.mxu0 %v3892
        %3956 = vmatpush1.bf16.msra.mxu0 %v3891
        %3957 = vmatprep.subr.bf16.mxu0 %v3894
        %3958 = vmatpush1.bf16.msra.mxu0 %v3893
        %3959 = vmatprep.mubr.bf16.mxu0 %v3690
        %3960 = vmatmul.mubr.bf16.gmra.mrb[0].mxu0 %v3689
        %v3961 = vpop.f32.mrb[0].mxu0
        %v3962 = vadd.f32 %v3760, %v3961
        %v3963 = vpop.f32.mrb[0].mxu0
        %v3964 = vadd.f32 %v3764, %v3963
        %v3965 = vpop.f32.mrb[0].mxu0
        %v3966 = vadd.f32 %v3760, %v3965
        %v3967 = vpop.f32.mrb[0].mxu0
        %v3968 = vadd.f32 %v3764, %v3967
        %3969 = vmatprep.mubr.bf16.mxu0 %v3692
        %3970 = vmatmul.mubr.bf16.gmra.mrb[0].mxu0 %v3691
        %v3971 = vpop.f32.mrb[0].mxu0
        %v3972 = vadd.f32 %v3760, %v3971
        %v3973 = vpop.f32.mrb[0].mxu0
        %v3974 = vadd.f32 %v3764, %v3973
        %v3975 = vpop.f32.mrb[0].mxu0
        %v3976 = vadd.f32 %v3760, %v3975
        %v3977 = vpop.f32.mrb[0].mxu0
        %v3978 = vadd.f32 %v3764, %v3977
        %3979 = vmatprep.mubr.bf16.mxu0 %v3694
        %3980 = vmatmul.mubr.bf16.gmra.mrb[0].mxu0 %v3693
        %v3981 = vpop.f32.mrb[0].mxu0
        %v3982 = vadd.f32 %v3760, %v3981
        %v3983 = vpop.f32.mrb[0].mxu0
        %v3984 = vadd.f32 %v3764, %v3983
        %v3985 = vpop.f32.mrb[0].mxu0
        %v3986 = vadd.f32 %v3760, %v3985
        %v3987 = vpop.f32.mrb[0].mxu0
        %v3988 = vadd.f32 %v3764, %v3987
        %3989 = vmatprep.mubr.bf16.mxu0 %v3696
        %3990 = vmatmul.mubr.bf16.gmra.mrb[0].mxu0 %v3695
        %v3991 = vpop.f32.mrb[0].mxu0
        %v3992 = vadd.f32 %v3760, %v3991
        %v3993 = vpop.f32.mrb[0].mxu0
        %v3994 = vadd.f32 %v3764, %v3993
        %v3995 = vpop.f32.mrb[0].mxu0
        %v3996 = vadd.f32 %v3760, %v3995
        %v3997 = vpop.f32.mrb[0].mxu0
        %v3998 = vadd.f32 %v3764, %v3997
        %3999 = vmatprep.mubr.bf16.mxu0 %v3698
        %4000 = vmatmul.mubr.bf16.gmra.mrb[0].mxu0 %v3697
        %v4001 = vpop.f32.mrb[0].mxu0
        %v4002 = vadd.f32 %v3760, %v4001
        %v4003 = vpop.f32.mrb[0].mxu0
        %v4004 = vadd.f32 %v3764, %v4003
        %v4005 = vpop.f32.mrb[0].mxu0
        %v4006 = vadd.f32 %v3760, %v4005
        %v4007 = vpop.f32.mrb[0].mxu0
        %v4008 = vadd.f32 %v3764, %v4007
        %4009 = vmatprep.mubr.bf16.mxu0 %v3700
        %4010 = vmatmul.mubr.bf16.gmra.mrb[0].mxu0 %v3699
        %v4011 = vpop.f32.mrb[0].mxu0
        %v4012 = vadd.f32 %v3760, %v4011
        %v4013 = vpop.f32.mrb[0].mxu0
        %v4014 = vadd.f32 %v3764, %v4013
        %v4015 = vpop.f32.mrb[0].mxu0
        %v4016 = vadd.f32 %v3760, %v4015
        %v4017 = vpop.f32.mrb[0].mxu0
        %v4018 = vadd.f32 %v3764, %v4017
        %4019 = vmatprep.mubr.bf16.mxu0 %v3702
        %4020 = vmatmul.mubr.bf16.gmra.mrb[0].mxu0 %v3701
        %v4021 = vpop.f32.mrb[0].mxu0
        %v4022 = vadd.f32 %v3760, %v4021
        %v4023 = vpop.f32.mrb[0].mxu0
        %v4024 = vadd.f32 %v3764, %v4023
        %v4025 = vpop.f32.mrb[0].mxu0
        %v4026 = vadd.f32 %v3760, %v4025
        %v4027 = vpop.f32.mrb[0].mxu0
        %v4028 = vadd.f32 %v3764, %v4027
        %4029 = vmatprep.mubr.bf16.mxu0 %v3704
        %4030 = vmatmul.mubr.bf16.gmra.mrb[0].mxu0 %v3703
        %v4031 = vpop.f32.mrb[0].mxu0
        %v4032 = vadd.f32 %v3760, %v4031
        %v4033 = vpop.f32.mrb[0].mxu0
        %v4034 = vadd.f32 %v3764, %v4033
        %v4035 = vpop.f32.mrb[0].mxu0
        %v4036 = vadd.f32 %v3760, %v4035
        %v4037 = vpop.f32.mrb[0].mxu0
        %v4038 = vadd.f32 %v3764, %v4037
        %4039 = vmatprep.mubr.bf16.mxu0 %v3706
        %4040 = vmatmul.mubr.bf16.gmra.mrb[0].mxu0 %v3705
        %v4041 = vpop.f32.mrb[0].mxu0
        %v4042 = vadd.f32 %v3760, %v4041
        %v4043 = vpop.f32.mrb[0].mxu0
        %v4044 = vadd.f32 %v3764, %v4043
        %v4045 = vpop.f32.mrb[0].mxu0
        %v4046 = vadd.f32 %v3760, %v4045
        %v4047 = vpop.f32.mrb[0].mxu0
        %v4048 = vadd.f32 %v3764, %v4047
        %4049 = vmatprep.mubr.bf16.mxu0 %v3708
        %4050 = vmatmul.mubr.bf16.gmra.mrb[0].mxu0 %v3707
        %v4051 = vpop.f32.mrb[0].mxu0
        %v4052 = vadd.f32 %v3760, %v4051
        %v4053 = vpop.f32.mrb[0].mxu0
        %v4054 = vadd.f32 %v3764, %v4053
        %v4055 = vpop.f32.mrb[0].mxu0
        %v4056 = vadd.f32 %v3760, %v4055
        %v4057 = vpop.f32.mrb[0].mxu0
        %v4058 = vadd.f32 %v3764, %v4057
        %4059 = vmatprep.mubr.bf16.mxu0 %v3710
        %4060 = vmatmul.mubr.bf16.gmra.mrb[0].mxu0 %v3709
        %v4061 = vpop.f32.mrb[0].mxu0
        %v4062 = vadd.f32 %v3760, %v4061
        %v4063 = vpop.f32.mrb[0].mxu0
        %v4064 = vadd.f32 %v3764, %v4063
        %v4065 = vpop.f32.mrb[0].mxu0
        %v4066 = vadd.f32 %v3760, %v4065
        %v4067 = vpop.f32.mrb[0].mxu0
        %v4068 = vadd.f32 %v3764, %v4067
        %4069 = vmatprep.mubr.bf16.mxu0 %v3712
        %4070 = vmatmul.mubr.bf16.gmra.mrb[0].mxu0 %v3711
        %v4071 = vpop.f32.mrb[0].mxu0
        %v4072 = vadd.f32 %v3760, %v4071
        %v4073 = vpop.f32.mrb[0].mxu0
        %v4074 = vadd.f32 %v3764, %v4073
        %v4075 = vpop.f32.mrb[0].mxu0
        %v4076 = vadd.f32 %v3760, %v4075
        %v4077 = vpop.f32.mrb[0].mxu0
        %v4078 = vadd.f32 %v3764, %v4077
        %4079 = vmatprep.mubr.bf16.mxu0 %v3714
        %4080 = vmatmul.mubr.bf16.gmra.mrb[0].mxu0 %v3713
        %v4081 = vpop.f32.mrb[0].mxu0
        %v4082 = vadd.f32 %v3760, %v4081
        %v4083 = vpop.f32.mrb[0].mxu0
        %v4084 = vadd.f32 %v3764, %v4083
        %v4085 = vpop.f32.mrb[0].mxu0
        %v4086 = vadd.f32 %v3760, %v4085
        %v4087 = vpop.f32.mrb[0].mxu0
        %v4088 = vadd.f32 %v3764, %v4087
        %4089 = vmatprep.mubr.bf16.mxu0 %v3716
        %4090 = vmatmul.mubr.bf16.gmra.mrb[0].mxu0 %v3715
        %v4091 = vpop.f32.mrb[0].mxu0
        %v4092 = vadd.f32 %v3760, %v4091
        %v4093 = vpop.f32.mrb[0].mxu0
        %v4094 = vadd.f32 %v3764, %v4093
        %v4095 = vpop.f32.mrb[0].mxu0
        %v4096 = vadd.f32 %v3760, %v4095
        %v4097 = vpop.f32.mrb[0].mxu0
        %v4098 = vadd.f32 %v3764, %v4097
        %4099 = vmatprep.mubr.bf16.mxu0 %v3718
        %4100 = vmatmul.mubr.bf16.gmra.mrb[0].mxu0 %v3717
        %v4101 = vpop.f32.mrb[0].mxu0
        %v4102 = vadd.f32 %v3760, %v4101
        %v4103 = vpop.f32.mrb[0].mxu0
        %v4104 = vadd.f32 %v3764, %v4103
        %v4105 = vpop.f32.mrb[0].mxu0
        %v4106 = vadd.f32 %v3760, %v4105
        %v4107 = vpop.f32.mrb[0].mxu0
        %v4108 = vadd.f32 %v3764, %v4107
        %4109 = vmatprep.mubr.bf16.mxu0 %v3720
        %4110 = vmatmul.mubr.bf16.gmra.mrb[0].mxu0 %v3719
        %v4111 = vpop.f32.mrb[0].mxu0
        %v4112 = vadd.f32 %v3760, %v4111
        %v4113 = vpop.f32.mrb[0].mxu0
        %v4114 = vadd.f32 %v3764, %v4113
        %v4115 = vpop.f32.mrb[0].mxu0
        %v4116 = vadd.f32 %v3760, %v4115
        %v4117 = vpop.f32.mrb[0].mxu0
        %v4118 = vadd.f32 %v3764, %v4117
        %4119 = vdwg.mxu0
        %v4120 = vmax.f32 %v3962, 0.0
        %v4121 = vmax.f32 %v3964, 0.0
        %v4122 = vmax.f32 %v3966, 0.0
        %v4123 = vmax.f32 %v3968, 0.0
        %v4124 = vmax.f32 %v3972, 0.0
        %v4125 = vmax.f32 %v3974, 0.0
        %v4126 = vmax.f32 %v3976, 0.0
        %v4127 = vmax.f32 %v3978, 0.0
        %v4128 = vmax.f32 %v3982, 0.0
        %v4129 = vmax.f32 %v3984, 0.0
        %v4130 = vmax.f32 %v3986, 0.0
        %v4131 = vmax.f32 %v3988, 0.0
        %v4132 = vmax.f32 %v3992, 0.0
        %v4133 = vmax.f32 %v3994, 0.0
        %v4134 = vmax.f32 %v3996, 0.0
        %v4135 = vmax.f32 %v3998, 0.0
        %v4136 = vmax.f32 %v4002, 0.0
        %v4137 = vmax.f32 %v4004, 0.0
        %v4138 = vmax.f32 %v4006, 0.0
        %v4139 = vmax.f32 %v4008, 0.0
        %v4140 = vmax.f32 %v4012, 0.0
        %v4141 = vmax.f32 %v4014, 0.0
        %v4142 = vmax.f32 %v4016, 0.0
        %v4143 = vmax.f32 %v4018, 0.0
        %v4144 = vmax.f32 %v4022, 0.0
        %v4145 = vmax.f32 %v4024, 0.0
        %v4146 = vmax.f32 %v4026, 0.0
        %v4147 = vmax.f32 %v4028, 0.0
        %v4148 = vmax.f32 %v4032, 0.0
        %v4149 = vmax.f32 %v4034, 0.0
        %v4150 = vmax.f32 %v4036, 0.0
        %v4151 = vmax.f32 %v4038, 0.0
        %v4152 = vmax.f32 %v4042, 0.0
        %v4153 = vmax.f32 %v4044, 0.0
        %v4154 = vmax.f32 %v4046, 0.0
        %v4155 = vmax.f32 %v4048, 0.0
        %v4156 = vmax.f32 %v4052, 0.0
        %v4157 = vmax.f32 %v4054, 0.0
        %v4158 = vmax.f32 %v4056, 0.0
        %v4159 = vmax.f32 %v4058, 0.0
        %v4160 = vmax.f32 %v4062, 0.0
        %v4161 = vmax.f32 %v4064, 0.0
        %v4162 = vmax.f32 %v4066, 0.0
        %v4163 = vmax.f32 %v4068, 0.0
        %v4164 = vmax.f32 %v4072, 0.0
        %v4165 = vmax.f32 %v4074, 0.0
        %v4166 = vmax.f32 %v4076, 0.0
        %v4167 = vmax.f32 %v4078, 0.0
        %v4168 = vmax.f32 %v4082, 0.0
        %v4169 = vmax.f32 %v4084, 0.0
        %v4170 = vmax.f32 %v4086, 0.0
        %v4171 = vmax.f32 %v4088, 0.0
        %v4172 = vmax.f32 %v4092, 0.0
        %v4173 = vmax.f32 %v4094, 0.0
        %v4174 = vmax.f32 %v4096, 0.0
        %v4175 = vmax.f32 %v4098, 0.0
        %v4176 = vmax.f32 %v4102, 0.0
        %v4177 = vmax.f32 %v4104, 0.0
        %v4178 = vmax.f32 %v4106, 0.0
        %v4179 = vmax.f32 %v4108, 0.0
        %v4180 = vmax.f32 %v4112, 0.0
        %v4181 = vmax.f32 %v4114, 0.0
        %v4182 = vmax.f32 %v4116, 0.0
        %v4183 = vmax.f32 %v4118, 0.0
        %v4184 = vpack.c.bf16 %v4122, %v4120
        %v4185 = vpack.c.bf16 %v4123, %v4121
        %v4186 = vpack.c.bf16 %v4126, %v4124
        %v4187 = vpack.c.bf16 %v4127, %v4125
        %v4188 = vpack.c.bf16 %v4130, %v4128
        %v4189 = vpack.c.bf16 %v4131, %v4129
        %v4190 = vpack.c.bf16 %v4134, %v4132
        %v4191 = vpack.c.bf16 %v4135, %v4133
        %v4192 = vpack.c.bf16 %v4138, %v4136
        %v4193 = vpack.c.bf16 %v4139, %v4137
        %v4194 = vpack.c.bf16 %v4142, %v4140
        %v4195 = vpack.c.bf16 %v4143, %v4141
        %v4196 = vpack.c.bf16 %v4146, %v4144
        %v4197 = vpack.c.bf16 %v4147, %v4145
        %v4198 = vpack.c.bf16 %v4150, %v4148
        %v4199 = vpack.c.bf16 %v4151, %v4149
        %v4200 = vpack.c.bf16 %v4154, %v4152
        %v4201 = vpack.c.bf16 %v4155, %v4153
        %v4202 = vpack.c.bf16 %v4158, %v4156
        %v4203 = vpack.c.bf16 %v4159, %v4157
        %v4204 = vpack.c.bf16 %v4162, %v4160
        %v4205 = vpack.c.bf16 %v4163, %v4161
        %v4206 = vpack.c.bf16 %v4166, %v4164
        %v4207 = vpack.c.bf16 %v4167, %v4165
        %v4208 = vpack.c.bf16 %v4170, %v4168
        %v4209 = vpack.c.bf16 %v4171, %v4169
        %v4210 = vpack.c.bf16 %v4174, %v4172
        %v4211 = vpack.c.bf16 %v4175, %v4173
        %v4212 = vpack.c.bf16 %v4178, %v4176
        %v4213 = vpack.c.bf16 %v4179, %v4177
        %v4214 = vpack.c.bf16 %v4182, %v4180
        %v4215 = vpack.c.bf16 %v4183, %v4181
        %s4216 = scalar_lea.vmem [#allocation2], 1536
        %v4217 = vld [vmem:[%s4216] sm:$0xff]
        %v4218 = vld [vmem:[%s4216 + $0x8] sm:$0xff]
        %v4219 = vld [vmem:[%s4216 + $0x10] sm:$0xff]
        %v4220 = vld [vmem:[%s4216 + $0x18] sm:$0xff]
        %v4221 = vld [vmem:[%s4216 + $0x20] sm:$0xff]
        %v4222 = vld [vmem:[%s4216 + $0x28] sm:$0xff]
        %v4223 = vld [vmem:[%s4216 + $0x30] sm:$0xff]
        %v4224 = vld [vmem:[%s4216 + $0x38] sm:$0xff]
        %v4225 = vld [vmem:[%s4216 + $0x40] sm:$0xff]
        %v4226 = vld [vmem:[%s4216 + $0x48] sm:$0xff]
        %v4227 = vld [vmem:[%s4216 + $0x50] sm:$0xff]
        %v4228 = vld [vmem:[%s4216 + $0x58] sm:$0xff]
        %v4229 = vld [vmem:[%s4216 + $0x60] sm:$0xff]
        %v4230 = vld [vmem:[%s4216 + $0x68] sm:$0xff]
        %v4231 = vld [vmem:[%s4216 + $0x70] sm:$0xff]
        %v4232 = vld [vmem:[%s4216 + $0x78] sm:$0xff]
        %v4233 = vld [vmem:[%s4216 + $0x80] sm:$0xff]
        %v4234 = vld [vmem:[%s4216 + $0x88] sm:$0xff]
        %v4235 = vld [vmem:[%s4216 + $0x90] sm:$0xff]
        %v4236 = vld [vmem:[%s4216 + $0x98] sm:$0xff]
        %v4237 = vld [vmem:[%s4216 + $0xa0] sm:$0xff]
        %v4238 = vld [vmem:[%s4216 + $0xa8] sm:$0xff]
        %v4239 = vld [vmem:[%s4216 + $0xb0] sm:$0xff]
        %v4240 = vld [vmem:[%s4216 + $0xb8] sm:$0xff]
        %v4241 = vld [vmem:[%s4216 + $0xc0] sm:$0xff]
        %v4242 = vld [vmem:[%s4216 + $0xc8] sm:$0xff]
        %v4243 = vld [vmem:[%s4216 + $0xd0] sm:$0xff]
        %v4244 = vld [vmem:[%s4216 + $0xd8] sm:$0xff]
        %v4245 = vld [vmem:[%s4216 + $0xe0] sm:$0xff]
        %v4246 = vld [vmem:[%s4216 + $0xe8] sm:$0xff]
        %v4247 = vld [vmem:[%s4216 + $0xf0] sm:$0xff]
        %v4248 = vld [vmem:[%s4216 + $0xf8] sm:$0xff]
        %s4249 = scalar_lea.vmem %s4, 14
        %v4250 = vld [vmem:[%s4249] sm:$0x3]
        %v4252 = vlaneseq
        %v4253 = vshrl.u32 %v4252, 7
        %v4254 = vsub.s32 0, %v4253
        %v4255 = vrot.slane %v4250, %v4254
        %v4256 = vlaneseq
        %v4257 = vshrl.u32 %v4256, 7
        %v4258 = vsub.s32 1, %v4257
        %v4259 = vrot.slane %v4250, %v4258
        %v4294 = vunpack.c.l.b16 %v4217
        %v4295 = vunpack.c.h.b16 %v4217
        %v4296 = vunpack.c.l.b16 %v4218
        %v4297 = vunpack.c.h.b16 %v4218
        %v4298 = vunpack.c.l.b16 %v4219
        %v4299 = vunpack.c.h.b16 %v4219
        %v4300 = vunpack.c.l.b16 %v4220
        %v4301 = vunpack.c.h.b16 %v4220
        %v4302 = vunpack.c.l.b16 %v4221
        %v4303 = vunpack.c.h.b16 %v4221
        %v4304 = vunpack.c.l.b16 %v4222
        %v4305 = vunpack.c.h.b16 %v4222
        %v4306 = vunpack.c.l.b16 %v4223
        %v4307 = vunpack.c.h.b16 %v4223
        %v4308 = vunpack.c.l.b16 %v4224
        %v4309 = vunpack.c.h.b16 %v4224
        %v4310 = vunpack.c.l.b16 %v4225
        %v4311 = vunpack.c.h.b16 %v4225
        %v4312 = vunpack.c.l.b16 %v4226
        %v4313 = vunpack.c.h.b16 %v4226
        %v4314 = vunpack.c.l.b16 %v4227
        %v4315 = vunpack.c.h.b16 %v4227
        %v4316 = vunpack.c.l.b16 %v4228
        %v4317 = vunpack.c.h.b16 %v4228
        %v4318 = vunpack.c.l.b16 %v4229
        %v4319 = vunpack.c.h.b16 %v4229
        %v4320 = vunpack.c.l.b16 %v4230
        %v4321 = vunpack.c.h.b16 %v4230
        %v4322 = vunpack.c.l.b16 %v4231
        %v4323 = vunpack.c.h.b16 %v4231
        %v4324 = vunpack.c.l.b16 %v4232
        %v4325 = vunpack.c.h.b16 %v4232
        %v4326 = vunpack.c.l.b16 %v4233
        %v4327 = vunpack.c.h.b16 %v4233
        %v4328 = vunpack.c.l.b16 %v4234
        %v4329 = vunpack.c.h.b16 %v4234
        %v4330 = vunpack.c.l.b16 %v4235
        %v4331 = vunpack.c.h.b16 %v4235
        %v4332 = vunpack.c.l.b16 %v4236
        %v4333 = vunpack.c.h.b16 %v4236
        %v4334 = vunpack.c.l.b16 %v4237
        %v4335 = vunpack.c.h.b16 %v4237
        %v4336 = vunpack.c.l.b16 %v4238
        %v4337 = vunpack.c.h.b16 %v4238
        %v4338 = vunpack.c.l.b16 %v4239
        %v4339 = vunpack.c.h.b16 %v4239
        %v4340 = vunpack.c.l.b16 %v4240
        %v4341 = vunpack.c.h.b16 %v4240
        %v4342 = vunpack.c.l.b16 %v4241
        %v4343 = vunpack.c.h.b16 %v4241
        %v4344 = vunpack.c.l.b16 %v4242
        %v4345 = vunpack.c.h.b16 %v4242
        %v4346 = vunpack.c.l.b16 %v4243
        %v4347 = vunpack.c.h.b16 %v4243
        %v4348 = vunpack.c.l.b16 %v4244
        %v4349 = vunpack.c.h.b16 %v4244
        %v4350 = vunpack.c.l.b16 %v4245
        %v4351 = vunpack.c.h.b16 %v4245
        %v4352 = vunpack.c.l.b16 %v4246
        %v4353 = vunpack.c.h.b16 %v4246
        %v4354 = vunpack.c.l.b16 %v4247
        %v4355 = vunpack.c.h.b16 %v4247
        %v4356 = vunpack.c.l.b16 %v4248
        %v4357 = vunpack.c.h.b16 %v4248
        %v4358 = vpack.c.b16 %v4296, %v4294
        %v4359 = vpack.c.b16 %v4297, %v4295
        %v4360 = vpack.c.b16 %v4300, %v4298
        %v4361 = vpack.c.b16 %v4301, %v4299
        %v4362 = vpack.c.b16 %v4304, %v4302
        %v4363 = vpack.c.b16 %v4305, %v4303
        %v4364 = vpack.c.b16 %v4308, %v4306
        %v4365 = vpack.c.b16 %v4309, %v4307
        %v4366 = vpack.c.b16 %v4312, %v4310
        %v4367 = vpack.c.b16 %v4313, %v4311
        %v4368 = vpack.c.b16 %v4316, %v4314
        %v4369 = vpack.c.b16 %v4317, %v4315
        %v4370 = vpack.c.b16 %v4320, %v4318
        %v4371 = vpack.c.b16 %v4321, %v4319
        %v4372 = vpack.c.b16 %v4324, %v4322
        %v4373 = vpack.c.b16 %v4325, %v4323
        %v4374 = vpack.c.b16 %v4328, %v4326
        %v4375 = vpack.c.b16 %v4329, %v4327
        %v4376 = vpack.c.b16 %v4332, %v4330
        %v4377 = vpack.c.b16 %v4333, %v4331
        %v4378 = vpack.c.b16 %v4336, %v4334
        %v4379 = vpack.c.b16 %v4337, %v4335
        %v4380 = vpack.c.b16 %v4340, %v4338
        %v4381 = vpack.c.b16 %v4341, %v4339
        %v4382 = vpack.c.b16 %v4344, %v4342
        %v4383 = vpack.c.b16 %v4345, %v4343
        %v4384 = vpack.c.b16 %v4348, %v4346
        %v4385 = vpack.c.b16 %v4349, %v4347
        %v4386 = vpack.c.b16 %v4352, %v4350
        %v4387 = vpack.c.b16 %v4353, %v4351
        %v4388 = vpack.c.b16 %v4356, %v4354
        %v4389 = vpack.c.b16 %v4357, %v4355
        %4422 = vmatprep.subr.bf16.mxu0 %v4359
        %4423 = vmatpush1.bf16.msra.mxu0 %v4358
        %4424 = vmatprep.subr.bf16.mxu0 %v4361
        %4425 = vmatpush1.bf16.msra.mxu0 %v4360
        %4426 = vmatprep.subr.bf16.mxu0 %v4363
        %4427 = vmatpush1.bf16.msra.mxu0 %v4362
        %4428 = vmatprep.subr.bf16.mxu0 %v4365
        %4429 = vmatpush1.bf16.msra.mxu0 %v4364
        %4430 = vmatprep.subr.bf16.mxu0 %v4367
        %4431 = vmatpush1.bf16.msra.mxu0 %v4366
        %4432 = vmatprep.subr.bf16.mxu0 %v4369
        %4433 = vmatpush1.bf16.msra.mxu0 %v4368
        %4434 = vmatprep.subr.bf16.mxu0 %v4371
        %4435 = vmatpush1.bf16.msra.mxu0 %v4370
        %4436 = vmatprep.subr.bf16.mxu0 %v4373
        %4437 = vmatpush1.bf16.msra.mxu0 %v4372
        %4438 = vmatprep.subr.bf16.mxu0 %v4375
        %4439 = vmatpush1.bf16.msra.mxu0 %v4374
        %4440 = vmatprep.subr.bf16.mxu0 %v4377
        %4441 = vmatpush1.bf16.msra.mxu0 %v4376
        %4442 = vmatprep.subr.bf16.mxu0 %v4379
        %4443 = vmatpush1.bf16.msra.mxu0 %v4378
        %4444 = vmatprep.subr.bf16.mxu0 %v4381
        %4445 = vmatpush1.bf16.msra.mxu0 %v4380
        %4446 = vmatprep.subr.bf16.mxu0 %v4383
        %4447 = vmatpush1.bf16.msra.mxu0 %v4382
        %4448 = vmatprep.subr.bf16.mxu0 %v4385
        %4449 = vmatpush1.bf16.msra.mxu0 %v4384
        %4450 = vmatprep.subr.bf16.mxu0 %v4387
        %4451 = vmatpush1.bf16.msra.mxu0 %v4386
        %4452 = vmatprep.subr.bf16.mxu0 %v4389
        %4453 = vmatpush1.bf16.msra.mxu0 %v4388
        %4454 = vmatprep.mubr.bf16.mxu0 %v4185
        %4455 = vmatmul.mubr.bf16.gmra.mrb[0].mxu0 %v4184
        %v4456 = vpop.f32.mrb[0].mxu0
        %v4457 = vadd.f32 %v4255, %v4456
        %v4458 = vpop.f32.mrb[0].mxu0
        %v4459 = vadd.f32 %v4259, %v4458
        %v4460 = vpop.f32.mrb[0].mxu0
        %v4461 = vadd.f32 %v4255, %v4460
        %v4462 = vpop.f32.mrb[0].mxu0
        %v4463 = vadd.f32 %v4259, %v4462
        %4464 = vmatprep.mubr.bf16.mxu0 %v4187
        %4465 = vmatmul.mubr.bf16.gmra.mrb[0].mxu0 %v4186
        %v4466 = vpop.f32.mrb[0].mxu0
        %v4467 = vadd.f32 %v4255, %v4466
        %v4468 = vpop.f32.mrb[0].mxu0
        %v4469 = vadd.f32 %v4259, %v4468
        %v4470 = vpop.f32.mrb[0].mxu0
        %v4471 = vadd.f32 %v4255, %v4470
        %v4472 = vpop.f32.mrb[0].mxu0
        %v4473 = vadd.f32 %v4259, %v4472
        %4474 = vmatprep.mubr.bf16.mxu0 %v4189
        %4475 = vmatmul.mubr.bf16.gmra.mrb[0].mxu0 %v4188
        %v4476 = vpop.f32.mrb[0].mxu0
        %v4477 = vadd.f32 %v4255, %v4476
        %v4478 = vpop.f32.mrb[0].mxu0
        %v4479 = vadd.f32 %v4259, %v4478
        %v4480 = vpop.f32.mrb[0].mxu0
        %v4481 = vadd.f32 %v4255, %v4480
        %v4482 = vpop.f32.mrb[0].mxu0
        %v4483 = vadd.f32 %v4259, %v4482
        %4484 = vmatprep.mubr.bf16.mxu0 %v4191
        %4485 = vmatmul.mubr.bf16.gmra.mrb[0].mxu0 %v4190
        %v4486 = vpop.f32.mrb[0].mxu0
        %v4487 = vadd.f32 %v4255, %v4486
        %v4488 = vpop.f32.mrb[0].mxu0
        %v4489 = vadd.f32 %v4259, %v4488
        %v4490 = vpop.f32.mrb[0].mxu0
        %v4491 = vadd.f32 %v4255, %v4490
        %v4492 = vpop.f32.mrb[0].mxu0
        %v4493 = vadd.f32 %v4259, %v4492
        %4494 = vmatprep.mubr.bf16.mxu0 %v4193
        %4495 = vmatmul.mubr.bf16.gmra.mrb[0].mxu0 %v4192
        %v4496 = vpop.f32.mrb[0].mxu0
        %v4497 = vadd.f32 %v4255, %v4496
        %v4498 = vpop.f32.mrb[0].mxu0
        %v4499 = vadd.f32 %v4259, %v4498
        %v4500 = vpop.f32.mrb[0].mxu0
        %v4501 = vadd.f32 %v4255, %v4500
        %v4502 = vpop.f32.mrb[0].mxu0
        %v4503 = vadd.f32 %v4259, %v4502
        %4504 = vmatprep.mubr.bf16.mxu0 %v4195
        %4505 = vmatmul.mubr.bf16.gmra.mrb[0].mxu0 %v4194
        %v4506 = vpop.f32.mrb[0].mxu0
        %v4507 = vadd.f32 %v4255, %v4506
        %v4508 = vpop.f32.mrb[0].mxu0
        %v4509 = vadd.f32 %v4259, %v4508
        %v4510 = vpop.f32.mrb[0].mxu0
        %v4511 = vadd.f32 %v4255, %v4510
        %v4512 = vpop.f32.mrb[0].mxu0
        %v4513 = vadd.f32 %v4259, %v4512
        %4514 = vmatprep.mubr.bf16.mxu0 %v4197
        %4515 = vmatmul.mubr.bf16.gmra.mrb[0].mxu0 %v4196
        %v4516 = vpop.f32.mrb[0].mxu0
        %v4517 = vadd.f32 %v4255, %v4516
        %v4518 = vpop.f32.mrb[0].mxu0
        %v4519 = vadd.f32 %v4259, %v4518
        %v4520 = vpop.f32.mrb[0].mxu0
        %v4521 = vadd.f32 %v4255, %v4520
        %v4522 = vpop.f32.mrb[0].mxu0
        %v4523 = vadd.f32 %v4259, %v4522
        %4524 = vmatprep.mubr.bf16.mxu0 %v4199
        %4525 = vmatmul.mubr.bf16.gmra.mrb[0].mxu0 %v4198
        %v4526 = vpop.f32.mrb[0].mxu0
        %v4527 = vadd.f32 %v4255, %v4526
        %v4528 = vpop.f32.mrb[0].mxu0
        %v4529 = vadd.f32 %v4259, %v4528
        %v4530 = vpop.f32.mrb[0].mxu0
        %v4531 = vadd.f32 %v4255, %v4530
        %v4532 = vpop.f32.mrb[0].mxu0
        %v4533 = vadd.f32 %v4259, %v4532
        %4534 = vmatprep.mubr.bf16.mxu0 %v4201
        %4535 = vmatmul.mubr.bf16.gmra.mrb[0].mxu0 %v4200
        %v4536 = vpop.f32.mrb[0].mxu0
        %v4537 = vadd.f32 %v4255, %v4536
        %v4538 = vpop.f32.mrb[0].mxu0
        %v4539 = vadd.f32 %v4259, %v4538
        %v4540 = vpop.f32.mrb[0].mxu0
        %v4541 = vadd.f32 %v4255, %v4540
        %v4542 = vpop.f32.mrb[0].mxu0
        %v4543 = vadd.f32 %v4259, %v4542
        %4544 = vmatprep.mubr.bf16.mxu0 %v4203
        %4545 = vmatmul.mubr.bf16.gmra.mrb[0].mxu0 %v4202
        %v4546 = vpop.f32.mrb[0].mxu0
        %v4547 = vadd.f32 %v4255, %v4546
        %v4548 = vpop.f32.mrb[0].mxu0
        %v4549 = vadd.f32 %v4259, %v4548
        %v4550 = vpop.f32.mrb[0].mxu0
        %v4551 = vadd.f32 %v4255, %v4550
        %v4552 = vpop.f32.mrb[0].mxu0
        %v4553 = vadd.f32 %v4259, %v4552
        %4554 = vmatprep.mubr.bf16.mxu0 %v4205
        %4555 = vmatmul.mubr.bf16.gmra.mrb[0].mxu0 %v4204
        %v4556 = vpop.f32.mrb[0].mxu0
        %v4557 = vadd.f32 %v4255, %v4556
        %v4558 = vpop.f32.mrb[0].mxu0
        %v4559 = vadd.f32 %v4259, %v4558
        %v4560 = vpop.f32.mrb[0].mxu0
        %v4561 = vadd.f32 %v4255, %v4560
        %v4562 = vpop.f32.mrb[0].mxu0
        %v4563 = vadd.f32 %v4259, %v4562
        %4564 = vmatprep.mubr.bf16.mxu0 %v4207
        %4565 = vmatmul.mubr.bf16.gmra.mrb[0].mxu0 %v4206
        %v4566 = vpop.f32.mrb[0].mxu0
        %v4567 = vadd.f32 %v4255, %v4566
        %v4568 = vpop.f32.mrb[0].mxu0
        %v4569 = vadd.f32 %v4259, %v4568
        %v4570 = vpop.f32.mrb[0].mxu0
        %v4571 = vadd.f32 %v4255, %v4570
        %v4572 = vpop.f32.mrb[0].mxu0
        %v4573 = vadd.f32 %v4259, %v4572
        %4574 = vmatprep.mubr.bf16.mxu0 %v4209
        %4575 = vmatmul.mubr.bf16.gmra.mrb[0].mxu0 %v4208
        %v4576 = vpop.f32.mrb[0].mxu0
        %v4577 = vadd.f32 %v4255, %v4576
        %v4578 = vpop.f32.mrb[0].mxu0
        %v4579 = vadd.f32 %v4259, %v4578
        %v4580 = vpop.f32.mrb[0].mxu0
        %v4581 = vadd.f32 %v4255, %v4580
        %v4582 = vpop.f32.mrb[0].mxu0
        %v4583 = vadd.f32 %v4259, %v4582
        %4584 = vmatprep.mubr.bf16.mxu0 %v4211
        %4585 = vmatmul.mubr.bf16.gmra.mrb[0].mxu0 %v4210
        %v4586 = vpop.f32.mrb[0].mxu0
        %v4587 = vadd.f32 %v4255, %v4586
        %v4588 = vpop.f32.mrb[0].mxu0
        %v4589 = vadd.f32 %v4259, %v4588
        %v4590 = vpop.f32.mrb[0].mxu0
        %v4591 = vadd.f32 %v4255, %v4590
        %v4592 = vpop.f32.mrb[0].mxu0
        %v4593 = vadd.f32 %v4259, %v4592
        %4594 = vmatprep.mubr.bf16.mxu0 %v4213
        %4595 = vmatmul.mubr.bf16.gmra.mrb[0].mxu0 %v4212
        %v4596 = vpop.f32.mrb[0].mxu0
        %v4597 = vadd.f32 %v4255, %v4596
        %v4598 = vpop.f32.mrb[0].mxu0
        %v4599 = vadd.f32 %v4259, %v4598
        %v4600 = vpop.f32.mrb[0].mxu0
        %v4601 = vadd.f32 %v4255, %v4600
        %v4602 = vpop.f32.mrb[0].mxu0
        %v4603 = vadd.f32 %v4259, %v4602
        %4604 = vmatprep.mubr.bf16.mxu0 %v4215
        %4605 = vmatmul.mubr.bf16.gmra.mrb[0].mxu0 %v4214
        %v4606 = vpop.f32.mrb[0].mxu0
        %v4607 = vadd.f32 %v4255, %v4606
        %v4608 = vpop.f32.mrb[0].mxu0
        %v4609 = vadd.f32 %v4259, %v4608
        %v4610 = vpop.f32.mrb[0].mxu0
        %v4611 = vadd.f32 %v4255, %v4610
        %v4612 = vpop.f32.mrb[0].mxu0
        %v4613 = vadd.f32 %v4259, %v4612
        %4614 = vdwg.mxu0
        %v4615 = vmax.f32 %v4457, 0.0
        %v4616 = vmax.f32 %v4459, 0.0
        %v4617 = vmax.f32 %v4461, 0.0
        %v4618 = vmax.f32 %v4463, 0.0
        %v4619 = vmax.f32 %v4467, 0.0
        %v4620 = vmax.f32 %v4469, 0.0
        %v4621 = vmax.f32 %v4471, 0.0
        %v4622 = vmax.f32 %v4473, 0.0
        %v4623 = vmax.f32 %v4477, 0.0
        %v4624 = vmax.f32 %v4479, 0.0
        %v4625 = vmax.f32 %v4481, 0.0
        %v4626 = vmax.f32 %v4483, 0.0
        %v4627 = vmax.f32 %v4487, 0.0
        %v4628 = vmax.f32 %v4489, 0.0
        %v4629 = vmax.f32 %v4491, 0.0
        %v4630 = vmax.f32 %v4493, 0.0
        %v4631 = vmax.f32 %v4497, 0.0
        %v4632 = vmax.f32 %v4499, 0.0
        %v4633 = vmax.f32 %v4501, 0.0
        %v4634 = vmax.f32 %v4503, 0.0
        %v4635 = vmax.f32 %v4507, 0.0
        %v4636 = vmax.f32 %v4509, 0.0
        %v4637 = vmax.f32 %v4511, 0.0
        %v4638 = vmax.f32 %v4513, 0.0
        %v4639 = vmax.f32 %v4517, 0.0
        %v4640 = vmax.f32 %v4519, 0.0
        %v4641 = vmax.f32 %v4521, 0.0
        %v4642 = vmax.f32 %v4523, 0.0
        %v4643 = vmax.f32 %v4527, 0.0
        %v4644 = vmax.f32 %v4529, 0.0
        %v4645 = vmax.f32 %v4531, 0.0
        %v4646 = vmax.f32 %v4533, 0.0
        %v4647 = vmax.f32 %v4537, 0.0
        %v4648 = vmax.f32 %v4539, 0.0
        %v4649 = vmax.f32 %v4541, 0.0
        %v4650 = vmax.f32 %v4543, 0.0
        %v4651 = vmax.f32 %v4547, 0.0
        %v4652 = vmax.f32 %v4549, 0.0
        %v4653 = vmax.f32 %v4551, 0.0
        %v4654 = vmax.f32 %v4553, 0.0
        %v4655 = vmax.f32 %v4557, 0.0
        %v4656 = vmax.f32 %v4559, 0.0
        %v4657 = vmax.f32 %v4561, 0.0
        %v4658 = vmax.f32 %v4563, 0.0
        %v4659 = vmax.f32 %v4567, 0.0
        %v4660 = vmax.f32 %v4569, 0.0
        %v4661 = vmax.f32 %v4571, 0.0
        %v4662 = vmax.f32 %v4573, 0.0
        %v4663 = vmax.f32 %v4577, 0.0
        %v4664 = vmax.f32 %v4579, 0.0
        %v4665 = vmax.f32 %v4581, 0.0
        %v4666 = vmax.f32 %v4583, 0.0
        %v4667 = vmax.f32 %v4587, 0.0
        %v4668 = vmax.f32 %v4589, 0.0
        %v4669 = vmax.f32 %v4591, 0.0
        %v4670 = vmax.f32 %v4593, 0.0
        %v4671 = vmax.f32 %v4597, 0.0
        %v4672 = vmax.f32 %v4599, 0.0
        %v4673 = vmax.f32 %v4601, 0.0
        %v4674 = vmax.f32 %v4603, 0.0
        %v4675 = vmax.f32 %v4607, 0.0
        %v4676 = vmax.f32 %v4609, 0.0
        %v4677 = vmax.f32 %v4611, 0.0
        %v4678 = vmax.f32 %v4613, 0.0
        %v4679 = vpack.c.bf16 %v4617, %v4615
        %v4680 = vpack.c.bf16 %v4618, %v4616
        %v4681 = vpack.c.bf16 %v4621, %v4619
        %v4682 = vpack.c.bf16 %v4622, %v4620
        %v4683 = vpack.c.bf16 %v4625, %v4623
        %v4684 = vpack.c.bf16 %v4626, %v4624
        %v4685 = vpack.c.bf16 %v4629, %v4627
        %v4686 = vpack.c.bf16 %v4630, %v4628
        %v4687 = vpack.c.bf16 %v4633, %v4631
        %v4688 = vpack.c.bf16 %v4634, %v4632
        %v4689 = vpack.c.bf16 %v4637, %v4635
        %v4690 = vpack.c.bf16 %v4638, %v4636
        %v4691 = vpack.c.bf16 %v4641, %v4639
        %v4692 = vpack.c.bf16 %v4642, %v4640
        %v4693 = vpack.c.bf16 %v4645, %v4643
        %v4694 = vpack.c.bf16 %v4646, %v4644
        %v4695 = vpack.c.bf16 %v4649, %v4647
        %v4696 = vpack.c.bf16 %v4650, %v4648
        %v4697 = vpack.c.bf16 %v4653, %v4651
        %v4698 = vpack.c.bf16 %v4654, %v4652
        %v4699 = vpack.c.bf16 %v4657, %v4655
        %v4700 = vpack.c.bf16 %v4658, %v4656
        %v4701 = vpack.c.bf16 %v4661, %v4659
        %v4702 = vpack.c.bf16 %v4662, %v4660
        %v4703 = vpack.c.bf16 %v4665, %v4663
        %v4704 = vpack.c.bf16 %v4666, %v4664
        %v4705 = vpack.c.bf16 %v4669, %v4667
        %v4706 = vpack.c.bf16 %v4670, %v4668
        %v4707 = vpack.c.bf16 %v4673, %v4671
        %v4708 = vpack.c.bf16 %v4674, %v4672
        %v4709 = vpack.c.bf16 %v4677, %v4675
        %v4710 = vpack.c.bf16 %v4678, %v4676
        %v4711 = vld [vmem:[%s5] sm:$0xf]
        %v4712 = vld [vmem:[%s5 + $0x4] sm:$0xf]
        %v4713 = vld [vmem:[%s5 + $0x8] sm:$0xf]
        %v4714 = vld [vmem:[%s5 + $0xc] sm:$0xf]
        %v4715 = vld [vmem:[%s5 + $0x10] sm:$0xf]
        %v4716 = vld [vmem:[%s5 + $0x14] sm:$0xf]
        %v4717 = vld [vmem:[%s5 + $0x18] sm:$0xf]
        %v4718 = vld [vmem:[%s5 + $0x1c] sm:$0xf]
        %v4719 = vld [vmem:[%s5 + $0x20] sm:$0xf]
        %v4720 = vld [vmem:[%s5 + $0x24] sm:$0xf]
        %v4721 = vld [vmem:[%s5 + $0x28] sm:$0xf]
        %v4722 = vld [vmem:[%s5 + $0x2c] sm:$0xf]
        %v4723 = vld [vmem:[%s5 + $0x30] sm:$0xf]
        %v4724 = vld [vmem:[%s5 + $0x34] sm:$0xf]
        %v4725 = vld [vmem:[%s5 + $0x38] sm:$0xf]
        %v4726 = vld [vmem:[%s5 + $0x3c] sm:$0xf]
        %v4727 = vld [vmem:[%s5 + $0x40] sm:$0xf]
        %v4728 = vld [vmem:[%s5 + $0x44] sm:$0xf]
        %v4729 = vld [vmem:[%s5 + $0x48] sm:$0xf]
        %v4730 = vld [vmem:[%s5 + $0x4c] sm:$0xf]
        %v4731 = vld [vmem:[%s5 + $0x50] sm:$0xf]
        %v4732 = vld [vmem:[%s5 + $0x54] sm:$0xf]
        %v4733 = vld [vmem:[%s5 + $0x58] sm:$0xf]
        %v4734 = vld [vmem:[%s5 + $0x5c] sm:$0xf]
        %v4735 = vld [vmem:[%s5 + $0x60] sm:$0xf]
        %v4736 = vld [vmem:[%s5 + $0x64] sm:$0xf]
        %v4737 = vld [vmem:[%s5 + $0x68] sm:$0xf]
        %v4738 = vld [vmem:[%s5 + $0x6c] sm:$0xf]
        %v4739 = vld [vmem:[%s5 + $0x70] sm:$0xf]
        %v4740 = vld [vmem:[%s5 + $0x74] sm:$0xf]
        %v4741 = vld [vmem:[%s5 + $0x78] sm:$0xf]
        %v4742 = vld [vmem:[%s5 + $0x7c] sm:$0xf]
        %v4743 = vld [vmem:[%s9] sm:$0x1]
        %v4745 = vlaneseq
        %v4746 = vshrl.u32 %v4745, 7
        %v4747 = vsub.s32 0, %v4746
        %v4748 = vrot.slane %v4743, %v4747
        %v4782 = vunpack.c.l.b16 %v4711
        %v4783 = vunpack.c.l.b16 %v4712
        %v4784 = vunpack.c.l.b16 %v4713
        %v4785 = vunpack.c.l.b16 %v4714
        %v4786 = vunpack.c.l.b16 %v4715
        %v4787 = vunpack.c.l.b16 %v4716
        %v4788 = vunpack.c.l.b16 %v4717
        %v4789 = vunpack.c.l.b16 %v4718
        %v4790 = vunpack.c.l.b16 %v4719
        %v4791 = vunpack.c.l.b16 %v4720
        %v4792 = vunpack.c.l.b16 %v4721
        %v4793 = vunpack.c.l.b16 %v4722
        %v4794 = vunpack.c.l.b16 %v4723
        %v4795 = vunpack.c.l.b16 %v4724
        %v4796 = vunpack.c.l.b16 %v4725
        %v4797 = vunpack.c.l.b16 %v4726
        %v4798 = vunpack.c.l.b16 %v4727
        %v4799 = vunpack.c.l.b16 %v4728
        %v4800 = vunpack.c.l.b16 %v4729
        %v4801 = vunpack.c.l.b16 %v4730
        %v4802 = vunpack.c.l.b16 %v4731
        %v4803 = vunpack.c.l.b16 %v4732
        %v4804 = vunpack.c.l.b16 %v4733
        %v4805 = vunpack.c.l.b16 %v4734
        %v4806 = vunpack.c.l.b16 %v4735
        %v4807 = vunpack.c.l.b16 %v4736
        %v4808 = vunpack.c.l.b16 %v4737
        %v4809 = vunpack.c.l.b16 %v4738
        %v4810 = vunpack.c.l.b16 %v4739
        %v4811 = vunpack.c.l.b16 %v4740
        %v4812 = vunpack.c.l.b16 %v4741
        %v4813 = vunpack.c.l.b16 %v4742
        %v4814 = vpack.c.b16 %v4783, %v4782
        %v4815 = vpack.c.b16 %v4785, %v4784
        %v4816 = vpack.c.b16 %v4787, %v4786
        %v4817 = vpack.c.b16 %v4789, %v4788
        %v4818 = vpack.c.b16 %v4791, %v4790
        %v4819 = vpack.c.b16 %v4793, %v4792
        %v4820 = vpack.c.b16 %v4795, %v4794
        %v4821 = vpack.c.b16 %v4797, %v4796
        %v4822 = vpack.c.b16 %v4799, %v4798
        %v4823 = vpack.c.b16 %v4801, %v4800
        %v4824 = vpack.c.b16 %v4803, %v4802
        %v4825 = vpack.c.b16 %v4805, %v4804
        %v4826 = vpack.c.b16 %v4807, %v4806
        %v4827 = vpack.c.b16 %v4809, %v4808
        %v4828 = vpack.c.b16 %v4811, %v4810
        %v4829 = vpack.c.b16 %v4813, %v4812
        %4846 = vmatprep.subr.bf16.mxu0 0
        %4847 = vmatpush1.bf16.msra.mxu0 %v4814
        %4848 = vmatprep.subr.bf16.mxu0 0
        %4849 = vmatpush1.bf16.msra.mxu0 %v4815
        %4850 = vmatprep.subr.bf16.mxu0 0
        %4851 = vmatpush1.bf16.msra.mxu0 %v4816
        %4852 = vmatprep.subr.bf16.mxu0 0
        %4853 = vmatpush1.bf16.msra.mxu0 %v4817
        %4854 = vmatprep.subr.bf16.mxu0 0
        %4855 = vmatpush1.bf16.msra.mxu0 %v4818
        %4856 = vmatprep.subr.bf16.mxu0 0
        %4857 = vmatpush1.bf16.msra.mxu0 %v4819
        %4858 = vmatprep.subr.bf16.mxu0 0
        %4859 = vmatpush1.bf16.msra.mxu0 %v4820
        %4860 = vmatprep.subr.bf16.mxu0 0
        %4861 = vmatpush1.bf16.msra.mxu0 %v4821
        %4862 = vmatprep.subr.bf16.mxu0 0
        %4863 = vmatpush1.bf16.msra.mxu0 %v4822
        %4864 = vmatprep.subr.bf16.mxu0 0
        %4865 = vmatpush1.bf16.msra.mxu0 %v4823
        %4866 = vmatprep.subr.bf16.mxu0 0
        %4867 = vmatpush1.bf16.msra.mxu0 %v4824
        %4868 = vmatprep.subr.bf16.mxu0 0
        %4869 = vmatpush1.bf16.msra.mxu0 %v4825
        %4870 = vmatprep.subr.bf16.mxu0 0
        %4871 = vmatpush1.bf16.msra.mxu0 %v4826
        %4872 = vmatprep.subr.bf16.mxu0 0
        %4873 = vmatpush1.bf16.msra.mxu0 %v4827
        %4874 = vmatprep.subr.bf16.mxu0 0
        %4875 = vmatpush1.bf16.msra.mxu0 %v4828
        %4876 = vmatprep.subr.bf16.mxu0 0
        %4877 = vmatpush1.bf16.msra.mxu0 %v4829
        %4878 = vmatprep.mubr.bf16.mxu0 %v4680
        %4879 = vmatmul.mubr.bf16.gmra.mrb[0].mxu0 %v4679
        %v4880 = vpop.f32.mrb[0].mxu0
        %v4881 = vadd.f32 %v4748, %v4880
        %v4882 = vpop.f32.mrb[0].mxu0
        %v4883 = vpop.f32.mrb[0].mxu0
        %v4884 = vadd.f32 %v4748, %v4883
        %v4885 = vpop.f32.mrb[0].mxu0
        %4886 = vmatprep.mubr.bf16.mxu0 %v4682
        %4887 = vmatmul.mubr.bf16.gmra.mrb[0].mxu0 %v4681
        %v4888 = vpop.f32.mrb[0].mxu0
        %v4889 = vadd.f32 %v4748, %v4888
        %v4890 = vpop.f32.mrb[0].mxu0
        %v4891 = vpop.f32.mrb[0].mxu0
        %v4892 = vadd.f32 %v4748, %v4891
        %v4893 = vpop.f32.mrb[0].mxu0
        %4894 = vmatprep.mubr.bf16.mxu0 %v4684
        %4895 = vmatmul.mubr.bf16.gmra.mrb[0].mxu0 %v4683
        %v4896 = vpop.f32.mrb[0].mxu0
        %v4897 = vadd.f32 %v4748, %v4896
        %v4898 = vpop.f32.mrb[0].mxu0
        %v4899 = vpop.f32.mrb[0].mxu0
        %v4900 = vadd.f32 %v4748, %v4899
        %v4901 = vpop.f32.mrb[0].mxu0
        %4902 = vmatprep.mubr.bf16.mxu0 %v4686
        %4903 = vmatmul.mubr.bf16.gmra.mrb[0].mxu0 %v4685
        %v4904 = vpop.f32.mrb[0].mxu0
        %v4905 = vadd.f32 %v4748, %v4904
        %v4906 = vpop.f32.mrb[0].mxu0
        %v4907 = vpop.f32.mrb[0].mxu0
        %v4908 = vadd.f32 %v4748, %v4907
        %v4909 = vpop.f32.mrb[0].mxu0
        %4910 = vmatprep.mubr.bf16.mxu0 %v4688
        %4911 = vmatmul.mubr.bf16.gmra.mrb[0].mxu0 %v4687
        %v4912 = vpop.f32.mrb[0].mxu0
        %v4913 = vadd.f32 %v4748, %v4912
        %v4914 = vpop.f32.mrb[0].mxu0
        %v4915 = vpop.f32.mrb[0].mxu0
        %v4916 = vadd.f32 %v4748, %v4915
        %v4917 = vpop.f32.mrb[0].mxu0
        %4918 = vmatprep.mubr.bf16.mxu0 %v4690
        %4919 = vmatmul.mubr.bf16.gmra.mrb[0].mxu0 %v4689
        %v4920 = vpop.f32.mrb[0].mxu0
        %v4921 = vadd.f32 %v4748, %v4920
        %v4922 = vpop.f32.mrb[0].mxu0
        %v4923 = vpop.f32.mrb[0].mxu0
        %v4924 = vadd.f32 %v4748, %v4923
        %v4925 = vpop.f32.mrb[0].mxu0
        %4926 = vmatprep.mubr.bf16.mxu0 %v4692
        %4927 = vmatmul.mubr.bf16.gmra.mrb[0].mxu0 %v4691
        %v4928 = vpop.f32.mrb[0].mxu0
        %v4929 = vadd.f32 %v4748, %v4928
        %v4930 = vpop.f32.mrb[0].mxu0
        %v4931 = vpop.f32.mrb[0].mxu0
        %v4932 = vadd.f32 %v4748, %v4931
        %v4933 = vpop.f32.mrb[0].mxu0
        %4934 = vmatprep.mubr.bf16.mxu0 %v4694
        %4935 = vmatmul.mubr.bf16.gmra.mrb[0].mxu0 %v4693
        %v4936 = vpop.f32.mrb[0].mxu0
        %v4937 = vadd.f32 %v4748, %v4936
        %v4938 = vpop.f32.mrb[0].mxu0
        %v4939 = vpop.f32.mrb[0].mxu0
        %v4940 = vadd.f32 %v4748, %v4939
        %v4941 = vpop.f32.mrb[0].mxu0
        %4942 = vmatprep.mubr.bf16.mxu0 %v4696
        %4943 = vmatmul.mubr.bf16.gmra.mrb[0].mxu0 %v4695
        %v4944 = vpop.f32.mrb[0].mxu0
        %v4945 = vadd.f32 %v4748, %v4944
        %v4946 = vpop.f32.mrb[0].mxu0
        %v4947 = vpop.f32.mrb[0].mxu0
        %v4948 = vadd.f32 %v4748, %v4947
        %v4949 = vpop.f32.mrb[0].mxu0
        %4950 = vmatprep.mubr.bf16.mxu0 %v4698
        %4951 = vmatmul.mubr.bf16.gmra.mrb[0].mxu0 %v4697
        %v4952 = vpop.f32.mrb[0].mxu0
        %v4953 = vadd.f32 %v4748, %v4952
        %v4954 = vpop.f32.mrb[0].mxu0
        %v4955 = vpop.f32.mrb[0].mxu0
        %v4956 = vadd.f32 %v4748, %v4955
        %v4957 = vpop.f32.mrb[0].mxu0
        %4958 = vmatprep.mubr.bf16.mxu0 %v4700
        %4959 = vmatmul.mubr.bf16.gmra.mrb[0].mxu0 %v4699
        %v4960 = vpop.f32.mrb[0].mxu0
        %v4961 = vadd.f32 %v4748, %v4960
        %v4962 = vpop.f32.mrb[0].mxu0
        %v4963 = vpop.f32.mrb[0].mxu0
        %v4964 = vadd.f32 %v4748, %v4963
        %v4965 = vpop.f32.mrb[0].mxu0
        %4966 = vmatprep.mubr.bf16.mxu0 %v4702
        %4967 = vmatmul.mubr.bf16.gmra.mrb[0].mxu0 %v4701
        %v4968 = vpop.f32.mrb[0].mxu0
        %v4969 = vadd.f32 %v4748, %v4968
        %v4970 = vpop.f32.mrb[0].mxu0
        %v4971 = vpop.f32.mrb[0].mxu0
        %v4972 = vadd.f32 %v4748, %v4971
        %v4973 = vpop.f32.mrb[0].mxu0
        %4974 = vmatprep.mubr.bf16.mxu0 %v4704
        %4975 = vmatmul.mubr.bf16.gmra.mrb[0].mxu0 %v4703
        %v4976 = vpop.f32.mrb[0].mxu0
        %v4977 = vadd.f32 %v4748, %v4976
        %v4978 = vpop.f32.mrb[0].mxu0
        %v4979 = vpop.f32.mrb[0].mxu0
        %v4980 = vadd.f32 %v4748, %v4979
        %v4981 = vpop.f32.mrb[0].mxu0
        %4982 = vmatprep.mubr.bf16.mxu0 %v4706
        %4983 = vmatmul.mubr.bf16.gmra.mrb[0].mxu0 %v4705
        %v4984 = vpop.f32.mrb[0].mxu0
        %v4985 = vadd.f32 %v4748, %v4984
        %v4986 = vpop.f32.mrb[0].mxu0
        %v4987 = vpop.f32.mrb[0].mxu0
        %v4988 = vadd.f32 %v4748, %v4987
        %v4989 = vpop.f32.mrb[0].mxu0
        %4990 = vmatprep.mubr.bf16.mxu0 %v4708
        %4991 = vmatmul.mubr.bf16.gmra.mrb[0].mxu0 %v4707
        %v4992 = vpop.f32.mrb[0].mxu0
        %v4993 = vadd.f32 %v4748, %v4992
        %v4994 = vpop.f32.mrb[0].mxu0
        %v4995 = vpop.f32.mrb[0].mxu0
        %v4996 = vadd.f32 %v4748, %v4995
        %v4997 = vpop.f32.mrb[0].mxu0
        %4998 = vmatprep.mubr.bf16.mxu0 %v4710
        %4999 = vmatmul.mubr.bf16.gmra.mrb[0].mxu0 %v4709
        %v5000 = vpop.f32.mrb[0].mxu0
        %v5001 = vadd.f32 %v4748, %v5000
        %v5002 = vpop.f32.mrb[0].mxu0
        %v5003 = vpop.f32.mrb[0].mxu0
        %v5004 = vadd.f32 %v4748, %v5003
        %v5005 = vpop.f32.mrb[0].mxu0
        %5006 = vdwg.mxu0
        %v5007 = vmax.f32 %v4881, 0.0
        %v5008 = vmax.f32 %v4884, 0.0
        %v5009 = vmax.f32 %v4889, 0.0
        %v5010 = vmax.f32 %v4892, 0.0
        %v5011 = vmax.f32 %v4897, 0.0
        %v5012 = vmax.f32 %v4900, 0.0
        %v5013 = vmax.f32 %v4905, 0.0
        %v5014 = vmax.f32 %v4908, 0.0
        %v5015 = vmax.f32 %v4913, 0.0
        %v5016 = vmax.f32 %v4916, 0.0
        %v5017 = vmax.f32 %v4921, 0.0
        %v5018 = vmax.f32 %v4924, 0.0
        %v5019 = vmax.f32 %v4929, 0.0
        %v5020 = vmax.f32 %v4932, 0.0
        %v5021 = vmax.f32 %v4937, 0.0
        %v5022 = vmax.f32 %v4940, 0.0
        %v5023 = vmax.f32 %v4945, 0.0
        %v5024 = vmax.f32 %v4948, 0.0
        %v5025 = vmax.f32 %v4953, 0.0
        %v5026 = vmax.f32 %v4956, 0.0
        %v5027 = vmax.f32 %v4961, 0.0
        %v5028 = vmax.f32 %v4964, 0.0
        %v5029 = vmax.f32 %v4969, 0.0
        %v5030 = vmax.f32 %v4972, 0.0
        %v5031 = vmax.f32 %v4977, 0.0
        %v5032 = vmax.f32 %v4980, 0.0
        %v5033 = vmax.f32 %v4985, 0.0
        %v5034 = vmax.f32 %v4988, 0.0
        %v5035 = vmax.f32 %v4993, 0.0
        %v5036 = vmax.f32 %v4996, 0.0
        %v5037 = vmax.f32 %v5001, 0.0
        %v5038 = vmax.f32 %v5004, 0.0
        %s5039 = scalar_lea.vmem [#allocation2], 1792
        %v5040 = vld [vmem:[%s5039] sm:$0xff]
        %v5041 = vld [vmem:[%s5039 + $0x8] sm:$0xff]
        %v5042 = vld [vmem:[%s5039 + $0x10] sm:$0xff]
        %v5043 = vld [vmem:[%s5039 + $0x18] sm:$0xff]
        %v5044 = vld [vmem:[%s5039 + $0x20] sm:$0xff]
        %v5045 = vld [vmem:[%s5039 + $0x28] sm:$0xff]
        %v5046 = vld [vmem:[%s5039 + $0x30] sm:$0xff]
        %v5047 = vld [vmem:[%s5039 + $0x38] sm:$0xff]
        %v5048 = vld [vmem:[%s5039 + $0x40] sm:$0xff]
        %v5049 = vld [vmem:[%s5039 + $0x48] sm:$0xff]
        %v5050 = vld [vmem:[%s5039 + $0x50] sm:$0xff]
        %v5051 = vld [vmem:[%s5039 + $0x58] sm:$0xff]
        %v5052 = vld [vmem:[%s5039 + $0x60] sm:$0xff]
        %v5053 = vld [vmem:[%s5039 + $0x68] sm:$0xff]
        %v5054 = vld [vmem:[%s5039 + $0x70] sm:$0xff]
        %v5055 = vld [vmem:[%s5039 + $0x78] sm:$0xff]
        %v5056 = vld [vmem:[%s5039 + $0x80] sm:$0xff]
        %v5057 = vld [vmem:[%s5039 + $0x88] sm:$0xff]
        %v5058 = vld [vmem:[%s5039 + $0x90] sm:$0xff]
        %v5059 = vld [vmem:[%s5039 + $0x98] sm:$0xff]
        %v5060 = vld [vmem:[%s5039 + $0xa0] sm:$0xff]
        %v5061 = vld [vmem:[%s5039 + $0xa8] sm:$0xff]
        %v5062 = vld [vmem:[%s5039 + $0xb0] sm:$0xff]
        %v5063 = vld [vmem:[%s5039 + $0xb8] sm:$0xff]
        %v5064 = vld [vmem:[%s5039 + $0xc0] sm:$0xff]
        %v5065 = vld [vmem:[%s5039 + $0xc8] sm:$0xff]
        %v5066 = vld [vmem:[%s5039 + $0xd0] sm:$0xff]
        %v5067 = vld [vmem:[%s5039 + $0xd8] sm:$0xff]
        %v5068 = vld [vmem:[%s5039 + $0xe0] sm:$0xff]
        %v5069 = vld [vmem:[%s5039 + $0xe8] sm:$0xff]
        %v5070 = vld [vmem:[%s5039 + $0xf0] sm:$0xff]
        %v5071 = vld [vmem:[%s5039 + $0xf8] sm:$0xff]
        %s5072 = scalar_lea.vmem %s4, 16
        %v5073 = vld [vmem:[%s5072] sm:$0x3]
        %v5075 = vlaneseq
        %v5076 = vshrl.u32 %v5075, 7
        %v5077 = vsub.s32 0, %v5076
        %v5078 = vrot.slane %v5073, %v5077
        %v5079 = vlaneseq
        %v5080 = vshrl.u32 %v5079, 7
        %v5081 = vsub.s32 1, %v5080
        %v5082 = vrot.slane %v5073, %v5081
        %v5117 = vunpack.c.l.b16 %v5040
        %v5118 = vunpack.c.h.b16 %v5040
        %v5119 = vunpack.c.l.b16 %v5041
        %v5120 = vunpack.c.h.b16 %v5041
        %v5121 = vunpack.c.l.b16 %v5042
        %v5122 = vunpack.c.h.b16 %v5042
        %v5123 = vunpack.c.l.b16 %v5043
        %v5124 = vunpack.c.h.b16 %v5043
        %v5125 = vunpack.c.l.b16 %v5044
        %v5126 = vunpack.c.h.b16 %v5044
        %v5127 = vunpack.c.l.b16 %v5045
        %v5128 = vunpack.c.h.b16 %v5045
        %v5129 = vunpack.c.l.b16 %v5046
        %v5130 = vunpack.c.h.b16 %v5046
        %v5131 = vunpack.c.l.b16 %v5047
        %v5132 = vunpack.c.h.b16 %v5047
        %v5133 = vunpack.c.l.b16 %v5048
        %v5134 = vunpack.c.h.b16 %v5048
        %v5135 = vunpack.c.l.b16 %v5049
        %v5136 = vunpack.c.h.b16 %v5049
        %v5137 = vunpack.c.l.b16 %v5050
        %v5138 = vunpack.c.h.b16 %v5050
        %v5139 = vunpack.c.l.b16 %v5051
        %v5140 = vunpack.c.h.b16 %v5051
        %v5141 = vunpack.c.l.b16 %v5052
        %v5142 = vunpack.c.h.b16 %v5052
        %v5143 = vunpack.c.l.b16 %v5053
        %v5144 = vunpack.c.h.b16 %v5053
        %v5145 = vunpack.c.l.b16 %v5054
        %v5146 = vunpack.c.h.b16 %v5054
        %v5147 = vunpack.c.l.b16 %v5055
        %v5148 = vunpack.c.h.b16 %v5055
        %v5149 = vunpack.c.l.b16 %v5056
        %v5150 = vunpack.c.h.b16 %v5056
        %v5151 = vunpack.c.l.b16 %v5057
        %v5152 = vunpack.c.h.b16 %v5057
        %v5153 = vunpack.c.l.b16 %v5058
        %v5154 = vunpack.c.h.b16 %v5058
        %v5155 = vunpack.c.l.b16 %v5059
        %v5156 = vunpack.c.h.b16 %v5059
        %v5157 = vunpack.c.l.b16 %v5060
        %v5158 = vunpack.c.h.b16 %v5060
        %v5159 = vunpack.c.l.b16 %v5061
        %v5160 = vunpack.c.h.b16 %v5061
        %v5161 = vunpack.c.l.b16 %v5062
        %v5162 = vunpack.c.h.b16 %v5062
        %v5163 = vunpack.c.l.b16 %v5063
        %v5164 = vunpack.c.h.b16 %v5063
        %v5165 = vunpack.c.l.b16 %v5064
        %v5166 = vunpack.c.h.b16 %v5064
        %v5167 = vunpack.c.l.b16 %v5065
        %v5168 = vunpack.c.h.b16 %v5065
        %v5169 = vunpack.c.l.b16 %v5066
        %v5170 = vunpack.c.h.b16 %v5066
        %v5171 = vunpack.c.l.b16 %v5067
        %v5172 = vunpack.c.h.b16 %v5067
        %v5173 = vunpack.c.l.b16 %v5068
        %v5174 = vunpack.c.h.b16 %v5068
        %v5175 = vunpack.c.l.b16 %v5069
        %v5176 = vunpack.c.h.b16 %v5069
        %v5177 = vunpack.c.l.b16 %v5070
        %v5178 = vunpack.c.h.b16 %v5070
        %v5179 = vunpack.c.l.b16 %v5071
        %v5180 = vunpack.c.h.b16 %v5071
        %v5181 = vpack.c.b16 %v5119, %v5117
        %v5182 = vpack.c.b16 %v5120, %v5118
        %v5183 = vpack.c.b16 %v5123, %v5121
        %v5184 = vpack.c.b16 %v5124, %v5122
        %v5185 = vpack.c.b16 %v5127, %v5125
        %v5186 = vpack.c.b16 %v5128, %v5126
        %v5187 = vpack.c.b16 %v5131, %v5129
        %v5188 = vpack.c.b16 %v5132, %v5130
        %v5189 = vpack.c.b16 %v5135, %v5133
        %v5190 = vpack.c.b16 %v5136, %v5134
        %v5191 = vpack.c.b16 %v5139, %v5137
        %v5192 = vpack.c.b16 %v5140, %v5138
        %v5193 = vpack.c.b16 %v5143, %v5141
        %v5194 = vpack.c.b16 %v5144, %v5142
        %v5195 = vpack.c.b16 %v5147, %v5145
        %v5196 = vpack.c.b16 %v5148, %v5146
        %v5197 = vpack.c.b16 %v5151, %v5149
        %v5198 = vpack.c.b16 %v5152, %v5150
        %v5199 = vpack.c.b16 %v5155, %v5153
        %v5200 = vpack.c.b16 %v5156, %v5154
        %v5201 = vpack.c.b16 %v5159, %v5157
        %v5202 = vpack.c.b16 %v5160, %v5158
        %v5203 = vpack.c.b16 %v5163, %v5161
        %v5204 = vpack.c.b16 %v5164, %v5162
        %v5205 = vpack.c.b16 %v5167, %v5165
        %v5206 = vpack.c.b16 %v5168, %v5166
        %v5207 = vpack.c.b16 %v5171, %v5169
        %v5208 = vpack.c.b16 %v5172, %v5170
        %v5209 = vpack.c.b16 %v5175, %v5173
        %v5210 = vpack.c.b16 %v5176, %v5174
        %v5211 = vpack.c.b16 %v5179, %v5177
        %v5212 = vpack.c.b16 %v5180, %v5178
        %5245 = vmatprep.subr.bf16.mxu0 %v5182
        %5246 = vmatpush1.bf16.msra.mxu0 %v5181
        %5247 = vmatprep.subr.bf16.mxu0 %v5184
        %5248 = vmatpush1.bf16.msra.mxu0 %v5183
        %5249 = vmatprep.subr.bf16.mxu0 %v5186
        %5250 = vmatpush1.bf16.msra.mxu0 %v5185
        %5251 = vmatprep.subr.bf16.mxu0 %v5188
        %5252 = vmatpush1.bf16.msra.mxu0 %v5187
        %5253 = vmatprep.subr.bf16.mxu0 %v5190
        %5254 = vmatpush1.bf16.msra.mxu0 %v5189
        %5255 = vmatprep.subr.bf16.mxu0 %v5192
        %5256 = vmatpush1.bf16.msra.mxu0 %v5191
        %5257 = vmatprep.subr.bf16.mxu0 %v5194
        %5258 = vmatpush1.bf16.msra.mxu0 %v5193
        %5259 = vmatprep.subr.bf16.mxu0 %v5196
        %5260 = vmatpush1.bf16.msra.mxu0 %v5195
        %5261 = vmatprep.subr.bf16.mxu0 %v5198
        %5262 = vmatpush1.bf16.msra.mxu0 %v5197
        %5263 = vmatprep.subr.bf16.mxu0 %v5200
        %5264 = vmatpush1.bf16.msra.mxu0 %v5199
        %5265 = vmatprep.subr.bf16.mxu0 %v5202
        %5266 = vmatpush1.bf16.msra.mxu0 %v5201
        %5267 = vmatprep.subr.bf16.mxu0 %v5204
        %5268 = vmatpush1.bf16.msra.mxu0 %v5203
        %5269 = vmatprep.subr.bf16.mxu0 %v5206
        %5270 = vmatpush1.bf16.msra.mxu0 %v5205
        %5271 = vmatprep.subr.bf16.mxu0 %v5208
        %5272 = vmatpush1.bf16.msra.mxu0 %v5207
        %5273 = vmatprep.subr.bf16.mxu0 %v5210
        %5274 = vmatpush1.bf16.msra.mxu0 %v5209
        %5275 = vmatprep.subr.bf16.mxu0 %v5212
        %5276 = vmatpush1.bf16.msra.mxu0 %v5211
        %5277 = vmatprep.mubr.bf16.mxu0 %v4680
        %5278 = vmatmul.mubr.bf16.gmra.mrb[0].mxu0 %v4679
        %v5279 = vpop.f32.mrb[0].mxu0
        %v5280 = vadd.f32 %v5078, %v5279
        %v5281 = vpop.f32.mrb[0].mxu0
        %v5282 = vadd.f32 %v5082, %v5281
        %v5283 = vpop.f32.mrb[0].mxu0
        %v5284 = vadd.f32 %v5078, %v5283
        %v5285 = vpop.f32.mrb[0].mxu0
        %v5286 = vadd.f32 %v5082, %v5285
        %5287 = vmatprep.mubr.bf16.mxu0 %v4682
        %5288 = vmatmul.mubr.bf16.gmra.mrb[0].mxu0 %v4681
        %v5289 = vpop.f32.mrb[0].mxu0
        %v5290 = vadd.f32 %v5078, %v5289
        %v5291 = vpop.f32.mrb[0].mxu0
        %v5292 = vadd.f32 %v5082, %v5291
        %v5293 = vpop.f32.mrb[0].mxu0
        %v5294 = vadd.f32 %v5078, %v5293
        %v5295 = vpop.f32.mrb[0].mxu0
        %v5296 = vadd.f32 %v5082, %v5295
        %5297 = vmatprep.mubr.bf16.mxu0 %v4684
        %5298 = vmatmul.mubr.bf16.gmra.mrb[0].mxu0 %v4683
        %v5299 = vpop.f32.mrb[0].mxu0
        %v5300 = vadd.f32 %v5078, %v5299
        %v5301 = vpop.f32.mrb[0].mxu0
        %v5302 = vadd.f32 %v5082, %v5301
        %v5303 = vpop.f32.mrb[0].mxu0
        %v5304 = vadd.f32 %v5078, %v5303
        %v5305 = vpop.f32.mrb[0].mxu0
        %v5306 = vadd.f32 %v5082, %v5305
        %5307 = vmatprep.mubr.bf16.mxu0 %v4686
        %5308 = vmatmul.mubr.bf16.gmra.mrb[0].mxu0 %v4685
        %v5309 = vpop.f32.mrb[0].mxu0
        %v5310 = vadd.f32 %v5078, %v5309
        %v5311 = vpop.f32.mrb[0].mxu0
        %v5312 = vadd.f32 %v5082, %v5311
        %v5313 = vpop.f32.mrb[0].mxu0
        %v5314 = vadd.f32 %v5078, %v5313
        %v5315 = vpop.f32.mrb[0].mxu0
        %v5316 = vadd.f32 %v5082, %v5315
        %5317 = vmatprep.mubr.bf16.mxu0 %v4688
        %5318 = vmatmul.mubr.bf16.gmra.mrb[0].mxu0 %v4687
        %v5319 = vpop.f32.mrb[0].mxu0
        %v5320 = vadd.f32 %v5078, %v5319
        %v5321 = vpop.f32.mrb[0].mxu0
        %v5322 = vadd.f32 %v5082, %v5321
        %v5323 = vpop.f32.mrb[0].mxu0
        %v5324 = vadd.f32 %v5078, %v5323
        %v5325 = vpop.f32.mrb[0].mxu0
        %v5326 = vadd.f32 %v5082, %v5325
        %5327 = vmatprep.mubr.bf16.mxu0 %v4690
        %5328 = vmatmul.mubr.bf16.gmra.mrb[0].mxu0 %v4689
        %v5329 = vpop.f32.mrb[0].mxu0
        %v5330 = vadd.f32 %v5078, %v5329
        %v5331 = vpop.f32.mrb[0].mxu0
        %v5332 = vadd.f32 %v5082, %v5331
        %v5333 = vpop.f32.mrb[0].mxu0
        %v5334 = vadd.f32 %v5078, %v5333
        %v5335 = vpop.f32.mrb[0].mxu0
        %v5336 = vadd.f32 %v5082, %v5335
        %5337 = vmatprep.mubr.bf16.mxu0 %v4692
        %5338 = vmatmul.mubr.bf16.gmra.mrb[0].mxu0 %v4691
        %v5339 = vpop.f32.mrb[0].mxu0
        %v5340 = vadd.f32 %v5078, %v5339
        %v5341 = vpop.f32.mrb[0].mxu0
        %v5342 = vadd.f32 %v5082, %v5341
        %v5343 = vpop.f32.mrb[0].mxu0
        %v5344 = vadd.f32 %v5078, %v5343
        %v5345 = vpop.f32.mrb[0].mxu0
        %v5346 = vadd.f32 %v5082, %v5345
        %5347 = vmatprep.mubr.bf16.mxu0 %v4694
        %5348 = vmatmul.mubr.bf16.gmra.mrb[0].mxu0 %v4693
        %v5349 = vpop.f32.mrb[0].mxu0
        %v5350 = vadd.f32 %v5078, %v5349
        %v5351 = vpop.f32.mrb[0].mxu0
        %v5352 = vadd.f32 %v5082, %v5351
        %v5353 = vpop.f32.mrb[0].mxu0
        %v5354 = vadd.f32 %v5078, %v5353
        %v5355 = vpop.f32.mrb[0].mxu0
        %v5356 = vadd.f32 %v5082, %v5355
        %5357 = vmatprep.mubr.bf16.mxu0 %v4696
        %5358 = vmatmul.mubr.bf16.gmra.mrb[0].mxu0 %v4695
        %v5359 = vpop.f32.mrb[0].mxu0
        %v5360 = vadd.f32 %v5078, %v5359
        %v5361 = vpop.f32.mrb[0].mxu0
        %v5362 = vadd.f32 %v5082, %v5361
        %v5363 = vpop.f32.mrb[0].mxu0
        %v5364 = vadd.f32 %v5078, %v5363
        %v5365 = vpop.f32.mrb[0].mxu0
        %v5366 = vadd.f32 %v5082, %v5365
        %5367 = vmatprep.mubr.bf16.mxu0 %v4698
        %5368 = vmatmul.mubr.bf16.gmra.mrb[0].mxu0 %v4697
        %v5369 = vpop.f32.mrb[0].mxu0
        %v5370 = vadd.f32 %v5078, %v5369
        %v5371 = vpop.f32.mrb[0].mxu0
        %v5372 = vadd.f32 %v5082, %v5371
        %v5373 = vpop.f32.mrb[0].mxu0
        %v5374 = vadd.f32 %v5078, %v5373
        %v5375 = vpop.f32.mrb[0].mxu0
        %v5376 = vadd.f32 %v5082, %v5375
        %5377 = vmatprep.mubr.bf16.mxu0 %v4700
        %5378 = vmatmul.mubr.bf16.gmra.mrb[0].mxu0 %v4699
        %v5379 = vpop.f32.mrb[0].mxu0
        %v5380 = vadd.f32 %v5078, %v5379
        %v5381 = vpop.f32.mrb[0].mxu0
        %v5382 = vadd.f32 %v5082, %v5381
        %v5383 = vpop.f32.mrb[0].mxu0
        %v5384 = vadd.f32 %v5078, %v5383
        %v5385 = vpop.f32.mrb[0].mxu0
        %v5386 = vadd.f32 %v5082, %v5385
        %5387 = vmatprep.mubr.bf16.mxu0 %v4702
        %5388 = vmatmul.mubr.bf16.gmra.mrb[0].mxu0 %v4701
        %v5389 = vpop.f32.mrb[0].mxu0
        %v5390 = vadd.f32 %v5078, %v5389
        %v5391 = vpop.f32.mrb[0].mxu0
        %v5392 = vadd.f32 %v5082, %v5391
        %v5393 = vpop.f32.mrb[0].mxu0
        %v5394 = vadd.f32 %v5078, %v5393
        %v5395 = vpop.f32.mrb[0].mxu0
        %v5396 = vadd.f32 %v5082, %v5395
        %5397 = vmatprep.mubr.bf16.mxu0 %v4704
        %5398 = vmatmul.mubr.bf16.gmra.mrb[0].mxu0 %v4703
        %v5399 = vpop.f32.mrb[0].mxu0
        %v5400 = vadd.f32 %v5078, %v5399
        %v5401 = vpop.f32.mrb[0].mxu0
        %v5402 = vadd.f32 %v5082, %v5401
        %v5403 = vpop.f32.mrb[0].mxu0
        %v5404 = vadd.f32 %v5078, %v5403
        %v5405 = vpop.f32.mrb[0].mxu0
        %v5406 = vadd.f32 %v5082, %v5405
        %5407 = vmatprep.mubr.bf16.mxu0 %v4706
        %5408 = vmatmul.mubr.bf16.gmra.mrb[0].mxu0 %v4705
        %v5409 = vpop.f32.mrb[0].mxu0
        %v5410 = vadd.f32 %v5078, %v5409
        %v5411 = vpop.f32.mrb[0].mxu0
        %v5412 = vadd.f32 %v5082, %v5411
        %v5413 = vpop.f32.mrb[0].mxu0
        %v5414 = vadd.f32 %v5078, %v5413
        %v5415 = vpop.f32.mrb[0].mxu0
        %v5416 = vadd.f32 %v5082, %v5415
        %5417 = vmatprep.mubr.bf16.mxu0 %v4708
        %5418 = vmatmul.mubr.bf16.gmra.mrb[0].mxu0 %v4707
        %v5419 = vpop.f32.mrb[0].mxu0
        %v5420 = vadd.f32 %v5078, %v5419
        %v5421 = vpop.f32.mrb[0].mxu0
        %v5422 = vadd.f32 %v5082, %v5421
        %v5423 = vpop.f32.mrb[0].mxu0
        %v5424 = vadd.f32 %v5078, %v5423
        %v5425 = vpop.f32.mrb[0].mxu0
        %v5426 = vadd.f32 %v5082, %v5425
        %5427 = vmatprep.mubr.bf16.mxu0 %v4710
        %5428 = vmatmul.mubr.bf16.gmra.mrb[0].mxu0 %v4709
        %v5429 = vpop.f32.mrb[0].mxu0
        %v5430 = vadd.f32 %v5078, %v5429
        %v5431 = vpop.f32.mrb[0].mxu0
        %v5432 = vadd.f32 %v5082, %v5431
        %v5433 = vpop.f32.mrb[0].mxu0
        %v5434 = vadd.f32 %v5078, %v5433
        %v5435 = vpop.f32.mrb[0].mxu0
        %v5436 = vadd.f32 %v5082, %v5435
        %5437 = vdwg.mxu0
        %v5438 = vmax.f32 %v5280, 0.0
        %v5439 = vmax.f32 %v5282, 0.0
        %v5440 = vmax.f32 %v5284, 0.0
        %v5441 = vmax.f32 %v5286, 0.0
        %v5442 = vmax.f32 %v5290, 0.0
        %v5443 = vmax.f32 %v5292, 0.0
        %v5444 = vmax.f32 %v5294, 0.0
        %v5445 = vmax.f32 %v5296, 0.0
        %v5446 = vmax.f32 %v5300, 0.0
        %v5447 = vmax.f32 %v5302, 0.0
        %v5448 = vmax.f32 %v5304, 0.0
        %v5449 = vmax.f32 %v5306, 0.0
        %v5450 = vmax.f32 %v5310, 0.0
        %v5451 = vmax.f32 %v5312, 0.0
        %v5452 = vmax.f32 %v5314, 0.0
        %v5453 = vmax.f32 %v5316, 0.0
        %v5454 = vmax.f32 %v5320, 0.0
        %v5455 = vmax.f32 %v5322, 0.0
        %v5456 = vmax.f32 %v5324, 0.0
        %v5457 = vmax.f32 %v5326, 0.0
        %v5458 = vmax.f32 %v5330, 0.0
        %v5459 = vmax.f32 %v5332, 0.0
        %v5460 = vmax.f32 %v5334, 0.0
        %v5461 = vmax.f32 %v5336, 0.0
        %v5462 = vmax.f32 %v5340, 0.0
        %v5463 = vmax.f32 %v5342, 0.0
        %v5464 = vmax.f32 %v5344, 0.0
        %v5465 = vmax.f32 %v5346, 0.0
        %v5466 = vmax.f32 %v5350, 0.0
        %v5467 = vmax.f32 %v5352, 0.0
        %v5468 = vmax.f32 %v5354, 0.0
        %v5469 = vmax.f32 %v5356, 0.0
        %v5470 = vmax.f32 %v5360, 0.0
        %v5471 = vmax.f32 %v5362, 0.0
        %v5472 = vmax.f32 %v5364, 0.0
        %v5473 = vmax.f32 %v5366, 0.0
        %v5474 = vmax.f32 %v5370, 0.0
        %v5475 = vmax.f32 %v5372, 0.0
        %v5476 = vmax.f32 %v5374, 0.0
        %v5477 = vmax.f32 %v5376, 0.0
        %v5478 = vmax.f32 %v5380, 0.0
        %v5479 = vmax.f32 %v5382, 0.0
        %v5480 = vmax.f32 %v5384, 0.0
        %v5481 = vmax.f32 %v5386, 0.0
        %v5482 = vmax.f32 %v5390, 0.0
        %v5483 = vmax.f32 %v5392, 0.0
        %v5484 = vmax.f32 %v5394, 0.0
        %v5485 = vmax.f32 %v5396, 0.0
        %v5486 = vmax.f32 %v5400, 0.0
        %v5487 = vmax.f32 %v5402, 0.0
        %v5488 = vmax.f32 %v5404, 0.0
        %v5489 = vmax.f32 %v5406, 0.0
        %v5490 = vmax.f32 %v5410, 0.0
        %v5491 = vmax.f32 %v5412, 0.0
        %v5492 = vmax.f32 %v5414, 0.0
        %v5493 = vmax.f32 %v5416, 0.0
        %v5494 = vmax.f32 %v5420, 0.0
        %v5495 = vmax.f32 %v5422, 0.0
        %v5496 = vmax.f32 %v5424, 0.0
        %v5497 = vmax.f32 %v5426, 0.0
        %v5498 = vmax.f32 %v5430, 0.0
        %v5499 = vmax.f32 %v5432, 0.0
        %v5500 = vmax.f32 %v5434, 0.0
        %v5501 = vmax.f32 %v5436, 0.0
        %v5502 = vpack.c.bf16 %v5440, %v5438
        %v5503 = vpack.c.bf16 %v5441, %v5439
        %v5504 = vpack.c.bf16 %v5444, %v5442
        %v5505 = vpack.c.bf16 %v5445, %v5443
        %v5506 = vpack.c.bf16 %v5448, %v5446
        %v5507 = vpack.c.bf16 %v5449, %v5447
        %v5508 = vpack.c.bf16 %v5452, %v5450
        %v5509 = vpack.c.bf16 %v5453, %v5451
        %v5510 = vpack.c.bf16 %v5456, %v5454
        %v5511 = vpack.c.bf16 %v5457, %v5455
        %v5512 = vpack.c.bf16 %v5460, %v5458
        %v5513 = vpack.c.bf16 %v5461, %v5459
        %v5514 = vpack.c.bf16 %v5464, %v5462
        %v5515 = vpack.c.bf16 %v5465, %v5463
        %v5516 = vpack.c.bf16 %v5468, %v5466
        %v5517 = vpack.c.bf16 %v5469, %v5467
        %v5518 = vpack.c.bf16 %v5472, %v5470
        %v5519 = vpack.c.bf16 %v5473, %v5471
        %v5520 = vpack.c.bf16 %v5476, %v5474
        %v5521 = vpack.c.bf16 %v5477, %v5475
        %v5522 = vpack.c.bf16 %v5480, %v5478
        %v5523 = vpack.c.bf16 %v5481, %v5479
        %v5524 = vpack.c.bf16 %v5484, %v5482
        %v5525 = vpack.c.bf16 %v5485, %v5483
        %v5526 = vpack.c.bf16 %v5488, %v5486
        %v5527 = vpack.c.bf16 %v5489, %v5487
        %v5528 = vpack.c.bf16 %v5492, %v5490
        %v5529 = vpack.c.bf16 %v5493, %v5491
        %v5530 = vpack.c.bf16 %v5496, %v5494
        %v5531 = vpack.c.bf16 %v5497, %v5495
        %v5532 = vpack.c.bf16 %v5500, %v5498
        %v5533 = vpack.c.bf16 %v5501, %v5499
        %s5534 = scalar_lea.vmem %s9, 1
        %v5535 = vld [vmem:[%s5534] sm:$0x1]
        %v5536 = vld [vmem:[%s6] sm:$0xf]
        %v5537 = vld [vmem:[%s6 + $0x4] sm:$0xf]
        %v5538 = vld [vmem:[%s6 + $0x8] sm:$0xf]
        %v5539 = vld [vmem:[%s6 + $0xc] sm:$0xf]
        %v5540 = vld [vmem:[%s6 + $0x10] sm:$0xf]
        %v5541 = vld [vmem:[%s6 + $0x14] sm:$0xf]
        %v5542 = vld [vmem:[%s6 + $0x18] sm:$0xf]
        %v5543 = vld [vmem:[%s6 + $0x1c] sm:$0xf]
        %v5544 = vld [vmem:[%s6 + $0x20] sm:$0xf]
        %v5545 = vld [vmem:[%s6 + $0x24] sm:$0xf]
        %v5546 = vld [vmem:[%s6 + $0x28] sm:$0xf]
        %v5547 = vld [vmem:[%s6 + $0x2c] sm:$0xf]
        %v5548 = vld [vmem:[%s6 + $0x30] sm:$0xf]
        %v5549 = vld [vmem:[%s6 + $0x34] sm:$0xf]
        %v5550 = vld [vmem:[%s6 + $0x38] sm:$0xf]
        %v5551 = vld [vmem:[%s6 + $0x3c] sm:$0xf]
        %v5552 = vld [vmem:[%s6 + $0x40] sm:$0xf]
        %v5553 = vld [vmem:[%s6 + $0x44] sm:$0xf]
        %v5554 = vld [vmem:[%s6 + $0x48] sm:$0xf]
        %v5555 = vld [vmem:[%s6 + $0x4c] sm:$0xf]
        %v5556 = vld [vmem:[%s6 + $0x50] sm:$0xf]
        %v5557 = vld [vmem:[%s6 + $0x54] sm:$0xf]
        %v5558 = vld [vmem:[%s6 + $0x58] sm:$0xf]
        %v5559 = vld [vmem:[%s6 + $0x5c] sm:$0xf]
        %v5560 = vld [vmem:[%s6 + $0x60] sm:$0xf]
        %v5561 = vld [vmem:[%s6 + $0x64] sm:$0xf]
        %v5562 = vld [vmem:[%s6 + $0x68] sm:$0xf]
        %v5563 = vld [vmem:[%s6 + $0x6c] sm:$0xf]
        %v5564 = vld [vmem:[%s6 + $0x70] sm:$0xf]
        %v5565 = vld [vmem:[%s6 + $0x74] sm:$0xf]
        %v5566 = vld [vmem:[%s6 + $0x78] sm:$0xf]
        %v5567 = vld [vmem:[%s6 + $0x7c] sm:$0xf]
        %v5568 = vld [vmem:[%s7] sm:$0xf]
        %v5569 = vld [vmem:[%s7 + $0x4] sm:$0xf]
        %v5570 = vld [vmem:[%s7 + $0x8] sm:$0xf]
        %v5571 = vld [vmem:[%s7 + $0xc] sm:$0xf]
        %v5604 = vunpack.c.l.b16 %v431
        %v5605 = vunpack.c.l.b16 %v432
        %v5606 = vunpack.c.l.b16 %v433
        %v5607 = vunpack.c.l.b16 %v434
        %v5608 = vunpack.c.l.b16 %v435
        %v5609 = vunpack.c.l.b16 %v436
        %v5610 = vunpack.c.l.b16 %v437
        %v5611 = vunpack.c.l.b16 %v438
        %v5612 = vunpack.c.l.b16 %v439
        %v5613 = vunpack.c.l.b16 %v440
        %v5614 = vunpack.c.l.b16 %v441
        %v5615 = vunpack.c.l.b16 %v442
        %v5616 = vunpack.c.l.b16 %v443
        %v5617 = vunpack.c.l.b16 %v444
        %v5618 = vunpack.c.l.b16 %v445
        %v5619 = vunpack.c.l.b16 %v446
        %v5620 = vunpack.c.l.b16 %v447
        %v5621 = vunpack.c.l.b16 %v448
        %v5622 = vunpack.c.l.b16 %v449
        %v5623 = vunpack.c.l.b16 %v450
        %v5624 = vunpack.c.l.b16 %v451
        %v5625 = vunpack.c.l.b16 %v452
        %v5626 = vunpack.c.l.b16 %v453
        %v5627 = vunpack.c.l.b16 %v454
        %v5628 = vunpack.c.l.b16 %v455
        %v5629 = vunpack.c.l.b16 %v456
        %v5630 = vunpack.c.l.b16 %v457
        %v5631 = vunpack.c.l.b16 %v458
        %v5632 = vunpack.c.l.b16 %v459
        %v5633 = vunpack.c.l.b16 %v460
        %v5634 = vunpack.c.l.b16 %v461
        %v5635 = vunpack.c.l.b16 %v462
        %v5636 = vpack.c.b16 %v5605, %v5604
        %v5637 = vpack.c.b16 %v5607, %v5606
        %v5638 = vpack.c.b16 %v5609, %v5608
        %v5639 = vpack.c.b16 %v5611, %v5610
        %v5640 = vpack.c.b16 %v5613, %v5612
        %v5641 = vpack.c.b16 %v5615, %v5614
        %v5642 = vpack.c.b16 %v5617, %v5616
        %v5643 = vpack.c.b16 %v5619, %v5618
        %v5644 = vpack.c.b16 %v5621, %v5620
        %v5645 = vpack.c.b16 %v5623, %v5622
        %v5646 = vpack.c.b16 %v5625, %v5624
        %v5647 = vpack.c.b16 %v5627, %v5626
        %v5648 = vpack.c.b16 %v5629, %v5628
        %v5649 = vpack.c.b16 %v5631, %v5630
        %v5650 = vpack.c.b16 %v5633, %v5632
        %v5651 = vpack.c.b16 %v5635, %v5634
        %v5656 = vunpack.c.l.b16 %v5568
        %v5657 = vunpack.c.l.b16 %v5569
        %v5658 = vunpack.c.l.b16 %v5570
        %v5659 = vunpack.c.l.b16 %v5571
        %v5660 = vpack.c.b16 %v5657, %v5656
        %v5661 = vpack.c.b16 %v5659, %v5658
        %vm5664 = vcmask 261120
        %v5666 = vsel %vm5664, %v5636, 0
        %v5669 = vsel %vm5664, %v5637, 0
        %v5672 = vsel %vm5664, %v5638, 0
        %v5675 = vsel %vm5664, %v5639, 0
        %v5678 = vsel %vm5664, %v5640, 0
        %v5681 = vsel %vm5664, %v5641, 0
        %v5684 = vsel %vm5664, %v5642, 0
        %v5687 = vsel %vm5664, %v5643, 0
        %v5690 = vsel %vm5664, %v5644, 0
        %v5693 = vsel %vm5664, %v5645, 0
        %v5696 = vsel %vm5664, %v5646, 0
        %v5699 = vsel %vm5664, %v5647, 0
        %v5702 = vsel %vm5664, %v5648, 0
        %v5705 = vsel %vm5664, %v5649, 0
        %v5708 = vsel %vm5664, %v5650, 0
        %v5711 = vsel %vm5664, %v5651, 0
        %5713 = vmatprep.subr.bf16.mxu0 0
        %5714 = vmatpush1.bf16.msra.mxu0 %v5660
        %5715 = vmatprep.subr.bf16.mxu0 0
        %5716 = vmatpush1.bf16.msra.mxu0 %v5661
        %5717 = vmatprep.subr.bf16.mxu0 0
        %5718 = vmatpush1.bf16.msra.mxu0 0
        %5719 = vmatprep.subr.bf16.mxu0 0
        %5720 = vmatpush1.bf16.msra.mxu0 0
        %5721 = vmatprep.subr.bf16.mxu0 0
        %5722 = vmatpush1.bf16.msra.mxu0 0
        %5723 = vmatprep.subr.bf16.mxu0 0
        %5724 = vmatpush1.bf16.msra.mxu0 0
        %5725 = vmatprep.subr.bf16.mxu0 0
        %5726 = vmatpush1.bf16.msra.mxu0 0
        %5727 = vmatprep.subr.bf16.mxu0 0
        %5728 = vmatpush1.bf16.msra.mxu0 0
        %5729 = vmatprep.subr.bf16.mxu0 0
        %5730 = vmatpush1.bf16.msra.mxu0 0
        %5731 = vmatprep.subr.bf16.mxu0 0
        %5732 = vmatpush1.bf16.msra.mxu0 0
        %5733 = vmatprep.subr.bf16.mxu0 0
        %5734 = vmatpush1.bf16.msra.mxu0 0
        %5735 = vmatprep.subr.bf16.mxu0 0
        %5736 = vmatpush1.bf16.msra.mxu0 0
        %5737 = vmatprep.subr.bf16.mxu0 0
        %5738 = vmatpush1.bf16.msra.mxu0 0
        %5739 = vmatprep.subr.bf16.mxu0 0
        %5740 = vmatpush1.bf16.msra.mxu0 0
        %5741 = vmatprep.subr.bf16.mxu0 0
        %5742 = vmatpush1.bf16.msra.mxu0 0
        %5743 = vmatprep.subr.bf16.mxu0 0
        %5744 = vmatpush1.bf16.msra.mxu0 0
        %5745 = vmatprep.mubr.bf16.mxu0 0
        %5746 = vmatmul.mubr.bf16.gmra.mrb[0].mxu0 %v5666
        %v5747 = vpop.f32.mrb[0].mxu0
        %v5748 = vadd.f32 0.0, %v5747
        %v5749 = vpop.f32.mrb[0].mxu0
        %v5750 = vpop.f32.mrb[0].mxu0
        %v5751 = vadd.f32 0.0, %v5750
        %v5752 = vpop.f32.mrb[0].mxu0
        %5753 = vmatprep.mubr.bf16.mxu0 0
        %5754 = vmatmul.mubr.bf16.gmra.mrb[0].mxu0 %v5669
        %v5755 = vpop.f32.mrb[0].mxu0
        %v5756 = vadd.f32 0.0, %v5755
        %v5757 = vpop.f32.mrb[0].mxu0
        %v5758 = vpop.f32.mrb[0].mxu0
        %v5759 = vadd.f32 0.0, %v5758
        %v5760 = vpop.f32.mrb[0].mxu0
        %5761 = vmatprep.mubr.bf16.mxu0 0
        %5762 = vmatmul.mubr.bf16.gmra.mrb[0].mxu0 %v5672
        %v5763 = vpop.f32.mrb[0].mxu0
        %v5764 = vadd.f32 0.0, %v5763
        %v5765 = vpop.f32.mrb[0].mxu0
        %v5766 = vpop.f32.mrb[0].mxu0
        %v5767 = vadd.f32 0.0, %v5766
        %v5768 = vpop.f32.mrb[0].mxu0
        %5769 = vmatprep.mubr.bf16.mxu0 0
        %5770 = vmatmul.mubr.bf16.gmra.mrb[0].mxu0 %v5675
        %v5771 = vpop.f32.mrb[0].mxu0
        %v5772 = vadd.f32 0.0, %v5771
        %v5773 = vpop.f32.mrb[0].mxu0
        %v5774 = vpop.f32.mrb[0].mxu0
        %v5775 = vadd.f32 0.0, %v5774
        %v5776 = vpop.f32.mrb[0].mxu0
        %5777 = vmatprep.mubr.bf16.mxu0 0
        %5778 = vmatmul.mubr.bf16.gmra.mrb[0].mxu0 %v5678
        %v5779 = vpop.f32.mrb[0].mxu0
        %v5780 = vadd.f32 0.0, %v5779
        %v5781 = vpop.f32.mrb[0].mxu0
        %v5782 = vpop.f32.mrb[0].mxu0
        %v5783 = vadd.f32 0.0, %v5782
        %v5784 = vpop.f32.mrb[0].mxu0
        %5785 = vmatprep.mubr.bf16.mxu0 0
        %5786 = vmatmul.mubr.bf16.gmra.mrb[0].mxu0 %v5681
        %v5787 = vpop.f32.mrb[0].mxu0
        %v5788 = vadd.f32 0.0, %v5787
        %v5789 = vpop.f32.mrb[0].mxu0
        %v5790 = vpop.f32.mrb[0].mxu0
        %v5791 = vadd.f32 0.0, %v5790
        %v5792 = vpop.f32.mrb[0].mxu0
        %5793 = vmatprep.mubr.bf16.mxu0 0
        %5794 = vmatmul.mubr.bf16.gmra.mrb[0].mxu0 %v5684
        %v5795 = vpop.f32.mrb[0].mxu0
        %v5796 = vadd.f32 0.0, %v5795
        %v5797 = vpop.f32.mrb[0].mxu0
        %v5798 = vpop.f32.mrb[0].mxu0
        %v5799 = vadd.f32 0.0, %v5798
        %v5800 = vpop.f32.mrb[0].mxu0
        %5801 = vmatprep.mubr.bf16.mxu0 0
        %5802 = vmatmul.mubr.bf16.gmra.mrb[0].mxu0 %v5687
        %v5803 = vpop.f32.mrb[0].mxu0
        %v5804 = vadd.f32 0.0, %v5803
        %v5805 = vpop.f32.mrb[0].mxu0
        %v5806 = vpop.f32.mrb[0].mxu0
        %v5807 = vadd.f32 0.0, %v5806
        %v5808 = vpop.f32.mrb[0].mxu0
        %5809 = vmatprep.mubr.bf16.mxu0 0
        %5810 = vmatmul.mubr.bf16.gmra.mrb[0].mxu0 %v5690
        %v5811 = vpop.f32.mrb[0].mxu0
        %v5812 = vadd.f32 0.0, %v5811
        %v5813 = vpop.f32.mrb[0].mxu0
        %v5814 = vpop.f32.mrb[0].mxu0
        %v5815 = vadd.f32 0.0, %v5814
        %v5816 = vpop.f32.mrb[0].mxu0
        %5817 = vmatprep.mubr.bf16.mxu0 0
        %5818 = vmatmul.mubr.bf16.gmra.mrb[0].mxu0 %v5693
        %v5819 = vpop.f32.mrb[0].mxu0
        %v5820 = vadd.f32 0.0, %v5819
        %v5821 = vpop.f32.mrb[0].mxu0
        %v5822 = vpop.f32.mrb[0].mxu0
        %v5823 = vadd.f32 0.0, %v5822
        %v5824 = vpop.f32.mrb[0].mxu0
        %5825 = vmatprep.mubr.bf16.mxu0 0
        %5826 = vmatmul.mubr.bf16.gmra.mrb[0].mxu0 %v5696
        %v5827 = vpop.f32.mrb[0].mxu0
        %v5828 = vadd.f32 0.0, %v5827
        %v5829 = vpop.f32.mrb[0].mxu0
        %v5830 = vpop.f32.mrb[0].mxu0
        %v5831 = vadd.f32 0.0, %v5830
        %v5832 = vpop.f32.mrb[0].mxu0
        %5833 = vmatprep.mubr.bf16.mxu0 0
        %5834 = vmatmul.mubr.bf16.gmra.mrb[0].mxu0 %v5699
        %v5835 = vpop.f32.mrb[0].mxu0
        %v5836 = vadd.f32 0.0, %v5835
        %v5837 = vpop.f32.mrb[0].mxu0
        %v5838 = vpop.f32.mrb[0].mxu0
        %v5839 = vadd.f32 0.0, %v5838
        %v5840 = vpop.f32.mrb[0].mxu0
        %5841 = vmatprep.mubr.bf16.mxu0 0
        %5842 = vmatmul.mubr.bf16.gmra.mrb[0].mxu0 %v5702
        %v5843 = vpop.f32.mrb[0].mxu0
        %v5844 = vadd.f32 0.0, %v5843
        %v5845 = vpop.f32.mrb[0].mxu0
        %v5846 = vpop.f32.mrb[0].mxu0
        %v5847 = vadd.f32 0.0, %v5846
        %v5848 = vpop.f32.mrb[0].mxu0
        %5849 = vmatprep.mubr.bf16.mxu0 0
        %5850 = vmatmul.mubr.bf16.gmra.mrb[0].mxu0 %v5705
        %v5851 = vpop.f32.mrb[0].mxu0
        %v5852 = vadd.f32 0.0, %v5851
        %v5853 = vpop.f32.mrb[0].mxu0
        %v5854 = vpop.f32.mrb[0].mxu0
        %v5855 = vadd.f32 0.0, %v5854
        %v5856 = vpop.f32.mrb[0].mxu0
        %5857 = vmatprep.mubr.bf16.mxu0 0
        %5858 = vmatmul.mubr.bf16.gmra.mrb[0].mxu0 %v5708
        %v5859 = vpop.f32.mrb[0].mxu0
        %v5860 = vadd.f32 0.0, %v5859
        %v5861 = vpop.f32.mrb[0].mxu0
        %v5862 = vpop.f32.mrb[0].mxu0
        %v5863 = vadd.f32 0.0, %v5862
        %v5864 = vpop.f32.mrb[0].mxu0
        %5865 = vmatprep.mubr.bf16.mxu0 0
        %5866 = vmatmul.mubr.bf16.gmra.mrb[0].mxu0 %v5711
        %v5867 = vpop.f32.mrb[0].mxu0
        %v5868 = vadd.f32 0.0, %v5867
        %v5869 = vpop.f32.mrb[0].mxu0
        %v5870 = vpop.f32.mrb[0].mxu0
        %v5871 = vadd.f32 0.0, %v5870
        %v5872 = vpop.f32.mrb[0].mxu0
        %5873 = vdwg.mxu0
        %v5906 = vunpack.c.l.b16 %v5536
        %v5907 = vunpack.c.l.b16 %v5537
        %v5908 = vunpack.c.l.b16 %v5538
        %v5909 = vunpack.c.l.b16 %v5539
        %v5910 = vunpack.c.l.b16 %v5540
        %v5911 = vunpack.c.l.b16 %v5541
        %v5912 = vunpack.c.l.b16 %v5542
        %v5913 = vunpack.c.l.b16 %v5543
        %v5914 = vunpack.c.l.b16 %v5544
        %v5915 = vunpack.c.l.b16 %v5545
        %v5916 = vunpack.c.l.b16 %v5546
        %v5917 = vunpack.c.l.b16 %v5547
        %v5918 = vunpack.c.l.b16 %v5548
        %v5919 = vunpack.c.l.b16 %v5549
        %v5920 = vunpack.c.l.b16 %v5550
        %v5921 = vunpack.c.l.b16 %v5551
        %v5922 = vunpack.c.l.b16 %v5552
        %v5923 = vunpack.c.l.b16 %v5553
        %v5924 = vunpack.c.l.b16 %v5554
        %v5925 = vunpack.c.l.b16 %v5555
        %v5926 = vunpack.c.l.b16 %v5556
        %v5927 = vunpack.c.l.b16 %v5557
        %v5928 = vunpack.c.l.b16 %v5558
        %v5929 = vunpack.c.l.b16 %v5559
        %v5930 = vunpack.c.l.b16 %v5560
        %v5931 = vunpack.c.l.b16 %v5561
        %v5932 = vunpack.c.l.b16 %v5562
        %v5933 = vunpack.c.l.b16 %v5563
        %v5934 = vunpack.c.l.b16 %v5564
        %v5935 = vunpack.c.l.b16 %v5565
        %v5936 = vunpack.c.l.b16 %v5566
        %v5937 = vunpack.c.l.b16 %v5567
        %v5938 = vpack.c.b16 %v5907, %v5906
        %v5939 = vpack.c.b16 %v5909, %v5908
        %v5940 = vpack.c.b16 %v5911, %v5910
        %v5941 = vpack.c.b16 %v5913, %v5912
        %v5942 = vpack.c.b16 %v5915, %v5914
        %v5943 = vpack.c.b16 %v5917, %v5916
        %v5944 = vpack.c.b16 %v5919, %v5918
        %v5945 = vpack.c.b16 %v5921, %v5920
        %v5946 = vpack.c.b16 %v5923, %v5922
        %v5947 = vpack.c.b16 %v5925, %v5924
        %v5948 = vpack.c.b16 %v5927, %v5926
        %v5949 = vpack.c.b16 %v5929, %v5928
        %v5950 = vpack.c.b16 %v5931, %v5930
        %v5951 = vpack.c.b16 %v5933, %v5932
        %v5952 = vpack.c.b16 %v5935, %v5934
        %v5953 = vpack.c.b16 %v5937, %v5936
        %5970 = vmatprep.subr.bf16.mxu0 0
        %5971 = vmatpush1.bf16.msra.mxu0 %v5938
        %5972 = vmatprep.subr.bf16.mxu0 0
        %5973 = vmatpush1.bf16.msra.mxu0 %v5939
        %5974 = vmatprep.subr.bf16.mxu0 0
        %5975 = vmatpush1.bf16.msra.mxu0 %v5940
        %5976 = vmatprep.subr.bf16.mxu0 0
        %5977 = vmatpush1.bf16.msra.mxu0 %v5941
        %5978 = vmatprep.subr.bf16.mxu0 0
        %5979 = vmatpush1.bf16.msra.mxu0 %v5942
        %5980 = vmatprep.subr.bf16.mxu0 0
        %5981 = vmatpush1.bf16.msra.mxu0 %v5943
        %5982 = vmatprep.subr.bf16.mxu0 0
        %5983 = vmatpush1.bf16.msra.mxu0 %v5944
        %5984 = vmatprep.subr.bf16.mxu0 0
        %5985 = vmatpush1.bf16.msra.mxu0 %v5945
        %5986 = vmatprep.subr.bf16.mxu0 0
        %5987 = vmatpush1.bf16.msra.mxu0 %v5946
        %5988 = vmatprep.subr.bf16.mxu0 0
        %5989 = vmatpush1.bf16.msra.mxu0 %v5947
        %5990 = vmatprep.subr.bf16.mxu0 0
        %5991 = vmatpush1.bf16.msra.mxu0 %v5948
        %5992 = vmatprep.subr.bf16.mxu0 0
        %5993 = vmatpush1.bf16.msra.mxu0 %v5949
        %5994 = vmatprep.subr.bf16.mxu0 0
        %5995 = vmatpush1.bf16.msra.mxu0 %v5950
        %5996 = vmatprep.subr.bf16.mxu0 0
        %5997 = vmatpush1.bf16.msra.mxu0 %v5951
        %5998 = vmatprep.subr.bf16.mxu0 0
        %5999 = vmatpush1.bf16.msra.mxu0 %v5952
        %6000 = vmatprep.subr.bf16.mxu0 0
        %6001 = vmatpush1.bf16.msra.mxu0 %v5953
        %6002 = vmatprep.mubr.bf16.mxu0 %v5503
        %6003 = vmatmul.mubr.bf16.gmra.mrb[0].mxu0 %v5502
        %v6004 = vpop.f32.mrb[0].mxu0
        %v6005 = vadd.f32 %v5748, %v6004
        %v6006 = vpop.f32.mrb[0].mxu0
        %v6007 = vpop.f32.mrb[0].mxu0
        %v6008 = vadd.f32 %v5751, %v6007
        %v6009 = vpop.f32.mrb[0].mxu0
        %6010 = vmatprep.mubr.bf16.mxu0 %v5505
        %6011 = vmatmul.mubr.bf16.gmra.mrb[0].mxu0 %v5504
        %v6012 = vpop.f32.mrb[0].mxu0
        %v6013 = vadd.f32 %v5756, %v6012
        %v6014 = vpop.f32.mrb[0].mxu0
        %v6015 = vpop.f32.mrb[0].mxu0
        %v6016 = vadd.f32 %v5759, %v6015
        %v6017 = vpop.f32.mrb[0].mxu0
        %6018 = vmatprep.mubr.bf16.mxu0 %v5507
        %6019 = vmatmul.mubr.bf16.gmra.mrb[0].mxu0 %v5506
        %v6020 = vpop.f32.mrb[0].mxu0
        %v6021 = vadd.f32 %v5764, %v6020
        %v6022 = vpop.f32.mrb[0].mxu0
        %v6023 = vpop.f32.mrb[0].mxu0
        %v6024 = vadd.f32 %v5767, %v6023
        %v6025 = vpop.f32.mrb[0].mxu0
        %6026 = vmatprep.mubr.bf16.mxu0 %v5509
        %6027 = vmatmul.mubr.bf16.gmra.mrb[0].mxu0 %v5508
        %v6028 = vpop.f32.mrb[0].mxu0
        %v6029 = vadd.f32 %v5772, %v6028
        %v6030 = vpop.f32.mrb[0].mxu0
        %v6031 = vpop.f32.mrb[0].mxu0
        %v6032 = vadd.f32 %v5775, %v6031
        %v6033 = vpop.f32.mrb[0].mxu0
        %6034 = vmatprep.mubr.bf16.mxu0 %v5511
        %6035 = vmatmul.mubr.bf16.gmra.mrb[0].mxu0 %v5510
        %v6036 = vpop.f32.mrb[0].mxu0
        %v6037 = vadd.f32 %v5780, %v6036
        %v6038 = vpop.f32.mrb[0].mxu0
        %v6039 = vpop.f32.mrb[0].mxu0
        %v6040 = vadd.f32 %v5783, %v6039
        %v6041 = vpop.f32.mrb[0].mxu0
        %6042 = vmatprep.mubr.bf16.mxu0 %v5513
        %6043 = vmatmul.mubr.bf16.gmra.mrb[0].mxu0 %v5512
        %v6044 = vpop.f32.mrb[0].mxu0
        %v6045 = vadd.f32 %v5788, %v6044
        %v6046 = vpop.f32.mrb[0].mxu0
        %v6047 = vpop.f32.mrb[0].mxu0
        %v6048 = vadd.f32 %v5791, %v6047
        %v6049 = vpop.f32.mrb[0].mxu0
        %6050 = vmatprep.mubr.bf16.mxu0 %v5515
        %6051 = vmatmul.mubr.bf16.gmra.mrb[0].mxu0 %v5514
        %v6052 = vpop.f32.mrb[0].mxu0
        %v6053 = vadd.f32 %v5796, %v6052
        %v6054 = vpop.f32.mrb[0].mxu0
        %v6055 = vpop.f32.mrb[0].mxu0
        %v6056 = vadd.f32 %v5799, %v6055
        %v6057 = vpop.f32.mrb[0].mxu0
        %6058 = vmatprep.mubr.bf16.mxu0 %v5517
        %6059 = vmatmul.mubr.bf16.gmra.mrb[0].mxu0 %v5516
        %v6060 = vpop.f32.mrb[0].mxu0
        %v6061 = vadd.f32 %v5804, %v6060
        %v6062 = vpop.f32.mrb[0].mxu0
        %v6063 = vpop.f32.mrb[0].mxu0
        %v6064 = vadd.f32 %v5807, %v6063
        %v6065 = vpop.f32.mrb[0].mxu0
        %6066 = vmatprep.mubr.bf16.mxu0 %v5519
        %6067 = vmatmul.mubr.bf16.gmra.mrb[0].mxu0 %v5518
        %v6068 = vpop.f32.mrb[0].mxu0
        %v6069 = vadd.f32 %v5812, %v6068
        %v6070 = vpop.f32.mrb[0].mxu0
        %v6071 = vpop.f32.mrb[0].mxu0
        %v6072 = vadd.f32 %v5815, %v6071
        %v6073 = vpop.f32.mrb[0].mxu0
        %6074 = vmatprep.mubr.bf16.mxu0 %v5521
        %6075 = vmatmul.mubr.bf16.gmra.mrb[0].mxu0 %v5520
        %v6076 = vpop.f32.mrb[0].mxu0
        %v6077 = vadd.f32 %v5820, %v6076
        %v6078 = vpop.f32.mrb[0].mxu0
        %v6079 = vpop.f32.mrb[0].mxu0
        %v6080 = vadd.f32 %v5823, %v6079
        %v6081 = vpop.f32.mrb[0].mxu0
        %6082 = vmatprep.mubr.bf16.mxu0 %v5523
        %6083 = vmatmul.mubr.bf16.gmra.mrb[0].mxu0 %v5522
        %v6084 = vpop.f32.mrb[0].mxu0
        %v6085 = vadd.f32 %v5828, %v6084
        %v6086 = vpop.f32.mrb[0].mxu0
        %v6087 = vpop.f32.mrb[0].mxu0
        %v6088 = vadd.f32 %v5831, %v6087
        %v6089 = vpop.f32.mrb[0].mxu0
        %6090 = vmatprep.mubr.bf16.mxu0 %v5525
        %6091 = vmatmul.mubr.bf16.gmra.mrb[0].mxu0 %v5524
        %v6092 = vpop.f32.mrb[0].mxu0
        %v6093 = vadd.f32 %v5836, %v6092
        %v6094 = vpop.f32.mrb[0].mxu0
        %v6095 = vpop.f32.mrb[0].mxu0
        %v6096 = vadd.f32 %v5839, %v6095
        %v6097 = vpop.f32.mrb[0].mxu0
        %6098 = vmatprep.mubr.bf16.mxu0 %v5527
        %6099 = vmatmul.mubr.bf16.gmra.mrb[0].mxu0 %v5526
        %v6100 = vpop.f32.mrb[0].mxu0
        %v6101 = vadd.f32 %v5844, %v6100
        %v6102 = vpop.f32.mrb[0].mxu0
        %v6103 = vpop.f32.mrb[0].mxu0
        %v6104 = vadd.f32 %v5847, %v6103
        %v6105 = vpop.f32.mrb[0].mxu0
        %6106 = vmatprep.mubr.bf16.mxu0 %v5529
        %6107 = vmatmul.mubr.bf16.gmra.mrb[0].mxu0 %v5528
        %v6108 = vpop.f32.mrb[0].mxu0
        %v6109 = vadd.f32 %v5852, %v6108
        %v6110 = vpop.f32.mrb[0].mxu0
        %v6111 = vpop.f32.mrb[0].mxu0
        %v6112 = vadd.f32 %v5855, %v6111
        %v6113 = vpop.f32.mrb[0].mxu0
        %6114 = vmatprep.mubr.bf16.mxu0 %v5531
        %6115 = vmatmul.mubr.bf16.gmra.mrb[0].mxu0 %v5530
        %v6116 = vpop.f32.mrb[0].mxu0
        %v6117 = vadd.f32 %v5860, %v6116
        %v6118 = vpop.f32.mrb[0].mxu0
        %v6119 = vpop.f32.mrb[0].mxu0
        %v6120 = vadd.f32 %v5863, %v6119
        %v6121 = vpop.f32.mrb[0].mxu0
        %6122 = vmatprep.mubr.bf16.mxu0 %v5533
        %6123 = vmatmul.mubr.bf16.gmra.mrb[0].mxu0 %v5532
        %v6124 = vpop.f32.mrb[0].mxu0
        %v6125 = vadd.f32 %v5868, %v6124
        %v6126 = vpop.f32.mrb[0].mxu0
        %v6127 = vpop.f32.mrb[0].mxu0
        %v6128 = vadd.f32 %v5871, %v6127
        %v6129 = vpop.f32.mrb[0].mxu0
        %6130 = vdwg.mxu0
        %v6132 = vlaneseq
        %v6133 = vshrl.u32 %v6132, 7
        %v6134 = vsub.s32 0, %v6133
        %v6135 = vrot.slane %v5535, %v6134
        %v6137 = vadd.f32 %v6005, %v6135
        %v6138 = vadd.f32 %v6008, %v6135
        %v6139 = vadd.f32 %v6013, %v6135
        %v6140 = vadd.f32 %v6016, %v6135
        %v6141 = vadd.f32 %v6021, %v6135
        %v6142 = vadd.f32 %v6024, %v6135
        %v6143 = vadd.f32 %v6029, %v6135
        %v6144 = vadd.f32 %v6032, %v6135
        %v6145 = vadd.f32 %v6037, %v6135
        %v6146 = vadd.f32 %v6040, %v6135
        %v6147 = vadd.f32 %v6045, %v6135
        %v6148 = vadd.f32 %v6048, %v6135
        %v6149 = vadd.f32 %v6053, %v6135
        %v6150 = vadd.f32 %v6056, %v6135
        %v6151 = vadd.f32 %v6061, %v6135
        %v6152 = vadd.f32 %v6064, %v6135
        %v6153 = vadd.f32 %v6069, %v6135
        %v6154 = vadd.f32 %v6072, %v6135
        %v6155 = vadd.f32 %v6077, %v6135
        %v6156 = vadd.f32 %v6080, %v6135
        %v6157 = vadd.f32 %v6085, %v6135
        %v6158 = vadd.f32 %v6088, %v6135
        %v6159 = vadd.f32 %v6093, %v6135
        %v6160 = vadd.f32 %v6096, %v6135
        %v6161 = vadd.f32 %v6101, %v6135
        %v6162 = vadd.f32 %v6104, %v6135
        %v6163 = vadd.f32 %v6109, %v6135
        %v6164 = vadd.f32 %v6112, %v6135
        %v6165 = vadd.f32 %v6117, %v6135
        %v6166 = vadd.f32 %v6120, %v6135
        %v6167 = vadd.f32 %v6125, %v6135
        %v6168 = vadd.f32 %v6128, %v6135
        %v6169 = vmax.f32 %v6137, 0.0
        %v6170 = vmax.f32 %v6138, 0.0
        %v6171 = vmax.f32 %v6139, 0.0
        %v6172 = vmax.f32 %v6140, 0.0
        %v6173 = vmax.f32 %v6141, 0.0
        %v6174 = vmax.f32 %v6142, 0.0
        %v6175 = vmax.f32 %v6143, 0.0
        %v6176 = vmax.f32 %v6144, 0.0
        %v6177 = vmax.f32 %v6145, 0.0
        %v6178 = vmax.f32 %v6146, 0.0
        %v6179 = vmax.f32 %v6147, 0.0
        %v6180 = vmax.f32 %v6148, 0.0
        %v6181 = vmax.f32 %v6149, 0.0
        %v6182 = vmax.f32 %v6150, 0.0
        %v6183 = vmax.f32 %v6151, 0.0
        %v6184 = vmax.f32 %v6152, 0.0
        %v6185 = vmax.f32 %v6153, 0.0
        %v6186 = vmax.f32 %v6154, 0.0
        %v6187 = vmax.f32 %v6155, 0.0
        %v6188 = vmax.f32 %v6156, 0.0
        %v6189 = vmax.f32 %v6157, 0.0
        %v6190 = vmax.f32 %v6158, 0.0
        %v6191 = vmax.f32 %v6159, 0.0
        %v6192 = vmax.f32 %v6160, 0.0
        %v6193 = vmax.f32 %v6161, 0.0
        %v6194 = vmax.f32 %v6162, 0.0
        %v6195 = vmax.f32 %v6163, 0.0
        %v6196 = vmax.f32 %v6164, 0.0
        %v6197 = vmax.f32 %v6165, 0.0
        %v6198 = vmax.f32 %v6166, 0.0
        %v6199 = vmax.f32 %v6167, 0.0
        %v6200 = vmax.f32 %v6168, 0.0
        %v6201 = vpack.c.bf16 %v6170, %v6169
        %v6202 = vpack.c.bf16 %v6172, %v6171
        %v6203 = vpack.c.bf16 %v6174, %v6173
        %v6204 = vpack.c.bf16 %v6176, %v6175
        %v6205 = vpack.c.bf16 %v6178, %v6177
        %v6206 = vpack.c.bf16 %v6180, %v6179
        %v6207 = vpack.c.bf16 %v6182, %v6181
        %v6208 = vpack.c.bf16 %v6184, %v6183
        %v6209 = vpack.c.bf16 %v6186, %v6185
        %v6210 = vpack.c.bf16 %v6188, %v6187
        %v6211 = vpack.c.bf16 %v6190, %v6189
        %v6212 = vpack.c.bf16 %v6192, %v6191
        %v6213 = vpack.c.bf16 %v6194, %v6193
        %v6214 = vpack.c.bf16 %v6196, %v6195
        %v6215 = vpack.c.bf16 %v6198, %v6197
        %v6216 = vpack.c.bf16 %v6200, %v6199
        %v6217 = vld [vmem:[%s8] sm:$0xf]
        %v6218 = vld [vmem:[%s8 + $0x4] sm:$0xf]
        %v6219 = vld [vmem:[%s8 + $0x8] sm:$0xf]
        %v6220 = vld [vmem:[%s8 + $0xc] sm:$0xf]
        %v6221 = vld [vmem:[%s8 + $0x10] sm:$0xf]
        %v6222 = vld [vmem:[%s8 + $0x14] sm:$0xf]
        %v6223 = vld [vmem:[%s8 + $0x18] sm:$0xf]
        %v6224 = vld [vmem:[%s8 + $0x1c] sm:$0xf]
        %v6225 = vld [vmem:[%s8 + $0x20] sm:$0xf]
        %v6226 = vld [vmem:[%s8 + $0x24] sm:$0xf]
        %v6227 = vld [vmem:[%s8 + $0x28] sm:$0xf]
        %v6228 = vld [vmem:[%s8 + $0x2c] sm:$0xf]
        %v6229 = vld [vmem:[%s8 + $0x30] sm:$0xf]
        %v6230 = vld [vmem:[%s8 + $0x34] sm:$0xf]
        %v6231 = vld [vmem:[%s8 + $0x38] sm:$0xf]
        %v6232 = vld [vmem:[%s8 + $0x3c] sm:$0xf]
        %s6233 = scalar_lea.vmem %s9, 2
        %v6234 = vld [vmem:[%s6233] sm:$0x1]
        %v6236 = vlaneseq
        %v6237 = vshrl.u32 %v6236, 7
        %v6238 = vsub.s32 0, %v6237
        %v6239 = vrot.slane %v6234, %v6238
        %v6257 = vunpack.c.l.b16 %v6217
        %v6258 = vunpack.c.l.b16 %v6218
        %v6259 = vunpack.c.l.b16 %v6219
        %v6260 = vunpack.c.l.b16 %v6220
        %v6261 = vunpack.c.l.b16 %v6221
        %v6262 = vunpack.c.l.b16 %v6222
        %v6263 = vunpack.c.l.b16 %v6223
        %v6264 = vunpack.c.l.b16 %v6224
        %v6265 = vunpack.c.l.b16 %v6225
        %v6266 = vunpack.c.l.b16 %v6226
        %v6267 = vunpack.c.l.b16 %v6227
        %v6268 = vunpack.c.l.b16 %v6228
        %v6269 = vunpack.c.l.b16 %v6229
        %v6270 = vunpack.c.l.b16 %v6230
        %v6271 = vunpack.c.l.b16 %v6231
        %v6272 = vunpack.c.l.b16 %v6232
        %v6273 = vpack.c.b16 %v6258, %v6257
        %v6274 = vpack.c.b16 %v6260, %v6259
        %v6275 = vpack.c.b16 %v6262, %v6261
        %v6276 = vpack.c.b16 %v6264, %v6263
        %v6277 = vpack.c.b16 %v6266, %v6265
        %v6278 = vpack.c.b16 %v6268, %v6267
        %v6279 = vpack.c.b16 %v6270, %v6269
        %v6280 = vpack.c.b16 %v6272, %v6271
        %6289 = vmatprep.subr.bf16.mxu0 0
        %6290 = vmatpush1.bf16.msra.mxu0 %v6273
        %6291 = vmatprep.subr.bf16.mxu0 0
        %6292 = vmatpush1.bf16.msra.mxu0 %v6274
        %6293 = vmatprep.subr.bf16.mxu0 0
        %6294 = vmatpush1.bf16.msra.mxu0 %v6275
        %6295 = vmatprep.subr.bf16.mxu0 0
        %6296 = vmatpush1.bf16.msra.mxu0 %v6276
        %6297 = vmatprep.subr.bf16.mxu0 0
        %6298 = vmatpush1.bf16.msra.mxu0 %v6277
        %6299 = vmatprep.subr.bf16.mxu0 0
        %6300 = vmatpush1.bf16.msra.mxu0 %v6278
        %6301 = vmatprep.subr.bf16.mxu0 0
        %6302 = vmatpush1.bf16.msra.mxu0 %v6279
        %6303 = vmatprep.subr.bf16.mxu0 0
        %6304 = vmatpush1.bf16.msra.mxu0 %v6280
        %6305 = vmatprep.subr.bf16.mxu0 0
        %6306 = vmatpush1.bf16.msra.mxu0 0
        %6307 = vmatprep.subr.bf16.mxu0 0
        %6308 = vmatpush1.bf16.msra.mxu0 0
        %6309 = vmatprep.subr.bf16.mxu0 0
        %6310 = vmatpush1.bf16.msra.mxu0 0
        %6311 = vmatprep.subr.bf16.mxu0 0
        %6312 = vmatpush1.bf16.msra.mxu0 0
        %6313 = vmatprep.subr.bf16.mxu0 0
        %6314 = vmatpush1.bf16.msra.mxu0 0
        %6315 = vmatprep.subr.bf16.mxu0 0
        %6316 = vmatpush1.bf16.msra.mxu0 0
        %6317 = vmatprep.subr.bf16.mxu0 0
        %6318 = vmatpush1.bf16.msra.mxu0 0
        %6319 = vmatprep.subr.bf16.mxu0 0
        %6320 = vmatpush1.bf16.msra.mxu0 0
        %6321 = vmatprep.mubr.bf16.mxu0 0
        %6322 = vmatmul.mubr.bf16.gmra.mrb[0].mxu0 %v6201
        %v6323 = vpop.f32.mrb[0].mxu0
        %v6324 = vadd.f32 %v6239, %v6323
        %v6325 = vpop.f32.mrb[0].mxu0
        %v6326 = vpop.f32.mrb[0].mxu0
        %v6327 = vadd.f32 %v6239, %v6326
        %v6328 = vpop.f32.mrb[0].mxu0
        %6329 = vmatprep.mubr.bf16.mxu0 0
        %6330 = vmatmul.mubr.bf16.gmra.mrb[0].mxu0 %v6202
        %v6331 = vpop.f32.mrb[0].mxu0
        %v6332 = vadd.f32 %v6239, %v6331
        %v6333 = vpop.f32.mrb[0].mxu0
        %v6334 = vpop.f32.mrb[0].mxu0
        %v6335 = vadd.f32 %v6239, %v6334
        %v6336 = vpop.f32.mrb[0].mxu0
        %6337 = vmatprep.mubr.bf16.mxu0 0
        %6338 = vmatmul.mubr.bf16.gmra.mrb[0].mxu0 %v6203
        %v6339 = vpop.f32.mrb[0].mxu0
        %v6340 = vadd.f32 %v6239, %v6339
        %v6341 = vpop.f32.mrb[0].mxu0
        %v6342 = vpop.f32.mrb[0].mxu0
        %v6343 = vadd.f32 %v6239, %v6342
        %v6344 = vpop.f32.mrb[0].mxu0
        %6345 = vmatprep.mubr.bf16.mxu0 0
        %6346 = vmatmul.mubr.bf16.gmra.mrb[0].mxu0 %v6204
        %v6347 = vpop.f32.mrb[0].mxu0
        %v6348 = vadd.f32 %v6239, %v6347
        %v6349 = vpop.f32.mrb[0].mxu0
        %v6350 = vpop.f32.mrb[0].mxu0
        %v6351 = vadd.f32 %v6239, %v6350
        %v6352 = vpop.f32.mrb[0].mxu0
        %6353 = vmatprep.mubr.bf16.mxu0 0
        %6354 = vmatmul.mubr.bf16.gmra.mrb[0].mxu0 %v6205
        %v6355 = vpop.f32.mrb[0].mxu0
        %v6356 = vadd.f32 %v6239, %v6355
        %v6357 = vpop.f32.mrb[0].mxu0
        %v6358 = vpop.f32.mrb[0].mxu0
        %v6359 = vadd.f32 %v6239, %v6358
        %v6360 = vpop.f32.mrb[0].mxu0
        %6361 = vmatprep.mubr.bf16.mxu0 0
        %6362 = vmatmul.mubr.bf16.gmra.mrb[0].mxu0 %v6206
        %v6363 = vpop.f32.mrb[0].mxu0
        %v6364 = vadd.f32 %v6239, %v6363
        %v6365 = vpop.f32.mrb[0].mxu0
        %v6366 = vpop.f32.mrb[0].mxu0
        %v6367 = vadd.f32 %v6239, %v6366
        %v6368 = vpop.f32.mrb[0].mxu0
        %6369 = vmatprep.mubr.bf16.mxu0 0
        %6370 = vmatmul.mubr.bf16.gmra.mrb[0].mxu0 %v6207
        %v6371 = vpop.f32.mrb[0].mxu0
        %v6372 = vadd.f32 %v6239, %v6371
        %v6373 = vpop.f32.mrb[0].mxu0
        %v6374 = vpop.f32.mrb[0].mxu0
        %v6375 = vadd.f32 %v6239, %v6374
        %v6376 = vpop.f32.mrb[0].mxu0
        %6377 = vmatprep.mubr.bf16.mxu0 0
        %6378 = vmatmul.mubr.bf16.gmra.mrb[0].mxu0 %v6208
        %v6379 = vpop.f32.mrb[0].mxu0
        %v6380 = vadd.f32 %v6239, %v6379
        %v6381 = vpop.f32.mrb[0].mxu0
        %v6382 = vpop.f32.mrb[0].mxu0
        %v6383 = vadd.f32 %v6239, %v6382
        %v6384 = vpop.f32.mrb[0].mxu0
        %6385 = vmatprep.mubr.bf16.mxu0 0
        %6386 = vmatmul.mubr.bf16.gmra.mrb[0].mxu0 %v6209
        %v6387 = vpop.f32.mrb[0].mxu0
        %v6388 = vadd.f32 %v6239, %v6387
        %v6389 = vpop.f32.mrb[0].mxu0
        %v6390 = vpop.f32.mrb[0].mxu0
        %v6391 = vadd.f32 %v6239, %v6390
        %v6392 = vpop.f32.mrb[0].mxu0
        %6393 = vmatprep.mubr.bf16.mxu0 0
        %6394 = vmatmul.mubr.bf16.gmra.mrb[0].mxu0 %v6210
        %v6395 = vpop.f32.mrb[0].mxu0
        %v6396 = vadd.f32 %v6239, %v6395
        %v6397 = vpop.f32.mrb[0].mxu0
        %v6398 = vpop.f32.mrb[0].mxu0
        %v6399 = vadd.f32 %v6239, %v6398
        %v6400 = vpop.f32.mrb[0].mxu0
        %6401 = vmatprep.mubr.bf16.mxu0 0
        %6402 = vmatmul.mubr.bf16.gmra.mrb[0].mxu0 %v6211
        %v6403 = vpop.f32.mrb[0].mxu0
        %v6404 = vadd.f32 %v6239, %v6403
        %v6405 = vpop.f32.mrb[0].mxu0
        %v6406 = vpop.f32.mrb[0].mxu0
        %v6407 = vadd.f32 %v6239, %v6406
        %v6408 = vpop.f32.mrb[0].mxu0
        %6409 = vmatprep.mubr.bf16.mxu0 0
        %6410 = vmatmul.mubr.bf16.gmra.mrb[0].mxu0 %v6212
        %v6411 = vpop.f32.mrb[0].mxu0
        %v6412 = vadd.f32 %v6239, %v6411
        %v6413 = vpop.f32.mrb[0].mxu0
        %v6414 = vpop.f32.mrb[0].mxu0
        %v6415 = vadd.f32 %v6239, %v6414
        %v6416 = vpop.f32.mrb[0].mxu0
        %6417 = vmatprep.mubr.bf16.mxu0 0
        %6418 = vmatmul.mubr.bf16.gmra.mrb[0].mxu0 %v6213
        %v6419 = vpop.f32.mrb[0].mxu0
        %v6420 = vadd.f32 %v6239, %v6419
        %v6421 = vpop.f32.mrb[0].mxu0
        %v6422 = vpop.f32.mrb[0].mxu0
        %v6423 = vadd.f32 %v6239, %v6422
        %v6424 = vpop.f32.mrb[0].mxu0
        %6425 = vmatprep.mubr.bf16.mxu0 0
        %6426 = vmatmul.mubr.bf16.gmra.mrb[0].mxu0 %v6214
        %v6427 = vpop.f32.mrb[0].mxu0
        %v6428 = vadd.f32 %v6239, %v6427
        %v6429 = vpop.f32.mrb[0].mxu0
        %v6430 = vpop.f32.mrb[0].mxu0
        %v6431 = vadd.f32 %v6239, %v6430
        %v6432 = vpop.f32.mrb[0].mxu0
        %6433 = vmatprep.mubr.bf16.mxu0 0
        %6434 = vmatmul.mubr.bf16.gmra.mrb[0].mxu0 %v6215
        %v6435 = vpop.f32.mrb[0].mxu0
        %v6436 = vadd.f32 %v6239, %v6435
        %v6437 = vpop.f32.mrb[0].mxu0
        %v6438 = vpop.f32.mrb[0].mxu0
        %v6439 = vadd.f32 %v6239, %v6438
        %v6440 = vpop.f32.mrb[0].mxu0
        %6441 = vmatprep.mubr.bf16.mxu0 0
        %6442 = vmatmul.mubr.bf16.gmra.mrb[0].mxu0 %v6216
        %v6443 = vpop.f32.mrb[0].mxu0
        %v6444 = vadd.f32 %v6239, %v6443
        %v6445 = vpop.f32.mrb[0].mxu0
        %v6446 = vpop.f32.mrb[0].mxu0
        %v6447 = vadd.f32 %v6239, %v6446
        %v6448 = vpop.f32.mrb[0].mxu0
        %6449 = vdwg.mxu0
        %v6450 = vxor.u32 %v6324, 2147483648
        %v6451 = vxor.u32 %v6327, 2147483648
        %v6452 = vxor.u32 %v6332, 2147483648
        %v6453 = vxor.u32 %v6335, 2147483648
        %v6454 = vxor.u32 %v6340, 2147483648
        %v6455 = vxor.u32 %v6343, 2147483648
        %v6456 = vxor.u32 %v6348, 2147483648
        %v6457 = vxor.u32 %v6351, 2147483648
        %v6458 = vxor.u32 %v6356, 2147483648
        %v6459 = vxor.u32 %v6359, 2147483648
        %v6460 = vxor.u32 %v6364, 2147483648
        %v6461 = vxor.u32 %v6367, 2147483648
        %v6462 = vxor.u32 %v6372, 2147483648
        %v6463 = vxor.u32 %v6375, 2147483648
        %v6464 = vxor.u32 %v6380, 2147483648
        %v6465 = vxor.u32 %v6383, 2147483648
        %v6466 = vxor.u32 %v6388, 2147483648
        %v6467 = vxor.u32 %v6391, 2147483648
        %v6468 = vxor.u32 %v6396, 2147483648
        %v6469 = vxor.u32 %v6399, 2147483648
        %v6470 = vxor.u32 %v6404, 2147483648
        %v6471 = vxor.u32 %v6407, 2147483648
        %v6472 = vxor.u32 %v6412, 2147483648
        %v6473 = vxor.u32 %v6415, 2147483648
        %v6474 = vxor.u32 %v6420, 2147483648
        %v6475 = vxor.u32 %v6423, 2147483648
        %v6476 = vxor.u32 %v6428, 2147483648
        %v6477 = vxor.u32 %v6431, 2147483648
        %v6478 = vxor.u32 %v6436, 2147483648
        %v6479 = vxor.u32 %v6439, 2147483648
        %v6480 = vxor.u32 %v6444, 2147483648
        %v6481 = vxor.u32 %v6447, 2147483648
        %v6482 = vmul.f32 %v6450, 1.442695
        %v6483 = vpow.pop %v6482
        %v6484 = vmul.f32 %v6451, 1.442695
        %v6485 = vpow.pop %v6484
        %v6486 = vmul.f32 %v6452, 1.442695
        %v6487 = vpow.pop %v6486
        %v6488 = vmul.f32 %v6453, 1.442695
        %v6489 = vpow.pop %v6488
        %v6490 = vmul.f32 %v6454, 1.442695
        %v6491 = vpow.pop %v6490
        %v6492 = vmul.f32 %v6455, 1.442695
        %v6493 = vpow.pop %v6492
        %v6494 = vmul.f32 %v6456, 1.442695
        %v6495 = vpow.pop %v6494
        %v6496 = vmul.f32 %v6457, 1.442695
        %v6497 = vpow.pop %v6496
        %v6498 = vmul.f32 %v6458, 1.442695
        %v6499 = vpow.pop %v6498
        %v6500 = vmul.f32 %v6459, 1.442695
        %v6501 = vpow.pop %v6500
        %v6502 = vmul.f32 %v6460, 1.442695
        %v6503 = vpow.pop %v6502
        %v6504 = vmul.f32 %v6461, 1.442695
        %v6505 = vpow.pop %v6504
        %v6506 = vmul.f32 %v6462, 1.442695
        %v6507 = vpow.pop %v6506
        %v6508 = vmul.f32 %v6463, 1.442695
        %v6509 = vpow.pop %v6508
        %v6510 = vmul.f32 %v6464, 1.442695
        %v6511 = vpow.pop %v6510
        %v6512 = vmul.f32 %v6465, 1.442695
        %v6513 = vpow.pop %v6512
        %v6514 = vmul.f32 %v6466, 1.442695
        %v6515 = vpow.pop %v6514
        %v6516 = vmul.f32 %v6467, 1.442695
        %v6517 = vpow.pop %v6516
        %v6518 = vmul.f32 %v6468, 1.442695
        %v6519 = vpow.pop %v6518
        %v6520 = vmul.f32 %v6469, 1.442695
        %v6521 = vpow.pop %v6520
        %v6522 = vmul.f32 %v6470, 1.442695
        %v6523 = vpow.pop %v6522
        %v6524 = vmul.f32 %v6471, 1.442695
        %v6525 = vpow.pop %v6524
        %v6526 = vmul.f32 %v6472, 1.442695
        %v6527 = vpow.pop %v6526
        %v6528 = vmul.f32 %v6473, 1.442695
        %v6529 = vpow.pop %v6528
        %v6530 = vmul.f32 %v6474, 1.442695
        %v6531 = vpow.pop %v6530
        %v6532 = vmul.f32 %v6475, 1.442695
        %v6533 = vpow.pop %v6532
        %v6534 = vmul.f32 %v6476, 1.442695
        %v6535 = vpow.pop %v6534
        %v6536 = vmul.f32 %v6477, 1.442695
        %v6537 = vpow.pop %v6536
        %v6538 = vmul.f32 %v6478, 1.442695
        %v6539 = vpow.pop %v6538
        %v6540 = vmul.f32 %v6479, 1.442695
        %v6541 = vpow.pop %v6540
        %v6542 = vmul.f32 %v6480, 1.442695
        %v6543 = vpow.pop %v6542
        %v6544 = vmul.f32 %v6481, 1.442695
        %v6545 = vpow.pop %v6544
        %v6546 = vadd.f32 %v6483, 1.0
        %v6547 = vadd.f32 %v6485, 1.0
        %v6548 = vadd.f32 %v6487, 1.0
        %v6549 = vadd.f32 %v6489, 1.0
        %v6550 = vadd.f32 %v6491, 1.0
        %v6551 = vadd.f32 %v6493, 1.0
        %v6552 = vadd.f32 %v6495, 1.0
        %v6553 = vadd.f32 %v6497, 1.0
        %v6554 = vadd.f32 %v6499, 1.0
        %v6555 = vadd.f32 %v6501, 1.0
        %v6556 = vadd.f32 %v6503, 1.0
        %v6557 = vadd.f32 %v6505, 1.0
        %v6558 = vadd.f32 %v6507, 1.0
        %v6559 = vadd.f32 %v6509, 1.0
        %v6560 = vadd.f32 %v6511, 1.0
        %v6561 = vadd.f32 %v6513, 1.0
        %v6562 = vadd.f32 %v6515, 1.0
        %v6563 = vadd.f32 %v6517, 1.0
        %v6564 = vadd.f32 %v6519, 1.0
        %v6565 = vadd.f32 %v6521, 1.0
        %v6566 = vadd.f32 %v6523, 1.0
        %v6567 = vadd.f32 %v6525, 1.0
        %v6568 = vadd.f32 %v6527, 1.0
        %v6569 = vadd.f32 %v6529, 1.0
        %v6570 = vadd.f32 %v6531, 1.0
        %v6571 = vadd.f32 %v6533, 1.0
        %v6572 = vadd.f32 %v6535, 1.0
        %v6573 = vadd.f32 %v6537, 1.0
        %v6574 = vadd.f32 %v6539, 1.0
        %v6575 = vadd.f32 %v6541, 1.0
        %v6576 = vadd.f32 %v6543, 1.0
        %v6577 = vadd.f32 %v6545, 1.0
        %v6578 = vrcp.pop %v6546
        %v6579 = vmul.f32 1.0, %v6578
        %v6580 = vrcp.pop %v6547
        %v6581 = vmul.f32 1.0, %v6580
        %v6582 = vrcp.pop %v6548
        %v6583 = vmul.f32 1.0, %v6582
        %v6584 = vrcp.pop %v6549
        %v6585 = vmul.f32 1.0, %v6584
        %v6586 = vrcp.pop %v6550
        %v6587 = vmul.f32 1.0, %v6586
        %v6588 = vrcp.pop %v6551
        %v6589 = vmul.f32 1.0, %v6588
        %v6590 = vrcp.pop %v6552
        %v6591 = vmul.f32 1.0, %v6590
        %v6592 = vrcp.pop %v6553
        %v6593 = vmul.f32 1.0, %v6592
        %v6594 = vrcp.pop %v6554
        %v6595 = vmul.f32 1.0, %v6594
        %v6596 = vrcp.pop %v6555
        %v6597 = vmul.f32 1.0, %v6596
        %v6598 = vrcp.pop %v6556
        %v6599 = vmul.f32 1.0, %v6598
        %v6600 = vrcp.pop %v6557
        %v6601 = vmul.f32 1.0, %v6600
        %v6602 = vrcp.pop %v6558
        %v6603 = vmul.f32 1.0, %v6602
        %v6604 = vrcp.pop %v6559
        %v6605 = vmul.f32 1.0, %v6604
        %v6606 = vrcp.pop %v6560
        %v6607 = vmul.f32 1.0, %v6606
        %v6608 = vrcp.pop %v6561
        %v6609 = vmul.f32 1.0, %v6608
        %v6610 = vrcp.pop %v6562
        %v6611 = vmul.f32 1.0, %v6610
        %v6612 = vrcp.pop %v6563
        %v6613 = vmul.f32 1.0, %v6612
        %v6614 = vrcp.pop %v6564
        %v6615 = vmul.f32 1.0, %v6614
        %v6616 = vrcp.pop %v6565
        %v6617 = vmul.f32 1.0, %v6616
        %v6618 = vrcp.pop %v6566
        %v6619 = vmul.f32 1.0, %v6618
        %v6620 = vrcp.pop %v6567
        %v6621 = vmul.f32 1.0, %v6620
        %v6622 = vrcp.pop %v6568
        %v6623 = vmul.f32 1.0, %v6622
        %v6624 = vrcp.pop %v6569
        %v6625 = vmul.f32 1.0, %v6624
        %v6626 = vrcp.pop %v6570
        %v6627 = vmul.f32 1.0, %v6626
        %v6628 = vrcp.pop %v6571
        %v6629 = vmul.f32 1.0, %v6628
        %v6630 = vrcp.pop %v6572
        %v6631 = vmul.f32 1.0, %v6630
        %v6632 = vrcp.pop %v6573
        %v6633 = vmul.f32 1.0, %v6632
        %v6634 = vrcp.pop %v6574
        %v6635 = vmul.f32 1.0, %v6634
        %v6636 = vrcp.pop %v6575
        %v6637 = vmul.f32 1.0, %v6636
        %v6638 = vrcp.pop %v6576
        %v6639 = vmul.f32 1.0, %v6638
        %v6640 = vrcp.pop %v6577
        %v6641 = vmul.f32 1.0, %v6640
        %v6642 = vlaneseq
        %v6643 = vand.u32 %v6642, 127
        %vm6644 = vcmp.lt.s32.totalorder %v6643, 3
        %v6645 = vsel %vm6644, %v6579, %v5007
        %v6646 = vsel %vm6644, %v6581, %v5008
        %v6647 = vsel %vm6644, %v6583, %v5009
        %v6648 = vsel %vm6644, %v6585, %v5010
        %v6649 = vsel %vm6644, %v6587, %v5011
        %v6650 = vsel %vm6644, %v6589, %v5012
        %v6651 = vsel %vm6644, %v6591, %v5013
        %v6652 = vsel %vm6644, %v6593, %v5014
        %v6653 = vsel %vm6644, %v6595, %v5015
        %v6654 = vsel %vm6644, %v6597, %v5016
        %v6655 = vsel %vm6644, %v6599, %v5017
        %v6656 = vsel %vm6644, %v6601, %v5018
        %v6657 = vsel %vm6644, %v6603, %v5019
        %v6658 = vsel %vm6644, %v6605, %v5020
        %v6659 = vsel %vm6644, %v6607, %v5021
        %v6660 = vsel %vm6644, %v6609, %v5022
        %v6661 = vsel %vm6644, %v6611, %v5023
        %v6662 = vsel %vm6644, %v6613, %v5024
        %v6663 = vsel %vm6644, %v6615, %v5025
        %v6664 = vsel %vm6644, %v6617, %v5026
        %v6665 = vsel %vm6644, %v6619, %v5027
        %v6666 = vsel %vm6644, %v6621, %v5028
        %v6667 = vsel %vm6644, %v6623, %v5029
        %v6668 = vsel %vm6644, %v6625, %v5030
        %v6669 = vsel %vm6644, %v6627, %v5031
        %v6670 = vsel %vm6644, %v6629, %v5032
        %v6671 = vsel %vm6644, %v6631, %v5033
        %v6672 = vsel %vm6644, %v6633, %v5034
        %v6673 = vsel %vm6644, %v6635, %v5035
        %v6674 = vsel %vm6644, %v6637, %v5036
        %v6675 = vsel %vm6644, %v6639, %v5037
        %v6676 = vsel %vm6644, %v6641, %v5038
        %6677 = vst [vmem:[%s384] sm:$0xff] %v6645
        %6678 = vst [vmem:[%s384 + $0x8] sm:$0xff] %v6646
        %6679 = vst [vmem:[%s384 + $0x10] sm:$0xff] %v6647
        %6680 = vst [vmem:[%s384 + $0x18] sm:$0xff] %v6648
        %6681 = vst [vmem:[%s384 + $0x20] sm:$0xff] %v6649
        %6682 = vst [vmem:[%s384 + $0x28] sm:$0xff] %v6650
        %6683 = vst [vmem:[%s384 + $0x30] sm:$0xff] %v6651
        %6684 = vst [vmem:[%s384 + $0x38] sm:$0xff] %v6652
        %6685 = vst [vmem:[%s384 + $0x40] sm:$0xff] %v6653
        %6686 = vst [vmem:[%s384 + $0x48] sm:$0xff] %v6654
        %6687 = vst [vmem:[%s384 + $0x50] sm:$0xff] %v6655
        %6688 = vst [vmem:[%s384 + $0x58] sm:$0xff] %v6656
        %6689 = vst [vmem:[%s384 + $0x60] sm:$0xff] %v6657
        %6690 = vst [vmem:[%s384 + $0x68] sm:$0xff] %v6658
        %6691 = vst [vmem:[%s384 + $0x70] sm:$0xff] %v6659
        %6692 = vst [vmem:[%s384 + $0x78] sm:$0xff] %v6660
        %6693 = vst [vmem:[%s384 + $0x80] sm:$0xff] %v6661
        %6694 = vst [vmem:[%s384 + $0x88] sm:$0xff] %v6662
        %6695 = vst [vmem:[%s384 + $0x90] sm:$0xff] %v6663
        %6696 = vst [vmem:[%s384 + $0x98] sm:$0xff] %v6664
        %6697 = vst [vmem:[%s384 + $0xa0] sm:$0xff] %v6665
        %6698 = vst [vmem:[%s384 + $0xa8] sm:$0xff] %v6666
        %6699 = vst [vmem:[%s384 + $0xb0] sm:$0xff] %v6667
        %6700 = vst [vmem:[%s384 + $0xb8] sm:$0xff] %v6668
        %6701 = vst [vmem:[%s384 + $0xc0] sm:$0xff] %v6669
        %6702 = vst [vmem:[%s384 + $0xc8] sm:$0xff] %v6670
        %6703 = vst [vmem:[%s384 + $0xd0] sm:$0xff] %v6671
        %6704 = vst [vmem:[%s384 + $0xd8] sm:$0xff] %v6672
        %6705 = vst [vmem:[%s384 + $0xe0] sm:$0xff] %v6673
        %6706 = vst [vmem:[%s384 + $0xe8] sm:$0xff] %v6674
        %6707 = vst [vmem:[%s384 + $0xf0] sm:$0xff] %v6675
        %6708 = vst [vmem:[%s384 + $0xf8] sm:$0xff] %v6676
        %s6709 = sand.u32 %s253, 1
        %s6710 = scalar_lea.sflag [#allocation4], %s6709
        %s6711 = sand.u32 %s253, 1
        %s6712 = smul.addr %s6711, 256
        %s6713 = scalar_lea.vmem [#allocation5], %s6712
        // Predicated region
        $region65: #{tpu_custom_call.1} parent=59 // pred_check
          %p6714 = pneg %p263
        $region66: #{tpu_custom_call.1} parent=59 // pred_check_branch
          %6716 = sbr.rel (%p6714) target = $region68
        $region67: #{tpu_custom_call.1} parent=59 // pred_region
          %s6717 = smul.u32 32, %s25
          %s6719 = ssub.s32 4096, 4096
          %6720 = vsyncadd %s6710, %s6719
          %s6721 = smul.addr %s6717, 128
          %s6722 = scalar_lea.hbm %s10, %s6721
          %s6723 = sshll.u32 %s6713, 4
          %s6724 = int_to_ptr.vmem [resolvable:$true] %s6723
          %6729 = dma.vmem_to_hbm [thread:$0]  %s6724, 4096, %s6722, %s6710, 128, 128, 8
        $region68: #{tpu_custom_call.1} parent=59 // pred_fallthru
          _
      $region60: #{tpu_custom_call.1} parent=5 // pred_fallthru
        _
      %p6730 = scmp.le.s32.totalorder 2, %s20
      // Predicated region
      $region69: #{tpu_custom_call.1} parent=5 // pred_check
        %p6731 = pneg %p6730
      $region70: #{tpu_custom_call.1} parent=5 // pred_check_branch
        %6733 = sbr.rel (%p6731) target = $region72
      $region71: #{tpu_custom_call.1} parent=5 // pred_region
        %s6734 = ssub.s32 %s20, 2
        // Predicated region
        $region73: #{tpu_custom_call.1} parent=71 // pred_check
          %p6735 = pneg %p269
        $region74: #{tpu_custom_call.1} parent=71 // pred_check_branch
          %6737 = sbr.rel (%p6735) target = $region76
        $region75: #{tpu_custom_call.1} parent=71 // pred_region
          %s6738 = sand.u32 %s254, 1
          %s6739 = scalar_lea.sflag [#allocation4], %s6738
          %s6740 = sand.u32 %s254, 1
          %s6741 = smul.addr %s6740, 256
          %s6742 = scalar_lea.vmem [#allocation5], %s6741
          %6743 = dma.done %s6739, 4096
        $region76: #{tpu_custom_call.1} parent=71 // pred_fallthru
          _
      $region72: #{tpu_custom_call.1} parent=5 // pred_fallthru
        _
    $region6: #{tpu_custom_call.1} parent=1 // loop_footer
      %s24 = sadd.s32 1, %s20
    $region7: #{tpu_custom_call.1} parent=1 // loop_footer_branch
      %19 = sbr.rel target = $region3
    $region8: #{tpu_custom_call.1} parent=1 // loop_exit
      _
    %6744 = vsyncpa [#allocation3], 1
    %s6745 = scalar_lea.sflag [#allocation3], 1
    %6746 = vsyncpa %s6745, 1
    %6747 = vsyncpa [#allocation4], 1
    %s6748 = scalar_lea.sflag [#allocation4], 1
    %6749 = vsyncpa %s6748, 1

</llo_original>
